<compile_context>
chip_gen: v7x
topology: tpu7x:2x2x1
jax: 0.10.0
libtpu: 0.0.40
codegen_flags: <defaults>
</compile_context>

<pallas_src>
import math
import functools
import numpy as np

import jax
import jax.numpy as jnp
from jax.experimental import pallas as pl
from jax.experimental.pallas import tpu as pltpu

F32 = jnp.float32
MM_DTYPE = jnp.bfloat16   # matmul-input dtype (accumulation is always f32)
EPS = 1e-5                # torch.nn.LayerNorm default eps
VMEM_LIMIT = 64 * 1024 * 1024


# ----------------------------- small helpers -------------------------------

def _ln(x, g, b):
    """LayerNorm over the last dim (biased variance, like torch.nn.LayerNorm)."""
    mu = jnp.mean(x, axis=-1, keepdims=True)
    var = jnp.mean((x - mu) ** 2, axis=-1, keepdims=True)
    return (x - mu) * jax.lax.rsqrt(var + EPS) * g + b


def _mmdot(a, b):
    """Matmul with f32 accumulation (operands already in their matmul dtype)."""
    return jnp.dot(a, b, preferred_element_type=jnp.float32)


def positional_encoding(T, H):
    pos = jnp.arange(T, dtype=F32)[:, None]
    div = jnp.exp(jnp.arange(0, H, 2, dtype=F32) * (-(math.log(10000.0) / H)))
    pe = jnp.zeros((T, H), F32)
    pe = pe.at[:, 0::2].set(jnp.sin(pos * div))
    pe = pe.at[:, 1::2].set(jnp.cos(pos * div))
    return pe


def _choose_tile(T, cap=512):
    """Row-tile size along T: as large as possible, divides T, multiple of 8."""
    if T <= cap:
        return T
    for c in (512, 256, 128, 64, 32, 16, 8):
        if T % c == 0:
            return c
    return T


def _const_spec(shape):
    """BlockSpec for a weight that is fully resident and grid-invariant."""
    nd = len(shape)
    return pl.BlockSpec(shape, lambda *args: (0,) * nd)


# ------------------------- front-end kernel --------------------------------
# f0 MLP (Linear(1,16)-ReLU-Linear(16,32)-LayerNorm) + input projection
# (phoneme / f0 partial matmuls + pre-folded per-batch singer/language bias)
# + positional-encoding add.  Grid = (B, T // tq), both axes parallel.

def _frontend_kernel(f0_ref, ph_ref, pe_ref, bias_ref,
                     w1_ref, b1_ref, w2_ref, b2_ref, g0_ref, be0_ref,
                     wpph_ref, wpf0_ref, out_ref, *, mm_dtype):
    # Linear(1,16) == broadcasted elementwise multiply by the single weight row.
    h = jnp.maximum(f0_ref[0] * w1_ref[...] + b1_ref[...], 0.0)        # [tq,16]
    f0p = _mmdot(h, w2_ref[...]) + b2_ref[...]                         # [tq,32]
    f0p = _ln(f0p, g0_ref[...], be0_ref[...])
    x = (_mmdot(ph_ref[0].astype(mm_dtype), wpph_ref[...])
         + _mmdot(f0p.astype(mm_dtype), wpf0_ref[...])
         + bias_ref[0]                                                  # [1,H]
         + pe_ref[...])                                                 # [tq,H]
    out_ref[0] = x


def frontend_call(f0, ph, pe, in_bias, p, mm_dtype):
    B, T, _ = f0.shape
    P = ph.shape[-1]
    H = pe.shape[-1]
    d1 = p["f0_w1"].shape[1]
    d2 = p["f0_w2"].shape[1]
    tq = _choose_tile(T)
    nT = T // tq
    kern = functools.partial(_frontend_kernel, mm_dtype=mm_dtype)
    return pl.pallas_call(
        kern,
        grid=(B, nT),
        out_shape=jax.ShapeDtypeStruct((B, T, H), F32),
        in_specs=[
            pl.BlockSpec((1, tq, 1), lambda b, t: (b, t, 0)),           # f0
            pl.BlockSpec((1, tq, P), lambda b, t: (b, t, 0)),           # phoneme
            pl.BlockSpec((tq, H), lambda b, t: (t, 0)),                 # pe [T,H]
            pl.BlockSpec((1, 1, H), lambda b, t: (b, 0, 0)),            # per-batch bias
            _const_spec((1, d1)), _const_spec((1, d1)),                 # f0 w1,b1
            _const_spec((d1, d2)), _const_spec((1, d2)),                # f0 w2,b2
            _const_spec((1, d2)), _const_spec((1, d2)),                 # f0 LN g,b
            _const_spec((P, H)), _const_spec((d2, H)),                  # wp_ph, wp_f0
        ],
        out_specs=pl.BlockSpec((1, tq, H), lambda b, t: (b, t, 0)),
        compiler_params=pltpu.CompilerParams(
            dimension_semantics=("parallel", "parallel")),
    )(f0, ph, pe, in_bias,
      p["f0_w1"], p["f0_b1"], p["f0_w2"], p["f0_b2"], p["f0_g"], p["f0_be"],
      p["wp_ph"].astype(mm_dtype), p["wp_f0"].astype(mm_dtype))


# ------------------------- dilated conv block kernel -----------------------
# Conv1d(C -> 2C, k=3, dilation=d, "same") as 3 per-tap matmuls. The +/-d
# shifted taps are built inside the kernel with zero boundary rows, so there is
# no HBM pad round trip and the activation is read exactly once.

def _conv_block_kernel(x_ref, w0_ref, w1_ref, w2_ref, b_ref, g_ref, be_ref,
                       out_ref, *, dilation, mm_dtype):
    x = x_ref[0]                                                        # [T,H] f32
    T, H = x.shape
    d = dilation
    zpad = jnp.zeros((d, H), F32)
    # left[t] = x[t-d] (zeros for t<d);  right[t] = x[t+d] (zeros for t>=T-d)
    # (could be pushed onto the XLU with pltpu.roll + iota masks; shifts are
    #  negligible next to the three [T,H]x[H,2H] matmuls)
    left = jnp.concatenate([zpad, x[: T - d]], axis=0)
    right = jnp.concatenate([x[d:], zpad], axis=0)
    y = (_mmdot(left.astype(mm_dtype), w0_ref[...])
         + _mmdot(x.astype(mm_dtype), w1_ref[...])
         + _mmdot(right.astype(mm_dtype), w2_ref[...])
         + b_ref[...])                                                  # [T,2H]
    filt = y[:, :H]
    gate = y[:, H:]
    act = jax.nn.sigmoid(gate) * jnp.tanh(filt)
    out_ref[0] = _ln(x + act, g_ref[...], be_ref[...])


def conv_block_call(x, blk, dilation, mm_dtype):
    B, T, H = x.shape
    kern = functools.partial(_conv_block_kernel, dilation=dilation,
                             mm_dtype=mm_dtype)
    return pl.pallas_call(
        kern,
        grid=(B,),
        out_shape=jax.ShapeDtypeStruct((B, T, H), F32),
        in_specs=[
            pl.BlockSpec((1, T, H), lambda b: (b, 0, 0)),
            _const_spec((H, 2 * H)), _const_spec((H, 2 * H)),
            _const_spec((H, 2 * H)),
            _const_spec((1, 2 * H)),
            _const_spec((1, H)), _const_spec((1, H)),
        ],
        out_specs=pl.BlockSpec((1, T, H), lambda b: (b, 0, 0)),
        compiler_params=pltpu.CompilerParams(
            dimension_semantics=("parallel",),
            vmem_limit_bytes=VMEM_LIMIT),
    )(x, blk["w_tap0"].astype(mm_dtype), blk["w_tap1"].astype(mm_dtype),
      blk["w_tap2"].astype(mm_dtype), blk["bias"], blk["ln_g"], blk["ln_b"])


# ------------------------- transformer encoder layer kernel ----------------
# Multi-head self-attention (no mask) + residual + LN + FFN + residual + LN.
# Head outputs are concatenated and projected with ONE K=128 matmul.
# NOTE: for very long sequences (T*T*4B per head > VMEM, esp. v7x's 64 MiB) a
# query-tile grid axis would be needed; typical mel-encoder T fits as-is.

def _encoder_layer_kernel(x_ref, wq_ref, bq_ref, wk_ref, bk_ref, wv_ref, bv_ref,
                          wo_ref, bo_ref, g1_ref, be1_ref,
                          w1_ref, b1_ref, w2_ref, b2_ref, g2_ref, be2_ref,
                          out_ref, *, num_heads, mm_dtype):
    x = x_ref[0]                                                        # [T,H] f32
    H = x.shape[-1]
    dk = H // num_heads
    scale = 1.0 / math.sqrt(dk)

    xm = x.astype(mm_dtype)
    # fold the 1/sqrt(dk) score scale into q once
    q = (_mmdot(xm, wq_ref[...]) + bq_ref[...]) * scale
    k = _mmdot(xm, wk_ref[...]) + bk_ref[...]
    v = _mmdot(xm, wv_ref[...]) + bv_ref[...]

    heads = []
    for h in range(num_heads):
        sl = slice(h * dk, (h + 1) * dk)
        qh = q[:, sl].astype(mm_dtype)
        kh_t = k[:, sl].T.astype(mm_dtype)          # transpose in f32, then cast
        vh = v[:, sl].astype(mm_dtype)
        s = _mmdot(qh, kh_t)                                            # [T,T] f32
        s = s - jnp.max(s, axis=-1, keepdims=True)
        p = jnp.exp(s)
        p = p * pl.reciprocal(jnp.sum(p, axis=-1, keepdims=True), approx=True)
        heads.append(_mmdot(p.astype(mm_dtype), vh))                    # [T,dk]
    attn = jnp.concatenate(heads, axis=-1)                              # [T,H]
    attn = _mmdot(attn.astype(mm_dtype), wo_ref[...]) + bo_ref[...]

    x1 = _ln(x + attn, g1_ref[...], be1_ref[...])
    hid = jnp.maximum(_mmdot(x1.astype(mm_dtype), w1_ref[...]) + b1_ref[...], 0.0)
    ff = _mmdot(hid.astype(mm_dtype), w2_ref[...]) + b2_ref[...]
    out_ref[0] = _ln(x1 + ff, g2_ref[...], be2_ref[...])


def encoder_layer_call(x, lyr, num_heads, mm_dtype):
    B, T, H = x.shape
    kern = functools.partial(_encoder_layer_kernel, num_heads=num_heads,
                             mm_dtype=mm_dtype)
    return pl.pallas_call(
        kern,
        grid=(B,),
        out_shape=jax.ShapeDtypeStruct((B, T, H), F32),
        in_specs=[
            pl.BlockSpec((1, T, H), lambda b: (b, 0, 0)),
            _const_spec((H, H)), _const_spec((1, H)),       # wq, bq
            _const_spec((H, H)), _const_spec((1, H)),       # wk, bk
            _const_spec((H, H)), _const_spec((1, H)),       # wv, bv
            _const_spec((H, H)), _const_spec((1, H)),       # wo, bo
            _const_spec((1, H)), _const_spec((1, H)),       # ln1 g, b
            _const_spec((H, 4 * H)), _const_spec((1, 4 * H)),
            _const_spec((4 * H, H)), _const_spec((1, H)),
            _const_spec((1, H)), _const_spec((1, H)),       # ln2 g, b
        ],
        out_specs=pl.BlockSpec((1, T, H), lambda b: (b, 0, 0)),
        compiler_params=pltpu.CompilerParams(
            dimension_semantics=("parallel",),
            vmem_limit_bytes=VMEM_LIMIT),
    )(x,
      lyr["wq"].astype(mm_dtype), lyr["bq"],
      lyr["wk"].astype(mm_dtype), lyr["bk"],
      lyr["wv"].astype(mm_dtype), lyr["bv"],
      lyr["wo"].astype(mm_dtype), lyr["bo"],
      lyr["ln1_g"], lyr["ln1_b"],
      lyr["w1"].astype(mm_dtype), lyr["b1"],
      lyr["w2"].astype(mm_dtype), lyr["b2"],
      lyr["ln2_g"], lyr["ln2_b"])


# ------------------------- output projection kernel ------------------------
# concat([x, singer, lang]) -> Linear -> ReLU -> Linear -> Sigmoid.
# The singer/language part of the first Linear is pre-folded into a per-batch
# bias; the second Linear is lane-padded to 128 for dense stores.

def _output_kernel(x_ref, bias_ref, w1_ref, w2_ref, b2_ref, out_ref, *, mm_dtype):
    xm = x_ref[0].astype(mm_dtype)                                      # [tq,H]
    h = jnp.maximum(_mmdot(xm, w1_ref[...]) + bias_ref[0], 0.0)
    out_ref[0] = jax.nn.sigmoid(_mmdot(h.astype(mm_dtype), w2_ref[...])
                                + b2_ref[...])


def output_call(x, out_bias, p, mm_dtype):
    B, T, H = x.shape
    n_mels = p["out_w2"].shape[1]
    nm_pad = pl.cdiv(n_mels, 128) * 128
    w2p = jnp.pad(p["out_w2"].astype(mm_dtype), ((0, 0), (0, nm_pad - n_mels)))
    b2p = jnp.pad(p["out_b2"], ((0, 0), (0, nm_pad - n_mels)))
    tq = _choose_tile(T)
    nT = T // tq
    kern = functools.partial(_output_kernel, mm_dtype=mm_dtype)
    out = pl.pallas_call(
        kern,
        grid=(B, nT),
        out_shape=jax.ShapeDtypeStruct((B, T, nm_pad), F32),
        in_specs=[
            pl.BlockSpec((1, tq, H), lambda b, t: (b, t, 0)),
            pl.BlockSpec((1, 1, H), lambda b, t: (b, 0, 0)),
            _const_spec((H, H)),
            _const_spec((H, nm_pad)),
            _const_spec((1, nm_pad)),
        ],
        out_specs=pl.BlockSpec((1, tq, nm_pad), lambda b, t: (b, t, 0)),
        compiler_params=pltpu.CompilerParams(
            dimension_semantics=("parallel", "parallel")),
    )(x, out_bias, p["out_w1x"].astype(mm_dtype), w2p, b2p)
    return out[..., :n_mels]


# ------------------------- full forward pass --------------------------------

def mel_encoder_forward(params, f0, phoneme, singer, language, num_heads=4,
                        mm_dtype=MM_DTYPE):
    B, T, _ = f0.shape
    H = params["bp"].shape[1]

    # Fold singer/language projections into per-batch [B,1,H] biases (tiny
    # XLA matmuls, done once per batch row instead of per token).
    in_bias = (params["bp"] + singer @ params["wp_s"]
               + language @ params["wp_l"])[:, None, :]
    out_bias = (params["out_b1"] + singer @ params["out_w1s"]
                + language @ params["out_w1l"])[:, None, :]

    pe = positional_encoding(T, H)                                      # [T,H]

    x = frontend_call(f0, phoneme, pe, in_bias, params, mm_dtype)

    for i, blk in enumerate(params["conv_blocks"]):
        x = conv_block_call(x, blk, dilation=2 ** i, mm_dtype=mm_dtype)

    for lyr in params["enc_layers"]:
        x = encoder_layer_call(x, lyr, num_heads=num_heads, mm_dtype=mm_dtype)

    return output_call(x, out_bias, params, mm_dtype)


# ------------------------- pure-JAX reference (for checking) ---------------

def ref_forward(p, f0, ph, sg, lg, num_heads=4):
    B, T, _ = f0.shape
    H = p["bp"].shape[1]
    S, L = sg.shape[-1], lg.shape[-1]
    sg3 = jnp.broadcast_to(sg[:, None, :], (B, T, S))
    lg3 = jnp.broadcast_to(lg[:, None, :], (B, T, L))

    h = jnp.maximum(f0 * p["f0_w1"] + p["f0_b1"], 0.0)
    f0p = _ln(h @ p["f0_w2"] + p["f0_b2"], p["f0_g"], p["f0_be"])
    x = (ph @ p["wp_ph"] + f0p @ p["wp_f0"] + sg3 @ p["wp_s"]
         + lg3 @ p["wp_l"] + p["bp"])
    x = x + positional_encoding(T, H)[None]

    for i, blk in enumerate(p["conv_blocks"]):
        d = 2 ** i
        xpad = jnp.pad(x, ((0, 0), (d, d), (0, 0)))
        y = (xpad[:, 0:T] @ blk["w_tap0"] + xpad[:, d:d + T] @ blk["w_tap1"]
             + xpad[:, 2 * d:2 * d + T] @ blk["w_tap2"] + blk["bias"])
        filt, gate = y[..., :H], y[..., H:]
        x = _ln(x + jax.nn.sigmoid(gate) * jnp.tanh(filt), blk["ln_g"], blk["ln_b"])

    dk = H // num_heads
    for lyr in p["enc_layers"]:
        q = x @ lyr["wq"] + lyr["bq"]
        k = x @ lyr["wk"] + lyr["bk"]
        v = x @ lyr["wv"] + lyr["bv"]
        qh = q.reshape(B, T, num_heads, dk).transpose(0, 2, 1, 3)
        kh = k.reshape(B, T, num_heads, dk).transpose(0, 2, 1, 3)
        vh = v.reshape(B, T, num_heads, dk).transpose(0, 2, 1, 3)
        s = jnp.einsum("bhqd,bhkd->bhqk", qh, kh) / math.sqrt(dk)
        w = jax.nn.softmax(s, axis=-1)
        o = jnp.einsum("bhqk,bhkd->bhqd", w, vh).transpose(0, 2, 1, 3).reshape(B, T, H)
        x = _ln(x + (o @ lyr["wo"] + lyr["bo"]), lyr["ln1_g"], lyr["ln1_b"])
        ff = jnp.maximum(x @ lyr["w1"] + lyr["b1"], 0.0) @ lyr["w2"] + lyr["b2"]
        x = _ln(x + ff, lyr["ln2_g"], lyr["ln2_b"])

    hcat = jnp.maximum(x @ p["out_w1x"] + sg3 @ p["out_w1s"]
                       + lg3 @ p["out_w1l"] + p["out_b1"], 0.0)
    return jax.nn.sigmoid(hcat @ p["out_w2"] + p["out_b2"])


# ------------------------- deterministic parameter init --------------------

def init_params(key, n_mels=80, P=128, S=16, L=8, H=128, f0_dim=32,
                n_enc=2, n_conv=2):
    keys = iter(jax.random.split(key, 128))

    def nrm(shape, scale=0.05):
        return (scale * jax.random.normal(next(keys), shape)).astype(F32)

    ones = lambda shape: jnp.ones(shape, F32)
    zeros = lambda shape: jnp.zeros(shape, F32)

    p = dict(
        f0_w1=nrm((1, 16)), f0_b1=nrm((1, 16)),
        f0_w2=nrm((16, f0_dim)), f0_b2=nrm((1, f0_dim)),
        f0_g=ones((1, f0_dim)), f0_be=zeros((1, f0_dim)),
        wp_ph=nrm((P, H)), wp_f0=nrm((f0_dim, H)), wp_s=nrm((S, H)),
        wp_l=nrm((L, H)), bp=nrm((1, H)),
        out_w1x=nrm((H, H)), out_w1s=nrm((S, H)), out_w1l=nrm((L, H)),
        out_b1=nrm((1, H)), out_w2=nrm((H, n_mels)), out_b2=nrm((1, n_mels)),
    )
    p["conv_blocks"] = [
        dict(w_tap0=nrm((H, 2 * H)), w_tap1=nrm((H, 2 * H)), w_tap2=nrm((H, 2 * H)),
             bias=nrm((1, 2 * H)), ln_g=ones((1, H)), ln_b=zeros((1, H)))
        for _ in range(n_conv)
    ]
    p["enc_layers"] = [
        dict(wq=nrm((H, H)), bq=nrm((1, H)), wk=nrm((H, H)), bk=nrm((1, H)),
             wv=nrm((H, H)), bv=nrm((1, H)), wo=nrm((H, H)), bo=nrm((1, H)),
             ln1_g=ones((1, H)), ln1_b=zeros((1, H)),
             w1=nrm((H, 4 * H)), b1=nrm((1, 4 * H)),
             w2=nrm((4 * H, H)), b2=nrm((1, H)),
             ln2_g=ones((1, H)), ln2_b=zeros((1, H)))
        for _ in range(n_enc)
    ]
    return p


# ------------------------- main ---------------------------------------------

if __name__ == "__main__":
    B, T = 2, 8
    key = jax.random.PRNGKey(0)
    kp, k1, k2, k3, k4 = jax.random.split(key, 5)

    params = init_params(kp)
    f0 = jax.random.normal(k1, (B, T, 1), F32)
    phoneme = jax.random.normal(k2, (B, T, 128), F32) * 0.5
    singer = jax.random.normal(k3, (B, 16), F32) * 0.5
    language = jax.random.normal(k4, (B, 8), F32) * 0.5

    fwd = jax.jit(mel_encoder_forward)
    mel = jax.block_until_ready(fwd(params, f0, phoneme, singer, language))

    assert mel.shape == (B, T, 80), mel.shape
    ref = jax.block_until_ready(ref_forward(params, f0, phoneme, singer, language))
    # bf16 matmul inputs (f32 accumulation / f32 LN & softmax) vs. f32 reference
    np.testing.assert_allclose(np.asarray(mel), np.asarray(ref),
                               atol=2e-2, rtol=2e-2)

    print("KERNEL_OK")
</pallas_src>

<mosaic_0001>
module attributes {stable_mosaic.version = 11 : i64} {
  func.func @_frontend_kernel(%arg0: i32, %arg1: i32, %arg2: memref<1x8x1xf32, #tpu.memory_space<vmem>>, %arg3: memref<1x8x128xf32, #tpu.memory_space<vmem>>, %arg4: memref<8x128xf32, #tpu.memory_space<vmem>>, %arg5: memref<1x1x128xf32, #tpu.memory_space<vmem>>, %arg6: memref<1x16xf32, #tpu.memory_space<vmem>>, %arg7: memref<1x16xf32, #tpu.memory_space<vmem>>, %arg8: memref<16x32xf32, #tpu.memory_space<vmem>>, %arg9: memref<1x32xf32, #tpu.memory_space<vmem>>, %arg10: memref<1x32xf32, #tpu.memory_space<vmem>>, %arg11: memref<1x32xf32, #tpu.memory_space<vmem>>, %arg12: memref<128x128xbf16, #tpu.memory_space<vmem>>, %arg13: memref<32x128xbf16, #tpu.memory_space<vmem>>, %arg14: memref<1x8x128xf32, #tpu.memory_space<vmem>>) attributes {dimension_semantics = [#tpu.dimension_semantics<parallel>, #tpu.dimension_semantics<parallel>], iteration_bounds = array<i64: 2, 1>, scalar_prefetch = 0 : i64, scratch_operands = 0 : i64, tpu.core_type = #tpu.core_type<tc>, window_params = [{transform_indices = @transform_0, window_bounds = array<i64: 1, 8, 1>}, {transform_indices = @transform_1, window_bounds = array<i64: 1, 8, 128>}, {transform_indices = @transform_2, window_bounds = array<i64: 8, 128>}, {transform_indices = @transform_3, window_bounds = array<i64: 1, 1, 128>}, {pipeline_mode = #tpu.pipeline_mode<synchronous>, transform_indices = @transform_4, window_bounds = array<i64: 1, 16>}, {pipeline_mode = #tpu.pipeline_mode<synchronous>, transform_indices = @transform_5, window_bounds = array<i64: 1, 16>}, {pipeline_mode = #tpu.pipeline_mode<synchronous>, transform_indices = @transform_6, window_bounds = array<i64: 16, 32>}, {pipeline_mode = #tpu.pipeline_mode<synchronous>, transform_indices = @transform_7, window_bounds = array<i64: 1, 32>}, {pipeline_mode = #tpu.pipeline_mode<synchronous>, transform_indices = @transform_8, window_bounds = array<i64: 1, 32>}, {pipeline_mode = #tpu.pipeline_mode<synchronous>, transform_indices = @transform_9, window_bounds = array<i64: 1, 32>}, {pipeline_mode = #tpu.pipeline_mode<synchronous>, transform_indices = @transform_10, window_bounds = array<i64: 128, 128>}, {pipeline_mode = #tpu.pipeline_mode<synchronous>, transform_indices = @transform_11, window_bounds = array<i64: 32, 128>}, {transform_indices = @transform_12, window_bounds = array<i64: 1, 8, 128>}]} {
    %c0 = arith.constant 0 : index
    %c0_0 = arith.constant 0 : index
    %c0_1 = arith.constant 0 : index
    %0 = vector.load %arg2[%c0, %c0_0, %c0_1] : memref<1x8x1xf32, #tpu.memory_space<vmem>>, vector<1x8x1xf32>
    %1 = vector.shape_cast %0 : vector<1x8x1xf32> to vector<8x1xf32>
    %c0_2 = arith.constant 0 : index
    %c0_3 = arith.constant 0 : index
    %2 = vector.load %arg6[%c0_2, %c0_3] : memref<1x16xf32, #tpu.memory_space<vmem>>, vector<1x16xf32>
    %3 = vector.broadcast %1 : vector<8x1xf32> to vector<8x16xf32>
    %4 = vector.broadcast %2 : vector<1x16xf32> to vector<8x16xf32>
    %5 = arith.mulf %3, %4 : vector<8x16xf32>
    %c0_4 = arith.constant 0 : index
    %c0_5 = arith.constant 0 : index
    %6 = vector.load %arg7[%c0_4, %c0_5] : memref<1x16xf32, #tpu.memory_space<vmem>>, vector<1x16xf32>
    %7 = vector.broadcast %6 : vector<1x16xf32> to vector<8x16xf32>
    %8 = arith.addf %5, %7 : vector<8x16xf32>
    %cst = arith.constant 0.000000e+00 : f32
    %9 = vector.broadcast %cst : f32 to vector<8x16xf32>
    %10 = arith.maximumf %8, %9 : vector<8x16xf32>
    %c0_6 = arith.constant 0 : index
    %c0_7 = arith.constant 0 : index
    %11 = vector.load %arg8[%c0_6, %c0_7] : memref<16x32xf32, #tpu.memory_space<vmem>>, vector<16x32xf32>
    %cst_8 = arith.constant dense<0.000000e+00> : vector<8x32xf32>
    %12 = tpu.matmul %10, %11, %cst_8 {dimension_numbers = #tpu.dot_dimension_numbers<[1], [0], [0], [1], [0, 0, 1, 1], [], []>} : vector<8x16xf32>, vector<16x32xf32>, vector<8x32xf32> -> vector<8x32xf32>
    %c0_9 = arith.constant 0 : index
    %c0_10 = arith.constant 0 : index
    %13 = vector.load %arg9[%c0_9, %c0_10] : memref<1x32xf32, #tpu.memory_space<vmem>>, vector<1x32xf32>
    %14 = vector.broadcast %13 : vector<1x32xf32> to vector<8x32xf32>
    %15 = arith.addf %12, %14 : vector<8x32xf32>
    %c0_11 = arith.constant 0 : index
    %c0_12 = arith.constant 0 : index
    %16 = vector.load %arg10[%c0_11, %c0_12] : memref<1x32xf32, #tpu.memory_space<vmem>>, vector<1x32xf32>
    %c0_13 = arith.constant 0 : index
    %c0_14 = arith.constant 0 : index
    %17 = vector.load %arg11[%c0_13, %c0_14] : memref<1x32xf32, #tpu.memory_space<vmem>>, vector<1x32xf32>
    %cst_15 = arith.constant dense<0.000000e+00> : vector<8xf32>
    %18 = vector.multi_reduction <add>, %15, %cst_15 [1] : vector<8x32xf32> to vector<8xf32>
    %19 = vector.shape_cast %18 : vector<8xf32> to vector<8x1xf32>
    %cst_16 = arith.constant 3.200000e+01 : f32
    %20 = vector.broadcast %cst_16 : f32 to vector<8x1xf32>
    %21 = arith.divf %19, %20 : vector<8x1xf32>
    %22 = vector.broadcast %21 : vector<8x1xf32> to vector<8x32xf32>
    %23 = arith.subf %15, %22 : vector<8x32xf32>
    %24 = arith.mulf %23, %23 : vector<8x32xf32>
    %cst_17 = arith.constant dense<0.000000e+00> : vector<8xf32>
    %25 = vector.multi_reduction <add>, %24, %cst_17 [1] : vector<8x32xf32> to vector<8xf32>
    %26 = vector.shape_cast %25 : vector<8xf32> to vector<8x1xf32>
    %cst_18 = arith.constant 3.200000e+01 : f32
    %27 = vector.broadcast %cst_18 : f32 to vector<8x1xf32>
    %28 = arith.divf %26, %27 : vector<8x1xf32>
    %29 = vector.broadcast %21 : vector<8x1xf32> to vector<8x32xf32>
    %30 = arith.subf %15, %29 : vector<8x32xf32>
    %cst_19 = arith.constant 9.99999974E-6 : f32
    %31 = vector.broadcast %cst_19 : f32 to vector<8x1xf32>
    %32 = arith.addf %28, %31 : vector<8x1xf32>
    %33 = math.rsqrt %32 : vector<8x1xf32>
    %34 = vector.broadcast %33 : vector<8x1xf32> to vector<8x32xf32>
    %35 = arith.mulf %30, %34 : vector<8x32xf32>
    %36 = vector.broadcast %16 : vector<1x32xf32> to vector<8x32xf32>
    %37 = arith.mulf %35, %36 : vector<8x32xf32>
    %38 = vector.broadcast %17 : vector<1x32xf32> to vector<8x32xf32>
    %39 = arith.addf %37, %38 : vector<8x32xf32>
    %c0_20 = arith.constant 0 : index
    %c0_21 = arith.constant 0 : index
    %c0_22 = arith.constant 0 : index
    %40 = vector.load %arg3[%c0_20, %c0_21, %c0_22] : memref<1x8x128xf32, #tpu.memory_space<vmem>>, vector<1x8x128xf32>
    %41 = vector.shape_cast %40 : vector<1x8x128xf32> to vector<8x128xf32>
    %42 = arith.truncf %41 : vector<8x128xf32> to vector<8x128xbf16>
    %c0_23 = arith.constant 0 : index
    %c0_24 = arith.constant 0 : index
    %43 = vector.load %arg12[%c0_23, %c0_24] : memref<128x128xbf16, #tpu.memory_space<vmem>>, vector<128x128xbf16>
    %cst_25 = arith.constant dense<0.000000e+00> : vector<8x128xf32>
    %44 = tpu.matmul %42, %43, %cst_25 {dimension_numbers = #tpu.dot_dimension_numbers<[1], [0], [0], [1], [0, 0, 1, 1], [], []>} : vector<8x128xbf16>, vector<128x128xbf16>, vector<8x128xf32> -> vector<8x128xf32>
    %45 = arith.truncf %39 : vector<8x32xf32> to vector<8x32xbf16>
    %c0_26 = arith.constant 0 : index
    %c0_27 = arith.constant 0 : index
    %46 = vector.load %arg13[%c0_26, %c0_27] : memref<32x128xbf16, #tpu.memory_space<vmem>>, vector<32x128xbf16>
    %cst_28 = arith.constant dense<0.000000e+00> : vector<8x128xf32>
    %47 = tpu.matmul %45, %46, %cst_28 {dimension_numbers = #tpu.dot_dimension_numbers<[1], [0], [0], [1], [0, 0, 1, 1], [], []>} : vector<8x32xbf16>, vector<32x128xbf16>, vector<8x128xf32> -> vector<8x128xf32>
    %48 = arith.addf %44, %47 : vector<8x128xf32>
    %c0_29 = arith.constant 0 : index
    %c0_30 = arith.constant 0 : index
    %c0_31 = arith.constant 0 : index
    %49 = vector.load %arg5[%c0_29, %c0_30, %c0_31] : memref<1x1x128xf32, #tpu.memory_space<vmem>>, vector<1x1x128xf32>
    %50 = vector.shape_cast %49 : vector<1x1x128xf32> to vector<1x128xf32>
    %51 = vector.broadcast %50 : vector<1x128xf32> to vector<8x128xf32>
    %52 = arith.addf %48, %51 : vector<8x128xf32>
    %c0_32 = arith.constant 0 : index
    %c0_33 = arith.constant 0 : index
    %53 = vector.load %arg4[%c0_32, %c0_33] : memref<8x128xf32, #tpu.memory_space<vmem>>, vector<8x128xf32>
    %54 = arith.addf %52, %53 : vector<8x128xf32>
    %c0_34 = arith.constant 0 : index
    %c0_35 = arith.constant 0 : index
    %c0_36 = arith.constant 0 : index
    %55 = vector.load %arg14[%c0_34, %c0_35, %c0_36] : memref<1x8x128xf32, #tpu.memory_space<vmem>>, vector<1x8x128xf32>
    %56 = vector.shape_cast %55 : vector<1x8x128xf32> to vector<8x128xf32>
    %57 = vector.shape_cast %54 : vector<8x128xf32> to vector<1x8x128xf32>
    tpu.vector_store %arg14[%c0_34, %c0_35, %c0_36], %57 {strides = array<i32>} : memref<1x8x128xf32, #tpu.memory_space<vmem>>, vector<1x8x128xf32>,
    return
  }
  func.func @transform_0(%arg0: i32, %arg1: i32) -> (i32, i32, i32) {
    %c0_i32 = arith.constant 0 : i32
    %c0_i32_0 = arith.constant 0 : i32
    return %arg0, %arg1, %c0_i32 : i32, i32, i32
  }
  func.func @transform_1(%arg0: i32, %arg1: i32) -> (i32, i32, i32) {
    %c0_i32 = arith.constant 0 : i32
    %c0_i32_0 = arith.constant 0 : i32
    return %arg0, %arg1, %c0_i32 : i32, i32, i32
  }
  func.func @transform_2(%arg0: i32, %arg1: i32) -> (i32, i32) {
    %c0_i32 = arith.constant 0 : i32
    %c0_i32_0 = arith.constant 0 : i32
    return %arg1, %c0_i32 : i32, i32
  }
  func.func @transform_3(%arg0: i32, %arg1: i32) -> (i32, i32, i32) {
    %c0_i32 = arith.constant 0 : i32
    %c0_i32_0 = arith.constant 0 : i32
    %c0_i32_1 = arith.constant 0 : i32
    return %arg0, %c0_i32, %c0_i32_0 : i32, i32, i32
  }
  func.func @transform_4(%arg0: i32, %arg1: i32) -> (i32, i32) {
    %c0_i32 = arith.constant 0 : i32
    %c0_i32_0 = arith.constant 0 : i32
    %c0_i32_1 = arith.constant 0 : i32
    return %c0_i32, %c0_i32_0 : i32, i32
  }
  func.func @transform_5(%arg0: i32, %arg1: i32) -> (i32, i32) {
    %c0_i32 = arith.constant 0 : i32
    %c0_i32_0 = arith.constant 0 : i32
    %c0_i32_1 = arith.constant 0 : i32
    return %c0_i32, %c0_i32_0 : i32, i32
  }
  func.func @transform_6(%arg0: i32, %arg1: i32) -> (i32, i32) {
    %c0_i32 = arith.constant 0 : i32
    %c0_i32_0 = arith.constant 0 : i32
    %c0_i32_1 = arith.constant 0 : i32
    return %c0_i32, %c0_i32_0 : i32, i32
  }
  func.func @transform_7(%arg0: i32, %arg1: i32) -> (i32, i32) {
    %c0_i32 = arith.constant 0 : i32
    %c0_i32_0 = arith.constant 0 : i32
    %c0_i32_1 = arith.constant 0 : i32
    return %c0_i32, %c0_i32_0 : i32, i32
  }
  func.func @transform_8(%arg0: i32, %arg1: i32) -> (i32, i32) {
    %c0_i32 = arith.constant 0 : i32
    %c0_i32_0 = arith.constant 0 : i32
    %c0_i32_1 = arith.constant 0 : i32
    return %c0_i32, %c0_i32_0 : i32, i32
  }
  func.func @transform_9(%arg0: i32, %arg1: i32) -> (i32, i32) {
    %c0_i32 = arith.constant 0 : i32
    %c0_i32_0 = arith.constant 0 : i32
    %c0_i32_1 = arith.constant 0 : i32
    return %c0_i32, %c0_i32_0 : i32, i32
  }
  func.func @transform_10(%arg0: i32, %arg1: i32) -> (i32, i32) {
    %c0_i32 = arith.constant 0 : i32
    %c0_i32_0 = arith.constant 0 : i32
    %c0_i32_1 = arith.constant 0 : i32
    return %c0_i32, %c0_i32_0 : i32, i32
  }
  func.func @transform_11(%arg0: i32, %arg1: i32) -> (i32, i32) {
    %c0_i32 = arith.constant 0 : i32
    %c0_i32_0 = arith.constant 0 : i32
    %c0_i32_1 = arith.constant 0 : i32
    return %c0_i32, %c0_i32_0 : i32, i32
  }
  func.func @transform_12(%arg0: i32, %arg1: i32) -> (i32, i32, i32) {
    %c0_i32 = arith.constant 0 : i32
    %c0_i32_0 = arith.constant 0 : i32
    return %arg0, %arg1, %c0_i32 : i32, i32, i32
  }
}

module attributes {stable_mosaic.version = 11 : i64} {
  func.func @_conv_block_kernel(%arg0: i32, %arg1: memref<1x8x128xf32, #tpu.memory_space<vmem>>, %arg2: memref<128x256xbf16, #tpu.memory_space<vmem>>, %arg3: memref<128x256xbf16, #tpu.memory_space<vmem>>, %arg4: memref<128x256xbf16, #tpu.memory_space<vmem>>, %arg5: memref<1x256xf32, #tpu.memory_space<vmem>>, %arg6: memref<1x128xf32, #tpu.memory_space<vmem>>, %arg7: memref<1x128xf32, #tpu.memory_space<vmem>>, %arg8: memref<1x8x128xf32, #tpu.memory_space<vmem>>) attributes {dimension_semantics = [#tpu.dimension_semantics<parallel>], iteration_bounds = array<i64: 2>, scalar_prefetch = 0 : i64, scratch_operands = 0 : i64, tpu.core_type = #tpu.core_type<tc>, window_params = [{transform_indices = @transform_0, window_bounds = array<i64: 1, 8, 128>}, {pipeline_mode = #tpu.pipeline_mode<synchronous>, transform_indices = @transform_1, window_bounds = array<i64: 128, 256>}, {pipeline_mode = #tpu.pipeline_mode<synchronous>, transform_indices = @transform_2, window_bounds = array<i64: 128, 256>}, {pipeline_mode = #tpu.pipeline_mode<synchronous>, transform_indices = @transform_3, window_bounds = array<i64: 128, 256>}, {pipeline_mode = #tpu.pipeline_mode<synchronous>, transform_indices = @transform_4, window_bounds = array<i64: 1, 256>}, {pipeline_mode = #tpu.pipeline_mode<synchronous>, transform_indices = @transform_5, window_bounds = array<i64: 1, 128>}, {pipeline_mode = #tpu.pipeline_mode<synchronous>, transform_indices = @transform_6, window_bounds = array<i64: 1, 128>}, {transform_indices = @transform_7, window_bounds = array<i64: 1, 8, 128>}]} {
    %c0 = arith.constant 0 : index
    %c0_0 = arith.constant 0 : index
    %c0_1 = arith.constant 0 : index
    %0 = vector.load %arg1[%c0, %c0_0, %c0_1] : memref<1x8x128xf32, #tpu.memory_space<vmem>>, vector<1x8x128xf32>
    %1 = vector.shape_cast %0 : vector<1x8x128xf32> to vector<8x128xf32>
    %cst = arith.constant 0.000000e+00 : f32
    %2 = vector.broadcast %cst : f32 to vector<1x128xf32>
    %3 = vector.extract_strided_slice %1 {offsets = [0, 0], sizes = [7, 128], strides = [1, 1]} : vector<8x128xf32> to vector<7x128xf32>
    %4 = tpu.concatenate %2, %3 in 0 : vector<1x128xf32>, vector<7x128xf32> -> vector<8x128xf32>
    %5 = vector.extract_strided_slice %1 {offsets = [1, 0], sizes = [7, 128], strides = [1, 1]} : vector<8x128xf32> to vector<7x128xf32>
    %6 = tpu.concatenate %5, %2 in 0 : vector<7x128xf32>, vector<1x128xf32> -> vector<8x128xf32>
    %7 = arith.truncf %4 : vector<8x128xf32> to vector<8x128xbf16>
    %c0_2 = arith.constant 0 : index
    %c0_3 = arith.constant 0 : index
    %8 = vector.load %arg2[%c0_2, %c0_3] : memref<128x256xbf16, #tpu.memory_space<vmem>>, vector<128x256xbf16>
    %cst_4 = arith.constant dense<0.000000e+00> : vector<8x256xf32>
    %9 = tpu.matmul %7, %8, %cst_4 {dimension_numbers = #tpu.dot_dimension_numbers<[1], [0], [0], [1], [0, 0, 1, 1], [], []>} : vector<8x128xbf16>, vector<128x256xbf16>, vector<8x256xf32> -> vector<8x256xf32>
    %10 = arith.truncf %1 : vector<8x128xf32> to vector<8x128xbf16>
    %c0_5 = arith.constant 0 : index
    %c0_6 = arith.constant 0 : index
    %11 = vector.load %arg3[%c0_5, %c0_6] : memref<128x256xbf16, #tpu.memory_space<vmem>>, vector<128x256xbf16>
    %cst_7 = arith.constant dense<0.000000e+00> : vector<8x256xf32>
    %12 = tpu.matmul %10, %11, %cst_7 {dimension_numbers = #tpu.dot_dimension_numbers<[1], [0], [0], [1], [0, 0, 1, 1], [], []>} : vector<8x128xbf16>, vector<128x256xbf16>, vector<8x256xf32> -> vector<8x256xf32>
    %13 = arith.addf %9, %12 : vector<8x256xf32>
    %14 = arith.truncf %6 : vector<8x128xf32> to vector<8x128xbf16>
    %c0_8 = arith.constant 0 : index
    %c0_9 = arith.constant 0 : index
    %15 = vector.load %arg4[%c0_8, %c0_9] : memref<128x256xbf16, #tpu.memory_space<vmem>>, vector<128x256xbf16>
    %cst_10 = arith.constant dense<0.000000e+00> : vector<8x256xf32>
    %16 = tpu.matmul %14, %15, %cst_10 {dimension_numbers = #tpu.dot_dimension_numbers<[1], [0], [0], [1], [0, 0, 1, 1], [], []>} : vector<8x128xbf16>, vector<128x256xbf16>, vector<8x256xf32> -> vector<8x256xf32>
    %17 = arith.addf %13, %16 : vector<8x256xf32>
    %c0_11 = arith.constant 0 : index
    %c0_12 = arith.constant 0 : index
    %18 = vector.load %arg5[%c0_11, %c0_12] : memref<1x256xf32, #tpu.memory_space<vmem>>, vector<1x256xf32>
    %19 = vector.broadcast %18 : vector<1x256xf32> to vector<8x256xf32>
    %20 = arith.addf %17, %19 : vector<8x256xf32>
    %21 = vector.extract_strided_slice %20 {offsets = [0, 0], sizes = [8, 128], strides = [1, 1]} : vector<8x256xf32> to vector<8x128xf32>
    %22 = vector.extract_strided_slice %20 {offsets = [0, 128], sizes = [8, 128], strides = [1, 1]} : vector<8x256xf32> to vector<8x128xf32>
    %23 = arith.negf %22 : vector<8x128xf32>
    %24 = math.exp %23 : vector<8x128xf32>
    %cst_13 = arith.constant 1.000000e+00 : f32
    %25 = vector.broadcast %cst_13 : f32 to vector<8x128xf32>
    %26 = arith.addf %25, %24 : vector<8x128xf32>
    %27 = arith.divf %25, %26 : vector<8x128xf32>
    %28 = math.tanh %21 : vector<8x128xf32>
    %29 = arith.mulf %27, %28 : vector<8x128xf32>
    %30 = arith.addf %1, %29 : vector<8x128xf32>
    %c0_14 = arith.constant 0 : index
    %c0_15 = arith.constant 0 : index
    %31 = vector.load %arg6[%c0_14, %c0_15] : memref<1x128xf32, #tpu.memory_space<vmem>>, vector<1x128xf32>
    %c0_16 = arith.constant 0 : index
    %c0_17 = arith.constant 0 : index
    %32 = vector.load %arg7[%c0_16, %c0_17] : memref<1x128xf32, #tpu.memory_space<vmem>>, vector<1x128xf32>
    %cst_18 = arith.constant dense<0.000000e+00> : vector<8xf32>
    %33 = vector.multi_reduction <add>, %30, %cst_18 [1] : vector<8x128xf32> to vector<8xf32>
    %34 = vector.shape_cast %33 : vector<8xf32> to vector<8x1xf32>
    %cst_19 = arith.constant 1.280000e+02 : f32
    %35 = vector.broadcast %cst_19 : f32 to vector<8x1xf32>
    %36 = arith.divf %34, %35 : vector<8x1xf32>
    %37 = vector.broadcast %36 : vector<8x1xf32> to vector<8x128xf32>
    %38 = arith.subf %30, %37 : vector<8x128xf32>
    %39 = arith.mulf %38, %38 : vector<8x128xf32>
    %cst_20 = arith.constant dense<0.000000e+00> : vector<8xf32>
    %40 = vector.multi_reduction <add>, %39, %cst_20 [1] : vector<8x128xf32> to vector<8xf32>
    %41 = vector.shape_cast %40 : vector<8xf32> to vector<8x1xf32>
    %cst_21 = arith.constant 1.280000e+02 : f32
    %42 = vector.broadcast %cst_21 : f32 to vector<8x1xf32>
    %43 = arith.divf %41, %42 : vector<8x1xf32>
    %44 = vector.broadcast %36 : vector<8x1xf32> to vector<8x128xf32>
    %45 = arith.subf %30, %44 : vector<8x128xf32>
    %cst_22 = arith.constant 9.99999974E-6 : f32
    %46 = vector.broadcast %cst_22 : f32 to vector<8x1xf32>
    %47 = arith.addf %43, %46 : vector<8x1xf32>
    %48 = math.rsqrt %47 : vector<8x1xf32>
    %49 = vector.broadcast %48 : vector<8x1xf32> to vector<8x128xf32>
    %50 = arith.mulf %45, %49 : vector<8x128xf32>
    %51 = vector.broadcast %31 : vector<1x128xf32> to vector<8x128xf32>
    %52 = arith.mulf %50, %51 : vector<8x128xf32>
    %53 = vector.broadcast %32 : vector<1x128xf32> to vector<8x128xf32>
    %54 = arith.addf %52, %53 : vector<8x128xf32>
    %c0_23 = arith.constant 0 : index
    %c0_24 = arith.constant 0 : index
    %c0_25 = arith.constant 0 : index
    %55 = vector.load %arg8[%c0_23, %c0_24, %c0_25] : memref<1x8x128xf32, #tpu.memory_space<vmem>>, vector<1x8x128xf32>
    %56 = vector.shape_cast %55 : vector<1x8x128xf32> to vector<8x128xf32>
    %57 = vector.shape_cast %54 : vector<8x128xf32> to vector<1x8x128xf32>
    tpu.vector_store %arg8[%c0_23, %c0_24, %c0_25], %57 {strides = array<i32>} : memref<1x8x128xf32, #tpu.memory_space<vmem>>, vector<1x8x128xf32>,
    return
  }
  func.func @transform_0(%arg0: i32) -> (i32, i32, i32) {
    %c0_i32 = arith.constant 0 : i32
    %c0_i32_0 = arith.constant 0 : i32
    %c0_i32_1 = arith.constant 0 : i32
    return %arg0, %c0_i32, %c0_i32_0 : i32, i32, i32
  }
  func.func @transform_1(%arg0: i32) -> (i32, i32) {
    %c0_i32 = arith.constant 0 : i32
    %c0_i32_0 = arith.constant 0 : i32
    %c0_i32_1 = arith.constant 0 : i32
    return %c0_i32, %c0_i32_0 : i32, i32
  }
  func.func @transform_2(%arg0: i32) -> (i32, i32) {
    %c0_i32 = arith.constant 0 : i32
    %c0_i32_0 = arith.constant 0 : i32
    %c0_i32_1 = arith.constant 0 : i32
    return %c0_i32, %c0_i32_0 : i32, i32
  }
  func.func @transform_3(%arg0: i32) -> (i32, i32) {
    %c0_i32 = arith.constant 0 : i32
    %c0_i32_0 = arith.constant 0 : i32
    %c0_i32_1 = arith.constant 0 : i32
    return %c0_i32, %c0_i32_0 : i32, i32
  }
  func.func @transform_4(%arg0: i32) -> (i32, i32) {
    %c0_i32 = arith.constant 0 : i32
    %c0_i32_0 = arith.constant 0 : i32
    %c0_i32_1 = arith.constant 0 : i32
    return %c0_i32, %c0_i32_0 : i32, i32
  }
  func.func @transform_5(%arg0: i32) -> (i32, i32) {
    %c0_i32 = arith.constant 0 : i32
    %c0_i32_0 = arith.constant 0 : i32
    %c0_i32_1 = arith.constant 0 : i32
    return %c0_i32, %c0_i32_0 : i32, i32
  }
  func.func @transform_6(%arg0: i32) -> (i32, i32) {
    %c0_i32 = arith.constant 0 : i32
    %c0_i32_0 = arith.constant 0 : i32
    %c0_i32_1 = arith.constant 0 : i32
    return %c0_i32, %c0_i32_0 : i32, i32
  }
  func.func @transform_7(%arg0: i32) -> (i32, i32, i32) {
    %c0_i32 = arith.constant 0 : i32
    %c0_i32_0 = arith.constant 0 : i32
    %c0_i32_1 = arith.constant 0 : i32
    return %arg0, %c0_i32, %c0_i32_0 : i32, i32, i32
  }
}

module attributes {stable_mosaic.version = 11 : i64} {
  func.func @_conv_block_kernel(%arg0: i32, %arg1: memref<1x8x128xf32, #tpu.memory_space<vmem>>, %arg2: memref<128x256xbf16, #tpu.memory_space<vmem>>, %arg3: memref<128x256xbf16, #tpu.memory_space<vmem>>, %arg4: memref<128x256xbf16, #tpu.memory_space<vmem>>, %arg5: memref<1x256xf32, #tpu.memory_space<vmem>>, %arg6: memref<1x128xf32, #tpu.memory_space<vmem>>, %arg7: memref<1x128xf32, #tpu.memory_space<vmem>>, %arg8: memref<1x8x128xf32, #tpu.memory_space<vmem>>) attributes {dimension_semantics = [#tpu.dimension_semantics<parallel>], iteration_bounds = array<i64: 2>, scalar_prefetch = 0 : i64, scratch_operands = 0 : i64, tpu.core_type = #tpu.core_type<tc>, window_params = [{transform_indices = @transform_0, window_bounds = array<i64: 1, 8, 128>}, {pipeline_mode = #tpu.pipeline_mode<synchronous>, transform_indices = @transform_1, window_bounds = array<i64: 128, 256>}, {pipeline_mode = #tpu.pipeline_mode<synchronous>, transform_indices = @transform_2, window_bounds = array<i64: 128, 256>}, {pipeline_mode = #tpu.pipeline_mode<synchronous>, transform_indices = @transform_3, window_bounds = array<i64: 128, 256>}, {pipeline_mode = #tpu.pipeline_mode<synchronous>, transform_indices = @transform_4, window_bounds = array<i64: 1, 256>}, {pipeline_mode = #tpu.pipeline_mode<synchronous>, transform_indices = @transform_5, window_bounds = array<i64: 1, 128>}, {pipeline_mode = #tpu.pipeline_mode<synchronous>, transform_indices = @transform_6, window_bounds = array<i64: 1, 128>}, {transform_indices = @transform_7, window_bounds = array<i64: 1, 8, 128>}]} {
    %c0 = arith.constant 0 : index
    %c0_0 = arith.constant 0 : index
    %c0_1 = arith.constant 0 : index
    %0 = vector.load %arg1[%c0, %c0_0, %c0_1] : memref<1x8x128xf32, #tpu.memory_space<vmem>>, vector<1x8x128xf32>
    %1 = vector.shape_cast %0 : vector<1x8x128xf32> to vector<8x128xf32>
    %cst = arith.constant 0.000000e+00 : f32
    %2 = vector.broadcast %cst : f32 to vector<2x128xf32>
    %3 = vector.extract_strided_slice %1 {offsets = [0, 0], sizes = [6, 128], strides = [1, 1]} : vector<8x128xf32> to vector<6x128xf32>
    %4 = tpu.concatenate %2, %3 in 0 : vector<2x128xf32>, vector<6x128xf32> -> vector<8x128xf32>
    %5 = vector.extract_strided_slice %1 {offsets = [2, 0], sizes = [6, 128], strides = [1, 1]} : vector<8x128xf32> to vector<6x128xf32>
    %6 = tpu.concatenate %5, %2 in 0 : vector<6x128xf32>, vector<2x128xf32> -> vector<8x128xf32>
    %7 = arith.truncf %4 : vector<8x128xf32> to vector<8x128xbf16>
    %c0_2 = arith.constant 0 : index
    %c0_3 = arith.constant 0 : index
    %8 = vector.load %arg2[%c0_2, %c0_3] : memref<128x256xbf16, #tpu.memory_space<vmem>>, vector<128x256xbf16>
    %cst_4 = arith.constant dense<0.000000e+00> : vector<8x256xf32>
    %9 = tpu.matmul %7, %8, %cst_4 {dimension_numbers = #tpu.dot_dimension_numbers<[1], [0], [0], [1], [0, 0, 1, 1], [], []>} : vector<8x128xbf16>, vector<128x256xbf16>, vector<8x256xf32> -> vector<8x256xf32>
    %10 = arith.truncf %1 : vector<8x128xf32> to vector<8x128xbf16>
    %c0_5 = arith.constant 0 : index
    %c0_6 = arith.constant 0 : index
    %11 = vector.load %arg3[%c0_5, %c0_6] : memref<128x256xbf16, #tpu.memory_space<vmem>>, vector<128x256xbf16>
    %cst_7 = arith.constant dense<0.000000e+00> : vector<8x256xf32>
    %12 = tpu.matmul %10, %11, %cst_7 {dimension_numbers = #tpu.dot_dimension_numbers<[1], [0], [0], [1], [0, 0, 1, 1], [], []>} : vector<8x128xbf16>, vector<128x256xbf16>, vector<8x256xf32> -> vector<8x256xf32>
    %13 = arith.addf %9, %12 : vector<8x256xf32>
    %14 = arith.truncf %6 : vector<8x128xf32> to vector<8x128xbf16>
    %c0_8 = arith.constant 0 : index
    %c0_9 = arith.constant 0 : index
    %15 = vector.load %arg4[%c0_8, %c0_9] : memref<128x256xbf16, #tpu.memory_space<vmem>>, vector<128x256xbf16>
    %cst_10 = arith.constant dense<0.000000e+00> : vector<8x256xf32>
    %16 = tpu.matmul %14, %15, %cst_10 {dimension_numbers = #tpu.dot_dimension_numbers<[1], [0], [0], [1], [0, 0, 1, 1], [], []>} : vector<8x128xbf16>, vector<128x256xbf16>, vector<8x256xf32> -> vector<8x256xf32>
    %17 = arith.addf %13, %16 : vector<8x256xf32>
    %c0_11 = arith.constant 0 : index
    %c0_12 = arith.constant 0 : index
    %18 = vector.load %arg5[%c0_11, %c0_12] : memref<1x256xf32, #tpu.memory_space<vmem>>, vector<1x256xf32>
    %19 = vector.broadcast %18 : vector<1x256xf32> to vector<8x256xf32>
    %20 = arith.addf %17, %19 : vector<8x256xf32>
    %21 = vector.extract_strided_slice %20 {offsets = [0, 0], sizes = [8, 128], strides = [1, 1]} : vector<8x256xf32> to vector<8x128xf32>
    %22 = vector.extract_strided_slice %20 {offsets = [0, 128], sizes = [8, 128], strides = [1, 1]} : vector<8x256xf32> to vector<8x128xf32>
    %23 = arith.negf %22 : vector<8x128xf32>
    %24 = math.exp %23 : vector<8x128xf32>
    %cst_13 = arith.constant 1.000000e+00 : f32
    %25 = vector.broadcast %cst_13 : f32 to vector<8x128xf32>
    %26 = arith.addf %25, %24 : vector<8x128xf32>
    %27 = arith.divf %25, %26 : vector<8x128xf32>
    %28 = math.tanh %21 : vector<8x128xf32>
    %29 = arith.mulf %27, %28 : vector<8x128xf32>
    %30 = arith.addf %1, %29 : vector<8x128xf32>
    %c0_14 = arith.constant 0 : index
    %c0_15 = arith.constant 0 : index
    %31 = vector.load %arg6[%c0_14, %c0_15] : memref<1x128xf32, #tpu.memory_space<vmem>>, vector<1x128xf32>
    %c0_16 = arith.constant 0 : index
    %c0_17 = arith.constant 0 : index
    %32 = vector.load %arg7[%c0_16, %c0_17] : memref<1x128xf32, #tpu.memory_space<vmem>>, vector<1x128xf32>
    %cst_18 = arith.constant dense<0.000000e+00> : vector<8xf32>
    %33 = vector.multi_reduction <add>, %30, %cst_18 [1] : vector<8x128xf32> to vector<8xf32>
    %34 = vector.shape_cast %33 : vector<8xf32> to vector<8x1xf32>
    %cst_19 = arith.constant 1.280000e+02 : f32
    %35 = vector.broadcast %cst_19 : f32 to vector<8x1xf32>
    %36 = arith.divf %34, %35 : vector<8x1xf32>
    %37 = vector.broadcast %36 : vector<8x1xf32> to vector<8x128xf32>
    %38 = arith.subf %30, %37 : vector<8x128xf32>
    %39 = arith.mulf %38, %38 : vector<8x128xf32>
    %cst_20 = arith.constant dense<0.000000e+00> : vector<8xf32>
    %40 = vector.multi_reduction <add>, %39, %cst_20 [1] : vector<8x128xf32> to vector<8xf32>
    %41 = vector.shape_cast %40 : vector<8xf32> to vector<8x1xf32>
    %cst_21 = arith.constant 1.280000e+02 : f32
    %42 = vector.broadcast %cst_21 : f32 to vector<8x1xf32>
    %43 = arith.divf %41, %42 : vector<8x1xf32>
    %44 = vector.broadcast %36 : vector<8x1xf32> to vector<8x128xf32>
    %45 = arith.subf %30, %44 : vector<8x128xf32>
    %cst_22 = arith.constant 9.99999974E-6 : f32
    %46 = vector.broadcast %cst_22 : f32 to vector<8x1xf32>
    %47 = arith.addf %43, %46 : vector<8x1xf32>
    %48 = math.rsqrt %47 : vector<8x1xf32>
    %49 = vector.broadcast %48 : vector<8x1xf32> to vector<8x128xf32>
    %50 = arith.mulf %45, %49 : vector<8x128xf32>
    %51 = vector.broadcast %31 : vector<1x128xf32> to vector<8x128xf32>
    %52 = arith.mulf %50, %51 : vector<8x128xf32>
    %53 = vector.broadcast %32 : vector<1x128xf32> to vector<8x128xf32>
    %54 = arith.addf %52, %53 : vector<8x128xf32>
    %c0_23 = arith.constant 0 : index
    %c0_24 = arith.constant 0 : index
    %c0_25 = arith.constant 0 : index
    %55 = vector.load %arg8[%c0_23, %c0_24, %c0_25] : memref<1x8x128xf32, #tpu.memory_space<vmem>>, vector<1x8x128xf32>
    %56 = vector.shape_cast %55 : vector<1x8x128xf32> to vector<8x128xf32>
    %57 = vector.shape_cast %54 : vector<8x128xf32> to vector<1x8x128xf32>
    tpu.vector_store %arg8[%c0_23, %c0_24, %c0_25], %57 {strides = array<i32>} : memref<1x8x128xf32, #tpu.memory_space<vmem>>, vector<1x8x128xf32>,
    return
  }
  func.func @transform_0(%arg0: i32) -> (i32, i32, i32) {
    %c0_i32 = arith.constant 0 : i32
    %c0_i32_0 = arith.constant 0 : i32
    %c0_i32_1 = arith.constant 0 : i32
    return %arg0, %c0_i32, %c0_i32_0 : i32, i32, i32
  }
  func.func @transform_1(%arg0: i32) -> (i32, i32) {
    %c0_i32 = arith.constant 0 : i32
    %c0_i32_0 = arith.constant 0 : i32
    %c0_i32_1 = arith.constant 0 : i32
    return %c0_i32, %c0_i32_0 : i32, i32
  }
  func.func @transform_2(%arg0: i32) -> (i32, i32) {
    %c0_i32 = arith.constant 0 : i32
    %c0_i32_0 = arith.constant 0 : i32
    %c0_i32_1 = arith.constant 0 : i32
    return %c0_i32, %c0_i32_0 : i32, i32
  }
  func.func @transform_3(%arg0: i32) -> (i32, i32) {
    %c0_i32 = arith.constant 0 : i32
    %c0_i32_0 = arith.constant 0 : i32
    %c0_i32_1 = arith.constant 0 : i32
    return %c0_i32, %c0_i32_0 : i32, i32
  }
  func.func @transform_4(%arg0: i32) -> (i32, i32) {
    %c0_i32 = arith.constant 0 : i32
    %c0_i32_0 = arith.constant 0 : i32
    %c0_i32_1 = arith.constant 0 : i32
    return %c0_i32, %c0_i32_0 : i32, i32
  }
  func.func @transform_5(%arg0: i32) -> (i32, i32) {
    %c0_i32 = arith.constant 0 : i32
    %c0_i32_0 = arith.constant 0 : i32
    %c0_i32_1 = arith.constant 0 : i32
    return %c0_i32, %c0_i32_0 : i32, i32
  }
  func.func @transform_6(%arg0: i32) -> (i32, i32) {
    %c0_i32 = arith.constant 0 : i32
    %c0_i32_0 = arith.constant 0 : i32
    %c0_i32_1 = arith.constant 0 : i32
    return %c0_i32, %c0_i32_0 : i32, i32
  }
  func.func @transform_7(%arg0: i32) -> (i32, i32, i32) {
    %c0_i32 = arith.constant 0 : i32
    %c0_i32_0 = arith.constant 0 : i32
    %c0_i32_1 = arith.constant 0 : i32
    return %arg0, %c0_i32, %c0_i32_0 : i32, i32, i32
  }
}

module attributes {stable_mosaic.version = 11 : i64} {
  func.func @_encoder_layer_kernel(%arg0: i32, %arg1: memref<1x8x128xf32, #tpu.memory_space<vmem>>, %arg2: memref<128x128xbf16, #tpu.memory_space<vmem>>, %arg3: memref<1x128xf32, #tpu.memory_space<vmem>>, %arg4: memref<128x128xbf16, #tpu.memory_space<vmem>>, %arg5: memref<1x128xf32, #tpu.memory_space<vmem>>, %arg6: memref<128x128xbf16, #tpu.memory_space<vmem>>, %arg7: memref<1x128xf32, #tpu.memory_space<vmem>>, %arg8: memref<128x128xbf16, #tpu.memory_space<vmem>>, %arg9: memref<1x128xf32, #tpu.memory_space<vmem>>, %arg10: memref<1x128xf32, #tpu.memory_space<vmem>>, %arg11: memref<1x128xf32, #tpu.memory_space<vmem>>, %arg12: memref<128x512xbf16, #tpu.memory_space<vmem>>, %arg13: memref<1x512xf32, #tpu.memory_space<vmem>>, %arg14: memref<512x128xbf16, #tpu.memory_space<vmem>>, %arg15: memref<1x128xf32, #tpu.memory_space<vmem>>, %arg16: memref<1x128xf32, #tpu.memory_space<vmem>>, %arg17: memref<1x128xf32, #tpu.memory_space<vmem>>, %arg18: memref<1x8x128xf32, #tpu.memory_space<vmem>>) attributes {dimension_semantics = [#tpu.dimension_semantics<parallel>], iteration_bounds = array<i64: 2>, scalar_prefetch = 0 : i64, scratch_operands = 0 : i64, tpu.core_type = #tpu.core_type<tc>, window_params = [{transform_indices = @transform_0, window_bounds = array<i64: 1, 8, 128>}, {pipeline_mode = #tpu.pipeline_mode<synchronous>, transform_indices = @transform_1, window_bounds = array<i64: 128, 128>}, {pipeline_mode = #tpu.pipeline_mode<synchronous>, transform_indices = @transform_2, window_bounds = array<i64: 1, 128>}, {pipeline_mode = #tpu.pipeline_mode<synchronous>, transform_indices = @transform_3, window_bounds = array<i64: 128, 128>}, {pipeline_mode = #tpu.pipeline_mode<synchronous>, transform_indices = @transform_4, window_bounds = array<i64: 1, 128>}, {pipeline_mode = #tpu.pipeline_mode<synchronous>, transform_indices = @transform_5, window_bounds = array<i64: 128, 128>}, {pipeline_mode = #tpu.pipeline_mode<synchronous>, transform_indices = @transform_6, window_bounds = array<i64: 1, 128>}, {pipeline_mode = #tpu.pipeline_mode<synchronous>, transform_indices = @transform_7, window_bounds = array<i64: 128, 128>}, {pipeline_mode = #tpu.pipeline_mode<synchronous>, transform_indices = @transform_8, window_bounds = array<i64: 1, 128>}, {pipeline_mode = #tpu.pipeline_mode<synchronous>, transform_indices = @transform_9, window_bounds = array<i64: 1, 128>}, {pipeline_mode = #tpu.pipeline_mode<synchronous>, transform_indices = @transform_10, window_bounds = array<i64: 1, 128>}, {pipeline_mode = #tpu.pipeline_mode<synchronous>, transform_indices = @transform_11, window_bounds = array<i64: 128, 512>}, {pipeline_mode = #tpu.pipeline_mode<synchronous>, transform_indices = @transform_12, window_bounds = array<i64: 1, 512>}, {pipeline_mode = #tpu.pipeline_mode<synchronous>, transform_indices = @transform_13, window_bounds = array<i64: 512, 128>}, {pipeline_mode = #tpu.pipeline_mode<synchronous>, transform_indices = @transform_14, window_bounds = array<i64: 1, 128>}, {pipeline_mode = #tpu.pipeline_mode<synchronous>, transform_indices = @transform_15, window_bounds = array<i64: 1, 128>}, {pipeline_mode = #tpu.pipeline_mode<synchronous>, transform_indices = @transform_16, window_bounds = array<i64: 1, 128>}, {transform_indices = @transform_17, window_bounds = array<i64: 1, 8, 128>}]} {
    %c0 = arith.constant 0 : index
    %c0_0 = arith.constant 0 : index
    %c0_1 = arith.constant 0 : index
    %0 = vector.load %arg1[%c0, %c0_0, %c0_1] : memref<1x8x128xf32, #tpu.memory_space<vmem>>, vector<1x8x128xf32>
    %1 = vector.shape_cast %0 : vector<1x8x128xf32> to vector<8x128xf32>
    %2 = arith.truncf %1 : vector<8x128xf32> to vector<8x128xbf16>
    %c0_2 = arith.constant 0 : index
    %c0_3 = arith.constant 0 : index
    %3 = vector.load %arg2[%c0_2, %c0_3] : memref<128x128xbf16, #tpu.memory_space<vmem>>, vector<128x128xbf16>
    %cst = arith.constant dense<0.000000e+00> : vector<8x128xf32>
    %4 = tpu.matmul %2, %3, %cst {dimension_numbers = #tpu.dot_dimension_numbers<[1], [0], [0], [1], [0, 0, 1, 1], [], []>} : vector<8x128xbf16>, vector<128x128xbf16>, vector<8x128xf32> -> vector<8x128xf32>
    %c0_4 = arith.constant 0 : index
    %c0_5 = arith.constant 0 : index
    %5 = vector.load %arg3[%c0_4, %c0_5] : memref<1x128xf32, #tpu.memory_space<vmem>>, vector<1x128xf32>
    %6 = vector.broadcast %5 : vector<1x128xf32> to vector<8x128xf32>
    %7 = arith.addf %4, %6 : vector<8x128xf32>
    %cst_6 = arith.constant 0.176776692 : f32
    %8 = vector.broadcast %cst_6 : f32 to vector<8x128xf32>
    %9 = arith.mulf %7, %8 : vector<8x128xf32>
    %c0_7 = arith.constant 0 : index
    %c0_8 = arith.constant 0 : index
    %10 = vector.load %arg4[%c0_7, %c0_8] : memref<128x128xbf16, #tpu.memory_space<vmem>>, vector<128x128xbf16>
    %cst_9 = arith.constant dense<0.000000e+00> : vector<8x128xf32>
    %11 = tpu.matmul %2, %10, %cst_9 {dimension_numbers = #tpu.dot_dimension_numbers<[1], [0], [0], [1], [0, 0, 1, 1], [], []>} : vector<8x128xbf16>, vector<128x128xbf16>, vector<8x128xf32> -> vector<8x128xf32>
    %c0_10 = arith.constant 0 : index
    %c0_11 = arith.constant 0 : index
    %12 = vector.load %arg5[%c0_10, %c0_11] : memref<1x128xf32, #tpu.memory_space<vmem>>, vector<1x128xf32>
    %13 = vector.broadcast %12 : vector<1x128xf32> to vector<8x128xf32>
    %14 = arith.addf %11, %13 : vector<8x128xf32>
    %c0_12 = arith.constant 0 : index
    %c0_13 = arith.constant 0 : index
    %15 = vector.load %arg6[%c0_12, %c0_13] : memref<128x128xbf16, #tpu.memory_space<vmem>>, vector<128x128xbf16>
    %cst_14 = arith.constant dense<0.000000e+00> : vector<8x128xf32>
    %16 = tpu.matmul %2, %15, %cst_14 {dimension_numbers = #tpu.dot_dimension_numbers<[1], [0], [0], [1], [0, 0, 1, 1], [], []>} : vector<8x128xbf16>, vector<128x128xbf16>, vector<8x128xf32> -> vector<8x128xf32>
    %c0_15 = arith.constant 0 : index
    %c0_16 = arith.constant 0 : index
    %17 = vector.load %arg7[%c0_15, %c0_16] : memref<1x128xf32, #tpu.memory_space<vmem>>, vector<1x128xf32>
    %18 = vector.broadcast %17 : vector<1x128xf32> to vector<8x128xf32>
    %19 = arith.addf %16, %18 : vector<8x128xf32>
    %20 = vector.extract_strided_slice %9 {offsets = [0, 0], sizes = [8, 32], strides = [1, 1]} : vector<8x128xf32> to vector<8x32xf32>
    %21 = arith.truncf %20 : vector<8x32xf32> to vector<8x32xbf16>
    %22 = vector.extract_strided_slice %14 {offsets = [0, 0], sizes = [8, 32], strides = [1, 1]} : vector<8x128xf32> to vector<8x32xf32>
    %23 = tpu.transpose %22, [1, 0] : vector<8x32xf32> -> vector<32x8xf32>
    %24 = arith.truncf %23 : vector<32x8xf32> to vector<32x8xbf16>
    %25 = vector.extract_strided_slice %19 {offsets = [0, 0], sizes = [8, 32], strides = [1, 1]} : vector<8x128xf32> to vector<8x32xf32>
    %26 = arith.truncf %25 : vector<8x32xf32> to vector<8x32xbf16>
    %cst_17 = arith.constant dense<0.000000e+00> : vector<8x8xf32>
    %27 = tpu.matmul %21, %24, %cst_17 {dimension_numbers = #tpu.dot_dimension_numbers<[1], [0], [0], [1], [0, 0, 1, 1], [], []>} : vector<8x32xbf16>, vector<32x8xbf16>, vector<8x8xf32> -> vector<8x8xf32>
    %cst_18 = arith.constant dense<0xFF800000> : vector<8xf32>
    %28 = vector.multi_reduction <maximumf>, %27, %cst_18 [1] : vector<8x8xf32> to vector<8xf32>
    %29 = vector.shape_cast %28 : vector<8xf32> to vector<8x1xf32>
    %30 = vector.broadcast %29 : vector<8x1xf32> to vector<8x8xf32>
    %31 = arith.subf %27, %30 : vector<8x8xf32>
    %32 = math.exp %31 : vector<8x8xf32>
    %cst_19 = arith.constant dense<0.000000e+00> : vector<8xf32>
    %33 = vector.multi_reduction <add>, %32, %cst_19 [1] : vector<8x8xf32> to vector<8xf32>
    %34 = vector.shape_cast %33 : vector<8xf32> to vector<8x1xf32>
    %35 = tpu.reciprocal %34 {approx = true} : vector<8x1xf32> -> vector<8x1xf32>
    %36 = vector.broadcast %35 : vector<8x1xf32> to vector<8x8xf32>
    %37 = arith.mulf %32, %36 : vector<8x8xf32>
    %38 = arith.truncf %37 : vector<8x8xf32> to vector<8x8xbf16>
    %cst_20 = arith.constant dense<0.000000e+00> : vector<8x32xf32>
    %39 = tpu.matmul %38, %26, %cst_20 {dimension_numbers = #tpu.dot_dimension_numbers<[1], [0], [0], [1], [0, 0, 1, 1], [], []>} : vector<8x8xbf16>, vector<8x32xbf16>, vector<8x32xf32> -> vector<8x32xf32>
    %40 = vector.extract_strided_slice %9 {offsets = [0, 32], sizes = [8, 32], strides = [1, 1]} : vector<8x128xf32> to vector<8x32xf32>
    %41 = arith.truncf %40 : vector<8x32xf32> to vector<8x32xbf16>
    %42 = vector.extract_strided_slice %14 {offsets = [0, 32], sizes = [8, 32], strides = [1, 1]} : vector<8x128xf32> to vector<8x32xf32>
    %43 = tpu.transpose %42, [1, 0] : vector<8x32xf32> -> vector<32x8xf32>
    %44 = arith.truncf %43 : vector<32x8xf32> to vector<32x8xbf16>
    %45 = vector.extract_strided_slice %19 {offsets = [0, 32], sizes = [8, 32], strides = [1, 1]} : vector<8x128xf32> to vector<8x32xf32>
    %46 = arith.truncf %45 : vector<8x32xf32> to vector<8x32xbf16>
    %cst_21 = arith.constant dense<0.000000e+00> : vector<8x8xf32>
    %47 = tpu.matmul %41, %44, %cst_21 {dimension_numbers = #tpu.dot_dimension_numbers<[1], [0], [0], [1], [0, 0, 1, 1], [], []>} : vector<8x32xbf16>, vector<32x8xbf16>, vector<8x8xf32> -> vector<8x8xf32>
    %cst_22 = arith.constant dense<0xFF800000> : vector<8xf32>
    %48 = vector.multi_reduction <maximumf>, %47, %cst_22 [1] : vector<8x8xf32> to vector<8xf32>
    %49 = vector.shape_cast %48 : vector<8xf32> to vector<8x1xf32>
    %50 = vector.broadcast %49 : vector<8x1xf32> to vector<8x8xf32>
    %51 = arith.subf %47, %50 : vector<8x8xf32>
    %52 = math.exp %51 : vector<8x8xf32>
    %cst_23 = arith.constant dense<0.000000e+00> : vector<8xf32>
    %53 = vector.multi_reduction <add>, %52, %cst_23 [1] : vector<8x8xf32> to vector<8xf32>
    %54 = vector.shape_cast %53 : vector<8xf32> to vector<8x1xf32>
    %55 = tpu.reciprocal %54 {approx = true} : vector<8x1xf32> -> vector<8x1xf32>
    %56 = vector.broadcast %55 : vector<8x1xf32> to vector<8x8xf32>
    %57 = arith.mulf %52, %56 : vector<8x8xf32>
    %58 = arith.truncf %57 : vector<8x8xf32> to vector<8x8xbf16>
    %cst_24 = arith.constant dense<0.000000e+00> : vector<8x32xf32>
    %59 = tpu.matmul %58, %46, %cst_24 {dimension_numbers = #tpu.dot_dimension_numbers<[1], [0], [0], [1], [0, 0, 1, 1], [], []>} : vector<8x8xbf16>, vector<8x32xbf16>, vector<8x32xf32> -> vector<8x32xf32>
    %60 = vector.extract_strided_slice %9 {offsets = [0, 64], sizes = [8, 32], strides = [1, 1]} : vector<8x128xf32> to vector<8x32xf32>
    %61 = arith.truncf %60 : vector<8x32xf32> to vector<8x32xbf16>
    %62 = vector.extract_strided_slice %14 {offsets = [0, 64], sizes = [8, 32], strides = [1, 1]} : vector<8x128xf32> to vector<8x32xf32>
    %63 = tpu.transpose %62, [1, 0] : vector<8x32xf32> -> vector<32x8xf32>
    %64 = arith.truncf %63 : vector<32x8xf32> to vector<32x8xbf16>
    %65 = vector.extract_strided_slice %19 {offsets = [0, 64], sizes = [8, 32], strides = [1, 1]} : vector<8x128xf32> to vector<8x32xf32>
    %66 = arith.truncf %65 : vector<8x32xf32> to vector<8x32xbf16>
    %cst_25 = arith.constant dense<0.000000e+00> : vector<8x8xf32>
    %67 = tpu.matmul %61, %64, %cst_25 {dimension_numbers = #tpu.dot_dimension_numbers<[1], [0], [0], [1], [0, 0, 1, 1], [], []>} : vector<8x32xbf16>, vector<32x8xbf16>, vector<8x8xf32> -> vector<8x8xf32>
    %cst_26 = arith.constant dense<0xFF800000> : vector<8xf32>
    %68 = vector.multi_reduction <maximumf>, %67, %cst_26 [1] : vector<8x8xf32> to vector<8xf32>
    %69 = vector.shape_cast %68 : vector<8xf32> to vector<8x1xf32>
    %70 = vector.broadcast %69 : vector<8x1xf32> to vector<8x8xf32>
    %71 = arith.subf %67, %70 : vector<8x8xf32>
    %72 = math.exp %71 : vector<8x8xf32>
    %cst_27 = arith.constant dense<0.000000e+00> : vector<8xf32>
    %73 = vector.multi_reduction <add>, %72, %cst_27 [1] : vector<8x8xf32> to vector<8xf32>
    %74 = vector.shape_cast %73 : vector<8xf32> to vector<8x1xf32>
    %75 = tpu.reciprocal %74 {approx = true} : vector<8x1xf32> -> vector<8x1xf32>
    %76 = vector.broadcast %75 : vector<8x1xf32> to vector<8x8xf32>
    %77 = arith.mulf %72, %76 : vector<8x8xf32>
    %78 = arith.truncf %77 : vector<8x8xf32> to vector<8x8xbf16>
    %cst_28 = arith.constant dense<0.000000e+00> : vector<8x32xf32>
    %79 = tpu.matmul %78, %66, %cst_28 {dimension_numbers = #tpu.dot_dimension_numbers<[1], [0], [0], [1], [0, 0, 1, 1], [], []>} : vector<8x8xbf16>, vector<8x32xbf16>, vector<8x32xf32> -> vector<8x32xf32>
    %80 = vector.extract_strided_slice %9 {offsets = [0, 96], sizes = [8, 32], strides = [1, 1]} : vector<8x128xf32> to vector<8x32xf32>
    %81 = arith.truncf %80 : vector<8x32xf32> to vector<8x32xbf16>
    %82 = vector.extract_strided_slice %14 {offsets = [0, 96], sizes = [8, 32], strides = [1, 1]} : vector<8x128xf32> to vector<8x32xf32>
    %83 = tpu.transpose %82, [1, 0] : vector<8x32xf32> -> vector<32x8xf32>
    %84 = arith.truncf %83 : vector<32x8xf32> to vector<32x8xbf16>
    %85 = vector.extract_strided_slice %19 {offsets = [0, 96], sizes = [8, 32], strides = [1, 1]} : vector<8x128xf32> to vector<8x32xf32>
    %86 = arith.truncf %85 : vector<8x32xf32> to vector<8x32xbf16>
    %cst_29 = arith.constant dense<0.000000e+00> : vector<8x8xf32>
    %87 = tpu.matmul %81, %84, %cst_29 {dimension_numbers = #tpu.dot_dimension_numbers<[1], [0], [0], [1], [0, 0, 1, 1], [], []>} : vector<8x32xbf16>, vector<32x8xbf16>, vector<8x8xf32> -> vector<8x8xf32>
    %cst_30 = arith.constant dense<0xFF800000> : vector<8xf32>
    %88 = vector.multi_reduction <maximumf>, %87, %cst_30 [1] : vector<8x8xf32> to vector<8xf32>
    %89 = vector.shape_cast %88 : vector<8xf32> to vector<8x1xf32>
    %90 = vector.broadcast %89 : vector<8x1xf32> to vector<8x8xf32>
    %91 = arith.subf %87, %90 : vector<8x8xf32>
    %92 = math.exp %91 : vector<8x8xf32>
    %cst_31 = arith.constant dense<0.000000e+00> : vector<8xf32>
    %93 = vector.multi_reduction <add>, %92, %cst_31 [1] : vector<8x8xf32> to vector<8xf32>
    %94 = vector.shape_cast %93 : vector<8xf32> to vector<8x1xf32>
    %95 = tpu.reciprocal %94 {approx = true} : vector<8x1xf32> -> vector<8x1xf32>
    %96 = vector.broadcast %95 : vector<8x1xf32> to vector<8x8xf32>
    %97 = arith.mulf %92, %96 : vector<8x8xf32>
    %98 = arith.truncf %97 : vector<8x8xf32> to vector<8x8xbf16>
    %cst_32 = arith.constant dense<0.000000e+00> : vector<8x32xf32>
    %99 = tpu.matmul %98, %86, %cst_32 {dimension_numbers = #tpu.dot_dimension_numbers<[1], [0], [0], [1], [0, 0, 1, 1], [], []>} : vector<8x8xbf16>, vector<8x32xbf16>, vector<8x32xf32> -> vector<8x32xf32>
    %100 = tpu.concatenate %39, %59, %79, %99 in 1 : vector<8x32xf32>, vector<8x32xf32>, vector<8x32xf32>, vector<8x32xf32> -> vector<8x128xf32>
    %101 = arith.truncf %100 : vector<8x128xf32> to vector<8x128xbf16>
    %c0_33 = arith.constant 0 : index
    %c0_34 = arith.constant 0 : index
    %102 = vector.load %arg8[%c0_33, %c0_34] : memref<128x128xbf16, #tpu.memory_space<vmem>>, vector<128x128xbf16>
    %cst_35 = arith.constant dense<0.000000e+00> : vector<8x128xf32>
    %103 = tpu.matmul %101, %102, %cst_35 {dimension_numbers = #tpu.dot_dimension_numbers<[1], [0], [0], [1], [0, 0, 1, 1], [], []>} : vector<8x128xbf16>, vector<128x128xbf16>, vector<8x128xf32> -> vector<8x128xf32>
    %c0_36 = arith.constant 0 : index
    %c0_37 = arith.constant 0 : index
    %104 = vector.load %arg9[%c0_36, %c0_37] : memref<1x128xf32, #tpu.memory_space<vmem>>, vector<1x128xf32>
    %105 = vector.broadcast %104 : vector<1x128xf32> to vector<8x128xf32>
    %106 = arith.addf %103, %105 : vector<8x128xf32>
    %107 = arith.addf %1, %106 : vector<8x128xf32>
    %c0_38 = arith.constant 0 : index
    %c0_39 = arith.constant 0 : index
    %108 = vector.load %arg10[%c0_38, %c0_39] : memref<1x128xf32, #tpu.memory_space<vmem>>, vector<1x128xf32>
    %c0_40 = arith.constant 0 : index
    %c0_41 = arith.constant 0 : index
    %109 = vector.load %arg11[%c0_40, %c0_41] : memref<1x128xf32, #tpu.memory_space<vmem>>, vector<1x128xf32>
    %cst_42 = arith.constant dense<0.000000e+00> : vector<8xf32>
    %110 = vector.multi_reduction <add>, %107, %cst_42 [1] : vector<8x128xf32> to vector<8xf32>
    %111 = vector.shape_cast %110 : vector<8xf32> to vector<8x1xf32>
    %cst_43 = arith.constant 1.280000e+02 : f32
    %112 = vector.broadcast %cst_43 : f32 to vector<8x1xf32>
    %113 = arith.divf %111, %112 : vector<8x1xf32>
    %114 = vector.broadcast %113 : vector<8x1xf32> to vector<8x128xf32>
    %115 = arith.subf %107, %114 : vector<8x128xf32>
    %116 = arith.mulf %115, %115 : vector<8x128xf32>
    %cst_44 = arith.constant dense<0.000000e+00> : vector<8xf32>
    %117 = vector.multi_reduction <add>, %116, %cst_44 [1] : vector<8x128xf32> to vector<8xf32>
    %118 = vector.shape_cast %117 : vector<8xf32> to vector<8x1xf32>
    %cst_45 = arith.constant 1.280000e+02 : f32
    %119 = vector.broadcast %cst_45 : f32 to vector<8x1xf32>
    %120 = arith.divf %118, %119 : vector<8x1xf32>
    %121 = vector.broadcast %113 : vector<8x1xf32> to vector<8x128xf32>
    %122 = arith.subf %107, %121 : vector<8x128xf32>
    %cst_46 = arith.constant 9.99999974E-6 : f32
    %123 = vector.broadcast %cst_46 : f32 to vector<8x1xf32>
    %124 = arith.addf %120, %123 : vector<8x1xf32>
    %125 = math.rsqrt %124 : vector<8x1xf32>
    %126 = vector.broadcast %125 : vector<8x1xf32> to vector<8x128xf32>
    %127 = arith.mulf %122, %126 : vector<8x128xf32>
    %128 = vector.broadcast %108 : vector<1x128xf32> to vector<8x128xf32>
    %129 = arith.mulf %127, %128 : vector<8x128xf32>
    %130 = vector.broadcast %109 : vector<1x128xf32> to vector<8x128xf32>
    %131 = arith.addf %129, %130 : vector<8x128xf32>
    %132 = arith.truncf %131 : vector<8x128xf32> to vector<8x128xbf16>
    %c0_47 = arith.constant 0 : index
    %c0_48 = arith.constant 0 : index
    %133 = vector.load %arg12[%c0_47, %c0_48] : memref<128x512xbf16, #tpu.memory_space<vmem>>, vector<128x512xbf16>
    %cst_49 = arith.constant dense<0.000000e+00> : vector<8x512xf32>
    %134 = tpu.matmul %132, %133, %cst_49 {dimension_numbers = #tpu.dot_dimension_numbers<[1], [0], [0], [1], [0, 0, 1, 1], [], []>} : vector<8x128xbf16>, vector<128x512xbf16>, vector<8x512xf32> -> vector<8x512xf32>
    %c0_50 = arith.constant 0 : index
    %c0_51 = arith.constant 0 : index
    %135 = vector.load %arg13[%c0_50, %c0_51] : memref<1x512xf32, #tpu.memory_space<vmem>>, vector<1x512xf32>
    %136 = vector.broadcast %135 : vector<1x512xf32> to vector<8x512xf32>
    %137 = arith.addf %134, %136 : vector<8x512xf32>
    %cst_52 = arith.constant 0.000000e+00 : f32
    %138 = vector.broadcast %cst_52 : f32 to vector<8x512xf32>
    %139 = arith.maximumf %137, %138 : vector<8x512xf32>
    %140 = arith.truncf %139 : vector<8x512xf32> to vector<8x512xbf16>
    %c0_53 = arith.constant 0 : index
    %c0_54 = arith.constant 0 : index
    %141 = vector.load %arg14[%c0_53, %c0_54] : memref<512x128xbf16, #tpu.memory_space<vmem>>, vector<512x128xbf16>
    %cst_55 = arith.constant dense<0.000000e+00> : vector<8x128xf32>
    %142 = tpu.matmul %140, %141, %cst_55 {dimension_numbers = #tpu.dot_dimension_numbers<[1], [0], [0], [1], [0, 0, 1, 1], [], []>} : vector<8x512xbf16>, vector<512x128xbf16>, vector<8x128xf32> -> vector<8x128xf32>
    %c0_56 = arith.constant 0 : index
    %c0_57 = arith.constant 0 : index
    %143 = vector.load %arg15[%c0_56, %c0_57] : memref<1x128xf32, #tpu.memory_space<vmem>>, vector<1x128xf32>
    %144 = vector.broadcast %143 : vector<1x128xf32> to vector<8x128xf32>
    %145 = arith.addf %142, %144 : vector<8x128xf32>
    %146 = arith.addf %131, %145 : vector<8x128xf32>
    %c0_58 = arith.constant 0 : index
    %c0_59 = arith.constant 0 : index
    %147 = vector.load %arg16[%c0_58, %c0_59] : memref<1x128xf32, #tpu.memory_space<vmem>>, vector<1x128xf32>
    %c0_60 = arith.constant 0 : index
    %c0_61 = arith.constant 0 : index
    %148 = vector.load %arg17[%c0_60, %c0_61] : memref<1x128xf32, #tpu.memory_space<vmem>>, vector<1x128xf32>
    %cst_62 = arith.constant dense<0.000000e+00> : vector<8xf32>
    %149 = vector.multi_reduction <add>, %146, %cst_62 [1] : vector<8x128xf32> to vector<8xf32>
    %150 = vector.shape_cast %149 : vector<8xf32> to vector<8x1xf32>
    %cst_63 = arith.constant 1.280000e+02 : f32
    %151 = vector.broadcast %cst_63 : f32 to vector<8x1xf32>
    %152 = arith.divf %150, %151 : vector<8x1xf32>
    %153 = vector.broadcast %152 : vector<8x1xf32> to vector<8x128xf32>
    %154 = arith.subf %146, %153 : vector<8x128xf32>
    %155 = arith.mulf %154, %154 : vector<8x128xf32>
    %cst_64 = arith.constant dense<0.000000e+00> : vector<8xf32>
    %156 = vector.multi_reduction <add>, %155, %cst_64 [1] : vector<8x128xf32> to vector<8xf32>
    %157 = vector.shape_cast %156 : vector<8xf32> to vector<8x1xf32>
    %cst_65 = arith.constant 1.280000e+02 : f32
    %158 = vector.broadcast %cst_65 : f32 to vector<8x1xf32>
    %159 = arith.divf %157, %158 : vector<8x1xf32>
    %160 = vector.broadcast %152 : vector<8x1xf32> to vector<8x128xf32>
    %161 = arith.subf %146, %160 : vector<8x128xf32>
    %cst_66 = arith.constant 9.99999974E-6 : f32
    %162 = vector.broadcast %cst_66 : f32 to vector<8x1xf32>
    %163 = arith.addf %159, %162 : vector<8x1xf32>
    %164 = math.rsqrt %163 : vector<8x1xf32>
    %165 = vector.broadcast %164 : vector<8x1xf32> to vector<8x128xf32>
    %166 = arith.mulf %161, %165 : vector<8x128xf32>
    %167 = vector.broadcast %147 : vector<1x128xf32> to vector<8x128xf32>
    %168 = arith.mulf %166, %167 : vector<8x128xf32>
    %169 = vector.broadcast %148 : vector<1x128xf32> to vector<8x128xf32>
    %170 = arith.addf %168, %169 : vector<8x128xf32>
    %c0_67 = arith.constant 0 : index
    %c0_68 = arith.constant 0 : index
    %c0_69 = arith.constant 0 : index
    %171 = vector.load %arg18[%c0_67, %c0_68, %c0_69] : memref<1x8x128xf32, #tpu.memory_space<vmem>>, vector<1x8x128xf32>
    %172 = vector.shape_cast %171 : vector<1x8x128xf32> to vector<8x128xf32>
    %173 = vector.shape_cast %170 : vector<8x128xf32> to vector<1x8x128xf32>
    tpu.vector_store %arg18[%c0_67, %c0_68, %c0_69], %173 {strides = array<i32>} : memref<1x8x128xf32, #tpu.memory_space<vmem>>, vector<1x8x128xf32>,
    return
  }
  func.func @transform_0(%arg0: i32) -> (i32, i32, i32) {
    %c0_i32 = arith.constant 0 : i32
    %c0_i32_0 = arith.constant 0 : i32
    %c0_i32_1 = arith.constant 0 : i32
    return %arg0, %c0_i32, %c0_i32_0 : i32, i32, i32
  }
  func.func @transform_1(%arg0: i32) -> (i32, i32) {
    %c0_i32 = arith.constant 0 : i32
    %c0_i32_0 = arith.constant 0 : i32
    %c0_i32_1 = arith.constant 0 : i32
    return %c0_i32, %c0_i32_0 : i32, i32
  }
  func.func @transform_2(%arg0: i32) -> (i32, i32) {
    %c0_i32 = arith.constant 0 : i32
    %c0_i32_0 = arith.constant 0 : i32
    %c0_i32_1 = arith.constant 0 : i32
    return %c0_i32, %c0_i32_0 : i32, i32
  }
  func.func @transform_3(%arg0: i32) -> (i32, i32) {
    %c0_i32 = arith.constant 0 : i32
    %c0_i32_0 = arith.constant 0 : i32
    %c0_i32_1 = arith.constant 0 : i32
    return %c0_i32, %c0_i32_0 : i32, i32
  }
  func.func @transform_4(%arg0: i32) -> (i32, i32) {
    %c0_i32 = arith.constant 0 : i32
    %c0_i32_0 = arith.constant 0 : i32
    %c0_i32_1 = arith.constant 0 : i32
    return %c0_i32, %c0_i32_0 : i32, i32
  }
  func.func @transform_5(%arg0: i32) -> (i32, i32) {
    %c0_i32 = arith.constant 0 : i32
    %c0_i32_0 = arith.constant 0 : i32
    %c0_i32_1 = arith.constant 0 : i32
    return %c0_i32, %c0_i32_0 : i32, i32
  }
  func.func @transform_6(%arg0: i32) -> (i32, i32) {
    %c0_i32 = arith.constant 0 : i32
    %c0_i32_0 = arith.constant 0 : i32
    %c0_i32_1 = arith.constant 0 : i32
    return %c0_i32, %c0_i32_0 : i32, i32
  }
  func.func @transform_7(%arg0: i32) -> (i32, i32) {
    %c0_i32 = arith.constant 0 : i32
    %c0_i32_0 = arith.constant 0 : i32
    %c0_i32_1 = arith.constant 0 : i32
    return %c0_i32, %c0_i32_0 : i32, i32
  }
  func.func @transform_8(%arg0: i32) -> (i32, i32) {
    %c0_i32 = arith.constant 0 : i32
    %c0_i32_0 = arith.constant 0 : i32
    %c0_i32_1 = arith.constant 0 : i32
    return %c0_i32, %c0_i32_0 : i32, i32
  }
  func.func @transform_9(%arg0: i32) -> (i32, i32) {
    %c0_i32 = arith.constant 0 : i32
    %c0_i32_0 = arith.constant 0 : i32
    %c0_i32_1 = arith.constant 0 : i32
    return %c0_i32, %c0_i32_0 : i32, i32
  }
  func.func @transform_10(%arg0: i32) -> (i32, i32) {
    %c0_i32 = arith.constant 0 : i32
    %c0_i32_0 = arith.constant 0 : i32
    %c0_i32_1 = arith.constant 0 : i32
    return %c0_i32, %c0_i32_0 : i32, i32
  }
  func.func @transform_11(%arg0: i32) -> (i32, i32) {
    %c0_i32 = arith.constant 0 : i32
    %c0_i32_0 = arith.constant 0 : i32
    %c0_i32_1 = arith.constant 0 : i32
    return %c0_i32, %c0_i32_0 : i32, i32
  }
  func.func @transform_12(%arg0: i32) -> (i32, i32) {
    %c0_i32 = arith.constant 0 : i32
    %c0_i32_0 = arith.constant 0 : i32
    %c0_i32_1 = arith.constant 0 : i32
    return %c0_i32, %c0_i32_0 : i32, i32
  }
  func.func @transform_13(%arg0: i32) -> (i32, i32) {
    %c0_i32 = arith.constant 0 : i32
    %c0_i32_0 = arith.constant 0 : i32
    %c0_i32_1 = arith.constant 0 : i32
    return %c0_i32, %c0_i32_0 : i32, i32
  }
  func.func @transform_14(%arg0: i32) -> (i32, i32) {
    %c0_i32 = arith.constant 0 : i32
    %c0_i32_0 = arith.constant 0 : i32
    %c0_i32_1 = arith.constant 0 : i32
    return %c0_i32, %c0_i32_0 : i32, i32
  }
  func.func @transform_15(%arg0: i32) -> (i32, i32) {
    %c0_i32 = arith.constant 0 : i32
    %c0_i32_0 = arith.constant 0 : i32
    %c0_i32_1 = arith.constant 0 : i32
    return %c0_i32, %c0_i32_0 : i32, i32
  }
  func.func @transform_16(%arg0: i32) -> (i32, i32) {
    %c0_i32 = arith.constant 0 : i32
    %c0_i32_0 = arith.constant 0 : i32
    %c0_i32_1 = arith.constant 0 : i32
    return %c0_i32, %c0_i32_0 : i32, i32
  }
  func.func @transform_17(%arg0: i32) -> (i32, i32, i32) {
    %c0_i32 = arith.constant 0 : i32
    %c0_i32_0 = arith.constant 0 : i32
    %c0_i32_1 = arith.constant 0 : i32
    return %arg0, %c0_i32, %c0_i32_0 : i32, i32, i32
  }
}

module attributes {stable_mosaic.version = 11 : i64} {
  func.func @_output_kernel(%arg0: i32, %arg1: i32, %arg2: memref<1x8x128xf32, #tpu.memory_space<vmem>>, %arg3: memref<1x1x128xf32, #tpu.memory_space<vmem>>, %arg4: memref<128x128xbf16, #tpu.memory_space<vmem>>, %arg5: memref<128x128xbf16, #tpu.memory_space<vmem>>, %arg6: memref<1x128xf32, #tpu.memory_space<vmem>>, %arg7: memref<1x8x128xf32, #tpu.memory_space<vmem>>) attributes {dimension_semantics = [#tpu.dimension_semantics<parallel>, #tpu.dimension_semantics<parallel>], iteration_bounds = array<i64: 2, 1>, scalar_prefetch = 0 : i64, scratch_operands = 0 : i64, tpu.core_type = #tpu.core_type<tc>, window_params = [{transform_indices = @transform_0, window_bounds = array<i64: 1, 8, 128>}, {transform_indices = @transform_1, window_bounds = array<i64: 1, 1, 128>}, {pipeline_mode = #tpu.pipeline_mode<synchronous>, transform_indices = @transform_2, window_bounds = array<i64: 128, 128>}, {pipeline_mode = #tpu.pipeline_mode<synchronous>, transform_indices = @transform_3, window_bounds = array<i64: 128, 128>}, {pipeline_mode = #tpu.pipeline_mode<synchronous>, transform_indices = @transform_4, window_bounds = array<i64: 1, 128>}, {transform_indices = @transform_5, window_bounds = array<i64: 1, 8, 128>}]} {
    %c0 = arith.constant 0 : index
    %c0_0 = arith.constant 0 : index
    %c0_1 = arith.constant 0 : index
    %0 = vector.load %arg2[%c0, %c0_0, %c0_1] : memref<1x8x128xf32, #tpu.memory_space<vmem>>, vector<1x8x128xf32>
    %1 = vector.shape_cast %0 : vector<1x8x128xf32> to vector<8x128xf32>
    %2 = arith.truncf %1 : vector<8x128xf32> to vector<8x128xbf16>
    %c0_2 = arith.constant 0 : index
    %c0_3 = arith.constant 0 : index
    %3 = vector.load %arg4[%c0_2, %c0_3] : memref<128x128xbf16, #tpu.memory_space<vmem>>, vector<128x128xbf16>
    %cst = arith.constant dense<0.000000e+00> : vector<8x128xf32>
    %4 = tpu.matmul %2, %3, %cst {dimension_numbers = #tpu.dot_dimension_numbers<[1], [0], [0], [1], [0, 0, 1, 1], [], []>} : vector<8x128xbf16>, vector<128x128xbf16>, vector<8x128xf32> -> vector<8x128xf32>
    %c0_4 = arith.constant 0 : index
    %c0_5 = arith.constant 0 : index
    %c0_6 = arith.constant 0 : index
    %5 = vector.load %arg3[%c0_4, %c0_5, %c0_6] : memref<1x1x128xf32, #tpu.memory_space<vmem>>, vector<1x1x128xf32>
    %6 = vector.shape_cast %5 : vector<1x1x128xf32> to vector<1x128xf32>
    %7 = vector.broadcast %6 : vector<1x128xf32> to vector<8x128xf32>
    %8 = arith.addf %4, %7 : vector<8x128xf32>
    %cst_7 = arith.constant 0.000000e+00 : f32
    %9 = vector.broadcast %cst_7 : f32 to vector<8x128xf32>
    %10 = arith.maximumf %8, %9 : vector<8x128xf32>
    %11 = arith.truncf %10 : vector<8x128xf32> to vector<8x128xbf16>
    %c0_8 = arith.constant 0 : index
    %c0_9 = arith.constant 0 : index
    %12 = vector.load %arg5[%c0_8, %c0_9] : memref<128x128xbf16, #tpu.memory_space<vmem>>, vector<128x128xbf16>
    %cst_10 = arith.constant dense<0.000000e+00> : vector<8x128xf32>
    %13 = tpu.matmul %11, %12, %cst_10 {dimension_numbers = #tpu.dot_dimension_numbers<[1], [0], [0], [1], [0, 0, 1, 1], [], []>} : vector<8x128xbf16>, vector<128x128xbf16>, vector<8x128xf32> -> vector<8x128xf32>
    %c0_11 = arith.constant 0 : index
    %c0_12 = arith.constant 0 : index
    %14 = vector.load %arg6[%c0_11, %c0_12] : memref<1x128xf32, #tpu.memory_space<vmem>>, vector<1x128xf32>
    %15 = vector.broadcast %14 : vector<1x128xf32> to vector<8x128xf32>
    %16 = arith.addf %13, %15 : vector<8x128xf32>
    %17 = arith.negf %16 : vector<8x128xf32>
    %18 = math.exp %17 : vector<8x128xf32>
    %cst_13 = arith.constant 1.000000e+00 : f32
    %19 = vector.broadcast %cst_13 : f32 to vector<8x128xf32>
    %20 = arith.addf %19, %18 : vector<8x128xf32>
    %21 = arith.divf %19, %20 : vector<8x128xf32>
    %c0_14 = arith.constant 0 : index
    %c0_15 = arith.constant 0 : index
    %c0_16 = arith.constant 0 : index
    %22 = vector.load %arg7[%c0_14, %c0_15, %c0_16] : memref<1x8x128xf32, #tpu.memory_space<vmem>>, vector<1x8x128xf32>
    %23 = vector.shape_cast %22 : vector<1x8x128xf32> to vector<8x128xf32>
    %24 = vector.shape_cast %21 : vector<8x128xf32> to vector<1x8x128xf32>
    tpu.vector_store %arg7[%c0_14, %c0_15, %c0_16], %24 {strides = array<i32>} : memref<1x8x128xf32, #tpu.memory_space<vmem>>, vector<1x8x128xf32>,
    return
  }
  func.func @transform_0(%arg0: i32, %arg1: i32) -> (i32, i32, i32) {
    %c0_i32 = arith.constant 0 : i32
    %c0_i32_0 = arith.constant 0 : i32
    return %arg0, %arg1, %c0_i32 : i32, i32, i32
  }
  func.func @transform_1(%arg0: i32, %arg1: i32) -> (i32, i32, i32) {
    %c0_i32 = arith.constant 0 : i32
    %c0_i32_0 = arith.constant 0 : i32
    %c0_i32_1 = arith.constant 0 : i32
    return %arg0, %c0_i32, %c0_i32_0 : i32, i32, i32
  }
  func.func @transform_2(%arg0: i32, %arg1: i32) -> (i32, i32) {
    %c0_i32 = arith.constant 0 : i32
    %c0_i32_0 = arith.constant 0 : i32
    %c0_i32_1 = arith.constant 0 : i32
    return %c0_i32, %c0_i32_0 : i32, i32
  }
  func.func @transform_3(%arg0: i32, %arg1: i32) -> (i32, i32) {
    %c0_i32 = arith.constant 0 : i32
    %c0_i32_0 = arith.constant 0 : i32
    %c0_i32_1 = arith.constant 0 : i32
    return %c0_i32, %c0_i32_0 : i32, i32
  }
  func.func @transform_4(%arg0: i32, %arg1: i32) -> (i32, i32) {
    %c0_i32 = arith.constant 0 : i32
    %c0_i32_0 = arith.constant 0 : i32
    %c0_i32_1 = arith.constant 0 : i32
    return %c0_i32, %c0_i32_0 : i32, i32
  }
  func.func @transform_5(%arg0: i32, %arg1: i32) -> (i32, i32, i32) {
    %c0_i32 = arith.constant 0 : i32
    %c0_i32_0 = arith.constant 0 : i32
    return %arg0, %arg1, %c0_i32 : i32, i32, i32
  }
}

</mosaic_0001>

<llo_original>
// kernel: mel_encoder_forward.6
$region0: #{mel_encoder_forward.6}
  #allocation0 [shape = 'u32[]', space=smem, size = 0x4, offset = 0x4, fixed_abs, tag = 'smem constant byte address 0x4 - core index']
  #allocation1 [shape = 'u32[144,128]{1,0:T(1,128)}', space=vmem, size = 0x12000, scoped, tag = 'internal scratch']
  %s0 = inlined_call_operand.vmem [shape: f32[2,8,1], index: 0, kind: input, shape index: {}]
  %s1 = inlined_call_operand.vmem [shape: f32[2,8,128], index: 1, kind: input, shape index: {}]
  %s2 = inlined_call_operand.vmem [shape: f32[8,128], index: 2, kind: input, shape index: {}]
  %s3 = inlined_call_operand.vmem [shape: f32[2,1,128], index: 3, kind: input, shape index: {}]
  %s4 = inlined_call_operand.vmem [shape: f32[1,16], index: 4, kind: input, shape index: {}]
  %s5 = inlined_call_operand.vmem [shape: f32[1,16], index: 5, kind: input, shape index: {}]
  %s6 = inlined_call_operand.vmem [shape: f32[16,32], index: 6, kind: input, shape index: {}]
  %s7 = inlined_call_operand.vmem [shape: f32[1,32], index: 7, kind: input, shape index: {}]
  %s8 = inlined_call_operand.vmem [shape: f32[1,32], index: 8, kind: input, shape index: {}]
  %s9 = inlined_call_operand.vmem [shape: f32[1,32], index: 9, kind: input, shape index: {}]
  %s10 = inlined_call_operand.vmem [shape: bf16[128,128], index: 10, kind: input, shape index: {}]
  %s11 = inlined_call_operand.vmem [shape: bf16[32,128], index: 11, kind: input, shape index: {}]
  %s12 = inlined_call_operand.hbm [shape: f32[2,8,128], index: 12, kind: output, shape index: {}]
  %s13 = sld [smem:[#allocation0]]
  $region81: #{mel_encoder_forward.6} parent=0
    _
  %s15 = ssub.s32 1, %s13
  %s16 = scalar_select 0, %s15, %s13
  $region1: #{mel_encoder_forward.6} parent=0
    #allocation2 [shape = 'u8[8192]{0}', space=vmem, size = 0x2000, scoped, tag = 'output window, operand 0']
    #allocation3 [shape = 's32[2]{0}', space=sflag, size = 0x8, scoped, tag = 'scoped memory for mel_encoder_forward.6']
    %17 = vsyncpa [#allocation3], 0
    %s18 = scalar_lea.sflag [#allocation3], 1
    %19 = vsyncpa %s18, 0
    loop: start=0, step=1, limit=4
    $region2: #{mel_encoder_forward.6} parent=1 // loop_pre_header
      _
    $region3: #{mel_encoder_forward.6} parent=1 // loop_header
      %s21 = sphi 0, %s25
      %p22 = scmp.ge.s32.totalorder %s21, 4
      %s28 = sphi 0, %s40
      %s29 = sphi 0, %s36
      %s30 = sphi 0, %s28
      %s31 = sphi 0, %s29
      %s32 = sphi 0, %s30
      %s33 = sphi 0, %s31
      %s45 = sphi 0, %s47
      %s48 = sphi 0, %s45
      %s49 = sphi 0, %s48
      %s65 = sphi 0, %s49
      %s73 = sphi 0, %s75
      %s76 = sphi 0, %s73
      %s77 = sphi 0, %s76
      %s93 = sphi 0, %s77
      %s99 = sphi 0, %s101
      %s102 = sphi 0, %s99
      %s103 = sphi 0, %s102
      %s119 = sphi 0, %s103
      %s125 = sphi 0, %s127
      %s128 = sphi 0, %s125
      %s129 = sphi 0, %s128
      %s145 = sphi 0, %s129
      %s149 = sphi 0, %s149
      %s151 = sphi 0, %s149
      %s152 = sphi 0, %s151
      %s166 = sphi 0, %s152
      %s170 = sphi 0, %s170
      %s172 = sphi 0, %s170
      %s173 = sphi 0, %s172
      %s187 = sphi 0, %s173
      %s191 = sphi 0, %s191
      %s193 = sphi 0, %s191
      %s194 = sphi 0, %s193
      %s208 = sphi 0, %s194
      %s212 = sphi 0, %s212
      %s214 = sphi 0, %s212
      %s215 = sphi 0, %s214
      %s229 = sphi 0, %s215
      %s233 = sphi 0, %s233
      %s235 = sphi 0, %s233
      %s236 = sphi 0, %s235
      %s250 = sphi 0, %s236
      %s254 = sphi 0, %s254
      %s256 = sphi 0, %s254
      %s257 = sphi 0, %s256
      %s271 = sphi 0, %s257
      %s275 = sphi 0, %s275
      %s277 = sphi 0, %s275
      %s278 = sphi 0, %s277
      %s292 = sphi 0, %s278
      %s296 = sphi 0, %s296
      %s298 = sphi 0, %s296
      %s299 = sphi 0, %s298
      %s313 = sphi 0, %s299
      %s321 = sphi 0, %s323
      %s324 = sphi 0, %s321
      %s325 = sphi 0, %s324
      %s341 = sphi 0, %s325
    $region4: #{mel_encoder_forward.6} parent=1 // loop_header_branch
      %24 = sbr.rel (%p22) target = $region8
    $region5: #{mel_encoder_forward.6} parent=1 // loop_body
      %s26 = ssub.s32 %s21, 1
      %s27 = ssub.s32 %s21, 2
      %s34 = sadd.s32 1, %s29
      %p35 = scmp.ge.s32.totalorder %s34, 1
      %s36 = scalar_select %p35, 0, %s34
      %s37 = sadd.s32 1, %s28
      %s38 = scalar_select %p35, %s37, %s28
      %p39 = scmp.ge.s32.totalorder %s38, 2
      %s40 = scalar_select %p39, 0, %s38
      %s41 = ssub.s32 %s28, %s40
      %s42 = ssub.s32 %s29, %s36
      %s43 = sor.u32 %s41, %s42
      %p44 = scmp.eq.s32.totalorder %s43, 0
      %s46 = sadd.s32 %s45, 1
      %s47 = scalar_select %p44, %s45, %s46
      %p50 = pneg %p44
      %p51 = scmp.eq.s32.totalorder %s21, 1
      %p52 = por %p50, %p51
      %p53 = scmp.ne.s32.totalorder %s45, %s48
      %p54 = scmp.eq.s32.totalorder %s21, 0
      %p55 = por %p53, %p54
      %p56 = scmp.ne.s32.totalorder %s45, %s48
      %p57 = scmp.eq.s32.totalorder %s26, 1
      %p58 = por %p56, %p57
      %p59 = scmp.ne.s32.totalorder %s48, %s49
      %p60 = scmp.eq.s32.totalorder %s26, 0
      %p61 = por %p59, %p60
      %p62 = scmp.ne.s32.totalorder %s48, %s49
      %p63 = scmp.eq.s32.totalorder %s27, 1
      %p64 = por %p62, %p63
      %p66 = scmp.ne.s32.totalorder %s49, %s65
      %p67 = scmp.eq.s32.totalorder %s27, 0
      %p68 = por %p66, %p67
      %s69 = ssub.s32 %s28, %s40
      %s70 = ssub.s32 %s29, %s36
      %s71 = sor.u32 %s69, %s70
      %p72 = scmp.eq.s32.totalorder %s71, 0
      %s74 = sadd.s32 %s73, 1
      %s75 = scalar_select %p72, %s73, %s74
      %p78 = pneg %p72
      %p79 = scmp.eq.s32.totalorder %s21, 1
      %p80 = por %p78, %p79
      %p81 = scmp.ne.s32.totalorder %s73, %s76
      %p82 = scmp.eq.s32.totalorder %s21, 0
      %p83 = por %p81, %p82
      %p84 = scmp.ne.s32.totalorder %s73, %s76
      %p85 = scmp.eq.s32.totalorder %s26, 1
      %p86 = por %p84, %p85
      %p87 = scmp.ne.s32.totalorder %s76, %s77
      %p88 = scmp.eq.s32.totalorder %s26, 0
      %p89 = por %p87, %p88
      %p90 = scmp.ne.s32.totalorder %s76, %s77
      %p91 = scmp.eq.s32.totalorder %s27, 1
      %p92 = por %p90, %p91
      %p94 = scmp.ne.s32.totalorder %s77, %s93
      %p95 = scmp.eq.s32.totalorder %s27, 0
      %p96 = por %p94, %p95
      %s97 = ssub.s32 %s29, %s36
      %p98 = scmp.eq.s32.totalorder %s97, 0
      %s100 = sadd.s32 %s99, 1
      %s101 = scalar_select %p98, %s99, %s100
      %p104 = pneg %p98
      %p105 = scmp.eq.s32.totalorder %s21, 1
      %p106 = por %p104, %p105
      %p107 = scmp.ne.s32.totalorder %s99, %s102
      %p108 = scmp.eq.s32.totalorder %s21, 0
      %p109 = por %p107, %p108
      %p110 = scmp.ne.s32.totalorder %s99, %s102
      %p111 = scmp.eq.s32.totalorder %s26, 1
      %p112 = por %p110, %p111
      %p113 = scmp.ne.s32.totalorder %s102, %s103
      %p114 = scmp.eq.s32.totalorder %s26, 0
      %p115 = por %p113, %p114
      %p116 = scmp.ne.s32.totalorder %s102, %s103
      %p117 = scmp.eq.s32.totalorder %s27, 1
      %p118 = por %p116, %p117
      %p120 = scmp.ne.s32.totalorder %s103, %s119
      %p121 = scmp.eq.s32.totalorder %s27, 0
      %p122 = por %p120, %p121
      %s123 = ssub.s32 %s28, %s40
      %p124 = scmp.eq.s32.totalorder %s123, 0
      %s126 = sadd.s32 %s125, 1
      %s127 = scalar_select %p124, %s125, %s126
      %p130 = pneg %p124
      %p131 = scmp.eq.s32.totalorder %s21, 1
      %p132 = por %p130, %p131
      %p133 = scmp.ne.s32.totalorder %s125, %s128
      %p134 = scmp.eq.s32.totalorder %s21, 0
      %p135 = por %p133, %p134
      %p136 = scmp.ne.s32.totalorder %s125, %s128
      %p137 = scmp.eq.s32.totalorder %s26, 1
      %p138 = por %p136, %p137
      %p139 = scmp.ne.s32.totalorder %s128, %s129
      %p140 = scmp.eq.s32.totalorder %s26, 0
      %p141 = por %p139, %p140
      %p142 = scmp.ne.s32.totalorder %s128, %s129
      %p143 = scmp.eq.s32.totalorder %s27, 1
      %p144 = por %p142, %p143
      %p146 = scmp.ne.s32.totalorder %s129, %s145
      %p147 = scmp.eq.s32.totalorder %s27, 0
      %p148 = por %p146, %p147
      %s150 = sadd.s32 %s149, 1
      %p153 = scmp.eq.s32.totalorder %s21, 1
      %p154 = scmp.ne.s32.totalorder %s149, %s151
      %p155 = scmp.eq.s32.totalorder %s21, 0
      %p156 = por %p154, %p155
      %p157 = scmp.ne.s32.totalorder %s149, %s151
      %p158 = scmp.eq.s32.totalorder %s26, 1
      %p159 = por %p157, %p158
      %p160 = scmp.ne.s32.totalorder %s151, %s152
      %p161 = scmp.eq.s32.totalorder %s26, 0
      %p162 = por %p160, %p161
      %p163 = scmp.ne.s32.totalorder %s151, %s152
      %p164 = scmp.eq.s32.totalorder %s27, 1
      %p165 = por %p163, %p164
      %p167 = scmp.ne.s32.totalorder %s152, %s166
      %p168 = scmp.eq.s32.totalorder %s27, 0
      %p169 = por %p167, %p168
      %s171 = sadd.s32 %s170, 1
      %p174 = scmp.eq.s32.totalorder %s21, 1
      %p175 = scmp.ne.s32.totalorder %s170, %s172
      %p176 = scmp.eq.s32.totalorder %s21, 0
      %p177 = por %p175, %p176
      %p178 = scmp.ne.s32.totalorder %s170, %s172
      %p179 = scmp.eq.s32.totalorder %s26, 1
      %p180 = por %p178, %p179
      %p181 = scmp.ne.s32.totalorder %s172, %s173
      %p182 = scmp.eq.s32.totalorder %s26, 0
      %p183 = por %p181, %p182
      %p184 = scmp.ne.s32.totalorder %s172, %s173
      %p185 = scmp.eq.s32.totalorder %s27, 1
      %p186 = por %p184, %p185
      %p188 = scmp.ne.s32.totalorder %s173, %s187
      %p189 = scmp.eq.s32.totalorder %s27, 0
      %p190 = por %p188, %p189
      %s192 = sadd.s32 %s191, 1
      %p195 = scmp.eq.s32.totalorder %s21, 1
      %p196 = scmp.ne.s32.totalorder %s191, %s193
      %p197 = scmp.eq.s32.totalorder %s21, 0
      %p198 = por %p196, %p197
      %p199 = scmp.ne.s32.totalorder %s191, %s193
      %p200 = scmp.eq.s32.totalorder %s26, 1
      %p201 = por %p199, %p200
      %p202 = scmp.ne.s32.totalorder %s193, %s194
      %p203 = scmp.eq.s32.totalorder %s26, 0
      %p204 = por %p202, %p203
      %p205 = scmp.ne.s32.totalorder %s193, %s194
      %p206 = scmp.eq.s32.totalorder %s27, 1
      %p207 = por %p205, %p206
      %p209 = scmp.ne.s32.totalorder %s194, %s208
      %p210 = scmp.eq.s32.totalorder %s27, 0
      %p211 = por %p209, %p210
      %s213 = sadd.s32 %s212, 1
      %p216 = scmp.eq.s32.totalorder %s21, 1
      %p217 = scmp.ne.s32.totalorder %s212, %s214
      %p218 = scmp.eq.s32.totalorder %s21, 0
      %p219 = por %p217, %p218
      %p220 = scmp.ne.s32.totalorder %s212, %s214
      %p221 = scmp.eq.s32.totalorder %s26, 1
      %p222 = por %p220, %p221
      %p223 = scmp.ne.s32.totalorder %s214, %s215
      %p224 = scmp.eq.s32.totalorder %s26, 0
      %p225 = por %p223, %p224
      %p226 = scmp.ne.s32.totalorder %s214, %s215
      %p227 = scmp.eq.s32.totalorder %s27, 1
      %p228 = por %p226, %p227
      %p230 = scmp.ne.s32.totalorder %s215, %s229
      %p231 = scmp.eq.s32.totalorder %s27, 0
      %p232 = por %p230, %p231
      %s234 = sadd.s32 %s233, 1
      %p237 = scmp.eq.s32.totalorder %s21, 1
      %p238 = scmp.ne.s32.totalorder %s233, %s235
      %p239 = scmp.eq.s32.totalorder %s21, 0
      %p240 = por %p238, %p239
      %p241 = scmp.ne.s32.totalorder %s233, %s235
      %p242 = scmp.eq.s32.totalorder %s26, 1
      %p243 = por %p241, %p242
      %p244 = scmp.ne.s32.totalorder %s235, %s236
      %p245 = scmp.eq.s32.totalorder %s26, 0
      %p246 = por %p244, %p245
      %p247 = scmp.ne.s32.totalorder %s235, %s236
      %p248 = scmp.eq.s32.totalorder %s27, 1
      %p249 = por %p247, %p248
      %p251 = scmp.ne.s32.totalorder %s236, %s250
      %p252 = scmp.eq.s32.totalorder %s27, 0
      %p253 = por %p251, %p252
      %s255 = sadd.s32 %s254, 1
      %p258 = scmp.eq.s32.totalorder %s21, 1
      %p259 = scmp.ne.s32.totalorder %s254, %s256
      %p260 = scmp.eq.s32.totalorder %s21, 0
      %p261 = por %p259, %p260
      %p262 = scmp.ne.s32.totalorder %s254, %s256
      %p263 = scmp.eq.s32.totalorder %s26, 1
      %p264 = por %p262, %p263
      %p265 = scmp.ne.s32.totalorder %s256, %s257
      %p266 = scmp.eq.s32.totalorder %s26, 0
      %p267 = por %p265, %p266
      %p268 = scmp.ne.s32.totalorder %s256, %s257
      %p269 = scmp.eq.s32.totalorder %s27, 1
      %p270 = por %p268, %p269
      %p272 = scmp.ne.s32.totalorder %s257, %s271
      %p273 = scmp.eq.s32.totalorder %s27, 0
      %p274 = por %p272, %p273
      %s276 = sadd.s32 %s275, 1
      %p279 = scmp.eq.s32.totalorder %s21, 1
      %p280 = scmp.ne.s32.totalorder %s275, %s277
      %p281 = scmp.eq.s32.totalorder %s21, 0
      %p282 = por %p280, %p281
      %p283 = scmp.ne.s32.totalorder %s275, %s277
      %p284 = scmp.eq.s32.totalorder %s26, 1
      %p285 = por %p283, %p284
      %p286 = scmp.ne.s32.totalorder %s277, %s278
      %p287 = scmp.eq.s32.totalorder %s26, 0
      %p288 = por %p286, %p287
      %p289 = scmp.ne.s32.totalorder %s277, %s278
      %p290 = scmp.eq.s32.totalorder %s27, 1
      %p291 = por %p289, %p290
      %p293 = scmp.ne.s32.totalorder %s278, %s292
      %p294 = scmp.eq.s32.totalorder %s27, 0
      %p295 = por %p293, %p294
      %s297 = sadd.s32 %s296, 1
      %p300 = scmp.eq.s32.totalorder %s21, 1
      %p301 = scmp.ne.s32.totalorder %s296, %s298
      %p302 = scmp.eq.s32.totalorder %s21, 0
      %p303 = por %p301, %p302
      %p304 = scmp.ne.s32.totalorder %s296, %s298
      %p305 = scmp.eq.s32.totalorder %s26, 1
      %p306 = por %p304, %p305
      %p307 = scmp.ne.s32.totalorder %s298, %s299
      %p308 = scmp.eq.s32.totalorder %s26, 0
      %p309 = por %p307, %p308
      %p310 = scmp.ne.s32.totalorder %s298, %s299
      %p311 = scmp.eq.s32.totalorder %s27, 1
      %p312 = por %p310, %p311
      %p314 = scmp.ne.s32.totalorder %s299, %s313
      %p315 = scmp.eq.s32.totalorder %s27, 0
      %p316 = por %p314, %p315
      %s317 = ssub.s32 %s28, %s40
      %s318 = ssub.s32 %s29, %s36
      %s319 = sor.u32 %s317, %s318
      %p320 = scmp.eq.s32.totalorder %s319, 0
      %s322 = sadd.s32 %s321, 1
      %s323 = scalar_select %p320, %s321, %s322
      %p326 = pneg %p320
      %p327 = scmp.eq.s32.totalorder %s21, 1
      %p328 = por %p326, %p327
      %p329 = scmp.ne.s32.totalorder %s321, %s324
      %p330 = scmp.eq.s32.totalorder %s21, 0
      %p331 = por %p329, %p330
      %p332 = scmp.ne.s32.totalorder %s321, %s324
      %p333 = scmp.eq.s32.totalorder %s26, 1
      %p334 = por %p332, %p333
      %p335 = scmp.ne.s32.totalorder %s324, %s325
      %p336 = scmp.eq.s32.totalorder %s26, 0
      %p337 = por %p335, %p336
      %p338 = scmp.ne.s32.totalorder %s324, %s325
      %p339 = scmp.eq.s32.totalorder %s27, 1
      %p340 = por %p338, %p339
      %p342 = scmp.ne.s32.totalorder %s325, %s341
      %p343 = scmp.eq.s32.totalorder %s27, 0
      %p344 = por %p342, %p343
      %p345 = scmp.le.s32.totalorder 1, %s21
      %p346 = scmp.lt.s32.totalorder %s21, 3
      %p347 = pnand %p345, %p346
      %p348 = pneg %p347
      // Predicated region
      $region9: #{mel_encoder_forward.6} parent=5 // pred_check
        _
      $region10: #{mel_encoder_forward.6} parent=5 // pred_check_branch
        %350 = sbr.rel (%p347) target = $region12
      $region11: #{mel_encoder_forward.6} parent=5 // pred_region
        %s351 = ssub.s32 %s21, 1
        // Predicated region
        $region13: #{mel_encoder_forward.6} parent=11 // pred_check
          %p352 = pneg %p115
        $region14: #{mel_encoder_forward.6} parent=11 // pred_check_branch
          %354 = sbr.rel (%p352) target = $region16
        $region15: #{mel_encoder_forward.6} parent=11 // pred_region
          %p355 = scmp.lt.s32.totalorder %s31, 0
          %s356 = scalar_select %p355, %s31, 0
          %s357 = smul.addr %s356, 8
          %s358 = scalar_lea.vmem %s2, %s357
        $region16: #{mel_encoder_forward.6} parent=11 // pred_fallthru
          _
        // Predicated region
        $region17: #{mel_encoder_forward.6} parent=11 // pred_check
          %p359 = pneg %p162
        $region18: #{mel_encoder_forward.6} parent=11 // pred_check_branch
          %361 = sbr.rel (%p359) target = $region20
        $region19: #{mel_encoder_forward.6} parent=11 // pred_region
          _
        $region20: #{mel_encoder_forward.6} parent=11 // pred_fallthru
          _
        // Predicated region
        $region21: #{mel_encoder_forward.6} parent=11 // pred_check
          %p362 = pneg %p183
        $region22: #{mel_encoder_forward.6} parent=11 // pred_check_branch
          %364 = sbr.rel (%p362) target = $region24
        $region23: #{mel_encoder_forward.6} parent=11 // pred_region
          _
        $region24: #{mel_encoder_forward.6} parent=11 // pred_fallthru
          _
        // Predicated region
        $region25: #{mel_encoder_forward.6} parent=11 // pred_check
          %p365 = pneg %p204
        $region26: #{mel_encoder_forward.6} parent=11 // pred_check_branch
          %367 = sbr.rel (%p365) target = $region28
        $region27: #{mel_encoder_forward.6} parent=11 // pred_region
          _
        $region28: #{mel_encoder_forward.6} parent=11 // pred_fallthru
          _
        // Predicated region
        $region29: #{mel_encoder_forward.6} parent=11 // pred_check
          %p368 = pneg %p225
        $region30: #{mel_encoder_forward.6} parent=11 // pred_check_branch
          %370 = sbr.rel (%p368) target = $region32
        $region31: #{mel_encoder_forward.6} parent=11 // pred_region
          _
        $region32: #{mel_encoder_forward.6} parent=11 // pred_fallthru
          _
        // Predicated region
        $region33: #{mel_encoder_forward.6} parent=11 // pred_check
          %p371 = pneg %p246
        $region34: #{mel_encoder_forward.6} parent=11 // pred_check_branch
          %373 = sbr.rel (%p371) target = $region36
        $region35: #{mel_encoder_forward.6} parent=11 // pred_region
          _
        $region36: #{mel_encoder_forward.6} parent=11 // pred_fallthru
          _
        // Predicated region
        $region37: #{mel_encoder_forward.6} parent=11 // pred_check
          %p374 = pneg %p267
        $region38: #{mel_encoder_forward.6} parent=11 // pred_check_branch
          %376 = sbr.rel (%p374) target = $region40
        $region39: #{mel_encoder_forward.6} parent=11 // pred_region
          _
        $region40: #{mel_encoder_forward.6} parent=11 // pred_fallthru
          _
        // Predicated region
        $region41: #{mel_encoder_forward.6} parent=11 // pred_check
          %p377 = pneg %p288
        $region42: #{mel_encoder_forward.6} parent=11 // pred_check_branch
          %379 = sbr.rel (%p377) target = $region44
        $region43: #{mel_encoder_forward.6} parent=11 // pred_region
          _
        $region44: #{mel_encoder_forward.6} parent=11 // pred_fallthru
          _
        // Predicated region
        $region45: #{mel_encoder_forward.6} parent=11 // pred_check
          %p380 = pneg %p309
        $region46: #{mel_encoder_forward.6} parent=11 // pred_check_branch
          %382 = sbr.rel (%p380) target = $region48
        $region47: #{mel_encoder_forward.6} parent=11 // pred_region
          _
        $region48: #{mel_encoder_forward.6} parent=11 // pred_fallthru
          _
      $region12: #{mel_encoder_forward.6} parent=5 // pred_fallthru
        _
      %p383 = scmp.lt.s32.totalorder %s21, 2
      // Predicated region
      $region49: #{mel_encoder_forward.6} parent=5 // pred_check
        %p384 = pneg %p383
      $region50: #{mel_encoder_forward.6} parent=5 // pred_check_branch
        %386 = sbr.rel (%p384) target = $region52
      $region51: #{mel_encoder_forward.6} parent=5 // pred_region
        // Predicated region
        $region53: #{mel_encoder_forward.6} parent=51 // pred_check
          %p387 = pneg %p55
        $region54: #{mel_encoder_forward.6} parent=51 // pred_check_branch
          %389 = sbr.rel (%p387) target = $region56
        $region55: #{mel_encoder_forward.6} parent=51 // pred_region
          %p390 = scmp.lt.s32.totalorder %s28, 1
          %s391 = scalar_select %p390, %s28, 1
          %p392 = scmp.lt.s32.totalorder %s29, 0
          %s393 = scalar_select %p392, %s29, 0
          %s394 = sadd.s32 %s393, %s391
          %s395 = smul.addr %s394, 8
          %s396 = scalar_lea.vmem %s0, %s395
        $region56: #{mel_encoder_forward.6} parent=51 // pred_fallthru
          _
        // Predicated region
        $region57: #{mel_encoder_forward.6} parent=51 // pred_check
          %p397 = pneg %p83
        $region58: #{mel_encoder_forward.6} parent=51 // pred_check_branch
          %399 = sbr.rel (%p397) target = $region60
        $region59: #{mel_encoder_forward.6} parent=51 // pred_region
          %p400 = scmp.lt.s32.totalorder %s28, 1
          %s401 = scalar_select %p400, %s28, 1
          %p402 = scmp.lt.s32.totalorder %s29, 0
          %s403 = scalar_select %p402, %s29, 0
          %s404 = sadd.s32 %s403, %s401
          %s405 = smul.addr %s404, 8
          %s406 = scalar_lea.vmem %s1, %s405
        $region60: #{mel_encoder_forward.6} parent=51 // pred_fallthru
          _
        // Predicated region
        $region61: #{mel_encoder_forward.6} parent=51 // pred_check
          %p407 = pneg %p135
        $region62: #{mel_encoder_forward.6} parent=51 // pred_check_branch
          %409 = sbr.rel (%p407) target = $region64
        $region63: #{mel_encoder_forward.6} parent=51 // pred_region
          %p410 = scmp.lt.s32.totalorder %s28, 1
          %s411 = scalar_select %p410, %s28, 1
          %s412 = scalar_lea.vmem %s3, %s411
        $region64: #{mel_encoder_forward.6} parent=51 // pred_fallthru
          _
      $region52: #{mel_encoder_forward.6} parent=5 // pred_fallthru
        _
      %p413 = scmp.le.s32.totalorder 1, %s21
      %p414 = scmp.lt.s32.totalorder %s21, 3
      %p415 = pnand %p413, %p414
      %p416 = pneg %p415
      // Predicated region
      $region65: #{mel_encoder_forward.6} parent=5 // pred_check
        _
      $region66: #{mel_encoder_forward.6} parent=5 // pred_check_branch
        %418 = sbr.rel (%p415) target = $region68
      $region67: #{mel_encoder_forward.6} parent=5 // pred_region
        %s419 = ssub.s32 %s21, 1
        %p420 = scmp.lt.s32.totalorder %s30, 1
        %s421 = scalar_select %p420, %s30, 1
        %p422 = scmp.lt.s32.totalorder %s31, 0
        %s423 = scalar_select %p422, %s31, 0
        %s424 = sadd.s32 %s423, %s421
        %s425 = smul.addr %s424, 8
        %s426 = scalar_lea.vmem %s0, %s425
        %p427 = pneg %p61
        %p428 = pneg %p58
        %p429 = scmp.lt.s32.totalorder %s30, 1
        %s430 = scalar_select %p429, %s30, 1
        %p431 = scmp.lt.s32.totalorder %s31, 0
        %s432 = scalar_select %p431, %s31, 0
        %s433 = sadd.s32 %s432, %s430
        %s434 = smul.addr %s433, 8
        %s435 = scalar_lea.vmem %s1, %s434
        %p436 = pneg %p89
        %p437 = pneg %p86
        %p438 = scmp.lt.s32.totalorder %s31, 0
        %s439 = scalar_select %p438, %s31, 0
        %s440 = smul.addr %s439, 8
        %s441 = scalar_lea.vmem %s2, %s440
        %p442 = pneg %p115
        %p443 = pneg %p112
        %p444 = scmp.lt.s32.totalorder %s30, 1
        %s445 = scalar_select %p444, %s30, 1
        %s446 = scalar_lea.vmem %s3, %s445
        %p447 = pneg %p141
        %p448 = pneg %p138
        %p449 = pneg %p162
        %p450 = pneg %p159
        %p451 = pneg %p183
        %p452 = pneg %p180
        %p453 = pneg %p204
        %p454 = pneg %p201
        %p455 = pneg %p225
        %p456 = pneg %p222
        %p457 = pneg %p246
        %p458 = pneg %p243
        %p459 = pneg %p267
        %p460 = pneg %p264
        %p461 = pneg %p288
        %p462 = pneg %p285
        %p463 = pneg %p309
        %p464 = pneg %p306
        %p465 = pneg %p337
        %p466 = pneg %p334
        %s467 = sand.u32 %s324, 1
        %s468 = scalar_lea.sflag [#allocation3], %s467
        %s469 = sand.u32 %s324, 1
        %s470 = smul.addr %s469, 8
        %s471 = scalar_lea.vmem [#allocation2], %s470
        %p472 = scmp.lt.s32.totalorder %s30, 1
        %s473 = scalar_select %p472, %s30, 1
        %p474 = scmp.lt.s32.totalorder %s31, 0
        %s475 = scalar_select %p474, %s31, 0
        %s476 = sadd.s32 %s475, %s473
        %s477 = smul.addr %s476, 8
        %s478 = scalar_lea.vmem %s0, %s477
        %p479 = scmp.lt.s32.totalorder %s30, 1
        %s480 = scalar_select %p479, %s30, 1
        %p481 = scmp.lt.s32.totalorder %s31, 0
        %s482 = scalar_select %p481, %s31, 0
        %s483 = sadd.s32 %s482, %s480
        %s484 = smul.addr %s483, 8
        %s485 = scalar_lea.vmem %s1, %s484
        %p486 = scmp.lt.s32.totalorder %s31, 0
        %s487 = scalar_select %p486, %s31, 0
        %s488 = smul.addr %s487, 8
        %s489 = scalar_lea.vmem %s2, %s488
        %p490 = scmp.lt.s32.totalorder %s30, 1
        %s491 = scalar_select %p490, %s30, 1
        %s492 = scalar_lea.vmem %s3, %s491
        %v494 = vld [vmem:[%s478] sm:$0xff]
        %v495 = vld [vmem:[%s4] sm:$0x1]
        %497 = vset.pattern.permute.xlu0 0
        %498 = vperm.xlu0 %497, %v494
        %v499 = vpop.permute.xlu0 %498
        %v502 = vlaneseq
        %v503 = vshrl.u32 %v502, 7
        %v504 = vsub.s32 0, %v503
        %v505 = vrot.slane %v495, %v504
        %v507 = vmul.f32 %v499, %v505
        %v508 = vld [vmem:[%s5] sm:$0x1]
        %v510 = vlaneseq
        %v511 = vshrl.u32 %v510, 7
        %v512 = vsub.s32 0, %v511
        %v513 = vrot.slane %v508, %v512
        %v515 = vadd.f32 %v507, %v513
        %v516 = vmax.f32 %v515, 0.0
        %v517 = vld [vmem:[%s6] sm:$0xff]
        %v518 = vld [vmem:[%s6 + $0x8] sm:$0xff]
        %v519 = vld [vmem:[%s7] sm:$0x1]
        %v521 = vlaneseq
        %v522 = vshrl.u32 %v521, 7
        %v523 = vsub.s32 0, %v522
        %v524 = vrot.slane %v519, %v523
        %vm526 = vcmask 130048
        %v528 = vsel %vm526, %v516, 0
        %530 = vmatprep.subr.mxu0 0.0
        %531 = vmatpush1.msra.mxu0 %v517
        %532 = vmatprep.subr.mxu0 0.0
        %533 = vmatpush1.msra.mxu0 %v518
        %534 = vmatprep.subr.mxu0 0.0
        %535 = vmatpush1.msra.mxu0 0.0
        %536 = vmatprep.subr.mxu0 0.0
        %537 = vmatpush1.msra.mxu0 0.0
        %538 = vmatprep.subr.mxu0 0.0
        %539 = vmatpush1.msra.mxu0 0.0
        %540 = vmatprep.subr.mxu0 0.0
        %541 = vmatpush1.msra.mxu0 0.0
        %542 = vmatprep.subr.mxu0 0.0
        %543 = vmatpush1.msra.mxu0 0.0
        %544 = vmatprep.subr.mxu0 0.0
        %545 = vmatpush1.msra.mxu0 0.0
        %546 = vmatprep.subr.mxu0 0.0
        %547 = vmatpush1.msra.mxu0 0.0
        %548 = vmatprep.subr.mxu0 0.0
        %549 = vmatpush1.msra.mxu0 0.0
        %550 = vmatprep.subr.mxu0 0.0
        %551 = vmatpush1.msra.mxu0 0.0
        %552 = vmatprep.subr.mxu0 0.0
        %553 = vmatpush1.msra.mxu0 0.0
        %554 = vmatprep.subr.mxu0 0.0
        %555 = vmatpush1.msra.mxu0 0.0
        %556 = vmatprep.subr.mxu0 0.0
        %557 = vmatpush1.msra.mxu0 0.0
        %558 = vmatprep.subr.mxu0 0.0
        %559 = vmatpush1.msra.mxu0 0.0
        %560 = vmatprep.subr.mxu0 0.0
        %561 = vmatpush1.msra.mxu0 0.0
        %562 = vmatprep.subr.mxu0 0.0
        %563 = vmatpush1.msra.mxu0 0.0
        %564 = vmatprep.subr.mxu0 0.0
        %565 = vmatpush1.msra.mxu0 0.0
        %566 = vmatprep.subr.mxu0 0.0
        %567 = vmatpush1.msra.mxu0 0.0
        %568 = vmatprep.subr.mxu0 0.0
        %569 = vmatpush1.msra.mxu0 0.0
        %570 = vmatprep.subr.mxu0 0.0
        %571 = vmatpush1.msra.mxu0 0.0
        %572 = vmatprep.subr.mxu0 0.0
        %573 = vmatpush1.msra.mxu0 0.0
        %574 = vmatprep.subr.mxu0 0.0
        %575 = vmatpush1.msra.mxu0 0.0
        %576 = vmatprep.subr.mxu0 0.0
        %577 = vmatpush1.msra.mxu0 0.0
        %578 = vmatprep.subr.mxu0 0.0
        %579 = vmatpush1.msra.mxu0 0.0
        %580 = vmatprep.subr.mxu0 0.0
        %581 = vmatpush1.msra.mxu0 0.0
        %582 = vmatprep.subr.mxu0 0.0
        %583 = vmatpush1.msra.mxu0 0.0
        %584 = vmatprep.subr.mxu0 0.0
        %585 = vmatpush1.msra.mxu0 0.0
        %586 = vmatprep.subr.mxu0 0.0
        %587 = vmatpush1.msra.mxu0 0.0
        %588 = vmatprep.subr.mxu0 0.0
        %589 = vmatpush1.msra.mxu0 0.0
        %590 = vmatprep.subr.mxu0 0.0
        %591 = vmatpush1.msra.mxu0 0.0
        %592 = vmatprep.subr.mxu0 0.0
        %593 = vmatpush1.msra.mxu0 0.0
        %594 = vmatprep.mubr.f32.mxu0 0.0
        %595 = vmatmul.mubr.f32.gmra.mrb[0].mxu0 %v528
        %v596 = vpop.f32.mrb[0].mxu0
        %v597 = vadd.f32 %v524, %v596
        %v598 = vpop.f32.mrb[0].mxu0
        %599 = vdwg.mxu0
        %v600 = vld [vmem:[%s8] sm:$0x1]
        %v601 = vld [vmem:[%s9] sm:$0x1]
        %vm602 = vcmask 261120
        %v603 = vsel %vm602, %v597, 0.0
        %604 = vadd.xlane.f32.xlu0 %v603
        %v605 = vpop.xlane.xlu0 %604
        %v606 = vrcp.pop 32.0
        %v607 = vmul.f32 %v605, %v606
        %v608 = vsub.f32 %v597, %v607
        %v609 = vmul.f32 %v608, %v608
        %v610 = vsel %vm602, %v609, 0.0
        %611 = vadd.xlane.f32.xlu0 %v610
        %v612 = vpop.xlane.xlu0 %611
        %v613 = vmul.f32 %v612, %v606
        %v614 = vadd.f32 %v613, 1e-05
        %v615 = vrsqrt.pop %v614
        %v616 = vmul.f32 %v608, %v615
        %v618 = vlaneseq
        %v619 = vshrl.u32 %v618, 7
        %v620 = vsub.s32 0, %v619
        %v621 = vrot.slane %v600, %v620
        %v623 = vmul.f32 %v616, %v621
        %v625 = vlaneseq
        %v626 = vshrl.u32 %v625, 7
        %v627 = vsub.s32 0, %v626
        %v628 = vrot.slane %v601, %v627
        %v630 = vadd.f32 %v623, %v628
        %v631 = vld [vmem:[%s485] sm:$0xff]
        %v632 = vpack.c.bf16 %v631, %v631
        %v633 = vld [vmem:[%s10] sm:$0xf]
        %v634 = vld [vmem:[%s10 + $0x4] sm:$0xf]
        %v635 = vld [vmem:[%s10 + $0x8] sm:$0xf]
        %v636 = vld [vmem:[%s10 + $0xc] sm:$0xf]
        %v637 = vld [vmem:[%s10 + $0x10] sm:$0xf]
        %v638 = vld [vmem:[%s10 + $0x14] sm:$0xf]
        %v639 = vld [vmem:[%s10 + $0x18] sm:$0xf]
        %v640 = vld [vmem:[%s10 + $0x1c] sm:$0xf]
        %v641 = vld [vmem:[%s10 + $0x20] sm:$0xf]
        %v642 = vld [vmem:[%s10 + $0x24] sm:$0xf]
        %v643 = vld [vmem:[%s10 + $0x28] sm:$0xf]
        %v644 = vld [vmem:[%s10 + $0x2c] sm:$0xf]
        %v645 = vld [vmem:[%s10 + $0x30] sm:$0xf]
        %v646 = vld [vmem:[%s10 + $0x34] sm:$0xf]
        %v647 = vld [vmem:[%s10 + $0x38] sm:$0xf]
        %v648 = vld [vmem:[%s10 + $0x3c] sm:$0xf]
        %v649 = vpack.c.bf16 %v630, %v630
        %v650 = vld [vmem:[%s11] sm:$0xf]
        %v651 = vld [vmem:[%s11 + $0x4] sm:$0xf]
        %v652 = vld [vmem:[%s11 + $0x8] sm:$0xf]
        %v653 = vld [vmem:[%s11 + $0xc] sm:$0xf]
        %v658 = vunpack.c.l.b16 %v650
        %v659 = vunpack.c.l.b16 %v651
        %v660 = vunpack.c.l.b16 %v652
        %v661 = vunpack.c.l.b16 %v653
        %v662 = vpack.c.b16 %v659, %v658
        %v663 = vpack.c.b16 %v661, %v660
        %v667 = vsel %vm602, %v649, 0
        %669 = vmatprep.subr.bf16.mxu0 0
        %670 = vmatpush1.bf16.msra.mxu0 %v662
        %671 = vmatprep.subr.bf16.mxu0 0
        %672 = vmatpush1.bf16.msra.mxu0 %v663
        %673 = vmatprep.subr.bf16.mxu0 0
        %674 = vmatpush1.bf16.msra.mxu0 0
        %675 = vmatprep.subr.bf16.mxu0 0
        %676 = vmatpush1.bf16.msra.mxu0 0
        %677 = vmatprep.subr.bf16.mxu0 0
        %678 = vmatpush1.bf16.msra.mxu0 0
        %679 = vmatprep.subr.bf16.mxu0 0
        %680 = vmatpush1.bf16.msra.mxu0 0
        %681 = vmatprep.subr.bf16.mxu0 0
        %682 = vmatpush1.bf16.msra.mxu0 0
        %683 = vmatprep.subr.bf16.mxu0 0
        %684 = vmatpush1.bf16.msra.mxu0 0
        %685 = vmatprep.subr.bf16.mxu0 0
        %686 = vmatpush1.bf16.msra.mxu0 0
        %687 = vmatprep.subr.bf16.mxu0 0
        %688 = vmatpush1.bf16.msra.mxu0 0
        %689 = vmatprep.subr.bf16.mxu0 0
        %690 = vmatpush1.bf16.msra.mxu0 0
        %691 = vmatprep.subr.bf16.mxu0 0
        %692 = vmatpush1.bf16.msra.mxu0 0
        %693 = vmatprep.subr.bf16.mxu0 0
        %694 = vmatpush1.bf16.msra.mxu0 0
        %695 = vmatprep.subr.bf16.mxu0 0
        %696 = vmatpush1.bf16.msra.mxu0 0
        %697 = vmatprep.subr.bf16.mxu0 0
        %698 = vmatpush1.bf16.msra.mxu0 0
        %699 = vmatprep.subr.bf16.mxu0 0
        %700 = vmatpush1.bf16.msra.mxu0 0
        %701 = vmatprep.mubr.bf16.mxu0 0
        %702 = vmatmul.mubr.bf16.gmra.mrb[0].mxu0 %v667
        %v703 = vpop.f32.mrb[0].mxu0
        %v704 = vadd.f32 0.0, %v703
        %v705 = vpop.f32.mrb[0].mxu0
        %v706 = vpop.f32.mrb[0].mxu0
        %v707 = vpop.f32.mrb[0].mxu0
        %708 = vdwg.mxu0
        %v725 = vunpack.c.l.b16 %v633
        %v726 = vunpack.c.l.b16 %v634
        %v727 = vunpack.c.l.b16 %v635
        %v728 = vunpack.c.l.b16 %v636
        %v729 = vunpack.c.l.b16 %v637
        %v730 = vunpack.c.l.b16 %v638
        %v731 = vunpack.c.l.b16 %v639
        %v732 = vunpack.c.l.b16 %v640
        %v733 = vunpack.c.l.b16 %v641
        %v734 = vunpack.c.l.b16 %v642
        %v735 = vunpack.c.l.b16 %v643
        %v736 = vunpack.c.l.b16 %v644
        %v737 = vunpack.c.l.b16 %v645
        %v738 = vunpack.c.l.b16 %v646
        %v739 = vunpack.c.l.b16 %v647
        %v740 = vunpack.c.l.b16 %v648
        %v741 = vpack.c.b16 %v726, %v725
        %v742 = vpack.c.b16 %v728, %v727
        %v743 = vpack.c.b16 %v730, %v729
        %v744 = vpack.c.b16 %v732, %v731
        %v745 = vpack.c.b16 %v734, %v733
        %v746 = vpack.c.b16 %v736, %v735
        %v747 = vpack.c.b16 %v738, %v737
        %v748 = vpack.c.b16 %v740, %v739
        %757 = vmatprep.subr.bf16.mxu0 0
        %758 = vmatpush1.bf16.msra.mxu0 %v741
        %759 = vmatprep.subr.bf16.mxu0 0
        %760 = vmatpush1.bf16.msra.mxu0 %v742
        %761 = vmatprep.subr.bf16.mxu0 0
        %762 = vmatpush1.bf16.msra.mxu0 %v743
        %763 = vmatprep.subr.bf16.mxu0 0
        %764 = vmatpush1.bf16.msra.mxu0 %v744
        %765 = vmatprep.subr.bf16.mxu0 0
        %766 = vmatpush1.bf16.msra.mxu0 %v745
        %767 = vmatprep.subr.bf16.mxu0 0
        %768 = vmatpush1.bf16.msra.mxu0 %v746
        %769 = vmatprep.subr.bf16.mxu0 0
        %770 = vmatpush1.bf16.msra.mxu0 %v747
        %771 = vmatprep.subr.bf16.mxu0 0
        %772 = vmatpush1.bf16.msra.mxu0 %v748
        %773 = vmatprep.subr.bf16.mxu0 0
        %774 = vmatpush1.bf16.msra.mxu0 0
        %775 = vmatprep.subr.bf16.mxu0 0
        %776 = vmatpush1.bf16.msra.mxu0 0
        %777 = vmatprep.subr.bf16.mxu0 0
        %778 = vmatpush1.bf16.msra.mxu0 0
        %779 = vmatprep.subr.bf16.mxu0 0
        %780 = vmatpush1.bf16.msra.mxu0 0
        %781 = vmatprep.subr.bf16.mxu0 0
        %782 = vmatpush1.bf16.msra.mxu0 0
        %783 = vmatprep.subr.bf16.mxu0 0
        %784 = vmatpush1.bf16.msra.mxu0 0
        %785 = vmatprep.subr.bf16.mxu0 0
        %786 = vmatpush1.bf16.msra.mxu0 0
        %787 = vmatprep.subr.bf16.mxu0 0
        %788 = vmatpush1.bf16.msra.mxu0 0
        %789 = vmatprep.mubr.bf16.mxu0 0
        %790 = vmatmul.mubr.bf16.gmra.mrb[0].mxu0 %v632
        %v791 = vpop.f32.mrb[0].mxu0
        %v792 = vadd.f32 %v704, %v791
        %v793 = vpop.f32.mrb[0].mxu0
        %v794 = vpop.f32.mrb[0].mxu0
        %v795 = vpop.f32.mrb[0].mxu0
        %796 = vdwg.mxu0
        %v797 = vld [vmem:[%s492] sm:$0x1]
        %v799 = vlaneseq
        %v800 = vshrl.u32 %v799, 7
        %v801 = vsub.s32 0, %v800
        %v802 = vrot.slane %v797, %v801
        %v804 = vadd.f32 %v792, %v802
        %v805 = vld [vmem:[%s489] sm:$0xff]
        %v806 = vadd.f32 %v804, %v805
        %807 = vst [vmem:[%s471] sm:$0xff] %v806
        %s808 = sand.u32 %s324, 1
        %s809 = scalar_lea.sflag [#allocation3], %s808
        %s810 = sand.u32 %s324, 1
        %s811 = smul.addr %s810, 8
        %s812 = scalar_lea.vmem [#allocation2], %s811
        // Predicated region
        $region69: #{mel_encoder_forward.6} parent=67 // pred_check
          %p813 = pneg %p334
        $region70: #{mel_encoder_forward.6} parent=67 // pred_check_branch
          %815 = sbr.rel (%p813) target = $region72
        $region71: #{mel_encoder_forward.6} parent=67 // pred_region
          %s817 = ssub.s32 128, 128
          %818 = vsyncadd %s809, %s817
          %s819 = sadd.s32 %s31, %s30
          %s820 = smul.addr %s819, 128
          %s821 = scalar_lea.hbm %s12, %s820
          %s823 = sshll.u32 %s812, 4
          %s824 = int_to_ptr.vmem [resolvable:$true] %s823
          %826 = dma.vmem_to_hbm [thread:$0]  %s824, 128, %s821, %s809
        $region72: #{mel_encoder_forward.6} parent=67 // pred_fallthru
          _
      $region68: #{mel_encoder_forward.6} parent=5 // pred_fallthru
        _
      %p827 = scmp.le.s32.totalorder 2, %s21
      // Predicated region
      $region73: #{mel_encoder_forward.6} parent=5 // pred_check
        %p828 = pneg %p827
      $region74: #{mel_encoder_forward.6} parent=5 // pred_check_branch
        %830 = sbr.rel (%p828) target = $region76
      $region75: #{mel_encoder_forward.6} parent=5 // pred_region
        %s831 = ssub.s32 %s21, 2
        // Predicated region
        $region77: #{mel_encoder_forward.6} parent=75 // pred_check
          %p832 = pneg %p340
        $region78: #{mel_encoder_forward.6} parent=75 // pred_check_branch
          %834 = sbr.rel (%p832) target = $region80
        $region79: #{mel_encoder_forward.6} parent=75 // pred_region
          %s835 = sand.u32 %s325, 1
          %s836 = scalar_lea.sflag [#allocation3], %s835
          %s837 = sand.u32 %s325, 1
          %s838 = smul.addr %s837, 8
          %s839 = scalar_lea.vmem [#allocation2], %s838
          %840 = dma.done %s836, 128
        $region80: #{mel_encoder_forward.6} parent=75 // pred_fallthru
          _
      $region76: #{mel_encoder_forward.6} parent=5 // pred_fallthru
        _
    $region6: #{mel_encoder_forward.6} parent=1 // loop_footer
      %s25 = sadd.s32 1, %s21
    $region7: #{mel_encoder_forward.6} parent=1 // loop_footer_branch
      %20 = sbr.rel target = $region3
    $region8: #{mel_encoder_forward.6} parent=1 // loop_exit
      _
    %841 = vsyncpa [#allocation3], 1
    %s842 = scalar_lea.sflag [#allocation3], 1
    %843 = vsyncpa %s842, 1

// kernel: mel_encoder_forward.7
$region0: #{mel_encoder_forward.7}
  #allocation0 [shape = 'u32[]', space=smem, size = 0x4, offset = 0x4, fixed_abs, tag = 'smem constant byte address 0x4 - core index']
  #allocation1 [shape = 'u32[144,128]{1,0:T(1,128)}', space=vmem, size = 0x12000, scoped, tag = 'internal scratch']
  %s0 = inlined_call_operand.hbm [shape: f32[2,8,128], index: 0, kind: input, shape index: {}]
  %s1 = inlined_call_operand.hbm [shape: bf16[128,256], index: 1, kind: input, shape index: {}]
  %s2 = inlined_call_operand.hbm [shape: bf16[128,256], index: 2, kind: input, shape index: {}]
  %s3 = inlined_call_operand.hbm [shape: bf16[128,256], index: 3, kind: input, shape index: {}]
  %s4 = inlined_call_operand.hbm [shape: f32[1,256], index: 4, kind: input, shape index: {}]
  %s5 = inlined_call_operand.hbm [shape: f32[1,128], index: 5, kind: input, shape index: {}]
  %s6 = inlined_call_operand.hbm [shape: f32[1,128], index: 6, kind: input, shape index: {}]
  %s7 = inlined_call_operand.hbm [shape: f32[2,8,128], index: 7, kind: output, shape index: {}]
  %s8 = sld [smem:[#allocation0]]
  $region89: #{mel_encoder_forward.7} parent=0
    _
  %s10 = ssub.s32 1, %s8
  %s11 = scalar_select 0, %s10, %s8
  $region1: #{mel_encoder_forward.7} parent=0
    #allocation2 [shape = 'u8[8192]{0}', space=vmem, size = 0x2000, scoped, tag = 'input window, operand 0']
    #allocation3 [shape = 's32[2]{0}', space=sflag, size = 0x8, scoped, tag = 'scoped memory for mel_encoder_forward.7']
    #allocation4 [shape = 's32[2]{0}', space=sflag, size = 0x8, scoped, tag = 'scoped memory for mel_encoder_forward.7']
    #allocation5 [shape = 'u8[65536]{0}', space=vmem, size = 0x10000, scoped, tag = 'input window, operand 1, single buffered']
    #allocation6 [shape = 's32[1]{0}', space=sflag, size = 0x4, scoped, tag = 'scoped memory for mel_encoder_forward.7']
    #allocation7 [shape = 'u8[65536]{0}', space=vmem, size = 0x10000, scoped, tag = 'input window, operand 2, single buffered']
    #allocation8 [shape = 'u8[65536]{0}', space=vmem, size = 0x10000, scoped, tag = 'input window, operand 3, single buffered']
    #allocation9 [shape = 's32[1]{0}', space=sflag, size = 0x4, scoped, tag = 'scoped memory for mel_encoder_forward.7']
    #allocation10 [shape = 'u8[1024]{0}', space=vmem, size = 0x400, scoped, tag = 'input window, operand 4, single buffered']
    #allocation11 [shape = 'u8[512]{0}', space=vmem, size = 0x400, scoped, tag = 'input window, operand 5, single buffered']
    #allocation12 [shape = 's32[1]{0}', space=sflag, size = 0x4, scoped, tag = 'scoped memory for mel_encoder_forward.7']
    #allocation13 [shape = 'u8[512]{0}', space=vmem, size = 0x400, scoped, tag = 'input window, operand 6, single buffered']
    #allocation14 [shape = 'u8[8192]{0}', space=vmem, size = 0x2000, scoped, tag = 'output window, operand 0']
    %12 = vsyncpa [#allocation3], 0
    %s13 = scalar_lea.sflag [#allocation3], 1
    %14 = vsyncpa %s13, 0
    %15 = vsyncpa [#allocation6], 0
    %16 = vsyncpa [#allocation9], 0
    %17 = vsyncpa [#allocation12], 0
    %18 = vsyncpa [#allocation4], 0
    %s19 = scalar_lea.sflag [#allocation4], 1
    %20 = vsyncpa %s19, 0
    loop: start=0, step=1, limit=4
    $region2: #{mel_encoder_forward.7} parent=1 // loop_pre_header
      _
    $region3: #{mel_encoder_forward.7} parent=1 // loop_header
      %s22 = sphi 0, %s26
      %p23 = scmp.ge.s32.totalorder %s22, 4
      %s32 = sphi 0, %s34
      %s35 = sphi 0, %s32
      %s36 = sphi 0, %s35
      %s52 = sphi 0, %s36
      %s56 = sphi 0, %s56
      %s58 = sphi 0, %s56
      %s59 = sphi 0, %s58
      %s73 = sphi 0, %s59
      %s77 = sphi 0, %s77
      %s79 = sphi 0, %s77
      %s80 = sphi 0, %s79
      %s94 = sphi 0, %s80
      %s98 = sphi 0, %s98
      %s100 = sphi 0, %s98
      %s101 = sphi 0, %s100
      %s115 = sphi 0, %s101
      %s119 = sphi 0, %s119
      %s121 = sphi 0, %s119
      %s122 = sphi 0, %s121
      %s136 = sphi 0, %s122
      %s140 = sphi 0, %s140
      %s142 = sphi 0, %s140
      %s143 = sphi 0, %s142
      %s157 = sphi 0, %s143
      %s161 = sphi 0, %s161
      %s163 = sphi 0, %s161
      %s164 = sphi 0, %s163
      %s178 = sphi 0, %s164
      %s184 = sphi 0, %s186
      %s187 = sphi 0, %s184
      %s188 = sphi 0, %s187
      %s204 = sphi 0, %s188
    $region4: #{mel_encoder_forward.7} parent=1 // loop_header_branch
      %25 = sbr.rel (%p23) target = $region8
    $region5: #{mel_encoder_forward.7} parent=1 // loop_body
      %s27 = ssub.s32 %s22, 1
      %s28 = ssub.s32 %s22, 2
      %s29 = sadd.s32 %s22, 1
      %s30 = ssub.s32 %s22, %s29
      %p31 = scmp.eq.s32.totalorder %s30, 0
      %s33 = sadd.s32 %s32, 1
      %s34 = scalar_select %p31, %s32, %s33
      %p37 = pneg %p31
      %p38 = scmp.eq.s32.totalorder %s22, 1
      %p39 = por %p37, %p38
      %p40 = scmp.ne.s32.totalorder %s32, %s35
      %p41 = scmp.eq.s32.totalorder %s22, 0
      %p42 = por %p40, %p41
      %p43 = scmp.ne.s32.totalorder %s32, %s35
      %p44 = scmp.eq.s32.totalorder %s27, 1
      %p45 = por %p43, %p44
      %p46 = scmp.ne.s32.totalorder %s35, %s36
      %p47 = scmp.eq.s32.totalorder %s27, 0
      %p48 = por %p46, %p47
      %p49 = scmp.ne.s32.totalorder %s35, %s36
      %p50 = scmp.eq.s32.totalorder %s28, 1
      %p51 = por %p49, %p50
      %p53 = scmp.ne.s32.totalorder %s36, %s52
      %p54 = scmp.eq.s32.totalorder %s28, 0
      %p55 = por %p53, %p54
      %s57 = sadd.s32 %s56, 1
      %p60 = scmp.eq.s32.totalorder %s22, 1
      %p61 = scmp.ne.s32.totalorder %s56, %s58
      %p62 = scmp.eq.s32.totalorder %s22, 0
      %p63 = por %p61, %p62
      %p64 = scmp.ne.s32.totalorder %s56, %s58
      %p65 = scmp.eq.s32.totalorder %s27, 1
      %p66 = por %p64, %p65
      %p67 = scmp.ne.s32.totalorder %s58, %s59
      %p68 = scmp.eq.s32.totalorder %s27, 0
      %p69 = por %p67, %p68
      %p70 = scmp.ne.s32.totalorder %s58, %s59
      %p71 = scmp.eq.s32.totalorder %s28, 1
      %p72 = por %p70, %p71
      %p74 = scmp.ne.s32.totalorder %s59, %s73
      %p75 = scmp.eq.s32.totalorder %s28, 0
      %p76 = por %p74, %p75
      %s78 = sadd.s32 %s77, 1
      %p81 = scmp.eq.s32.totalorder %s22, 1
      %p82 = scmp.ne.s32.totalorder %s77, %s79
      %p83 = scmp.eq.s32.totalorder %s22, 0
      %p84 = por %p82, %p83
      %p85 = scmp.ne.s32.totalorder %s77, %s79
      %p86 = scmp.eq.s32.totalorder %s27, 1
      %p87 = por %p85, %p86
      %p88 = scmp.ne.s32.totalorder %s79, %s80
      %p89 = scmp.eq.s32.totalorder %s27, 0
      %p90 = por %p88, %p89
      %p91 = scmp.ne.s32.totalorder %s79, %s80
      %p92 = scmp.eq.s32.totalorder %s28, 1
      %p93 = por %p91, %p92
      %p95 = scmp.ne.s32.totalorder %s80, %s94
      %p96 = scmp.eq.s32.totalorder %s28, 0
      %p97 = por %p95, %p96
      %s99 = sadd.s32 %s98, 1
      %p102 = scmp.eq.s32.totalorder %s22, 1
      %p103 = scmp.ne.s32.totalorder %s98, %s100
      %p104 = scmp.eq.s32.totalorder %s22, 0
      %p105 = por %p103, %p104
      %p106 = scmp.ne.s32.totalorder %s98, %s100
      %p107 = scmp.eq.s32.totalorder %s27, 1
      %p108 = por %p106, %p107
      %p109 = scmp.ne.s32.totalorder %s100, %s101
      %p110 = scmp.eq.s32.totalorder %s27, 0
      %p111 = por %p109, %p110
      %p112 = scmp.ne.s32.totalorder %s100, %s101
      %p113 = scmp.eq.s32.totalorder %s28, 1
      %p114 = por %p112, %p113
      %p116 = scmp.ne.s32.totalorder %s101, %s115
      %p117 = scmp.eq.s32.totalorder %s28, 0
      %p118 = por %p116, %p117
      %s120 = sadd.s32 %s119, 1
      %p123 = scmp.eq.s32.totalorder %s22, 1
      %p124 = scmp.ne.s32.totalorder %s119, %s121
      %p125 = scmp.eq.s32.totalorder %s22, 0
      %p126 = por %p124, %p125
      %p127 = scmp.ne.s32.totalorder %s119, %s121
      %p128 = scmp.eq.s32.totalorder %s27, 1
      %p129 = por %p127, %p128
      %p130 = scmp.ne.s32.totalorder %s121, %s122
      %p131 = scmp.eq.s32.totalorder %s27, 0
      %p132 = por %p130, %p131
      %p133 = scmp.ne.s32.totalorder %s121, %s122
      %p134 = scmp.eq.s32.totalorder %s28, 1
      %p135 = por %p133, %p134
      %p137 = scmp.ne.s32.totalorder %s122, %s136
      %p138 = scmp.eq.s32.totalorder %s28, 0
      %p139 = por %p137, %p138
      %s141 = sadd.s32 %s140, 1
      %p144 = scmp.eq.s32.totalorder %s22, 1
      %p145 = scmp.ne.s32.totalorder %s140, %s142
      %p146 = scmp.eq.s32.totalorder %s22, 0
      %p147 = por %p145, %p146
      %p148 = scmp.ne.s32.totalorder %s140, %s142
      %p149 = scmp.eq.s32.totalorder %s27, 1
      %p150 = por %p148, %p149
      %p151 = scmp.ne.s32.totalorder %s142, %s143
      %p152 = scmp.eq.s32.totalorder %s27, 0
      %p153 = por %p151, %p152
      %p154 = scmp.ne.s32.totalorder %s142, %s143
      %p155 = scmp.eq.s32.totalorder %s28, 1
      %p156 = por %p154, %p155
      %p158 = scmp.ne.s32.totalorder %s143, %s157
      %p159 = scmp.eq.s32.totalorder %s28, 0
      %p160 = por %p158, %p159
      %s162 = sadd.s32 %s161, 1
      %p165 = scmp.eq.s32.totalorder %s22, 1
      %p166 = scmp.ne.s32.totalorder %s161, %s163
      %p167 = scmp.eq.s32.totalorder %s22, 0
      %p168 = por %p166, %p167
      %p169 = scmp.ne.s32.totalorder %s161, %s163
      %p170 = scmp.eq.s32.totalorder %s27, 1
      %p171 = por %p169, %p170
      %p172 = scmp.ne.s32.totalorder %s163, %s164
      %p173 = scmp.eq.s32.totalorder %s27, 0
      %p174 = por %p172, %p173
      %p175 = scmp.ne.s32.totalorder %s163, %s164
      %p176 = scmp.eq.s32.totalorder %s28, 1
      %p177 = por %p175, %p176
      %p179 = scmp.ne.s32.totalorder %s164, %s178
      %p180 = scmp.eq.s32.totalorder %s28, 0
      %p181 = por %p179, %p180
      %s182 = ssub.s32 %s22, %s29
      %p183 = scmp.eq.s32.totalorder %s182, 0
      %s185 = sadd.s32 %s184, 1
      %s186 = scalar_select %p183, %s184, %s185
      %p189 = pneg %p183
      %p190 = scmp.eq.s32.totalorder %s22, 1
      %p191 = por %p189, %p190
      %p192 = scmp.ne.s32.totalorder %s184, %s187
      %p193 = scmp.eq.s32.totalorder %s22, 0
      %p194 = por %p192, %p193
      %p195 = scmp.ne.s32.totalorder %s184, %s187
      %p196 = scmp.eq.s32.totalorder %s27, 1
      %p197 = por %p195, %p196
      %p198 = scmp.ne.s32.totalorder %s187, %s188
      %p199 = scmp.eq.s32.totalorder %s27, 0
      %p200 = por %p198, %p199
      %p201 = scmp.ne.s32.totalorder %s187, %s188
      %p202 = scmp.eq.s32.totalorder %s28, 1
      %p203 = por %p201, %p202
      %p205 = scmp.ne.s32.totalorder %s188, %s204
      %p206 = scmp.eq.s32.totalorder %s28, 0
      %p207 = por %p205, %p206
      %p208 = scmp.le.s32.totalorder 1, %s22
      %p209 = scmp.lt.s32.totalorder %s22, 3
      %p210 = pnand %p208, %p209
      %p211 = pneg %p210
      // Predicated region
      $region9: #{mel_encoder_forward.7} parent=5 // pred_check
        _
      $region10: #{mel_encoder_forward.7} parent=5 // pred_check_branch
        %213 = sbr.rel (%p210) target = $region12
      $region11: #{mel_encoder_forward.7} parent=5 // pred_region
        %s214 = ssub.s32 %s22, 1
        // Predicated region
        $region13: #{mel_encoder_forward.7} parent=11 // pred_check
          %p215 = pneg %p69
        $region14: #{mel_encoder_forward.7} parent=11 // pred_check_branch
          %217 = sbr.rel (%p215) target = $region16
        $region15: #{mel_encoder_forward.7} parent=11 // pred_region
          %s219 = ssub.s32 2048, 2048
          %220 = vsyncadd [#allocation6], %s219
          %s221 = sshll.u32 [#allocation5], 4
          %s222 = int_to_ptr.vmem [resolvable:$true] %s221
          %227 = dma.hbm_to_vmem [thread:$0]  %s1, 2048, %s222, [#allocation6], 128, 128, 8
        $region16: #{mel_encoder_forward.7} parent=11 // pred_fallthru
          _
        // Predicated region
        $region17: #{mel_encoder_forward.7} parent=11 // pred_check
          %p228 = pneg %p90
        $region18: #{mel_encoder_forward.7} parent=11 // pred_check_branch
          %230 = sbr.rel (%p228) target = $region20
        $region19: #{mel_encoder_forward.7} parent=11 // pred_region
          %s232 = ssub.s32 2048, 2048
          %233 = vsyncadd [#allocation6], %s232
          %s234 = sshll.u32 [#allocation7], 4
          %s235 = int_to_ptr.vmem [resolvable:$true] %s234
          %240 = dma.hbm_to_vmem [thread:$0]  %s2, 2048, %s235, [#allocation6], 128, 128, 8
        $region20: #{mel_encoder_forward.7} parent=11 // pred_fallthru
          _
        // Predicated region
        $region21: #{mel_encoder_forward.7} parent=11 // pred_check
          %p241 = pneg %p111
        $region22: #{mel_encoder_forward.7} parent=11 // pred_check_branch
          %243 = sbr.rel (%p241) target = $region24
        $region23: #{mel_encoder_forward.7} parent=11 // pred_region
          %s245 = ssub.s32 2048, 2048
          %246 = vsyncadd [#allocation9], %s245
          %s247 = sshll.u32 [#allocation8], 4
          %s248 = int_to_ptr.vmem [resolvable:$true] %s247
          %253 = dma.hbm_to_vmem [thread:$0]  %s3, 2048, %s248, [#allocation9], 128, 128, 8
        $region24: #{mel_encoder_forward.7} parent=11 // pred_fallthru
          _
        // Predicated region
        $region25: #{mel_encoder_forward.7} parent=11 // pred_check
          %p254 = pneg %p132
        $region26: #{mel_encoder_forward.7} parent=11 // pred_check_branch
          %256 = sbr.rel (%p254) target = $region28
        $region27: #{mel_encoder_forward.7} parent=11 // pred_region
          %s258 = ssub.s32 32, 32
          %259 = vsyncadd [#allocation9], %s258
          %s261 = sshll.u32 [#allocation10], 4
          %s262 = int_to_ptr.vmem [resolvable:$true] %s261
          %264 = dma.hbm_to_vmem [thread:$0]  %s4, 32, %s262, [#allocation9]
        $region28: #{mel_encoder_forward.7} parent=11 // pred_fallthru
          _
        // Predicated region
        $region29: #{mel_encoder_forward.7} parent=11 // pred_check
          %p265 = pneg %p153
        $region30: #{mel_encoder_forward.7} parent=11 // pred_check_branch
          %267 = sbr.rel (%p265) target = $region32
        $region31: #{mel_encoder_forward.7} parent=11 // pred_region
          %s269 = ssub.s32 16, 16
          %270 = vsyncadd [#allocation12], %s269
          %s272 = sshll.u32 [#allocation11], 4
          %s273 = int_to_ptr.vmem [resolvable:$true] %s272
          %275 = dma.hbm_to_vmem [thread:$0]  %s5, 16, %s273, [#allocation12]
        $region32: #{mel_encoder_forward.7} parent=11 // pred_fallthru
          _
        // Predicated region
        $region33: #{mel_encoder_forward.7} parent=11 // pred_check
          %p276 = pneg %p174
        $region34: #{mel_encoder_forward.7} parent=11 // pred_check_branch
          %278 = sbr.rel (%p276) target = $region36
        $region35: #{mel_encoder_forward.7} parent=11 // pred_region
          %s280 = ssub.s32 16, 16
          %281 = vsyncadd [#allocation12], %s280
          %s283 = sshll.u32 [#allocation13], 4
          %s284 = int_to_ptr.vmem [resolvable:$true] %s283
          %286 = dma.hbm_to_vmem [thread:$0]  %s6, 16, %s284, [#allocation12]
        $region36: #{mel_encoder_forward.7} parent=11 // pred_fallthru
          _
      $region12: #{mel_encoder_forward.7} parent=5 // pred_fallthru
        _
      %p287 = scmp.lt.s32.totalorder %s22, 2
      // Predicated region
      $region37: #{mel_encoder_forward.7} parent=5 // pred_check
        %p288 = pneg %p287
      $region38: #{mel_encoder_forward.7} parent=5 // pred_check_branch
        %290 = sbr.rel (%p288) target = $region40
      $region39: #{mel_encoder_forward.7} parent=5 // pred_region
        // Predicated region
        $region41: #{mel_encoder_forward.7} parent=39 // pred_check
          %p291 = pneg %p42
        $region42: #{mel_encoder_forward.7} parent=39 // pred_check_branch
          %293 = sbr.rel (%p291) target = $region44
        $region43: #{mel_encoder_forward.7} parent=39 // pred_region
          %s294 = sand.u32 %s32, 1
          %s295 = scalar_lea.sflag [#allocation3], %s294
          %s296 = sand.u32 %s32, 1
          %s297 = smul.addr %s296, 8
          %s298 = scalar_lea.vmem [#allocation2], %s297
          %s300 = ssub.s32 128, 128
          %301 = vsyncadd %s295, %s300
          %s302 = smul.addr %s22, 128
          %s303 = scalar_lea.hbm %s0, %s302
          %s305 = sshll.u32 %s298, 4
          %s306 = int_to_ptr.vmem [resolvable:$true] %s305
          %308 = dma.hbm_to_vmem [thread:$0]  %s303, 128, %s306, %s295
        $region44: #{mel_encoder_forward.7} parent=39 // pred_fallthru
          _
      $region40: #{mel_encoder_forward.7} parent=5 // pred_fallthru
        _
      %p309 = scmp.le.s32.totalorder 1, %s22
      %p310 = scmp.lt.s32.totalorder %s22, 3
      %p311 = pnand %p309, %p310
      %p312 = pneg %p311
      // Predicated region
      $region45: #{mel_encoder_forward.7} parent=5 // pred_check
        _
      $region46: #{mel_encoder_forward.7} parent=5 // pred_check_branch
        %314 = sbr.rel (%p311) target = $region48
      $region47: #{mel_encoder_forward.7} parent=5 // pred_region
        %s315 = ssub.s32 %s22, 1
        %s316 = sand.u32 %s35, 1
        %s317 = scalar_lea.sflag [#allocation3], %s316
        %s318 = sand.u32 %s35, 1
        %s319 = smul.addr %s318, 8
        %s320 = scalar_lea.vmem [#allocation2], %s319
        // Predicated region
        $region49: #{mel_encoder_forward.7} parent=47 // pred_check
          %p321 = pneg %p48
        $region50: #{mel_encoder_forward.7} parent=47 // pred_check_branch
          %323 = sbr.rel (%p321) target = $region52
        $region51: #{mel_encoder_forward.7} parent=47 // pred_region
          %324 = dma.done %s317, 128
        $region52: #{mel_encoder_forward.7} parent=47 // pred_fallthru
          _
        // Predicated region
        $region53: #{mel_encoder_forward.7} parent=47 // pred_check
          %p325 = pneg %p69
        $region54: #{mel_encoder_forward.7} parent=47 // pred_check_branch
          %327 = sbr.rel (%p325) target = $region56
        $region55: #{mel_encoder_forward.7} parent=47 // pred_region
          %328 = dma.done [#allocation6], 2048
        $region56: #{mel_encoder_forward.7} parent=47 // pred_fallthru
          _
        // Predicated region
        $region57: #{mel_encoder_forward.7} parent=47 // pred_check
          %p329 = pneg %p90
        $region58: #{mel_encoder_forward.7} parent=47 // pred_check_branch
          %331 = sbr.rel (%p329) target = $region60
        $region59: #{mel_encoder_forward.7} parent=47 // pred_region
          %332 = dma.done [#allocation6], 2048
        $region60: #{mel_encoder_forward.7} parent=47 // pred_fallthru
          _
        // Predicated region
        $region61: #{mel_encoder_forward.7} parent=47 // pred_check
          %p333 = pneg %p111
        $region62: #{mel_encoder_forward.7} parent=47 // pred_check_branch
          %335 = sbr.rel (%p333) target = $region64
        $region63: #{mel_encoder_forward.7} parent=47 // pred_region
          %336 = dma.done [#allocation9], 2048
        $region64: #{mel_encoder_forward.7} parent=47 // pred_fallthru
          _
        // Predicated region
        $region65: #{mel_encoder_forward.7} parent=47 // pred_check
          %p337 = pneg %p132
        $region66: #{mel_encoder_forward.7} parent=47 // pred_check_branch
          %339 = sbr.rel (%p337) target = $region68
        $region67: #{mel_encoder_forward.7} parent=47 // pred_region
          %340 = dma.done [#allocation9], 32
        $region68: #{mel_encoder_forward.7} parent=47 // pred_fallthru
          _
        // Predicated region
        $region69: #{mel_encoder_forward.7} parent=47 // pred_check
          %p341 = pneg %p153
        $region70: #{mel_encoder_forward.7} parent=47 // pred_check_branch
          %343 = sbr.rel (%p341) target = $region72
        $region71: #{mel_encoder_forward.7} parent=47 // pred_region
          %344 = dma.done [#allocation12], 16
        $region72: #{mel_encoder_forward.7} parent=47 // pred_fallthru
          _
        // Predicated region
        $region73: #{mel_encoder_forward.7} parent=47 // pred_check
          %p345 = pneg %p174
        $region74: #{mel_encoder_forward.7} parent=47 // pred_check_branch
          %347 = sbr.rel (%p345) target = $region76
        $region75: #{mel_encoder_forward.7} parent=47 // pred_region
          %348 = dma.done [#allocation12], 16
        $region76: #{mel_encoder_forward.7} parent=47 // pred_fallthru
          _
        %s349 = sand.u32 %s35, 1
        %s350 = scalar_lea.sflag [#allocation3], %s349
        %s351 = sand.u32 %s35, 1
        %s352 = smul.addr %s351, 8
        %s353 = scalar_lea.vmem [#allocation2], %s352
        %p354 = pneg %p48
        %p355 = pneg %p45
        %p356 = pneg %p69
        %p357 = pneg %p66
        %p358 = pneg %p90
        %p359 = pneg %p87
        %p360 = pneg %p111
        %p361 = pneg %p108
        %p362 = pneg %p132
        %p363 = pneg %p129
        %p364 = pneg %p153
        %p365 = pneg %p150
        %p366 = pneg %p174
        %p367 = pneg %p171
        %p368 = pneg %p200
        %p369 = pneg %p197
        %s370 = sand.u32 %s187, 1
        %s371 = scalar_lea.sflag [#allocation4], %s370
        %s372 = sand.u32 %s187, 1
        %s373 = smul.addr %s372, 8
        %s374 = scalar_lea.vmem [#allocation14], %s373
        %v376 = vld [vmem:[%s320] sm:$0xff]
        %v378 = vrot.slane %v376, 7
        %vm380 = vcmask 1040384
        %v381 = vsel %vm380, 0.0, %v378
        %v382 = vrot.slane %v376, 1
        %vm384 = vcmask 1046528
        %v385 = vsel %vm384, %v382, 0.0
        %v386 = vpack.c.bf16 %v381, %v381
        %v387 = vld [vmem:[#allocation5] sm:$0xff]
        %v388 = vld [vmem:[#allocation5 + $0x8] sm:$0xff]
        %v389 = vld [vmem:[#allocation5 + $0x10] sm:$0xff]
        %v390 = vld [vmem:[#allocation5 + $0x18] sm:$0xff]
        %v391 = vld [vmem:[#allocation5 + $0x20] sm:$0xff]
        %v392 = vld [vmem:[#allocation5 + $0x28] sm:$0xff]
        %v393 = vld [vmem:[#allocation5 + $0x30] sm:$0xff]
        %v394 = vld [vmem:[#allocation5 + $0x38] sm:$0xff]
        %v395 = vld [vmem:[#allocation5 + $0x40] sm:$0xff]
        %v396 = vld [vmem:[#allocation5 + $0x48] sm:$0xff]
        %v397 = vld [vmem:[#allocation5 + $0x50] sm:$0xff]
        %v398 = vld [vmem:[#allocation5 + $0x58] sm:$0xff]
        %v399 = vld [vmem:[#allocation5 + $0x60] sm:$0xff]
        %v400 = vld [vmem:[#allocation5 + $0x68] sm:$0xff]
        %v401 = vld [vmem:[#allocation5 + $0x70] sm:$0xff]
        %v402 = vld [vmem:[#allocation5 + $0x78] sm:$0xff]
        %v403 = vpack.c.bf16 %v376, %v376
        %v404 = vld [vmem:[#allocation7] sm:$0xff]
        %v405 = vld [vmem:[#allocation7 + $0x8] sm:$0xff]
        %v406 = vld [vmem:[#allocation7 + $0x10] sm:$0xff]
        %v407 = vld [vmem:[#allocation7 + $0x18] sm:$0xff]
        %v408 = vld [vmem:[#allocation7 + $0x20] sm:$0xff]
        %v409 = vld [vmem:[#allocation7 + $0x28] sm:$0xff]
        %v410 = vld [vmem:[#allocation7 + $0x30] sm:$0xff]
        %v411 = vld [vmem:[#allocation7 + $0x38] sm:$0xff]
        %v412 = vld [vmem:[#allocation7 + $0x40] sm:$0xff]
        %v413 = vld [vmem:[#allocation7 + $0x48] sm:$0xff]
        %v414 = vld [vmem:[#allocation7 + $0x50] sm:$0xff]
        %v415 = vld [vmem:[#allocation7 + $0x58] sm:$0xff]
        %v416 = vld [vmem:[#allocation7 + $0x60] sm:$0xff]
        %v417 = vld [vmem:[#allocation7 + $0x68] sm:$0xff]
        %v418 = vld [vmem:[#allocation7 + $0x70] sm:$0xff]
        %v419 = vld [vmem:[#allocation7 + $0x78] sm:$0xff]
        %v436 = vunpack.c.l.b16 %v404
        %v437 = vunpack.c.h.b16 %v404
        %v438 = vunpack.c.l.b16 %v405
        %v439 = vunpack.c.h.b16 %v405
        %v440 = vunpack.c.l.b16 %v406
        %v441 = vunpack.c.h.b16 %v406
        %v442 = vunpack.c.l.b16 %v407
        %v443 = vunpack.c.h.b16 %v407
        %v444 = vunpack.c.l.b16 %v408
        %v445 = vunpack.c.h.b16 %v408
        %v446 = vunpack.c.l.b16 %v409
        %v447 = vunpack.c.h.b16 %v409
        %v448 = vunpack.c.l.b16 %v410
        %v449 = vunpack.c.h.b16 %v410
        %v450 = vunpack.c.l.b16 %v411
        %v451 = vunpack.c.h.b16 %v411
        %v452 = vunpack.c.l.b16 %v412
        %v453 = vunpack.c.h.b16 %v412
        %v454 = vunpack.c.l.b16 %v413
        %v455 = vunpack.c.h.b16 %v413
        %v456 = vunpack.c.l.b16 %v414
        %v457 = vunpack.c.h.b16 %v414
        %v458 = vunpack.c.l.b16 %v415
        %v459 = vunpack.c.h.b16 %v415
        %v460 = vunpack.c.l.b16 %v416
        %v461 = vunpack.c.h.b16 %v416
        %v462 = vunpack.c.l.b16 %v417
        %v463 = vunpack.c.h.b16 %v417
        %v464 = vunpack.c.l.b16 %v418
        %v465 = vunpack.c.h.b16 %v418
        %v466 = vunpack.c.l.b16 %v419
        %v467 = vunpack.c.h.b16 %v419
        %v468 = vpack.c.b16 %v438, %v436
        %v469 = vpack.c.b16 %v439, %v437
        %v470 = vpack.c.b16 %v442, %v440
        %v471 = vpack.c.b16 %v443, %v441
        %v472 = vpack.c.b16 %v446, %v444
        %v473 = vpack.c.b16 %v447, %v445
        %v474 = vpack.c.b16 %v450, %v448
        %v475 = vpack.c.b16 %v451, %v449
        %v476 = vpack.c.b16 %v454, %v452
        %v477 = vpack.c.b16 %v455, %v453
        %v478 = vpack.c.b16 %v458, %v456
        %v479 = vpack.c.b16 %v459, %v457
        %v480 = vpack.c.b16 %v462, %v460
        %v481 = vpack.c.b16 %v463, %v461
        %v482 = vpack.c.b16 %v466, %v464
        %v483 = vpack.c.b16 %v467, %v465
        %500 = vmatprep.subr.bf16.mxu0 %v469
        %501 = vmatpush1.bf16.msra.mxu0 %v468
        %502 = vmatprep.subr.bf16.mxu0 %v471
        %503 = vmatpush1.bf16.msra.mxu0 %v470
        %504 = vmatprep.subr.bf16.mxu0 %v473
        %505 = vmatpush1.bf16.msra.mxu0 %v472
        %506 = vmatprep.subr.bf16.mxu0 %v475
        %507 = vmatpush1.bf16.msra.mxu0 %v474
        %508 = vmatprep.subr.bf16.mxu0 %v477
        %509 = vmatpush1.bf16.msra.mxu0 %v476
        %510 = vmatprep.subr.bf16.mxu0 %v479
        %511 = vmatpush1.bf16.msra.mxu0 %v478
        %512 = vmatprep.subr.bf16.mxu0 %v481
        %513 = vmatpush1.bf16.msra.mxu0 %v480
        %514 = vmatprep.subr.bf16.mxu0 %v483
        %515 = vmatpush1.bf16.msra.mxu0 %v482
        %516 = vmatprep.subr.bf16.mxu0 0
        %517 = vmatpush1.bf16.msra.mxu0 0
        %518 = vmatprep.subr.bf16.mxu0 0
        %519 = vmatpush1.bf16.msra.mxu0 0
        %520 = vmatprep.subr.bf16.mxu0 0
        %521 = vmatpush1.bf16.msra.mxu0 0
        %522 = vmatprep.subr.bf16.mxu0 0
        %523 = vmatpush1.bf16.msra.mxu0 0
        %524 = vmatprep.subr.bf16.mxu0 0
        %525 = vmatpush1.bf16.msra.mxu0 0
        %526 = vmatprep.subr.bf16.mxu0 0
        %527 = vmatpush1.bf16.msra.mxu0 0
        %528 = vmatprep.subr.bf16.mxu0 0
        %529 = vmatpush1.bf16.msra.mxu0 0
        %530 = vmatprep.subr.bf16.mxu0 0
        %531 = vmatpush1.bf16.msra.mxu0 0
        %532 = vmatprep.mubr.bf16.mxu0 0
        %533 = vmatmul.mubr.bf16.gmra.mrb[0].mxu0 %v403
        %v534 = vpop.f32.mrb[0].mxu0
        %v535 = vadd.f32 0.0, %v534
        %v536 = vpop.f32.mrb[0].mxu0
        %v537 = vadd.f32 0.0, %v536
        %v538 = vpop.f32.mrb[0].mxu0
        %v539 = vpop.f32.mrb[0].mxu0
        %540 = vdwg.mxu0
        %v557 = vunpack.c.l.b16 %v387
        %v558 = vunpack.c.h.b16 %v387
        %v559 = vunpack.c.l.b16 %v388
        %v560 = vunpack.c.h.b16 %v388
        %v561 = vunpack.c.l.b16 %v389
        %v562 = vunpack.c.h.b16 %v389
        %v563 = vunpack.c.l.b16 %v390
        %v564 = vunpack.c.h.b16 %v390
        %v565 = vunpack.c.l.b16 %v391
        %v566 = vunpack.c.h.b16 %v391
        %v567 = vunpack.c.l.b16 %v392
        %v568 = vunpack.c.h.b16 %v392
        %v569 = vunpack.c.l.b16 %v393
        %v570 = vunpack.c.h.b16 %v393
        %v571 = vunpack.c.l.b16 %v394
        %v572 = vunpack.c.h.b16 %v394
        %v573 = vunpack.c.l.b16 %v395
        %v574 = vunpack.c.h.b16 %v395
        %v575 = vunpack.c.l.b16 %v396
        %v576 = vunpack.c.h.b16 %v396
        %v577 = vunpack.c.l.b16 %v397
        %v578 = vunpack.c.h.b16 %v397
        %v579 = vunpack.c.l.b16 %v398
        %v580 = vunpack.c.h.b16 %v398
        %v581 = vunpack.c.l.b16 %v399
        %v582 = vunpack.c.h.b16 %v399
        %v583 = vunpack.c.l.b16 %v400
        %v584 = vunpack.c.h.b16 %v400
        %v585 = vunpack.c.l.b16 %v401
        %v586 = vunpack.c.h.b16 %v401
        %v587 = vunpack.c.l.b16 %v402
        %v588 = vunpack.c.h.b16 %v402
        %v589 = vpack.c.b16 %v559, %v557
        %v590 = vpack.c.b16 %v560, %v558
        %v591 = vpack.c.b16 %v563, %v561
        %v592 = vpack.c.b16 %v564, %v562
        %v593 = vpack.c.b16 %v567, %v565
        %v594 = vpack.c.b16 %v568, %v566
        %v595 = vpack.c.b16 %v571, %v569
        %v596 = vpack.c.b16 %v572, %v570
        %v597 = vpack.c.b16 %v575, %v573
        %v598 = vpack.c.b16 %v576, %v574
        %v599 = vpack.c.b16 %v579, %v577
        %v600 = vpack.c.b16 %v580, %v578
        %v601 = vpack.c.b16 %v583, %v581
        %v602 = vpack.c.b16 %v584, %v582
        %v603 = vpack.c.b16 %v587, %v585
        %v604 = vpack.c.b16 %v588, %v586
        %621 = vmatprep.subr.bf16.mxu0 %v590
        %622 = vmatpush1.bf16.msra.mxu0 %v589
        %623 = vmatprep.subr.bf16.mxu0 %v592
        %624 = vmatpush1.bf16.msra.mxu0 %v591
        %625 = vmatprep.subr.bf16.mxu0 %v594
        %626 = vmatpush1.bf16.msra.mxu0 %v593
        %627 = vmatprep.subr.bf16.mxu0 %v596
        %628 = vmatpush1.bf16.msra.mxu0 %v595
        %629 = vmatprep.subr.bf16.mxu0 %v598
        %630 = vmatpush1.bf16.msra.mxu0 %v597
        %631 = vmatprep.subr.bf16.mxu0 %v600
        %632 = vmatpush1.bf16.msra.mxu0 %v599
        %633 = vmatprep.subr.bf16.mxu0 %v602
        %634 = vmatpush1.bf16.msra.mxu0 %v601
        %635 = vmatprep.subr.bf16.mxu0 %v604
        %636 = vmatpush1.bf16.msra.mxu0 %v603
        %637 = vmatprep.subr.bf16.mxu0 0
        %638 = vmatpush1.bf16.msra.mxu0 0
        %639 = vmatprep.subr.bf16.mxu0 0
        %640 = vmatpush1.bf16.msra.mxu0 0
        %641 = vmatprep.subr.bf16.mxu0 0
        %642 = vmatpush1.bf16.msra.mxu0 0
        %643 = vmatprep.subr.bf16.mxu0 0
        %644 = vmatpush1.bf16.msra.mxu0 0
        %645 = vmatprep.subr.bf16.mxu0 0
        %646 = vmatpush1.bf16.msra.mxu0 0
        %647 = vmatprep.subr.bf16.mxu0 0
        %648 = vmatpush1.bf16.msra.mxu0 0
        %649 = vmatprep.subr.bf16.mxu0 0
        %650 = vmatpush1.bf16.msra.mxu0 0
        %651 = vmatprep.subr.bf16.mxu0 0
        %652 = vmatpush1.bf16.msra.mxu0 0
        %653 = vmatprep.mubr.bf16.mxu0 0
        %654 = vmatmul.mubr.bf16.gmra.mrb[0].mxu0 %v386
        %v655 = vpop.f32.mrb[0].mxu0
        %v656 = vadd.f32 %v535, %v655
        %v657 = vpop.f32.mrb[0].mxu0
        %v658 = vadd.f32 %v537, %v657
        %v659 = vpop.f32.mrb[0].mxu0
        %v660 = vpop.f32.mrb[0].mxu0
        %661 = vdwg.mxu0
        %v662 = vpack.c.bf16 %v385, %v385
        %v663 = vld [vmem:[#allocation8] sm:$0xff]
        %v664 = vld [vmem:[#allocation8 + $0x8] sm:$0xff]
        %v665 = vld [vmem:[#allocation8 + $0x10] sm:$0xff]
        %v666 = vld [vmem:[#allocation8 + $0x18] sm:$0xff]
        %v667 = vld [vmem:[#allocation8 + $0x20] sm:$0xff]
        %v668 = vld [vmem:[#allocation8 + $0x28] sm:$0xff]
        %v669 = vld [vmem:[#allocation8 + $0x30] sm:$0xff]
        %v670 = vld [vmem:[#allocation8 + $0x38] sm:$0xff]
        %v671 = vld [vmem:[#allocation8 + $0x40] sm:$0xff]
        %v672 = vld [vmem:[#allocation8 + $0x48] sm:$0xff]
        %v673 = vld [vmem:[#allocation8 + $0x50] sm:$0xff]
        %v674 = vld [vmem:[#allocation8 + $0x58] sm:$0xff]
        %v675 = vld [vmem:[#allocation8 + $0x60] sm:$0xff]
        %v676 = vld [vmem:[#allocation8 + $0x68] sm:$0xff]
        %v677 = vld [vmem:[#allocation8 + $0x70] sm:$0xff]
        %v678 = vld [vmem:[#allocation8 + $0x78] sm:$0xff]
        %v695 = vunpack.c.l.b16 %v663
        %v696 = vunpack.c.h.b16 %v663
        %v697 = vunpack.c.l.b16 %v664
        %v698 = vunpack.c.h.b16 %v664
        %v699 = vunpack.c.l.b16 %v665
        %v700 = vunpack.c.h.b16 %v665
        %v701 = vunpack.c.l.b16 %v666
        %v702 = vunpack.c.h.b16 %v666
        %v703 = vunpack.c.l.b16 %v667
        %v704 = vunpack.c.h.b16 %v667
        %v705 = vunpack.c.l.b16 %v668
        %v706 = vunpack.c.h.b16 %v668
        %v707 = vunpack.c.l.b16 %v669
        %v708 = vunpack.c.h.b16 %v669
        %v709 = vunpack.c.l.b16 %v670
        %v710 = vunpack.c.h.b16 %v670
        %v711 = vunpack.c.l.b16 %v671
        %v712 = vunpack.c.h.b16 %v671
        %v713 = vunpack.c.l.b16 %v672
        %v714 = vunpack.c.h.b16 %v672
        %v715 = vunpack.c.l.b16 %v673
        %v716 = vunpack.c.h.b16 %v673
        %v717 = vunpack.c.l.b16 %v674
        %v718 = vunpack.c.h.b16 %v674
        %v719 = vunpack.c.l.b16 %v675
        %v720 = vunpack.c.h.b16 %v675
        %v721 = vunpack.c.l.b16 %v676
        %v722 = vunpack.c.h.b16 %v676
        %v723 = vunpack.c.l.b16 %v677
        %v724 = vunpack.c.h.b16 %v677
        %v725 = vunpack.c.l.b16 %v678
        %v726 = vunpack.c.h.b16 %v678
        %v727 = vpack.c.b16 %v697, %v695
        %v728 = vpack.c.b16 %v698, %v696
        %v729 = vpack.c.b16 %v701, %v699
        %v730 = vpack.c.b16 %v702, %v700
        %v731 = vpack.c.b16 %v705, %v703
        %v732 = vpack.c.b16 %v706, %v704
        %v733 = vpack.c.b16 %v709, %v707
        %v734 = vpack.c.b16 %v710, %v708
        %v735 = vpack.c.b16 %v713, %v711
        %v736 = vpack.c.b16 %v714, %v712
        %v737 = vpack.c.b16 %v717, %v715
        %v738 = vpack.c.b16 %v718, %v716
        %v739 = vpack.c.b16 %v721, %v719
        %v740 = vpack.c.b16 %v722, %v720
        %v741 = vpack.c.b16 %v725, %v723
        %v742 = vpack.c.b16 %v726, %v724
        %759 = vmatprep.subr.bf16.mxu0 %v728
        %760 = vmatpush1.bf16.msra.mxu0 %v727
        %761 = vmatprep.subr.bf16.mxu0 %v730
        %762 = vmatpush1.bf16.msra.mxu0 %v729
        %763 = vmatprep.subr.bf16.mxu0 %v732
        %764 = vmatpush1.bf16.msra.mxu0 %v731
        %765 = vmatprep.subr.bf16.mxu0 %v734
        %766 = vmatpush1.bf16.msra.mxu0 %v733
        %767 = vmatprep.subr.bf16.mxu0 %v736
        %768 = vmatpush1.bf16.msra.mxu0 %v735
        %769 = vmatprep.subr.bf16.mxu0 %v738
        %770 = vmatpush1.bf16.msra.mxu0 %v737
        %771 = vmatprep.subr.bf16.mxu0 %v740
        %772 = vmatpush1.bf16.msra.mxu0 %v739
        %773 = vmatprep.subr.bf16.mxu0 %v742
        %774 = vmatpush1.bf16.msra.mxu0 %v741
        %775 = vmatprep.subr.bf16.mxu0 0
        %776 = vmatpush1.bf16.msra.mxu0 0
        %777 = vmatprep.subr.bf16.mxu0 0
        %778 = vmatpush1.bf16.msra.mxu0 0
        %779 = vmatprep.subr.bf16.mxu0 0
        %780 = vmatpush1.bf16.msra.mxu0 0
        %781 = vmatprep.subr.bf16.mxu0 0
        %782 = vmatpush1.bf16.msra.mxu0 0
        %783 = vmatprep.subr.bf16.mxu0 0
        %784 = vmatpush1.bf16.msra.mxu0 0
        %785 = vmatprep.subr.bf16.mxu0 0
        %786 = vmatpush1.bf16.msra.mxu0 0
        %787 = vmatprep.subr.bf16.mxu0 0
        %788 = vmatpush1.bf16.msra.mxu0 0
        %789 = vmatprep.subr.bf16.mxu0 0
        %790 = vmatpush1.bf16.msra.mxu0 0
        %791 = vmatprep.mubr.bf16.mxu0 0
        %792 = vmatmul.mubr.bf16.gmra.mrb[0].mxu0 %v662
        %v793 = vpop.f32.mrb[0].mxu0
        %v794 = vadd.f32 0.0, %v793
        %v795 = vpop.f32.mrb[0].mxu0
        %v796 = vadd.f32 0.0, %v795
        %v797 = vpop.f32.mrb[0].mxu0
        %v798 = vpop.f32.mrb[0].mxu0
        %799 = vdwg.mxu0
        %v800 = vadd.f32 %v656, %v794
        %v801 = vadd.f32 %v658, %v796
        %v802 = vld [vmem:[#allocation10] sm:$0x3]
        %v804 = vlaneseq
        %v805 = vshrl.u32 %v804, 7
        %v806 = vsub.s32 0, %v805
        %v807 = vrot.slane %v802, %v806
        %v808 = vlaneseq
        %v809 = vshrl.u32 %v808, 7
        %v810 = vsub.s32 1, %v809
        %v811 = vrot.slane %v802, %v810
        %v814 = vadd.f32 %v800, %v807
        %v815 = vadd.f32 %v801, %v811
        %v816 = vxor.u32 %v815, 2147483648
        %v817 = vmul.f32 %v816, 1.442695
        %v818 = vpow.pop %v817
        %v819 = vadd.f32 %v818, 1.0
        %v820 = vrcp.pop %v819
        %v821 = vmul.f32 1.0, %v820
        %v822 = vtanh.pop %v814
        %v823 = vmul.f32 %v821, %v822
        %v824 = vadd.f32 %v376, %v823
        %v825 = vld [vmem:[#allocation11] sm:$0x1]
        %v826 = vld [vmem:[#allocation13] sm:$0x1]
        %827 = vadd.xlane.f32.xlu0 %v824
        %v828 = vpop.xlane.xlu0 %827
        %v829 = vrcp.pop 128.0
        %v830 = vmul.f32 %v828, %v829
        %v831 = vsub.f32 %v824, %v830
        %v832 = vmul.f32 %v831, %v831
        %833 = vadd.xlane.f32.xlu0 %v832
        %v834 = vpop.xlane.xlu0 %833
        %v835 = vmul.f32 %v834, %v829
        %v836 = vadd.f32 %v835, 1e-05
        %v837 = vrsqrt.pop %v836
        %v838 = vmul.f32 %v831, %v837
        %v840 = vlaneseq
        %v841 = vshrl.u32 %v840, 7
        %v842 = vsub.s32 0, %v841
        %v843 = vrot.slane %v825, %v842
        %v845 = vmul.f32 %v838, %v843
        %v847 = vlaneseq
        %v848 = vshrl.u32 %v847, 7
        %v849 = vsub.s32 0, %v848
        %v850 = vrot.slane %v826, %v849
        %v852 = vadd.f32 %v845, %v850
        %853 = vst [vmem:[%s374] sm:$0xff] %v852
        %s854 = sand.u32 %s187, 1
        %s855 = scalar_lea.sflag [#allocation4], %s854
        %s856 = sand.u32 %s187, 1
        %s857 = smul.addr %s856, 8
        %s858 = scalar_lea.vmem [#allocation14], %s857
        // Predicated region
        $region77: #{mel_encoder_forward.7} parent=47 // pred_check
          %p859 = pneg %p197
        $region78: #{mel_encoder_forward.7} parent=47 // pred_check_branch
          %861 = sbr.rel (%p859) target = $region80
        $region79: #{mel_encoder_forward.7} parent=47 // pred_region
          %s863 = ssub.s32 128, 128
          %864 = vsyncadd %s855, %s863
          %s865 = smul.addr %s27, 128
          %s866 = scalar_lea.hbm %s7, %s865
          %s868 = sshll.u32 %s858, 4
          %s869 = int_to_ptr.vmem [resolvable:$true] %s868
          %871 = dma.vmem_to_hbm [thread:$0]  %s869, 128, %s866, %s855
        $region80: #{mel_encoder_forward.7} parent=47 // pred_fallthru
          _
      $region48: #{mel_encoder_forward.7} parent=5 // pred_fallthru
        _
      %p872 = scmp.le.s32.totalorder 2, %s22
      // Predicated region
      $region81: #{mel_encoder_forward.7} parent=5 // pred_check
        %p873 = pneg %p872
      $region82: #{mel_encoder_forward.7} parent=5 // pred_check_branch
        %875 = sbr.rel (%p873) target = $region84
      $region83: #{mel_encoder_forward.7} parent=5 // pred_region
        %s876 = ssub.s32 %s22, 2
        // Predicated region
        $region85: #{mel_encoder_forward.7} parent=83 // pred_check
          %p877 = pneg %p203
        $region86: #{mel_encoder_forward.7} parent=83 // pred_check_branch
          %879 = sbr.rel (%p877) target = $region88
        $region87: #{mel_encoder_forward.7} parent=83 // pred_region
          %s880 = sand.u32 %s188, 1
          %s881 = scalar_lea.sflag [#allocation4], %s880
          %s882 = sand.u32 %s188, 1
          %s883 = smul.addr %s882, 8
          %s884 = scalar_lea.vmem [#allocation14], %s883
          %885 = dma.done %s881, 128
        $region88: #{mel_encoder_forward.7} parent=83 // pred_fallthru
          _
      $region84: #{mel_encoder_forward.7} parent=5 // pred_fallthru
        _
    $region6: #{mel_encoder_forward.7} parent=1 // loop_footer
      %s26 = sadd.s32 1, %s22
    $region7: #{mel_encoder_forward.7} parent=1 // loop_footer_branch
      %21 = sbr.rel target = $region3
    $region8: #{mel_encoder_forward.7} parent=1 // loop_exit
      _
    %886 = vsyncpa [#allocation3], 1
    %s887 = scalar_lea.sflag [#allocation3], 1
    %888 = vsyncpa %s887, 1
    %889 = vsyncpa [#allocation6], 1
    %890 = vsyncpa [#allocation9], 1
    %891 = vsyncpa [#allocation12], 1
    %892 = vsyncpa [#allocation4], 1
    %s893 = scalar_lea.sflag [#allocation4], 1
    %894 = vsyncpa %s893, 1

// kernel: mel_encoder_forward.8
$region0: #{mel_encoder_forward.8}
  #allocation0 [shape = 'u32[]', space=smem, size = 0x4, offset = 0x4, fixed_abs, tag = 'smem constant byte address 0x4 - core index']
  #allocation1 [shape = 'u32[144,128]{1,0:T(1,128)}', space=vmem, size = 0x12000, scoped, tag = 'internal scratch']
  %s0 = inlined_call_operand.hbm [shape: f32[2,8,128], index: 0, kind: input, shape index: {}]
  %s1 = inlined_call_operand.hbm [shape: bf16[128,256], index: 1, kind: input, shape index: {}]
  %s2 = inlined_call_operand.hbm [shape: bf16[128,256], index: 2, kind: input, shape index: {}]
  %s3 = inlined_call_operand.hbm [shape: bf16[128,256], index: 3, kind: input, shape index: {}]
  %s4 = inlined_call_operand.hbm [shape: f32[1,256], index: 4, kind: input, shape index: {}]
  %s5 = inlined_call_operand.hbm [shape: f32[1,128], index: 5, kind: input, shape index: {}]
  %s6 = inlined_call_operand.hbm [shape: f32[1,128], index: 6, kind: input, shape index: {}]
  %s7 = inlined_call_operand.hbm [shape: f32[2,8,128], index: 7, kind: output, shape index: {}]
  %s8 = sld [smem:[#allocation0]]
  $region89: #{mel_encoder_forward.8} parent=0
    _
  %s10 = ssub.s32 1, %s8
  %s11 = scalar_select 0, %s10, %s8
  $region1: #{mel_encoder_forward.8} parent=0
    #allocation2 [shape = 'u8[8192]{0}', space=vmem, size = 0x2000, scoped, tag = 'input window, operand 0']
    #allocation3 [shape = 's32[2]{0}', space=sflag, size = 0x8, scoped, tag = 'scoped memory for mel_encoder_forward.8']
    #allocation4 [shape = 's32[2]{0}', space=sflag, size = 0x8, scoped, tag = 'scoped memory for mel_encoder_forward.8']
    #allocation5 [shape = 'u8[65536]{0}', space=vmem, size = 0x10000, scoped, tag = 'input window, operand 1, single buffered']
    #allocation6 [shape = 's32[1]{0}', space=sflag, size = 0x4, scoped, tag = 'scoped memory for mel_encoder_forward.8']
    #allocation7 [shape = 'u8[65536]{0}', space=vmem, size = 0x10000, scoped, tag = 'input window, operand 2, single buffered']
    #allocation8 [shape = 'u8[65536]{0}', space=vmem, size = 0x10000, scoped, tag = 'input window, operand 3, single buffered']
    #allocation9 [shape = 's32[1]{0}', space=sflag, size = 0x4, scoped, tag = 'scoped memory for mel_encoder_forward.8']
    #allocation10 [shape = 'u8[1024]{0}', space=vmem, size = 0x400, scoped, tag = 'input window, operand 4, single buffered']
    #allocation11 [shape = 'u8[512]{0}', space=vmem, size = 0x400, scoped, tag = 'input window, operand 5, single buffered']
    #allocation12 [shape = 's32[1]{0}', space=sflag, size = 0x4, scoped, tag = 'scoped memory for mel_encoder_forward.8']
    #allocation13 [shape = 'u8[512]{0}', space=vmem, size = 0x400, scoped, tag = 'input window, operand 6, single buffered']
    #allocation14 [shape = 'u8[8192]{0}', space=vmem, size = 0x2000, scoped, tag = 'output window, operand 0']
    %12 = vsyncpa [#allocation3], 0
    %s13 = scalar_lea.sflag [#allocation3], 1
    %14 = vsyncpa %s13, 0
    %15 = vsyncpa [#allocation6], 0
    %16 = vsyncpa [#allocation9], 0
    %17 = vsyncpa [#allocation12], 0
    %18 = vsyncpa [#allocation4], 0
    %s19 = scalar_lea.sflag [#allocation4], 1
    %20 = vsyncpa %s19, 0
    loop: start=0, step=1, limit=4
    $region2: #{mel_encoder_forward.8} parent=1 // loop_pre_header
      _
    $region3: #{mel_encoder_forward.8} parent=1 // loop_header
      %s22 = sphi 0, %s26
      %p23 = scmp.ge.s32.totalorder %s22, 4
      %s32 = sphi 0, %s34
      %s35 = sphi 0, %s32
      %s36 = sphi 0, %s35
      %s52 = sphi 0, %s36
      %s56 = sphi 0, %s56
      %s58 = sphi 0, %s56
      %s59 = sphi 0, %s58
      %s73 = sphi 0, %s59
      %s77 = sphi 0, %s77
      %s79 = sphi 0, %s77
      %s80 = sphi 0, %s79
      %s94 = sphi 0, %s80
      %s98 = sphi 0, %s98
      %s100 = sphi 0, %s98
      %s101 = sphi 0, %s100
      %s115 = sphi 0, %s101
      %s119 = sphi 0, %s119
      %s121 = sphi 0, %s119
      %s122 = sphi 0, %s121
      %s136 = sphi 0, %s122
      %s140 = sphi 0, %s140
      %s142 = sphi 0, %s140
      %s143 = sphi 0, %s142
      %s157 = sphi 0, %s143
      %s161 = sphi 0, %s161
      %s163 = sphi 0, %s161
      %s164 = sphi 0, %s163
      %s178 = sphi 0, %s164
      %s184 = sphi 0, %s186
      %s187 = sphi 0, %s184
      %s188 = sphi 0, %s187
      %s204 = sphi 0, %s188
    $region4: #{mel_encoder_forward.8} parent=1 // loop_header_branch
      %25 = sbr.rel (%p23) target = $region8
    $region5: #{mel_encoder_forward.8} parent=1 // loop_body
      %s27 = ssub.s32 %s22, 1
      %s28 = ssub.s32 %s22, 2
      %s29 = sadd.s32 %s22, 1
      %s30 = ssub.s32 %s22, %s29
      %p31 = scmp.eq.s32.totalorder %s30, 0
      %s33 = sadd.s32 %s32, 1
      %s34 = scalar_select %p31, %s32, %s33
      %p37 = pneg %p31
      %p38 = scmp.eq.s32.totalorder %s22, 1
      %p39 = por %p37, %p38
      %p40 = scmp.ne.s32.totalorder %s32, %s35
      %p41 = scmp.eq.s32.totalorder %s22, 0
      %p42 = por %p40, %p41
      %p43 = scmp.ne.s32.totalorder %s32, %s35
      %p44 = scmp.eq.s32.totalorder %s27, 1
      %p45 = por %p43, %p44
      %p46 = scmp.ne.s32.totalorder %s35, %s36
      %p47 = scmp.eq.s32.totalorder %s27, 0
      %p48 = por %p46, %p47
      %p49 = scmp.ne.s32.totalorder %s35, %s36
      %p50 = scmp.eq.s32.totalorder %s28, 1
      %p51 = por %p49, %p50
      %p53 = scmp.ne.s32.totalorder %s36, %s52
      %p54 = scmp.eq.s32.totalorder %s28, 0
      %p55 = por %p53, %p54
      %s57 = sadd.s32 %s56, 1
      %p60 = scmp.eq.s32.totalorder %s22, 1
      %p61 = scmp.ne.s32.totalorder %s56, %s58
      %p62 = scmp.eq.s32.totalorder %s22, 0
      %p63 = por %p61, %p62
      %p64 = scmp.ne.s32.totalorder %s56, %s58
      %p65 = scmp.eq.s32.totalorder %s27, 1
      %p66 = por %p64, %p65
      %p67 = scmp.ne.s32.totalorder %s58, %s59
      %p68 = scmp.eq.s32.totalorder %s27, 0
      %p69 = por %p67, %p68
      %p70 = scmp.ne.s32.totalorder %s58, %s59
      %p71 = scmp.eq.s32.totalorder %s28, 1
      %p72 = por %p70, %p71
      %p74 = scmp.ne.s32.totalorder %s59, %s73
      %p75 = scmp.eq.s32.totalorder %s28, 0
      %p76 = por %p74, %p75
      %s78 = sadd.s32 %s77, 1
      %p81 = scmp.eq.s32.totalorder %s22, 1
      %p82 = scmp.ne.s32.totalorder %s77, %s79
      %p83 = scmp.eq.s32.totalorder %s22, 0
      %p84 = por %p82, %p83
      %p85 = scmp.ne.s32.totalorder %s77, %s79
      %p86 = scmp.eq.s32.totalorder %s27, 1
      %p87 = por %p85, %p86
      %p88 = scmp.ne.s32.totalorder %s79, %s80
      %p89 = scmp.eq.s32.totalorder %s27, 0
      %p90 = por %p88, %p89
      %p91 = scmp.ne.s32.totalorder %s79, %s80
      %p92 = scmp.eq.s32.totalorder %s28, 1
      %p93 = por %p91, %p92
      %p95 = scmp.ne.s32.totalorder %s80, %s94
      %p96 = scmp.eq.s32.totalorder %s28, 0
      %p97 = por %p95, %p96
      %s99 = sadd.s32 %s98, 1
      %p102 = scmp.eq.s32.totalorder %s22, 1
      %p103 = scmp.ne.s32.totalorder %s98, %s100
      %p104 = scmp.eq.s32.totalorder %s22, 0
      %p105 = por %p103, %p104
      %p106 = scmp.ne.s32.totalorder %s98, %s100
      %p107 = scmp.eq.s32.totalorder %s27, 1
      %p108 = por %p106, %p107
      %p109 = scmp.ne.s32.totalorder %s100, %s101
      %p110 = scmp.eq.s32.totalorder %s27, 0
      %p111 = por %p109, %p110
      %p112 = scmp.ne.s32.totalorder %s100, %s101
      %p113 = scmp.eq.s32.totalorder %s28, 1
      %p114 = por %p112, %p113
      %p116 = scmp.ne.s32.totalorder %s101, %s115
      %p117 = scmp.eq.s32.totalorder %s28, 0
      %p118 = por %p116, %p117
      %s120 = sadd.s32 %s119, 1
      %p123 = scmp.eq.s32.totalorder %s22, 1
      %p124 = scmp.ne.s32.totalorder %s119, %s121
      %p125 = scmp.eq.s32.totalorder %s22, 0
      %p126 = por %p124, %p125
      %p127 = scmp.ne.s32.totalorder %s119, %s121
      %p128 = scmp.eq.s32.totalorder %s27, 1
      %p129 = por %p127, %p128
      %p130 = scmp.ne.s32.totalorder %s121, %s122
      %p131 = scmp.eq.s32.totalorder %s27, 0
      %p132 = por %p130, %p131
      %p133 = scmp.ne.s32.totalorder %s121, %s122
      %p134 = scmp.eq.s32.totalorder %s28, 1
      %p135 = por %p133, %p134
      %p137 = scmp.ne.s32.totalorder %s122, %s136
      %p138 = scmp.eq.s32.totalorder %s28, 0
      %p139 = por %p137, %p138
      %s141 = sadd.s32 %s140, 1
      %p144 = scmp.eq.s32.totalorder %s22, 1
      %p145 = scmp.ne.s32.totalorder %s140, %s142
      %p146 = scmp.eq.s32.totalorder %s22, 0
      %p147 = por %p145, %p146
      %p148 = scmp.ne.s32.totalorder %s140, %s142
      %p149 = scmp.eq.s32.totalorder %s27, 1
      %p150 = por %p148, %p149
      %p151 = scmp.ne.s32.totalorder %s142, %s143
      %p152 = scmp.eq.s32.totalorder %s27, 0
      %p153 = por %p151, %p152
      %p154 = scmp.ne.s32.totalorder %s142, %s143
      %p155 = scmp.eq.s32.totalorder %s28, 1
      %p156 = por %p154, %p155
      %p158 = scmp.ne.s32.totalorder %s143, %s157
      %p159 = scmp.eq.s32.totalorder %s28, 0
      %p160 = por %p158, %p159
      %s162 = sadd.s32 %s161, 1
      %p165 = scmp.eq.s32.totalorder %s22, 1
      %p166 = scmp.ne.s32.totalorder %s161, %s163
      %p167 = scmp.eq.s32.totalorder %s22, 0
      %p168 = por %p166, %p167
      %p169 = scmp.ne.s32.totalorder %s161, %s163
      %p170 = scmp.eq.s32.totalorder %s27, 1
      %p171 = por %p169, %p170
      %p172 = scmp.ne.s32.totalorder %s163, %s164
      %p173 = scmp.eq.s32.totalorder %s27, 0
      %p174 = por %p172, %p173
      %p175 = scmp.ne.s32.totalorder %s163, %s164
      %p176 = scmp.eq.s32.totalorder %s28, 1
      %p177 = por %p175, %p176
      %p179 = scmp.ne.s32.totalorder %s164, %s178
      %p180 = scmp.eq.s32.totalorder %s28, 0
      %p181 = por %p179, %p180
      %s182 = ssub.s32 %s22, %s29
      %p183 = scmp.eq.s32.totalorder %s182, 0
      %s185 = sadd.s32 %s184, 1
      %s186 = scalar_select %p183, %s184, %s185
      %p189 = pneg %p183
      %p190 = scmp.eq.s32.totalorder %s22, 1
      %p191 = por %p189, %p190
      %p192 = scmp.ne.s32.totalorder %s184, %s187
      %p193 = scmp.eq.s32.totalorder %s22, 0
      %p194 = por %p192, %p193
      %p195 = scmp.ne.s32.totalorder %s184, %s187
      %p196 = scmp.eq.s32.totalorder %s27, 1
      %p197 = por %p195, %p196
      %p198 = scmp.ne.s32.totalorder %s187, %s188
      %p199 = scmp.eq.s32.totalorder %s27, 0
      %p200 = por %p198, %p199
      %p201 = scmp.ne.s32.totalorder %s187, %s188
      %p202 = scmp.eq.s32.totalorder %s28, 1
      %p203 = por %p201, %p202
      %p205 = scmp.ne.s32.totalorder %s188, %s204
      %p206 = scmp.eq.s32.totalorder %s28, 0
      %p207 = por %p205, %p206
      %p208 = scmp.le.s32.totalorder 1, %s22
      %p209 = scmp.lt.s32.totalorder %s22, 3
      %p210 = pnand %p208, %p209
      %p211 = pneg %p210
      // Predicated region
      $region9: #{mel_encoder_forward.8} parent=5 // pred_check
        _
      $region10: #{mel_encoder_forward.8} parent=5 // pred_check_branch
        %213 = sbr.rel (%p210) target = $region12
      $region11: #{mel_encoder_forward.8} parent=5 // pred_region
        %s214 = ssub.s32 %s22, 1
        // Predicated region
        $region13: #{mel_encoder_forward.8} parent=11 // pred_check
          %p215 = pneg %p69
        $region14: #{mel_encoder_forward.8} parent=11 // pred_check_branch
          %217 = sbr.rel (%p215) target = $region16
        $region15: #{mel_encoder_forward.8} parent=11 // pred_region
          %s219 = ssub.s32 2048, 2048
          %220 = vsyncadd [#allocation6], %s219
          %s221 = sshll.u32 [#allocation5], 4
          %s222 = int_to_ptr.vmem [resolvable:$true] %s221
          %227 = dma.hbm_to_vmem [thread:$0]  %s1, 2048, %s222, [#allocation6], 128, 128, 8
        $region16: #{mel_encoder_forward.8} parent=11 // pred_fallthru
          _
        // Predicated region
        $region17: #{mel_encoder_forward.8} parent=11 // pred_check
          %p228 = pneg %p90
        $region18: #{mel_encoder_forward.8} parent=11 // pred_check_branch
          %230 = sbr.rel (%p228) target = $region20
        $region19: #{mel_encoder_forward.8} parent=11 // pred_region
          %s232 = ssub.s32 2048, 2048
          %233 = vsyncadd [#allocation6], %s232
          %s234 = sshll.u32 [#allocation7], 4
          %s235 = int_to_ptr.vmem [resolvable:$true] %s234
          %240 = dma.hbm_to_vmem [thread:$0]  %s2, 2048, %s235, [#allocation6], 128, 128, 8
        $region20: #{mel_encoder_forward.8} parent=11 // pred_fallthru
          _
        // Predicated region
        $region21: #{mel_encoder_forward.8} parent=11 // pred_check
          %p241 = pneg %p111
        $region22: #{mel_encoder_forward.8} parent=11 // pred_check_branch
          %243 = sbr.rel (%p241) target = $region24
        $region23: #{mel_encoder_forward.8} parent=11 // pred_region
          %s245 = ssub.s32 2048, 2048
          %246 = vsyncadd [#allocation9], %s245
          %s247 = sshll.u32 [#allocation8], 4
          %s248 = int_to_ptr.vmem [resolvable:$true] %s247
          %253 = dma.hbm_to_vmem [thread:$0]  %s3, 2048, %s248, [#allocation9], 128, 128, 8
        $region24: #{mel_encoder_forward.8} parent=11 // pred_fallthru
          _
        // Predicated region
        $region25: #{mel_encoder_forward.8} parent=11 // pred_check
          %p254 = pneg %p132
        $region26: #{mel_encoder_forward.8} parent=11 // pred_check_branch
          %256 = sbr.rel (%p254) target = $region28
        $region27: #{mel_encoder_forward.8} parent=11 // pred_region
          %s258 = ssub.s32 32, 32
          %259 = vsyncadd [#allocation9], %s258
          %s261 = sshll.u32 [#allocation10], 4
          %s262 = int_to_ptr.vmem [resolvable:$true] %s261
          %264 = dma.hbm_to_vmem [thread:$0]  %s4, 32, %s262, [#allocation9]
        $region28: #{mel_encoder_forward.8} parent=11 // pred_fallthru
          _
        // Predicated region
        $region29: #{mel_encoder_forward.8} parent=11 // pred_check
          %p265 = pneg %p153
        $region30: #{mel_encoder_forward.8} parent=11 // pred_check_branch
          %267 = sbr.rel (%p265) target = $region32
        $region31: #{mel_encoder_forward.8} parent=11 // pred_region
          %s269 = ssub.s32 16, 16
          %270 = vsyncadd [#allocation12], %s269
          %s272 = sshll.u32 [#allocation11], 4
          %s273 = int_to_ptr.vmem [resolvable:$true] %s272
          %275 = dma.hbm_to_vmem [thread:$0]  %s5, 16, %s273, [#allocation12]
        $region32: #{mel_encoder_forward.8} parent=11 // pred_fallthru
          _
        // Predicated region
        $region33: #{mel_encoder_forward.8} parent=11 // pred_check
          %p276 = pneg %p174
        $region34: #{mel_encoder_forward.8} parent=11 // pred_check_branch
          %278 = sbr.rel (%p276) target = $region36
        $region35: #{mel_encoder_forward.8} parent=11 // pred_region
          %s280 = ssub.s32 16, 16
          %281 = vsyncadd [#allocation12], %s280
          %s283 = sshll.u32 [#allocation13], 4
          %s284 = int_to_ptr.vmem [resolvable:$true] %s283
          %286 = dma.hbm_to_vmem [thread:$0]  %s6, 16, %s284, [#allocation12]
        $region36: #{mel_encoder_forward.8} parent=11 // pred_fallthru
          _
      $region12: #{mel_encoder_forward.8} parent=5 // pred_fallthru
        _
      %p287 = scmp.lt.s32.totalorder %s22, 2
      // Predicated region
      $region37: #{mel_encoder_forward.8} parent=5 // pred_check
        %p288 = pneg %p287
      $region38: #{mel_encoder_forward.8} parent=5 // pred_check_branch
        %290 = sbr.rel (%p288) target = $region40
      $region39: #{mel_encoder_forward.8} parent=5 // pred_region
        // Predicated region
        $region41: #{mel_encoder_forward.8} parent=39 // pred_check
          %p291 = pneg %p42
        $region42: #{mel_encoder_forward.8} parent=39 // pred_check_branch
          %293 = sbr.rel (%p291) target = $region44
        $region43: #{mel_encoder_forward.8} parent=39 // pred_region
          %s294 = sand.u32 %s32, 1
          %s295 = scalar_lea.sflag [#allocation3], %s294
          %s296 = sand.u32 %s32, 1
          %s297 = smul.addr %s296, 8
          %s298 = scalar_lea.vmem [#allocation2], %s297
          %s300 = ssub.s32 128, 128
          %301 = vsyncadd %s295, %s300
          %s302 = smul.addr %s22, 128
          %s303 = scalar_lea.hbm %s0, %s302
          %s305 = sshll.u32 %s298, 4
          %s306 = int_to_ptr.vmem [resolvable:$true] %s305
          %308 = dma.hbm_to_vmem [thread:$0]  %s303, 128, %s306, %s295
        $region44: #{mel_encoder_forward.8} parent=39 // pred_fallthru
          _
      $region40: #{mel_encoder_forward.8} parent=5 // pred_fallthru
        _
      %p309 = scmp.le.s32.totalorder 1, %s22
      %p310 = scmp.lt.s32.totalorder %s22, 3
      %p311 = pnand %p309, %p310
      %p312 = pneg %p311
      // Predicated region
      $region45: #{mel_encoder_forward.8} parent=5 // pred_check
        _
      $region46: #{mel_encoder_forward.8} parent=5 // pred_check_branch
        %314 = sbr.rel (%p311) target = $region48
      $region47: #{mel_encoder_forward.8} parent=5 // pred_region
        %s315 = ssub.s32 %s22, 1
        %s316 = sand.u32 %s35, 1
        %s317 = scalar_lea.sflag [#allocation3], %s316
        %s318 = sand.u32 %s35, 1
        %s319 = smul.addr %s318, 8
        %s320 = scalar_lea.vmem [#allocation2], %s319
        // Predicated region
        $region49: #{mel_encoder_forward.8} parent=47 // pred_check
          %p321 = pneg %p48
        $region50: #{mel_encoder_forward.8} parent=47 // pred_check_branch
          %323 = sbr.rel (%p321) target = $region52
        $region51: #{mel_encoder_forward.8} parent=47 // pred_region
          %324 = dma.done %s317, 128
        $region52: #{mel_encoder_forward.8} parent=47 // pred_fallthru
          _
        // Predicated region
        $region53: #{mel_encoder_forward.8} parent=47 // pred_check
          %p325 = pneg %p69
        $region54: #{mel_encoder_forward.8} parent=47 // pred_check_branch
          %327 = sbr.rel (%p325) target = $region56
        $region55: #{mel_encoder_forward.8} parent=47 // pred_region
          %328 = dma.done [#allocation6], 2048
        $region56: #{mel_encoder_forward.8} parent=47 // pred_fallthru
          _
        // Predicated region
        $region57: #{mel_encoder_forward.8} parent=47 // pred_check
          %p329 = pneg %p90
        $region58: #{mel_encoder_forward.8} parent=47 // pred_check_branch
          %331 = sbr.rel (%p329) target = $region60
        $region59: #{mel_encoder_forward.8} parent=47 // pred_region
          %332 = dma.done [#allocation6], 2048
        $region60: #{mel_encoder_forward.8} parent=47 // pred_fallthru
          _
        // Predicated region
        $region61: #{mel_encoder_forward.8} parent=47 // pred_check
          %p333 = pneg %p111
        $region62: #{mel_encoder_forward.8} parent=47 // pred_check_branch
          %335 = sbr.rel (%p333) target = $region64
        $region63: #{mel_encoder_forward.8} parent=47 // pred_region
          %336 = dma.done [#allocation9], 2048
        $region64: #{mel_encoder_forward.8} parent=47 // pred_fallthru
          _
        // Predicated region
        $region65: #{mel_encoder_forward.8} parent=47 // pred_check
          %p337 = pneg %p132
        $region66: #{mel_encoder_forward.8} parent=47 // pred_check_branch
          %339 = sbr.rel (%p337) target = $region68
        $region67: #{mel_encoder_forward.8} parent=47 // pred_region
          %340 = dma.done [#allocation9], 32
        $region68: #{mel_encoder_forward.8} parent=47 // pred_fallthru
          _
        // Predicated region
        $region69: #{mel_encoder_forward.8} parent=47 // pred_check
          %p341 = pneg %p153
        $region70: #{mel_encoder_forward.8} parent=47 // pred_check_branch
          %343 = sbr.rel (%p341) target = $region72
        $region71: #{mel_encoder_forward.8} parent=47 // pred_region
          %344 = dma.done [#allocation12], 16
        $region72: #{mel_encoder_forward.8} parent=47 // pred_fallthru
          _
        // Predicated region
        $region73: #{mel_encoder_forward.8} parent=47 // pred_check
          %p345 = pneg %p174
        $region74: #{mel_encoder_forward.8} parent=47 // pred_check_branch
          %347 = sbr.rel (%p345) target = $region76
        $region75: #{mel_encoder_forward.8} parent=47 // pred_region
          %348 = dma.done [#allocation12], 16
        $region76: #{mel_encoder_forward.8} parent=47 // pred_fallthru
          _
        %s349 = sand.u32 %s35, 1
        %s350 = scalar_lea.sflag [#allocation3], %s349
        %s351 = sand.u32 %s35, 1
        %s352 = smul.addr %s351, 8
        %s353 = scalar_lea.vmem [#allocation2], %s352
        %p354 = pneg %p48
        %p355 = pneg %p45
        %p356 = pneg %p69
        %p357 = pneg %p66
        %p358 = pneg %p90
        %p359 = pneg %p87
        %p360 = pneg %p111
        %p361 = pneg %p108
        %p362 = pneg %p132
        %p363 = pneg %p129
        %p364 = pneg %p153
        %p365 = pneg %p150
        %p366 = pneg %p174
        %p367 = pneg %p171
        %p368 = pneg %p200
        %p369 = pneg %p197
        %s370 = sand.u32 %s187, 1
        %s371 = scalar_lea.sflag [#allocation4], %s370
        %s372 = sand.u32 %s187, 1
        %s373 = smul.addr %s372, 8
        %s374 = scalar_lea.vmem [#allocation14], %s373
        %v376 = vld [vmem:[%s320] sm:$0xff]
        %v378 = vrot.slane %v376, 6
        %vm380 = vcmask 1041408
        %v381 = vsel %vm380, 0.0, %v378
        %v382 = vrot.slane %v376, 2
        %vm384 = vcmask 1045504
        %v385 = vsel %vm384, %v382, 0.0
        %v386 = vpack.c.bf16 %v381, %v381
        %v387 = vld [vmem:[#allocation5] sm:$0xff]
        %v388 = vld [vmem:[#allocation5 + $0x8] sm:$0xff]
        %v389 = vld [vmem:[#allocation5 + $0x10] sm:$0xff]
        %v390 = vld [vmem:[#allocation5 + $0x18] sm:$0xff]
        %v391 = vld [vmem:[#allocation5 + $0x20] sm:$0xff]
        %v392 = vld [vmem:[#allocation5 + $0x28] sm:$0xff]
        %v393 = vld [vmem:[#allocation5 + $0x30] sm:$0xff]
        %v394 = vld [vmem:[#allocation5 + $0x38] sm:$0xff]
        %v395 = vld [vmem:[#allocation5 + $0x40] sm:$0xff]
        %v396 = vld [vmem:[#allocation5 + $0x48] sm:$0xff]
        %v397 = vld [vmem:[#allocation5 + $0x50] sm:$0xff]
        %v398 = vld [vmem:[#allocation5 + $0x58] sm:$0xff]
        %v399 = vld [vmem:[#allocation5 + $0x60] sm:$0xff]
        %v400 = vld [vmem:[#allocation5 + $0x68] sm:$0xff]
        %v401 = vld [vmem:[#allocation5 + $0x70] sm:$0xff]
        %v402 = vld [vmem:[#allocation5 + $0x78] sm:$0xff]
        %v403 = vpack.c.bf16 %v376, %v376
        %v404 = vld [vmem:[#allocation7] sm:$0xff]
        %v405 = vld [vmem:[#allocation7 + $0x8] sm:$0xff]
        %v406 = vld [vmem:[#allocation7 + $0x10] sm:$0xff]
        %v407 = vld [vmem:[#allocation7 + $0x18] sm:$0xff]
        %v408 = vld [vmem:[#allocation7 + $0x20] sm:$0xff]
        %v409 = vld [vmem:[#allocation7 + $0x28] sm:$0xff]
        %v410 = vld [vmem:[#allocation7 + $0x30] sm:$0xff]
        %v411 = vld [vmem:[#allocation7 + $0x38] sm:$0xff]
        %v412 = vld [vmem:[#allocation7 + $0x40] sm:$0xff]
        %v413 = vld [vmem:[#allocation7 + $0x48] sm:$0xff]
        %v414 = vld [vmem:[#allocation7 + $0x50] sm:$0xff]
        %v415 = vld [vmem:[#allocation7 + $0x58] sm:$0xff]
        %v416 = vld [vmem:[#allocation7 + $0x60] sm:$0xff]
        %v417 = vld [vmem:[#allocation7 + $0x68] sm:$0xff]
        %v418 = vld [vmem:[#allocation7 + $0x70] sm:$0xff]
        %v419 = vld [vmem:[#allocation7 + $0x78] sm:$0xff]
        %v436 = vunpack.c.l.b16 %v404
        %v437 = vunpack.c.h.b16 %v404
        %v438 = vunpack.c.l.b16 %v405
        %v439 = vunpack.c.h.b16 %v405
        %v440 = vunpack.c.l.b16 %v406
        %v441 = vunpack.c.h.b16 %v406
        %v442 = vunpack.c.l.b16 %v407
        %v443 = vunpack.c.h.b16 %v407
        %v444 = vunpack.c.l.b16 %v408
        %v445 = vunpack.c.h.b16 %v408
        %v446 = vunpack.c.l.b16 %v409
        %v447 = vunpack.c.h.b16 %v409
        %v448 = vunpack.c.l.b16 %v410
        %v449 = vunpack.c.h.b16 %v410
        %v450 = vunpack.c.l.b16 %v411
        %v451 = vunpack.c.h.b16 %v411
        %v452 = vunpack.c.l.b16 %v412
        %v453 = vunpack.c.h.b16 %v412
        %v454 = vunpack.c.l.b16 %v413
        %v455 = vunpack.c.h.b16 %v413
        %v456 = vunpack.c.l.b16 %v414
        %v457 = vunpack.c.h.b16 %v414
        %v458 = vunpack.c.l.b16 %v415
        %v459 = vunpack.c.h.b16 %v415
        %v460 = vunpack.c.l.b16 %v416
        %v461 = vunpack.c.h.b16 %v416
        %v462 = vunpack.c.l.b16 %v417
        %v463 = vunpack.c.h.b16 %v417
        %v464 = vunpack.c.l.b16 %v418
        %v465 = vunpack.c.h.b16 %v418
        %v466 = vunpack.c.l.b16 %v419
        %v467 = vunpack.c.h.b16 %v419
        %v468 = vpack.c.b16 %v438, %v436
        %v469 = vpack.c.b16 %v439, %v437
        %v470 = vpack.c.b16 %v442, %v440
        %v471 = vpack.c.b16 %v443, %v441
        %v472 = vpack.c.b16 %v446, %v444
        %v473 = vpack.c.b16 %v447, %v445
        %v474 = vpack.c.b16 %v450, %v448
        %v475 = vpack.c.b16 %v451, %v449
        %v476 = vpack.c.b16 %v454, %v452
        %v477 = vpack.c.b16 %v455, %v453
        %v478 = vpack.c.b16 %v458, %v456
        %v479 = vpack.c.b16 %v459, %v457
        %v480 = vpack.c.b16 %v462, %v460
        %v481 = vpack.c.b16 %v463, %v461
        %v482 = vpack.c.b16 %v466, %v464
        %v483 = vpack.c.b16 %v467, %v465
        %500 = vmatprep.subr.bf16.mxu0 %v469
        %501 = vmatpush1.bf16.msra.mxu0 %v468
        %502 = vmatprep.subr.bf16.mxu0 %v471
        %503 = vmatpush1.bf16.msra.mxu0 %v470
        %504 = vmatprep.subr.bf16.mxu0 %v473
        %505 = vmatpush1.bf16.msra.mxu0 %v472
        %506 = vmatprep.subr.bf16.mxu0 %v475
        %507 = vmatpush1.bf16.msra.mxu0 %v474
        %508 = vmatprep.subr.bf16.mxu0 %v477
        %509 = vmatpush1.bf16.msra.mxu0 %v476
        %510 = vmatprep.subr.bf16.mxu0 %v479
        %511 = vmatpush1.bf16.msra.mxu0 %v478
        %512 = vmatprep.subr.bf16.mxu0 %v481
        %513 = vmatpush1.bf16.msra.mxu0 %v480
        %514 = vmatprep.subr.bf16.mxu0 %v483
        %515 = vmatpush1.bf16.msra.mxu0 %v482
        %516 = vmatprep.subr.bf16.mxu0 0
        %517 = vmatpush1.bf16.msra.mxu0 0
        %518 = vmatprep.subr.bf16.mxu0 0
        %519 = vmatpush1.bf16.msra.mxu0 0
        %520 = vmatprep.subr.bf16.mxu0 0
        %521 = vmatpush1.bf16.msra.mxu0 0
        %522 = vmatprep.subr.bf16.mxu0 0
        %523 = vmatpush1.bf16.msra.mxu0 0
        %524 = vmatprep.subr.bf16.mxu0 0
        %525 = vmatpush1.bf16.msra.mxu0 0
        %526 = vmatprep.subr.bf16.mxu0 0
        %527 = vmatpush1.bf16.msra.mxu0 0
        %528 = vmatprep.subr.bf16.mxu0 0
        %529 = vmatpush1.bf16.msra.mxu0 0
        %530 = vmatprep.subr.bf16.mxu0 0
        %531 = vmatpush1.bf16.msra.mxu0 0
        %532 = vmatprep.mubr.bf16.mxu0 0
        %533 = vmatmul.mubr.bf16.gmra.mrb[0].mxu0 %v403
        %v534 = vpop.f32.mrb[0].mxu0
        %v535 = vadd.f32 0.0, %v534
        %v536 = vpop.f32.mrb[0].mxu0
        %v537 = vadd.f32 0.0, %v536
        %v538 = vpop.f32.mrb[0].mxu0
        %v539 = vpop.f32.mrb[0].mxu0
        %540 = vdwg.mxu0
        %v557 = vunpack.c.l.b16 %v387
        %v558 = vunpack.c.h.b16 %v387
        %v559 = vunpack.c.l.b16 %v388
        %v560 = vunpack.c.h.b16 %v388
        %v561 = vunpack.c.l.b16 %v389
        %v562 = vunpack.c.h.b16 %v389
        %v563 = vunpack.c.l.b16 %v390
        %v564 = vunpack.c.h.b16 %v390
        %v565 = vunpack.c.l.b16 %v391
        %v566 = vunpack.c.h.b16 %v391
        %v567 = vunpack.c.l.b16 %v392
        %v568 = vunpack.c.h.b16 %v392
        %v569 = vunpack.c.l.b16 %v393
        %v570 = vunpack.c.h.b16 %v393
        %v571 = vunpack.c.l.b16 %v394
        %v572 = vunpack.c.h.b16 %v394
        %v573 = vunpack.c.l.b16 %v395
        %v574 = vunpack.c.h.b16 %v395
        %v575 = vunpack.c.l.b16 %v396
        %v576 = vunpack.c.h.b16 %v396
        %v577 = vunpack.c.l.b16 %v397
        %v578 = vunpack.c.h.b16 %v397
        %v579 = vunpack.c.l.b16 %v398
        %v580 = vunpack.c.h.b16 %v398
        %v581 = vunpack.c.l.b16 %v399
        %v582 = vunpack.c.h.b16 %v399
        %v583 = vunpack.c.l.b16 %v400
        %v584 = vunpack.c.h.b16 %v400
        %v585 = vunpack.c.l.b16 %v401
        %v586 = vunpack.c.h.b16 %v401
        %v587 = vunpack.c.l.b16 %v402
        %v588 = vunpack.c.h.b16 %v402
        %v589 = vpack.c.b16 %v559, %v557
        %v590 = vpack.c.b16 %v560, %v558
        %v591 = vpack.c.b16 %v563, %v561
        %v592 = vpack.c.b16 %v564, %v562
        %v593 = vpack.c.b16 %v567, %v565
        %v594 = vpack.c.b16 %v568, %v566
        %v595 = vpack.c.b16 %v571, %v569
        %v596 = vpack.c.b16 %v572, %v570
        %v597 = vpack.c.b16 %v575, %v573
        %v598 = vpack.c.b16 %v576, %v574
        %v599 = vpack.c.b16 %v579, %v577
        %v600 = vpack.c.b16 %v580, %v578
        %v601 = vpack.c.b16 %v583, %v581
        %v602 = vpack.c.b16 %v584, %v582
        %v603 = vpack.c.b16 %v587, %v585
        %v604 = vpack.c.b16 %v588, %v586
        %621 = vmatprep.subr.bf16.mxu0 %v590
        %622 = vmatpush1.bf16.msra.mxu0 %v589
        %623 = vmatprep.subr.bf16.mxu0 %v592
        %624 = vmatpush1.bf16.msra.mxu0 %v591
        %625 = vmatprep.subr.bf16.mxu0 %v594
        %626 = vmatpush1.bf16.msra.mxu0 %v593
        %627 = vmatprep.subr.bf16.mxu0 %v596
        %628 = vmatpush1.bf16.msra.mxu0 %v595
        %629 = vmatprep.subr.bf16.mxu0 %v598
        %630 = vmatpush1.bf16.msra.mxu0 %v597
        %631 = vmatprep.subr.bf16.mxu0 %v600
        %632 = vmatpush1.bf16.msra.mxu0 %v599
        %633 = vmatprep.subr.bf16.mxu0 %v602
        %634 = vmatpush1.bf16.msra.mxu0 %v601
        %635 = vmatprep.subr.bf16.mxu0 %v604
        %636 = vmatpush1.bf16.msra.mxu0 %v603
        %637 = vmatprep.subr.bf16.mxu0 0
        %638 = vmatpush1.bf16.msra.mxu0 0
        %639 = vmatprep.subr.bf16.mxu0 0
        %640 = vmatpush1.bf16.msra.mxu0 0
        %641 = vmatprep.subr.bf16.mxu0 0
        %642 = vmatpush1.bf16.msra.mxu0 0
        %643 = vmatprep.subr.bf16.mxu0 0
        %644 = vmatpush1.bf16.msra.mxu0 0
        %645 = vmatprep.subr.bf16.mxu0 0
        %646 = vmatpush1.bf16.msra.mxu0 0
        %647 = vmatprep.subr.bf16.mxu0 0
        %648 = vmatpush1.bf16.msra.mxu0 0
        %649 = vmatprep.subr.bf16.mxu0 0
        %650 = vmatpush1.bf16.msra.mxu0 0
        %651 = vmatprep.subr.bf16.mxu0 0
        %652 = vmatpush1.bf16.msra.mxu0 0
        %653 = vmatprep.mubr.bf16.mxu0 0
        %654 = vmatmul.mubr.bf16.gmra.mrb[0].mxu0 %v386
        %v655 = vpop.f32.mrb[0].mxu0
        %v656 = vadd.f32 %v535, %v655
        %v657 = vpop.f32.mrb[0].mxu0
        %v658 = vadd.f32 %v537, %v657
        %v659 = vpop.f32.mrb[0].mxu0
        %v660 = vpop.f32.mrb[0].mxu0
        %661 = vdwg.mxu0
        %v662 = vpack.c.bf16 %v385, %v385
        %v663 = vld [vmem:[#allocation8] sm:$0xff]
        %v664 = vld [vmem:[#allocation8 + $0x8] sm:$0xff]
        %v665 = vld [vmem:[#allocation8 + $0x10] sm:$0xff]
        %v666 = vld [vmem:[#allocation8 + $0x18] sm:$0xff]
        %v667 = vld [vmem:[#allocation8 + $0x20] sm:$0xff]
        %v668 = vld [vmem:[#allocation8 + $0x28] sm:$0xff]
        %v669 = vld [vmem:[#allocation8 + $0x30] sm:$0xff]
        %v670 = vld [vmem:[#allocation8 + $0x38] sm:$0xff]
        %v671 = vld [vmem:[#allocation8 + $0x40] sm:$0xff]
        %v672 = vld [vmem:[#allocation8 + $0x48] sm:$0xff]
        %v673 = vld [vmem:[#allocation8 + $0x50] sm:$0xff]
        %v674 = vld [vmem:[#allocation8 + $0x58] sm:$0xff]
        %v675 = vld [vmem:[#allocation8 + $0x60] sm:$0xff]
        %v676 = vld [vmem:[#allocation8 + $0x68] sm:$0xff]
        %v677 = vld [vmem:[#allocation8 + $0x70] sm:$0xff]
        %v678 = vld [vmem:[#allocation8 + $0x78] sm:$0xff]
        %v695 = vunpack.c.l.b16 %v663
        %v696 = vunpack.c.h.b16 %v663
        %v697 = vunpack.c.l.b16 %v664
        %v698 = vunpack.c.h.b16 %v664
        %v699 = vunpack.c.l.b16 %v665
        %v700 = vunpack.c.h.b16 %v665
        %v701 = vunpack.c.l.b16 %v666
        %v702 = vunpack.c.h.b16 %v666
        %v703 = vunpack.c.l.b16 %v667
        %v704 = vunpack.c.h.b16 %v667
        %v705 = vunpack.c.l.b16 %v668
        %v706 = vunpack.c.h.b16 %v668
        %v707 = vunpack.c.l.b16 %v669
        %v708 = vunpack.c.h.b16 %v669
        %v709 = vunpack.c.l.b16 %v670
        %v710 = vunpack.c.h.b16 %v670
        %v711 = vunpack.c.l.b16 %v671
        %v712 = vunpack.c.h.b16 %v671
        %v713 = vunpack.c.l.b16 %v672
        %v714 = vunpack.c.h.b16 %v672
        %v715 = vunpack.c.l.b16 %v673
        %v716 = vunpack.c.h.b16 %v673
        %v717 = vunpack.c.l.b16 %v674
        %v718 = vunpack.c.h.b16 %v674
        %v719 = vunpack.c.l.b16 %v675
        %v720 = vunpack.c.h.b16 %v675
        %v721 = vunpack.c.l.b16 %v676
        %v722 = vunpack.c.h.b16 %v676
        %v723 = vunpack.c.l.b16 %v677
        %v724 = vunpack.c.h.b16 %v677
        %v725 = vunpack.c.l.b16 %v678
        %v726 = vunpack.c.h.b16 %v678
        %v727 = vpack.c.b16 %v697, %v695
        %v728 = vpack.c.b16 %v698, %v696
        %v729 = vpack.c.b16 %v701, %v699
        %v730 = vpack.c.b16 %v702, %v700
        %v731 = vpack.c.b16 %v705, %v703
        %v732 = vpack.c.b16 %v706, %v704
        %v733 = vpack.c.b16 %v709, %v707
        %v734 = vpack.c.b16 %v710, %v708
        %v735 = vpack.c.b16 %v713, %v711
        %v736 = vpack.c.b16 %v714, %v712
        %v737 = vpack.c.b16 %v717, %v715
        %v738 = vpack.c.b16 %v718, %v716
        %v739 = vpack.c.b16 %v721, %v719
        %v740 = vpack.c.b16 %v722, %v720
        %v741 = vpack.c.b16 %v725, %v723
        %v742 = vpack.c.b16 %v726, %v724
        %759 = vmatprep.subr.bf16.mxu0 %v728
        %760 = vmatpush1.bf16.msra.mxu0 %v727
        %761 = vmatprep.subr.bf16.mxu0 %v730
        %762 = vmatpush1.bf16.msra.mxu0 %v729
        %763 = vmatprep.subr.bf16.mxu0 %v732
        %764 = vmatpush1.bf16.msra.mxu0 %v731
        %765 = vmatprep.subr.bf16.mxu0 %v734
        %766 = vmatpush1.bf16.msra.mxu0 %v733
        %767 = vmatprep.subr.bf16.mxu0 %v736
        %768 = vmatpush1.bf16.msra.mxu0 %v735
        %769 = vmatprep.subr.bf16.mxu0 %v738
        %770 = vmatpush1.bf16.msra.mxu0 %v737
        %771 = vmatprep.subr.bf16.mxu0 %v740
        %772 = vmatpush1.bf16.msra.mxu0 %v739
        %773 = vmatprep.subr.bf16.mxu0 %v742
        %774 = vmatpush1.bf16.msra.mxu0 %v741
        %775 = vmatprep.subr.bf16.mxu0 0
        %776 = vmatpush1.bf16.msra.mxu0 0
        %777 = vmatprep.subr.bf16.mxu0 0
        %778 = vmatpush1.bf16.msra.mxu0 0
        %779 = vmatprep.subr.bf16.mxu0 0
        %780 = vmatpush1.bf16.msra.mxu0 0
        %781 = vmatprep.subr.bf16.mxu0 0
        %782 = vmatpush1.bf16.msra.mxu0 0
        %783 = vmatprep.subr.bf16.mxu0 0
        %784 = vmatpush1.bf16.msra.mxu0 0
        %785 = vmatprep.subr.bf16.mxu0 0
        %786 = vmatpush1.bf16.msra.mxu0 0
        %787 = vmatprep.subr.bf16.mxu0 0
        %788 = vmatpush1.bf16.msra.mxu0 0
        %789 = vmatprep.subr.bf16.mxu0 0
        %790 = vmatpush1.bf16.msra.mxu0 0
        %791 = vmatprep.mubr.bf16.mxu0 0
        %792 = vmatmul.mubr.bf16.gmra.mrb[0].mxu0 %v662
        %v793 = vpop.f32.mrb[0].mxu0
        %v794 = vadd.f32 0.0, %v793
        %v795 = vpop.f32.mrb[0].mxu0
        %v796 = vadd.f32 0.0, %v795
        %v797 = vpop.f32.mrb[0].mxu0
        %v798 = vpop.f32.mrb[0].mxu0
        %799 = vdwg.mxu0
        %v800 = vadd.f32 %v656, %v794
        %v801 = vadd.f32 %v658, %v796
        %v802 = vld [vmem:[#allocation10] sm:$0x3]
        %v804 = vlaneseq
        %v805 = vshrl.u32 %v804, 7
        %v806 = vsub.s32 0, %v805
        %v807 = vrot.slane %v802, %v806
        %v808 = vlaneseq
        %v809 = vshrl.u32 %v808, 7
        %v810 = vsub.s32 1, %v809
        %v811 = vrot.slane %v802, %v810
        %v814 = vadd.f32 %v800, %v807
        %v815 = vadd.f32 %v801, %v811
        %v816 = vxor.u32 %v815, 2147483648
        %v817 = vmul.f32 %v816, 1.442695
        %v818 = vpow.pop %v817
        %v819 = vadd.f32 %v818, 1.0
        %v820 = vrcp.pop %v819
        %v821 = vmul.f32 1.0, %v820
        %v822 = vtanh.pop %v814
        %v823 = vmul.f32 %v821, %v822
        %v824 = vadd.f32 %v376, %v823
        %v825 = vld [vmem:[#allocation11] sm:$0x1]
        %v826 = vld [vmem:[#allocation13] sm:$0x1]
        %827 = vadd.xlane.f32.xlu0 %v824
        %v828 = vpop.xlane.xlu0 %827
        %v829 = vrcp.pop 128.0
        %v830 = vmul.f32 %v828, %v829
        %v831 = vsub.f32 %v824, %v830
        %v832 = vmul.f32 %v831, %v831
        %833 = vadd.xlane.f32.xlu0 %v832
        %v834 = vpop.xlane.xlu0 %833
        %v835 = vmul.f32 %v834, %v829
        %v836 = vadd.f32 %v835, 1e-05
        %v837 = vrsqrt.pop %v836
        %v838 = vmul.f32 %v831, %v837
        %v840 = vlaneseq
        %v841 = vshrl.u32 %v840, 7
        %v842 = vsub.s32 0, %v841
        %v843 = vrot.slane %v825, %v842
        %v845 = vmul.f32 %v838, %v843
        %v847 = vlaneseq
        %v848 = vshrl.u32 %v847, 7
        %v849 = vsub.s32 0, %v848
        %v850 = vrot.slane %v826, %v849
        %v852 = vadd.f32 %v845, %v850
        %853 = vst [vmem:[%s374] sm:$0xff] %v852
        %s854 = sand.u32 %s187, 1
        %s855 = scalar_lea.sflag [#allocation4], %s854
        %s856 = sand.u32 %s187, 1
        %s857 = smul.addr %s856, 8
        %s858 = scalar_lea.vmem [#allocation14], %s857
        // Predicated region
        $region77: #{mel_encoder_forward.8} parent=47 // pred_check
          %p859 = pneg %p197
        $region78: #{mel_encoder_forward.8} parent=47 // pred_check_branch
          %861 = sbr.rel (%p859) target = $region80
        $region79: #{mel_encoder_forward.8} parent=47 // pred_region
          %s863 = ssub.s32 128, 128
          %864 = vsyncadd %s855, %s863
          %s865 = smul.addr %s27, 128
          %s866 = scalar_lea.hbm %s7, %s865
          %s868 = sshll.u32 %s858, 4
          %s869 = int_to_ptr.vmem [resolvable:$true] %s868
          %871 = dma.vmem_to_hbm [thread:$0]  %s869, 128, %s866, %s855
        $region80: #{mel_encoder_forward.8} parent=47 // pred_fallthru
          _
      $region48: #{mel_encoder_forward.8} parent=5 // pred_fallthru
        _
      %p872 = scmp.le.s32.totalorder 2, %s22
      // Predicated region
      $region81: #{mel_encoder_forward.8} parent=5 // pred_check
        %p873 = pneg %p872
      $region82: #{mel_encoder_forward.8} parent=5 // pred_check_branch
        %875 = sbr.rel (%p873) target = $region84
      $region83: #{mel_encoder_forward.8} parent=5 // pred_region
        %s876 = ssub.s32 %s22, 2
        // Predicated region
        $region85: #{mel_encoder_forward.8} parent=83 // pred_check
          %p877 = pneg %p203
        $region86: #{mel_encoder_forward.8} parent=83 // pred_check_branch
          %879 = sbr.rel (%p877) target = $region88
        $region87: #{mel_encoder_forward.8} parent=83 // pred_region
          %s880 = sand.u32 %s188, 1
          %s881 = scalar_lea.sflag [#allocation4], %s880
          %s882 = sand.u32 %s188, 1
          %s883 = smul.addr %s882, 8
          %s884 = scalar_lea.vmem [#allocation14], %s883
          %885 = dma.done %s881, 128
        $region88: #{mel_encoder_forward.8} parent=83 // pred_fallthru
          _
      $region84: #{mel_encoder_forward.8} parent=5 // pred_fallthru
        _
    $region6: #{mel_encoder_forward.8} parent=1 // loop_footer
      %s26 = sadd.s32 1, %s22
    $region7: #{mel_encoder_forward.8} parent=1 // loop_footer_branch
      %21 = sbr.rel target = $region3
    $region8: #{mel_encoder_forward.8} parent=1 // loop_exit
      _
    %886 = vsyncpa [#allocation3], 1
    %s887 = scalar_lea.sflag [#allocation3], 1
    %888 = vsyncpa %s887, 1
    %889 = vsyncpa [#allocation6], 1
    %890 = vsyncpa [#allocation9], 1
    %891 = vsyncpa [#allocation12], 1
    %892 = vsyncpa [#allocation4], 1
    %s893 = scalar_lea.sflag [#allocation4], 1
    %894 = vsyncpa %s893, 1

// kernel: mel_encoder_forward.11
$region0: #{mel_encoder_forward.11}
  #allocation0 [shape = 'u32[]', space=smem, size = 0x4, offset = 0x4, fixed_abs, tag = 'smem constant byte address 0x4 - core index']
  #allocation1 [shape = 'u32[144,128]{1,0:T(1,128)}', space=vmem, size = 0x12000, scoped, tag = 'internal scratch']
  %s0 = inlined_call_operand.vmem [shape: f32[2,8,128], index: 0, kind: input, shape index: {}]
  %s1 = inlined_call_operand.vmem [shape: f32[2,1,128], index: 1, kind: input, shape index: {}]
  %s2 = inlined_call_operand.vmem [shape: bf16[128,128], index: 2, kind: input, shape index: {}]
  %s3 = inlined_call_operand.vmem [shape: bf16[128,128], index: 3, kind: input, shape index: {}]
  %s4 = inlined_call_operand.vmem [shape: f32[1,128], index: 4, kind: input, shape index: {}]
  %s5 = inlined_call_operand.hbm [shape: f32[2,8,128], index: 5, kind: output, shape index: {}]
  %s6 = sld [smem:[#allocation0]]
  $region53: #{mel_encoder_forward.11} parent=0
    _
  %s8 = ssub.s32 1, %s6
  %s9 = scalar_select 0, %s8, %s6
  $region1: #{mel_encoder_forward.11} parent=0
    #allocation2 [shape = 'u8[8192]{0}', space=vmem, size = 0x2000, scoped, tag = 'output window, operand 0']
    #allocation3 [shape = 's32[2]{0}', space=sflag, size = 0x8, scoped, tag = 'scoped memory for mel_encoder_forward.11']
    %10 = vsyncpa [#allocation3], 0
    %s11 = scalar_lea.sflag [#allocation3], 1
    %12 = vsyncpa %s11, 0
    loop: start=0, step=1, limit=4
    $region2: #{mel_encoder_forward.11} parent=1 // loop_pre_header
      _
    $region3: #{mel_encoder_forward.11} parent=1 // loop_header
      %s14 = sphi 0, %s18
      %p15 = scmp.ge.s32.totalorder %s14, 4
      %s21 = sphi 0, %s33
      %s22 = sphi 0, %s29
      %s23 = sphi 0, %s21
      %s24 = sphi 0, %s22
      %s25 = sphi 0, %s23
      %s26 = sphi 0, %s24
      %s38 = sphi 0, %s40
      %s41 = sphi 0, %s38
      %s42 = sphi 0, %s41
      %s58 = sphi 0, %s42
      %s64 = sphi 0, %s66
      %s67 = sphi 0, %s64
      %s68 = sphi 0, %s67
      %s84 = sphi 0, %s68
      %s88 = sphi 0, %s88
      %s90 = sphi 0, %s88
      %s91 = sphi 0, %s90
      %s105 = sphi 0, %s91
      %s109 = sphi 0, %s109
      %s111 = sphi 0, %s109
      %s112 = sphi 0, %s111
      %s126 = sphi 0, %s112
      %s130 = sphi 0, %s130
      %s132 = sphi 0, %s130
      %s133 = sphi 0, %s132
      %s147 = sphi 0, %s133
      %s155 = sphi 0, %s157
      %s158 = sphi 0, %s155
      %s159 = sphi 0, %s158
      %s175 = sphi 0, %s159
    $region4: #{mel_encoder_forward.11} parent=1 // loop_header_branch
      %17 = sbr.rel (%p15) target = $region8
    $region5: #{mel_encoder_forward.11} parent=1 // loop_body
      %s19 = ssub.s32 %s14, 1
      %s20 = ssub.s32 %s14, 2
      %s27 = sadd.s32 1, %s22
      %p28 = scmp.ge.s32.totalorder %s27, 1
      %s29 = scalar_select %p28, 0, %s27
      %s30 = sadd.s32 1, %s21
      %s31 = scalar_select %p28, %s30, %s21
      %p32 = scmp.ge.s32.totalorder %s31, 2
      %s33 = scalar_select %p32, 0, %s31
      %s34 = ssub.s32 %s21, %s33
      %s35 = ssub.s32 %s22, %s29
      %s36 = sor.u32 %s34, %s35
      %p37 = scmp.eq.s32.totalorder %s36, 0
      %s39 = sadd.s32 %s38, 1
      %s40 = scalar_select %p37, %s38, %s39
      %p43 = pneg %p37
      %p44 = scmp.eq.s32.totalorder %s14, 1
      %p45 = por %p43, %p44
      %p46 = scmp.ne.s32.totalorder %s38, %s41
      %p47 = scmp.eq.s32.totalorder %s14, 0
      %p48 = por %p46, %p47
      %p49 = scmp.ne.s32.totalorder %s38, %s41
      %p50 = scmp.eq.s32.totalorder %s19, 1
      %p51 = por %p49, %p50
      %p52 = scmp.ne.s32.totalorder %s41, %s42
      %p53 = scmp.eq.s32.totalorder %s19, 0
      %p54 = por %p52, %p53
      %p55 = scmp.ne.s32.totalorder %s41, %s42
      %p56 = scmp.eq.s32.totalorder %s20, 1
      %p57 = por %p55, %p56
      %p59 = scmp.ne.s32.totalorder %s42, %s58
      %p60 = scmp.eq.s32.totalorder %s20, 0
      %p61 = por %p59, %p60
      %s62 = ssub.s32 %s21, %s33
      %p63 = scmp.eq.s32.totalorder %s62, 0
      %s65 = sadd.s32 %s64, 1
      %s66 = scalar_select %p63, %s64, %s65
      %p69 = pneg %p63
      %p70 = scmp.eq.s32.totalorder %s14, 1
      %p71 = por %p69, %p70
      %p72 = scmp.ne.s32.totalorder %s64, %s67
      %p73 = scmp.eq.s32.totalorder %s14, 0
      %p74 = por %p72, %p73
      %p75 = scmp.ne.s32.totalorder %s64, %s67
      %p76 = scmp.eq.s32.totalorder %s19, 1
      %p77 = por %p75, %p76
      %p78 = scmp.ne.s32.totalorder %s67, %s68
      %p79 = scmp.eq.s32.totalorder %s19, 0
      %p80 = por %p78, %p79
      %p81 = scmp.ne.s32.totalorder %s67, %s68
      %p82 = scmp.eq.s32.totalorder %s20, 1
      %p83 = por %p81, %p82
      %p85 = scmp.ne.s32.totalorder %s68, %s84
      %p86 = scmp.eq.s32.totalorder %s20, 0
      %p87 = por %p85, %p86
      %s89 = sadd.s32 %s88, 1
      %p92 = scmp.eq.s32.totalorder %s14, 1
      %p93 = scmp.ne.s32.totalorder %s88, %s90
      %p94 = scmp.eq.s32.totalorder %s14, 0
      %p95 = por %p93, %p94
      %p96 = scmp.ne.s32.totalorder %s88, %s90
      %p97 = scmp.eq.s32.totalorder %s19, 1
      %p98 = por %p96, %p97
      %p99 = scmp.ne.s32.totalorder %s90, %s91
      %p100 = scmp.eq.s32.totalorder %s19, 0
      %p101 = por %p99, %p100
      %p102 = scmp.ne.s32.totalorder %s90, %s91
      %p103 = scmp.eq.s32.totalorder %s20, 1
      %p104 = por %p102, %p103
      %p106 = scmp.ne.s32.totalorder %s91, %s105
      %p107 = scmp.eq.s32.totalorder %s20, 0
      %p108 = por %p106, %p107
      %s110 = sadd.s32 %s109, 1
      %p113 = scmp.eq.s32.totalorder %s14, 1
      %p114 = scmp.ne.s32.totalorder %s109, %s111
      %p115 = scmp.eq.s32.totalorder %s14, 0
      %p116 = por %p114, %p115
      %p117 = scmp.ne.s32.totalorder %s109, %s111
      %p118 = scmp.eq.s32.totalorder %s19, 1
      %p119 = por %p117, %p118
      %p120 = scmp.ne.s32.totalorder %s111, %s112
      %p121 = scmp.eq.s32.totalorder %s19, 0
      %p122 = por %p120, %p121
      %p123 = scmp.ne.s32.totalorder %s111, %s112
      %p124 = scmp.eq.s32.totalorder %s20, 1
      %p125 = por %p123, %p124
      %p127 = scmp.ne.s32.totalorder %s112, %s126
      %p128 = scmp.eq.s32.totalorder %s20, 0
      %p129 = por %p127, %p128
      %s131 = sadd.s32 %s130, 1
      %p134 = scmp.eq.s32.totalorder %s14, 1
      %p135 = scmp.ne.s32.totalorder %s130, %s132
      %p136 = scmp.eq.s32.totalorder %s14, 0
      %p137 = por %p135, %p136
      %p138 = scmp.ne.s32.totalorder %s130, %s132
      %p139 = scmp.eq.s32.totalorder %s19, 1
      %p140 = por %p138, %p139
      %p141 = scmp.ne.s32.totalorder %s132, %s133
      %p142 = scmp.eq.s32.totalorder %s19, 0
      %p143 = por %p141, %p142
      %p144 = scmp.ne.s32.totalorder %s132, %s133
      %p145 = scmp.eq.s32.totalorder %s20, 1
      %p146 = por %p144, %p145
      %p148 = scmp.ne.s32.totalorder %s133, %s147
      %p149 = scmp.eq.s32.totalorder %s20, 0
      %p150 = por %p148, %p149
      %s151 = ssub.s32 %s21, %s33
      %s152 = ssub.s32 %s22, %s29
      %s153 = sor.u32 %s151, %s152
      %p154 = scmp.eq.s32.totalorder %s153, 0
      %s156 = sadd.s32 %s155, 1
      %s157 = scalar_select %p154, %s155, %s156
      %p160 = pneg %p154
      %p161 = scmp.eq.s32.totalorder %s14, 1
      %p162 = por %p160, %p161
      %p163 = scmp.ne.s32.totalorder %s155, %s158
      %p164 = scmp.eq.s32.totalorder %s14, 0
      %p165 = por %p163, %p164
      %p166 = scmp.ne.s32.totalorder %s155, %s158
      %p167 = scmp.eq.s32.totalorder %s19, 1
      %p168 = por %p166, %p167
      %p169 = scmp.ne.s32.totalorder %s158, %s159
      %p170 = scmp.eq.s32.totalorder %s19, 0
      %p171 = por %p169, %p170
      %p172 = scmp.ne.s32.totalorder %s158, %s159
      %p173 = scmp.eq.s32.totalorder %s20, 1
      %p174 = por %p172, %p173
      %p176 = scmp.ne.s32.totalorder %s159, %s175
      %p177 = scmp.eq.s32.totalorder %s20, 0
      %p178 = por %p176, %p177
      %p179 = scmp.le.s32.totalorder 1, %s14
      %p180 = scmp.lt.s32.totalorder %s14, 3
      %p181 = pnand %p179, %p180
      %p182 = pneg %p181
      // Predicated region
      $region9: #{mel_encoder_forward.11} parent=5 // pred_check
        _
      $region10: #{mel_encoder_forward.11} parent=5 // pred_check_branch
        %184 = sbr.rel (%p181) target = $region12
      $region11: #{mel_encoder_forward.11} parent=5 // pred_region
        %s185 = ssub.s32 %s14, 1
        // Predicated region
        $region13: #{mel_encoder_forward.11} parent=11 // pred_check
          %p186 = pneg %p101
        $region14: #{mel_encoder_forward.11} parent=11 // pred_check_branch
          %188 = sbr.rel (%p186) target = $region16
        $region15: #{mel_encoder_forward.11} parent=11 // pred_region
          _
        $region16: #{mel_encoder_forward.11} parent=11 // pred_fallthru
          _
        // Predicated region
        $region17: #{mel_encoder_forward.11} parent=11 // pred_check
          %p189 = pneg %p122
        $region18: #{mel_encoder_forward.11} parent=11 // pred_check_branch
          %191 = sbr.rel (%p189) target = $region20
        $region19: #{mel_encoder_forward.11} parent=11 // pred_region
          _
        $region20: #{mel_encoder_forward.11} parent=11 // pred_fallthru
          _
        // Predicated region
        $region21: #{mel_encoder_forward.11} parent=11 // pred_check
          %p192 = pneg %p143
        $region22: #{mel_encoder_forward.11} parent=11 // pred_check_branch
          %194 = sbr.rel (%p192) target = $region24
        $region23: #{mel_encoder_forward.11} parent=11 // pred_region
          _
        $region24: #{mel_encoder_forward.11} parent=11 // pred_fallthru
          _
      $region12: #{mel_encoder_forward.11} parent=5 // pred_fallthru
        _
      %p195 = scmp.lt.s32.totalorder %s14, 2
      // Predicated region
      $region25: #{mel_encoder_forward.11} parent=5 // pred_check
        %p196 = pneg %p195
      $region26: #{mel_encoder_forward.11} parent=5 // pred_check_branch
        %198 = sbr.rel (%p196) target = $region28
      $region27: #{mel_encoder_forward.11} parent=5 // pred_region
        // Predicated region
        $region29: #{mel_encoder_forward.11} parent=27 // pred_check
          %p199 = pneg %p48
        $region30: #{mel_encoder_forward.11} parent=27 // pred_check_branch
          %201 = sbr.rel (%p199) target = $region32
        $region31: #{mel_encoder_forward.11} parent=27 // pred_region
          %p202 = scmp.lt.s32.totalorder %s21, 1
          %s203 = scalar_select %p202, %s21, 1
          %p204 = scmp.lt.s32.totalorder %s22, 0
          %s205 = scalar_select %p204, %s22, 0
          %s206 = sadd.s32 %s205, %s203
          %s207 = smul.addr %s206, 8
          %s208 = scalar_lea.vmem %s0, %s207
        $region32: #{mel_encoder_forward.11} parent=27 // pred_fallthru
          _
        // Predicated region
        $region33: #{mel_encoder_forward.11} parent=27 // pred_check
          %p209 = pneg %p74
        $region34: #{mel_encoder_forward.11} parent=27 // pred_check_branch
          %211 = sbr.rel (%p209) target = $region36
        $region35: #{mel_encoder_forward.11} parent=27 // pred_region
          %p212 = scmp.lt.s32.totalorder %s21, 1
          %s213 = scalar_select %p212, %s21, 1
          %s214 = scalar_lea.vmem %s1, %s213
        $region36: #{mel_encoder_forward.11} parent=27 // pred_fallthru
          _
      $region28: #{mel_encoder_forward.11} parent=5 // pred_fallthru
        _
      %p215 = scmp.le.s32.totalorder 1, %s14
      %p216 = scmp.lt.s32.totalorder %s14, 3
      %p217 = pnand %p215, %p216
      %p218 = pneg %p217
      // Predicated region
      $region37: #{mel_encoder_forward.11} parent=5 // pred_check
        _
      $region38: #{mel_encoder_forward.11} parent=5 // pred_check_branch
        %220 = sbr.rel (%p217) target = $region40
      $region39: #{mel_encoder_forward.11} parent=5 // pred_region
        %s221 = ssub.s32 %s14, 1
        %p222 = scmp.lt.s32.totalorder %s23, 1
        %s223 = scalar_select %p222, %s23, 1
        %p224 = scmp.lt.s32.totalorder %s24, 0
        %s225 = scalar_select %p224, %s24, 0
        %s226 = sadd.s32 %s225, %s223
        %s227 = smul.addr %s226, 8
        %s228 = scalar_lea.vmem %s0, %s227
        %p229 = pneg %p54
        %p230 = pneg %p51
        %p231 = scmp.lt.s32.totalorder %s23, 1
        %s232 = scalar_select %p231, %s23, 1
        %s233 = scalar_lea.vmem %s1, %s232
        %p234 = pneg %p80
        %p235 = pneg %p77
        %p236 = pneg %p101
        %p237 = pneg %p98
        %p238 = pneg %p122
        %p239 = pneg %p119
        %p240 = pneg %p143
        %p241 = pneg %p140
        %p242 = pneg %p171
        %p243 = pneg %p168
        %s244 = sand.u32 %s158, 1
        %s245 = scalar_lea.sflag [#allocation3], %s244
        %s246 = sand.u32 %s158, 1
        %s247 = smul.addr %s246, 8
        %s248 = scalar_lea.vmem [#allocation2], %s247
        %p249 = scmp.lt.s32.totalorder %s23, 1
        %s250 = scalar_select %p249, %s23, 1
        %p251 = scmp.lt.s32.totalorder %s24, 0
        %s252 = scalar_select %p251, %s24, 0
        %s253 = sadd.s32 %s252, %s250
        %s254 = smul.addr %s253, 8
        %s255 = scalar_lea.vmem %s0, %s254
        %p256 = scmp.lt.s32.totalorder %s23, 1
        %s257 = scalar_select %p256, %s23, 1
        %s258 = scalar_lea.vmem %s1, %s257
        %v260 = vld [vmem:[%s255] sm:$0xff]
        %v261 = vpack.c.bf16 %v260, %v260
        %v262 = vld [vmem:[%s2] sm:$0xf]
        %v263 = vld [vmem:[%s2 + $0x4] sm:$0xf]
        %v264 = vld [vmem:[%s2 + $0x8] sm:$0xf]
        %v265 = vld [vmem:[%s2 + $0xc] sm:$0xf]
        %v266 = vld [vmem:[%s2 + $0x10] sm:$0xf]
        %v267 = vld [vmem:[%s2 + $0x14] sm:$0xf]
        %v268 = vld [vmem:[%s2 + $0x18] sm:$0xf]
        %v269 = vld [vmem:[%s2 + $0x1c] sm:$0xf]
        %v270 = vld [vmem:[%s2 + $0x20] sm:$0xf]
        %v271 = vld [vmem:[%s2 + $0x24] sm:$0xf]
        %v272 = vld [vmem:[%s2 + $0x28] sm:$0xf]
        %v273 = vld [vmem:[%s2 + $0x2c] sm:$0xf]
        %v274 = vld [vmem:[%s2 + $0x30] sm:$0xf]
        %v275 = vld [vmem:[%s2 + $0x34] sm:$0xf]
        %v276 = vld [vmem:[%s2 + $0x38] sm:$0xf]
        %v277 = vld [vmem:[%s2 + $0x3c] sm:$0xf]
        %v278 = vld [vmem:[%s258] sm:$0x1]
        %v280 = vlaneseq
        %v281 = vshrl.u32 %v280, 7
        %v282 = vsub.s32 0, %v281
        %v283 = vrot.slane %v278, %v282
        %v301 = vunpack.c.l.b16 %v262
        %v302 = vunpack.c.l.b16 %v263
        %v303 = vunpack.c.l.b16 %v264
        %v304 = vunpack.c.l.b16 %v265
        %v305 = vunpack.c.l.b16 %v266
        %v306 = vunpack.c.l.b16 %v267
        %v307 = vunpack.c.l.b16 %v268
        %v308 = vunpack.c.l.b16 %v269
        %v309 = vunpack.c.l.b16 %v270
        %v310 = vunpack.c.l.b16 %v271
        %v311 = vunpack.c.l.b16 %v272
        %v312 = vunpack.c.l.b16 %v273
        %v313 = vunpack.c.l.b16 %v274
        %v314 = vunpack.c.l.b16 %v275
        %v315 = vunpack.c.l.b16 %v276
        %v316 = vunpack.c.l.b16 %v277
        %v317 = vpack.c.b16 %v302, %v301
        %v318 = vpack.c.b16 %v304, %v303
        %v319 = vpack.c.b16 %v306, %v305
        %v320 = vpack.c.b16 %v308, %v307
        %v321 = vpack.c.b16 %v310, %v309
        %v322 = vpack.c.b16 %v312, %v311
        %v323 = vpack.c.b16 %v314, %v313
        %v324 = vpack.c.b16 %v316, %v315
        %333 = vmatprep.subr.bf16.mxu0 0
        %334 = vmatpush1.bf16.msra.mxu0 %v317
        %335 = vmatprep.subr.bf16.mxu0 0
        %336 = vmatpush1.bf16.msra.mxu0 %v318
        %337 = vmatprep.subr.bf16.mxu0 0
        %338 = vmatpush1.bf16.msra.mxu0 %v319
        %339 = vmatprep.subr.bf16.mxu0 0
        %340 = vmatpush1.bf16.msra.mxu0 %v320
        %341 = vmatprep.subr.bf16.mxu0 0
        %342 = vmatpush1.bf16.msra.mxu0 %v321
        %343 = vmatprep.subr.bf16.mxu0 0
        %344 = vmatpush1.bf16.msra.mxu0 %v322
        %345 = vmatprep.subr.bf16.mxu0 0
        %346 = vmatpush1.bf16.msra.mxu0 %v323
        %347 = vmatprep.subr.bf16.mxu0 0
        %348 = vmatpush1.bf16.msra.mxu0 %v324
        %349 = vmatprep.subr.bf16.mxu0 0
        %350 = vmatpush1.bf16.msra.mxu0 0
        %351 = vmatprep.subr.bf16.mxu0 0
        %352 = vmatpush1.bf16.msra.mxu0 0
        %353 = vmatprep.subr.bf16.mxu0 0
        %354 = vmatpush1.bf16.msra.mxu0 0
        %355 = vmatprep.subr.bf16.mxu0 0
        %356 = vmatpush1.bf16.msra.mxu0 0
        %357 = vmatprep.subr.bf16.mxu0 0
        %358 = vmatpush1.bf16.msra.mxu0 0
        %359 = vmatprep.subr.bf16.mxu0 0
        %360 = vmatpush1.bf16.msra.mxu0 0
        %361 = vmatprep.subr.bf16.mxu0 0
        %362 = vmatpush1.bf16.msra.mxu0 0
        %363 = vmatprep.subr.bf16.mxu0 0
        %364 = vmatpush1.bf16.msra.mxu0 0
        %365 = vmatprep.mubr.bf16.mxu0 0
        %366 = vmatmul.mubr.bf16.gmra.mrb[0].mxu0 %v261
        %v367 = vpop.f32.mrb[0].mxu0
        %v368 = vadd.f32 %v283, %v367
        %v369 = vpop.f32.mrb[0].mxu0
        %v370 = vpop.f32.mrb[0].mxu0
        %v371 = vpop.f32.mrb[0].mxu0
        %372 = vdwg.mxu0
        %v373 = vmax.f32 %v368, 0.0
        %v374 = vpack.c.bf16 %v373, %v373
        %v375 = vld [vmem:[%s3] sm:$0xf]
        %v376 = vld [vmem:[%s3 + $0x4] sm:$0xf]
        %v377 = vld [vmem:[%s3 + $0x8] sm:$0xf]
        %v378 = vld [vmem:[%s3 + $0xc] sm:$0xf]
        %v379 = vld [vmem:[%s3 + $0x10] sm:$0xf]
        %v380 = vld [vmem:[%s3 + $0x14] sm:$0xf]
        %v381 = vld [vmem:[%s3 + $0x18] sm:$0xf]
        %v382 = vld [vmem:[%s3 + $0x1c] sm:$0xf]
        %v383 = vld [vmem:[%s3 + $0x20] sm:$0xf]
        %v384 = vld [vmem:[%s3 + $0x24] sm:$0xf]
        %v385 = vld [vmem:[%s3 + $0x28] sm:$0xf]
        %v386 = vld [vmem:[%s3 + $0x2c] sm:$0xf]
        %v387 = vld [vmem:[%s3 + $0x30] sm:$0xf]
        %v388 = vld [vmem:[%s3 + $0x34] sm:$0xf]
        %v389 = vld [vmem:[%s3 + $0x38] sm:$0xf]
        %v390 = vld [vmem:[%s3 + $0x3c] sm:$0xf]
        %v391 = vld [vmem:[%s4] sm:$0x1]
        %v393 = vlaneseq
        %v394 = vshrl.u32 %v393, 7
        %v395 = vsub.s32 0, %v394
        %v396 = vrot.slane %v391, %v395
        %v414 = vunpack.c.l.b16 %v375
        %v415 = vunpack.c.l.b16 %v376
        %v416 = vunpack.c.l.b16 %v377
        %v417 = vunpack.c.l.b16 %v378
        %v418 = vunpack.c.l.b16 %v379
        %v419 = vunpack.c.l.b16 %v380
        %v420 = vunpack.c.l.b16 %v381
        %v421 = vunpack.c.l.b16 %v382
        %v422 = vunpack.c.l.b16 %v383
        %v423 = vunpack.c.l.b16 %v384
        %v424 = vunpack.c.l.b16 %v385
        %v425 = vunpack.c.l.b16 %v386
        %v426 = vunpack.c.l.b16 %v387
        %v427 = vunpack.c.l.b16 %v388
        %v428 = vunpack.c.l.b16 %v389
        %v429 = vunpack.c.l.b16 %v390
        %v430 = vpack.c.b16 %v415, %v414
        %v431 = vpack.c.b16 %v417, %v416
        %v432 = vpack.c.b16 %v419, %v418
        %v433 = vpack.c.b16 %v421, %v420
        %v434 = vpack.c.b16 %v423, %v422
        %v435 = vpack.c.b16 %v425, %v424
        %v436 = vpack.c.b16 %v427, %v426
        %v437 = vpack.c.b16 %v429, %v428
        %446 = vmatprep.subr.bf16.mxu0 0
        %447 = vmatpush1.bf16.msra.mxu0 %v430
        %448 = vmatprep.subr.bf16.mxu0 0
        %449 = vmatpush1.bf16.msra.mxu0 %v431
        %450 = vmatprep.subr.bf16.mxu0 0
        %451 = vmatpush1.bf16.msra.mxu0 %v432
        %452 = vmatprep.subr.bf16.mxu0 0
        %453 = vmatpush1.bf16.msra.mxu0 %v433
        %454 = vmatprep.subr.bf16.mxu0 0
        %455 = vmatpush1.bf16.msra.mxu0 %v434
        %456 = vmatprep.subr.bf16.mxu0 0
        %457 = vmatpush1.bf16.msra.mxu0 %v435
        %458 = vmatprep.subr.bf16.mxu0 0
        %459 = vmatpush1.bf16.msra.mxu0 %v436
        %460 = vmatprep.subr.bf16.mxu0 0
        %461 = vmatpush1.bf16.msra.mxu0 %v437
        %462 = vmatprep.subr.bf16.mxu0 0
        %463 = vmatpush1.bf16.msra.mxu0 0
        %464 = vmatprep.subr.bf16.mxu0 0
        %465 = vmatpush1.bf16.msra.mxu0 0
        %466 = vmatprep.subr.bf16.mxu0 0
        %467 = vmatpush1.bf16.msra.mxu0 0
        %468 = vmatprep.subr.bf16.mxu0 0
        %469 = vmatpush1.bf16.msra.mxu0 0
        %470 = vmatprep.subr.bf16.mxu0 0
        %471 = vmatpush1.bf16.msra.mxu0 0
        %472 = vmatprep.subr.bf16.mxu0 0
        %473 = vmatpush1.bf16.msra.mxu0 0
        %474 = vmatprep.subr.bf16.mxu0 0
        %475 = vmatpush1.bf16.msra.mxu0 0
        %476 = vmatprep.subr.bf16.mxu0 0
        %477 = vmatpush1.bf16.msra.mxu0 0
        %478 = vmatprep.mubr.bf16.mxu0 0
        %479 = vmatmul.mubr.bf16.gmra.mrb[0].mxu0 %v374
        %v480 = vpop.f32.mrb[0].mxu0
        %v481 = vadd.f32 %v396, %v480
        %v482 = vpop.f32.mrb[0].mxu0
        %v483 = vpop.f32.mrb[0].mxu0
        %v484 = vpop.f32.mrb[0].mxu0
        %485 = vdwg.mxu0
        %v486 = vxor.u32 %v481, 2147483648
        %v487 = vmul.f32 %v486, 1.442695
        %v488 = vpow.pop %v487
        %v489 = vadd.f32 %v488, 1.0
        %v490 = vrcp.pop %v489
        %v491 = vmul.f32 1.0, %v490
        %492 = vst [vmem:[%s248] sm:$0xff] %v491
        %s493 = sand.u32 %s158, 1
        %s494 = scalar_lea.sflag [#allocation3], %s493
        %s495 = sand.u32 %s158, 1
        %s496 = smul.addr %s495, 8
        %s497 = scalar_lea.vmem [#allocation2], %s496
        // Predicated region
        $region41: #{mel_encoder_forward.11} parent=39 // pred_check
          %p498 = pneg %p168
        $region42: #{mel_encoder_forward.11} parent=39 // pred_check_branch
          %500 = sbr.rel (%p498) target = $region44
        $region43: #{mel_encoder_forward.11} parent=39 // pred_region
          %s502 = ssub.s32 128, 128
          %503 = vsyncadd %s494, %s502
          %s504 = sadd.s32 %s24, %s23
          %s505 = smul.addr %s504, 128
          %s506 = scalar_lea.hbm %s5, %s505
          %s508 = sshll.u32 %s497, 4
          %s509 = int_to_ptr.vmem [resolvable:$true] %s508
          %511 = dma.vmem_to_hbm [thread:$0]  %s509, 128, %s506, %s494
        $region44: #{mel_encoder_forward.11} parent=39 // pred_fallthru
          _
      $region40: #{mel_encoder_forward.11} parent=5 // pred_fallthru
        _
      %p512 = scmp.le.s32.totalorder 2, %s14
      // Predicated region
      $region45: #{mel_encoder_forward.11} parent=5 // pred_check
        %p513 = pneg %p512
      $region46: #{mel_encoder_forward.11} parent=5 // pred_check_branch
        %515 = sbr.rel (%p513) target = $region48
      $region47: #{mel_encoder_forward.11} parent=5 // pred_region
        %s516 = ssub.s32 %s14, 2
        // Predicated region
        $region49: #{mel_encoder_forward.11} parent=47 // pred_check
          %p517 = pneg %p174
        $region50: #{mel_encoder_forward.11} parent=47 // pred_check_branch
          %519 = sbr.rel (%p517) target = $region52
        $region51: #{mel_encoder_forward.11} parent=47 // pred_region
          %s520 = sand.u32 %s159, 1
          %s521 = scalar_lea.sflag [#allocation3], %s520
          %s522 = sand.u32 %s159, 1
          %s523 = smul.addr %s522, 8
          %s524 = scalar_lea.vmem [#allocation2], %s523
          %525 = dma.done %s521, 128
        $region52: #{mel_encoder_forward.11} parent=47 // pred_fallthru
          _
      $region48: #{mel_encoder_forward.11} parent=5 // pred_fallthru
        _
    $region6: #{mel_encoder_forward.11} parent=1 // loop_footer
      %s18 = sadd.s32 1, %s14
    $region7: #{mel_encoder_forward.11} parent=1 // loop_footer_branch
      %13 = sbr.rel target = $region3
    $region8: #{mel_encoder_forward.11} parent=1 // loop_exit
      _
    %526 = vsyncpa [#allocation3], 1
    %s527 = scalar_lea.sflag [#allocation3], 1
    %528 = vsyncpa %s527, 1

// kernel: mel_encoder_forward.9
$region0: #{mel_encoder_forward.9}
  #allocation0 [shape = 'u32[]', space=smem, size = 0x4, offset = 0x4, fixed_abs, tag = 'smem constant byte address 0x4 - core index']
  #allocation1 [shape = 'u32[144,128]{1,0:T(1,128)}', space=vmem, size = 0x12000, scoped, tag = 'internal scratch']
  %s0 = inlined_call_operand.hbm [shape: f32[2,8,128], index: 0, kind: input, shape index: {}]
  %s1 = inlined_call_operand.hbm [shape: bf16[128,128], index: 1, kind: input, shape index: {}]
  %s2 = inlined_call_operand.hbm [shape: f32[1,128], index: 2, kind: input, shape index: {}]
  %s3 = inlined_call_operand.hbm [shape: bf16[128,128], index: 3, kind: input, shape index: {}]
  %s4 = inlined_call_operand.hbm [shape: f32[1,128], index: 4, kind: input, shape index: {}]
  %s5 = inlined_call_operand.hbm [shape: bf16[128,128], index: 5, kind: input, shape index: {}]
  %s6 = inlined_call_operand.hbm [shape: f32[1,128], index: 6, kind: input, shape index: {}]
  %s7 = inlined_call_operand.hbm [shape: bf16[128,128], index: 7, kind: input, shape index: {}]
  %s8 = inlined_call_operand.hbm [shape: f32[1,128], index: 8, kind: input, shape index: {}]
  %s9 = inlined_call_operand.hbm [shape: f32[1,128], index: 9, kind: input, shape index: {}]
  %s10 = inlined_call_operand.hbm [shape: f32[1,128], index: 10, kind: input, shape index: {}]
  %s11 = inlined_call_operand.hbm [shape: bf16[128,512], index: 11, kind: input, shape index: {}]
  %s12 = inlined_call_operand.hbm [shape: f32[1,512], index: 12, kind: input, shape index: {}]
  %s13 = inlined_call_operand.hbm [shape: bf16[512,128], index: 13, kind: input, shape index: {}]
  %s14 = inlined_call_operand.hbm [shape: f32[1,128], index: 14, kind: input, shape index: {}]
  %s15 = inlined_call_operand.hbm [shape: f32[1,128], index: 15, kind: input, shape index: {}]
  %s16 = inlined_call_operand.hbm [shape: f32[1,128], index: 16, kind: input, shape index: {}]
  %s17 = inlined_call_operand.hbm [shape: f32[2,8,128], index: 17, kind: output, shape index: {}]
  %s18 = sld [smem:[#allocation0]]
  $region169: #{mel_encoder_forward.9} parent=0
    _
  %s20 = ssub.s32 1, %s18
  %s21 = scalar_select 0, %s20, %s18
  $region1: #{mel_encoder_forward.9} parent=0
    #allocation2 [shape = 'u8[8192]{0}', space=vmem, size = 0x2000, scoped, tag = 'input window, operand 0']
    #allocation3 [shape = 's32[2]{0}', space=sflag, size = 0x8, scoped, tag = 'scoped memory for mel_encoder_forward.9']
    #allocation4 [shape = 's32[2]{0}', space=sflag, size = 0x8, scoped, tag = 'scoped memory for mel_encoder_forward.9']
    #allocation5 [shape = 'u8[32768]{0}', space=vmem, size = 0x8000, scoped, tag = 'input window, operand 1, single buffered']
    #allocation6 [shape = 's32[1]{0}', space=sflag, size = 0x4, scoped, tag = 'scoped memory for mel_encoder_forward.9']
    #allocation7 [shape = 'u8[512]{0}', space=vmem, size = 0x400, scoped, tag = 'input window, operand 2, single buffered']
    #allocation8 [shape = 'u8[32768]{0}', space=vmem, size = 0x8000, scoped, tag = 'input window, operand 3, single buffered']
    #allocation9 [shape = 's32[1]{0}', space=sflag, size = 0x4, scoped, tag = 'scoped memory for mel_encoder_forward.9']
    #allocation10 [shape = 'u8[512]{0}', space=vmem, size = 0x400, scoped, tag = 'input window, operand 4, single buffered']
    #allocation11 [shape = 'u8[32768]{0}', space=vmem, size = 0x8000, scoped, tag = 'input window, operand 5, single buffered']
    #allocation12 [shape = 's32[1]{0}', space=sflag, size = 0x4, scoped, tag = 'scoped memory for mel_encoder_forward.9']
    #allocation13 [shape = 'u8[512]{0}', space=vmem, size = 0x400, scoped, tag = 'input window, operand 6, single buffered']
    #allocation14 [shape = 'u8[32768]{0}', space=vmem, size = 0x8000, scoped, tag = 'input window, operand 7, single buffered']
    #allocation15 [shape = 's32[1]{0}', space=sflag, size = 0x4, scoped, tag = 'scoped memory for mel_encoder_forward.9']
    #allocation16 [shape = 'u8[512]{0}', space=vmem, size = 0x400, scoped, tag = 'input window, operand 8, single buffered']
    #allocation17 [shape = 'u8[512]{0}', space=vmem, size = 0x400, scoped, tag = 'input window, operand 9, single buffered']
    #allocation18 [shape = 's32[1]{0}', space=sflag, size = 0x4, scoped, tag = 'scoped memory for mel_encoder_forward.9']
    #allocation19 [shape = 'u8[512]{0}', space=vmem, size = 0x400, scoped, tag = 'input window, operand 10, single buffered']
    #allocation20 [shape = 'u8[131072]{0}', space=vmem, size = 0x20000, scoped, tag = 'input window, operand 11, single buffered']
    #allocation21 [shape = 's32[1]{0}', space=sflag, size = 0x4, scoped, tag = 'scoped memory for mel_encoder_forward.9']
    #allocation22 [shape = 'u8[2048]{0}', space=vmem, size = 0x800, scoped, tag = 'input window, operand 12, single buffered']
    #allocation23 [shape = 'u8[131072]{0}', space=vmem, size = 0x20000, scoped, tag = 'input window, operand 13, single buffered']
    #allocation24 [shape = 's32[1]{0}', space=sflag, size = 0x4, scoped, tag = 'scoped memory for mel_encoder_forward.9']
    #allocation25 [shape = 'u8[512]{0}', space=vmem, size = 0x400, scoped, tag = 'input window, operand 14, single buffered']
    #allocation26 [shape = 'u8[512]{0}', space=vmem, size = 0x400, scoped, tag = 'input window, operand 15, single buffered']
    #allocation27 [shape = 's32[1]{0}', space=sflag, size = 0x4, scoped, tag = 'scoped memory for mel_encoder_forward.9']
    #allocation28 [shape = 'u8[512]{0}', space=vmem, size = 0x400, scoped, tag = 'input window, operand 16, single buffered']
    #allocation29 [shape = 'u8[8192]{0}', space=vmem, size = 0x2000, scoped, tag = 'output window, operand 0']
    %22 = vsyncpa [#allocation3], 0
    %s23 = scalar_lea.sflag [#allocation3], 1
    %24 = vsyncpa %s23, 0
    %25 = vsyncpa [#allocation6], 0
    %26 = vsyncpa [#allocation9], 0
    %27 = vsyncpa [#allocation12], 0
    %28 = vsyncpa [#allocation15], 0
    %29 = vsyncpa [#allocation18], 0
    %30 = vsyncpa [#allocation21], 0
    %31 = vsyncpa [#allocation24], 0
    %32 = vsyncpa [#allocation27], 0
    %33 = vsyncpa [#allocation4], 0
    %s34 = scalar_lea.sflag [#allocation4], 1
    %35 = vsyncpa %s34, 0
    loop: start=0, step=1, limit=4
    $region2: #{mel_encoder_forward.9} parent=1 // loop_pre_header
      _
    $region3: #{mel_encoder_forward.9} parent=1 // loop_header
      %s37 = sphi 0, %s41
      %p38 = scmp.ge.s32.totalorder %s37, 4
      %s47 = sphi 0, %s49
      %s50 = sphi 0, %s47
      %s51 = sphi 0, %s50
      %s67 = sphi 0, %s51
      %s71 = sphi 0, %s71
      %s73 = sphi 0, %s71
      %s74 = sphi 0, %s73
      %s88 = sphi 0, %s74
      %s92 = sphi 0, %s92
      %s94 = sphi 0, %s92
      %s95 = sphi 0, %s94
      %s109 = sphi 0, %s95
      %s113 = sphi 0, %s113
      %s115 = sphi 0, %s113
      %s116 = sphi 0, %s115
      %s130 = sphi 0, %s116
      %s134 = sphi 0, %s134
      %s136 = sphi 0, %s134
      %s137 = sphi 0, %s136
      %s151 = sphi 0, %s137
      %s155 = sphi 0, %s155
      %s157 = sphi 0, %s155
      %s158 = sphi 0, %s157
      %s172 = sphi 0, %s158
      %s176 = sphi 0, %s176
      %s178 = sphi 0, %s176
      %s179 = sphi 0, %s178
      %s193 = sphi 0, %s179
      %s197 = sphi 0, %s197
      %s199 = sphi 0, %s197
      %s200 = sphi 0, %s199
      %s214 = sphi 0, %s200
      %s218 = sphi 0, %s218
      %s220 = sphi 0, %s218
      %s221 = sphi 0, %s220
      %s235 = sphi 0, %s221
      %s239 = sphi 0, %s239
      %s241 = sphi 0, %s239
      %s242 = sphi 0, %s241
      %s256 = sphi 0, %s242
      %s260 = sphi 0, %s260
      %s262 = sphi 0, %s260
      %s263 = sphi 0, %s262
      %s277 = sphi 0, %s263
      %s281 = sphi 0, %s281
      %s283 = sphi 0, %s281
      %s284 = sphi 0, %s283
      %s298 = sphi 0, %s284
      %s302 = sphi 0, %s302
      %s304 = sphi 0, %s302
      %s305 = sphi 0, %s304
      %s319 = sphi 0, %s305
      %s323 = sphi 0, %s323
      %s325 = sphi 0, %s323
      %s326 = sphi 0, %s325
      %s340 = sphi 0, %s326
      %s344 = sphi 0, %s344
      %s346 = sphi 0, %s344
      %s347 = sphi 0, %s346
      %s361 = sphi 0, %s347
      %s365 = sphi 0, %s365
      %s367 = sphi 0, %s365
      %s368 = sphi 0, %s367
      %s382 = sphi 0, %s368
      %s386 = sphi 0, %s386
      %s388 = sphi 0, %s386
      %s389 = sphi 0, %s388
      %s403 = sphi 0, %s389
      %s409 = sphi 0, %s411
      %s412 = sphi 0, %s409
      %s413 = sphi 0, %s412
      %s429 = sphi 0, %s413
    $region4: #{mel_encoder_forward.9} parent=1 // loop_header_branch
      %40 = sbr.rel (%p38) target = $region8
    $region5: #{mel_encoder_forward.9} parent=1 // loop_body
      %s42 = ssub.s32 %s37, 1
      %s43 = ssub.s32 %s37, 2
      %s44 = sadd.s32 %s37, 1
      %s45 = ssub.s32 %s37, %s44
      %p46 = scmp.eq.s32.totalorder %s45, 0
      %s48 = sadd.s32 %s47, 1
      %s49 = scalar_select %p46, %s47, %s48
      %p52 = pneg %p46
      %p53 = scmp.eq.s32.totalorder %s37, 1
      %p54 = por %p52, %p53
      %p55 = scmp.ne.s32.totalorder %s47, %s50
      %p56 = scmp.eq.s32.totalorder %s37, 0
      %p57 = por %p55, %p56
      %p58 = scmp.ne.s32.totalorder %s47, %s50
      %p59 = scmp.eq.s32.totalorder %s42, 1
      %p60 = por %p58, %p59
      %p61 = scmp.ne.s32.totalorder %s50, %s51
      %p62 = scmp.eq.s32.totalorder %s42, 0
      %p63 = por %p61, %p62
      %p64 = scmp.ne.s32.totalorder %s50, %s51
      %p65 = scmp.eq.s32.totalorder %s43, 1
      %p66 = por %p64, %p65
      %p68 = scmp.ne.s32.totalorder %s51, %s67
      %p69 = scmp.eq.s32.totalorder %s43, 0
      %p70 = por %p68, %p69
      %s72 = sadd.s32 %s71, 1
      %p75 = scmp.eq.s32.totalorder %s37, 1
      %p76 = scmp.ne.s32.totalorder %s71, %s73
      %p77 = scmp.eq.s32.totalorder %s37, 0
      %p78 = por %p76, %p77
      %p79 = scmp.ne.s32.totalorder %s71, %s73
      %p80 = scmp.eq.s32.totalorder %s42, 1
      %p81 = por %p79, %p80
      %p82 = scmp.ne.s32.totalorder %s73, %s74
      %p83 = scmp.eq.s32.totalorder %s42, 0
      %p84 = por %p82, %p83
      %p85 = scmp.ne.s32.totalorder %s73, %s74
      %p86 = scmp.eq.s32.totalorder %s43, 1
      %p87 = por %p85, %p86
      %p89 = scmp.ne.s32.totalorder %s74, %s88
      %p90 = scmp.eq.s32.totalorder %s43, 0
      %p91 = por %p89, %p90
      %s93 = sadd.s32 %s92, 1
      %p96 = scmp.eq.s32.totalorder %s37, 1
      %p97 = scmp.ne.s32.totalorder %s92, %s94
      %p98 = scmp.eq.s32.totalorder %s37, 0
      %p99 = por %p97, %p98
      %p100 = scmp.ne.s32.totalorder %s92, %s94
      %p101 = scmp.eq.s32.totalorder %s42, 1
      %p102 = por %p100, %p101
      %p103 = scmp.ne.s32.totalorder %s94, %s95
      %p104 = scmp.eq.s32.totalorder %s42, 0
      %p105 = por %p103, %p104
      %p106 = scmp.ne.s32.totalorder %s94, %s95
      %p107 = scmp.eq.s32.totalorder %s43, 1
      %p108 = por %p106, %p107
      %p110 = scmp.ne.s32.totalorder %s95, %s109
      %p111 = scmp.eq.s32.totalorder %s43, 0
      %p112 = por %p110, %p111
      %s114 = sadd.s32 %s113, 1
      %p117 = scmp.eq.s32.totalorder %s37, 1
      %p118 = scmp.ne.s32.totalorder %s113, %s115
      %p119 = scmp.eq.s32.totalorder %s37, 0
      %p120 = por %p118, %p119
      %p121 = scmp.ne.s32.totalorder %s113, %s115
      %p122 = scmp.eq.s32.totalorder %s42, 1
      %p123 = por %p121, %p122
      %p124 = scmp.ne.s32.totalorder %s115, %s116
      %p125 = scmp.eq.s32.totalorder %s42, 0
      %p126 = por %p124, %p125
      %p127 = scmp.ne.s32.totalorder %s115, %s116
      %p128 = scmp.eq.s32.totalorder %s43, 1
      %p129 = por %p127, %p128
      %p131 = scmp.ne.s32.totalorder %s116, %s130
      %p132 = scmp.eq.s32.totalorder %s43, 0
      %p133 = por %p131, %p132
      %s135 = sadd.s32 %s134, 1
      %p138 = scmp.eq.s32.totalorder %s37, 1
      %p139 = scmp.ne.s32.totalorder %s134, %s136
      %p140 = scmp.eq.s32.totalorder %s37, 0
      %p141 = por %p139, %p140
      %p142 = scmp.ne.s32.totalorder %s134, %s136
      %p143 = scmp.eq.s32.totalorder %s42, 1
      %p144 = por %p142, %p143
      %p145 = scmp.ne.s32.totalorder %s136, %s137
      %p146 = scmp.eq.s32.totalorder %s42, 0
      %p147 = por %p145, %p146
      %p148 = scmp.ne.s32.totalorder %s136, %s137
      %p149 = scmp.eq.s32.totalorder %s43, 1
      %p150 = por %p148, %p149
      %p152 = scmp.ne.s32.totalorder %s137, %s151
      %p153 = scmp.eq.s32.totalorder %s43, 0
      %p154 = por %p152, %p153
      %s156 = sadd.s32 %s155, 1
      %p159 = scmp.eq.s32.totalorder %s37, 1
      %p160 = scmp.ne.s32.totalorder %s155, %s157
      %p161 = scmp.eq.s32.totalorder %s37, 0
      %p162 = por %p160, %p161
      %p163 = scmp.ne.s32.totalorder %s155, %s157
      %p164 = scmp.eq.s32.totalorder %s42, 1
      %p165 = por %p163, %p164
      %p166 = scmp.ne.s32.totalorder %s157, %s158
      %p167 = scmp.eq.s32.totalorder %s42, 0
      %p168 = por %p166, %p167
      %p169 = scmp.ne.s32.totalorder %s157, %s158
      %p170 = scmp.eq.s32.totalorder %s43, 1
      %p171 = por %p169, %p170
      %p173 = scmp.ne.s32.totalorder %s158, %s172
      %p174 = scmp.eq.s32.totalorder %s43, 0
      %p175 = por %p173, %p174
      %s177 = sadd.s32 %s176, 1
      %p180 = scmp.eq.s32.totalorder %s37, 1
      %p181 = scmp.ne.s32.totalorder %s176, %s178
      %p182 = scmp.eq.s32.totalorder %s37, 0
      %p183 = por %p181, %p182
      %p184 = scmp.ne.s32.totalorder %s176, %s178
      %p185 = scmp.eq.s32.totalorder %s42, 1
      %p186 = por %p184, %p185
      %p187 = scmp.ne.s32.totalorder %s178, %s179
      %p188 = scmp.eq.s32.totalorder %s42, 0
      %p189 = por %p187, %p188
      %p190 = scmp.ne.s32.totalorder %s178, %s179
      %p191 = scmp.eq.s32.totalorder %s43, 1
      %p192 = por %p190, %p191
      %p194 = scmp.ne.s32.totalorder %s179, %s193
      %p195 = scmp.eq.s32.totalorder %s43, 0
      %p196 = por %p194, %p195
      %s198 = sadd.s32 %s197, 1
      %p201 = scmp.eq.s32.totalorder %s37, 1
      %p202 = scmp.ne.s32.totalorder %s197, %s199
      %p203 = scmp.eq.s32.totalorder %s37, 0
      %p204 = por %p202, %p203
      %p205 = scmp.ne.s32.totalorder %s197, %s199
      %p206 = scmp.eq.s32.totalorder %s42, 1
      %p207 = por %p205, %p206
      %p208 = scmp.ne.s32.totalorder %s199, %s200
      %p209 = scmp.eq.s32.totalorder %s42, 0
      %p210 = por %p208, %p209
      %p211 = scmp.ne.s32.totalorder %s199, %s200
      %p212 = scmp.eq.s32.totalorder %s43, 1
      %p213 = por %p211, %p212
      %p215 = scmp.ne.s32.totalorder %s200, %s214
      %p216 = scmp.eq.s32.totalorder %s43, 0
      %p217 = por %p215, %p216
      %s219 = sadd.s32 %s218, 1
      %p222 = scmp.eq.s32.totalorder %s37, 1
      %p223 = scmp.ne.s32.totalorder %s218, %s220
      %p224 = scmp.eq.s32.totalorder %s37, 0
      %p225 = por %p223, %p224
      %p226 = scmp.ne.s32.totalorder %s218, %s220
      %p227 = scmp.eq.s32.totalorder %s42, 1
      %p228 = por %p226, %p227
      %p229 = scmp.ne.s32.totalorder %s220, %s221
      %p230 = scmp.eq.s32.totalorder %s42, 0
      %p231 = por %p229, %p230
      %p232 = scmp.ne.s32.totalorder %s220, %s221
      %p233 = scmp.eq.s32.totalorder %s43, 1
      %p234 = por %p232, %p233
      %p236 = scmp.ne.s32.totalorder %s221, %s235
      %p237 = scmp.eq.s32.totalorder %s43, 0
      %p238 = por %p236, %p237
      %s240 = sadd.s32 %s239, 1
      %p243 = scmp.eq.s32.totalorder %s37, 1
      %p244 = scmp.ne.s32.totalorder %s239, %s241
      %p245 = scmp.eq.s32.totalorder %s37, 0
      %p246 = por %p244, %p245
      %p247 = scmp.ne.s32.totalorder %s239, %s241
      %p248 = scmp.eq.s32.totalorder %s42, 1
      %p249 = por %p247, %p248
      %p250 = scmp.ne.s32.totalorder %s241, %s242
      %p251 = scmp.eq.s32.totalorder %s42, 0
      %p252 = por %p250, %p251
      %p253 = scmp.ne.s32.totalorder %s241, %s242
      %p254 = scmp.eq.s32.totalorder %s43, 1
      %p255 = por %p253, %p254
      %p257 = scmp.ne.s32.totalorder %s242, %s256
      %p258 = scmp.eq.s32.totalorder %s43, 0
      %p259 = por %p257, %p258
      %s261 = sadd.s32 %s260, 1
      %p264 = scmp.eq.s32.totalorder %s37, 1
      %p265 = scmp.ne.s32.totalorder %s260, %s262
      %p266 = scmp.eq.s32.totalorder %s37, 0
      %p267 = por %p265, %p266
      %p268 = scmp.ne.s32.totalorder %s260, %s262
      %p269 = scmp.eq.s32.totalorder %s42, 1
      %p270 = por %p268, %p269
      %p271 = scmp.ne.s32.totalorder %s262, %s263
      %p272 = scmp.eq.s32.totalorder %s42, 0
      %p273 = por %p271, %p272
      %p274 = scmp.ne.s32.totalorder %s262, %s263
      %p275 = scmp.eq.s32.totalorder %s43, 1
      %p276 = por %p274, %p275
      %p278 = scmp.ne.s32.totalorder %s263, %s277
      %p279 = scmp.eq.s32.totalorder %s43, 0
      %p280 = por %p278, %p279
      %s282 = sadd.s32 %s281, 1
      %p285 = scmp.eq.s32.totalorder %s37, 1
      %p286 = scmp.ne.s32.totalorder %s281, %s283
      %p287 = scmp.eq.s32.totalorder %s37, 0
      %p288 = por %p286, %p287
      %p289 = scmp.ne.s32.totalorder %s281, %s283
      %p290 = scmp.eq.s32.totalorder %s42, 1
      %p291 = por %p289, %p290
      %p292 = scmp.ne.s32.totalorder %s283, %s284
      %p293 = scmp.eq.s32.totalorder %s42, 0
      %p294 = por %p292, %p293
      %p295 = scmp.ne.s32.totalorder %s283, %s284
      %p296 = scmp.eq.s32.totalorder %s43, 1
      %p297 = por %p295, %p296
      %p299 = scmp.ne.s32.totalorder %s284, %s298
      %p300 = scmp.eq.s32.totalorder %s43, 0
      %p301 = por %p299, %p300
      %s303 = sadd.s32 %s302, 1
      %p306 = scmp.eq.s32.totalorder %s37, 1
      %p307 = scmp.ne.s32.totalorder %s302, %s304
      %p308 = scmp.eq.s32.totalorder %s37, 0
      %p309 = por %p307, %p308
      %p310 = scmp.ne.s32.totalorder %s302, %s304
      %p311 = scmp.eq.s32.totalorder %s42, 1
      %p312 = por %p310, %p311
      %p313 = scmp.ne.s32.totalorder %s304, %s305
      %p314 = scmp.eq.s32.totalorder %s42, 0
      %p315 = por %p313, %p314
      %p316 = scmp.ne.s32.totalorder %s304, %s305
      %p317 = scmp.eq.s32.totalorder %s43, 1
      %p318 = por %p316, %p317
      %p320 = scmp.ne.s32.totalorder %s305, %s319
      %p321 = scmp.eq.s32.totalorder %s43, 0
      %p322 = por %p320, %p321
      %s324 = sadd.s32 %s323, 1
      %p327 = scmp.eq.s32.totalorder %s37, 1
      %p328 = scmp.ne.s32.totalorder %s323, %s325
      %p329 = scmp.eq.s32.totalorder %s37, 0
      %p330 = por %p328, %p329
      %p331 = scmp.ne.s32.totalorder %s323, %s325
      %p332 = scmp.eq.s32.totalorder %s42, 1
      %p333 = por %p331, %p332
      %p334 = scmp.ne.s32.totalorder %s325, %s326
      %p335 = scmp.eq.s32.totalorder %s42, 0
      %p336 = por %p334, %p335
      %p337 = scmp.ne.s32.totalorder %s325, %s326
      %p338 = scmp.eq.s32.totalorder %s43, 1
      %p339 = por %p337, %p338
      %p341 = scmp.ne.s32.totalorder %s326, %s340
      %p342 = scmp.eq.s32.totalorder %s43, 0
      %p343 = por %p341, %p342
      %s345 = sadd.s32 %s344, 1
      %p348 = scmp.eq.s32.totalorder %s37, 1
      %p349 = scmp.ne.s32.totalorder %s344, %s346
      %p350 = scmp.eq.s32.totalorder %s37, 0
      %p351 = por %p349, %p350
      %p352 = scmp.ne.s32.totalorder %s344, %s346
      %p353 = scmp.eq.s32.totalorder %s42, 1
      %p354 = por %p352, %p353
      %p355 = scmp.ne.s32.totalorder %s346, %s347
      %p356 = scmp.eq.s32.totalorder %s42, 0
      %p357 = por %p355, %p356
      %p358 = scmp.ne.s32.totalorder %s346, %s347
      %p359 = scmp.eq.s32.totalorder %s43, 1
      %p360 = por %p358, %p359
      %p362 = scmp.ne.s32.totalorder %s347, %s361
      %p363 = scmp.eq.s32.totalorder %s43, 0
      %p364 = por %p362, %p363
      %s366 = sadd.s32 %s365, 1
      %p369 = scmp.eq.s32.totalorder %s37, 1
      %p370 = scmp.ne.s32.totalorder %s365, %s367
      %p371 = scmp.eq.s32.totalorder %s37, 0
      %p372 = por %p370, %p371
      %p373 = scmp.ne.s32.totalorder %s365, %s367
      %p374 = scmp.eq.s32.totalorder %s42, 1
      %p375 = por %p373, %p374
      %p376 = scmp.ne.s32.totalorder %s367, %s368
      %p377 = scmp.eq.s32.totalorder %s42, 0
      %p378 = por %p376, %p377
      %p379 = scmp.ne.s32.totalorder %s367, %s368
      %p380 = scmp.eq.s32.totalorder %s43, 1
      %p381 = por %p379, %p380
      %p383 = scmp.ne.s32.totalorder %s368, %s382
      %p384 = scmp.eq.s32.totalorder %s43, 0
      %p385 = por %p383, %p384
      %s387 = sadd.s32 %s386, 1
      %p390 = scmp.eq.s32.totalorder %s37, 1
      %p391 = scmp.ne.s32.totalorder %s386, %s388
      %p392 = scmp.eq.s32.totalorder %s37, 0
      %p393 = por %p391, %p392
      %p394 = scmp.ne.s32.totalorder %s386, %s388
      %p395 = scmp.eq.s32.totalorder %s42, 1
      %p396 = por %p394, %p395
      %p397 = scmp.ne.s32.totalorder %s388, %s389
      %p398 = scmp.eq.s32.totalorder %s42, 0
      %p399 = por %p397, %p398
      %p400 = scmp.ne.s32.totalorder %s388, %s389
      %p401 = scmp.eq.s32.totalorder %s43, 1
      %p402 = por %p400, %p401
      %p404 = scmp.ne.s32.totalorder %s389, %s403
      %p405 = scmp.eq.s32.totalorder %s43, 0
      %p406 = por %p404, %p405
      %s407 = ssub.s32 %s37, %s44
      %p408 = scmp.eq.s32.totalorder %s407, 0
      %s410 = sadd.s32 %s409, 1
      %s411 = scalar_select %p408, %s409, %s410
      %p414 = pneg %p408
      %p415 = scmp.eq.s32.totalorder %s37, 1
      %p416 = por %p414, %p415
      %p417 = scmp.ne.s32.totalorder %s409, %s412
      %p418 = scmp.eq.s32.totalorder %s37, 0
      %p419 = por %p417, %p418
      %p420 = scmp.ne.s32.totalorder %s409, %s412
      %p421 = scmp.eq.s32.totalorder %s42, 1
      %p422 = por %p420, %p421
      %p423 = scmp.ne.s32.totalorder %s412, %s413
      %p424 = scmp.eq.s32.totalorder %s42, 0
      %p425 = por %p423, %p424
      %p426 = scmp.ne.s32.totalorder %s412, %s413
      %p427 = scmp.eq.s32.totalorder %s43, 1
      %p428 = por %p426, %p427
      %p430 = scmp.ne.s32.totalorder %s413, %s429
      %p431 = scmp.eq.s32.totalorder %s43, 0
      %p432 = por %p430, %p431
      %p433 = scmp.le.s32.totalorder 1, %s37
      %p434 = scmp.lt.s32.totalorder %s37, 3
      %p435 = pnand %p433, %p434
      %p436 = pneg %p435
      // Predicated region
      $region9: #{mel_encoder_forward.9} parent=5 // pred_check
        _
      $region10: #{mel_encoder_forward.9} parent=5 // pred_check_branch
        %438 = sbr.rel (%p435) target = $region12
      $region11: #{mel_encoder_forward.9} parent=5 // pred_region
        %s439 = ssub.s32 %s37, 1
        // Predicated region
        $region13: #{mel_encoder_forward.9} parent=11 // pred_check
          %p440 = pneg %p84
        $region14: #{mel_encoder_forward.9} parent=11 // pred_check_branch
          %442 = sbr.rel (%p440) target = $region16
        $region15: #{mel_encoder_forward.9} parent=11 // pred_region
          %s444 = ssub.s32 1024, 1024
          %445 = vsyncadd [#allocation6], %s444
          %s446 = sshll.u32 [#allocation5], 4
          %s447 = int_to_ptr.vmem [resolvable:$true] %s446
          %452 = dma.hbm_to_vmem [thread:$0]  %s1, 1024, %s447, [#allocation6], 64, 64, 4
        $region16: #{mel_encoder_forward.9} parent=11 // pred_fallthru
          _
        // Predicated region
        $region17: #{mel_encoder_forward.9} parent=11 // pred_check
          %p453 = pneg %p105
        $region18: #{mel_encoder_forward.9} parent=11 // pred_check_branch
          %455 = sbr.rel (%p453) target = $region20
        $region19: #{mel_encoder_forward.9} parent=11 // pred_region
          %s457 = ssub.s32 16, 16
          %458 = vsyncadd [#allocation6], %s457
          %s460 = sshll.u32 [#allocation7], 4
          %s461 = int_to_ptr.vmem [resolvable:$true] %s460
          %463 = dma.hbm_to_vmem [thread:$0]  %s2, 16, %s461, [#allocation6]
        $region20: #{mel_encoder_forward.9} parent=11 // pred_fallthru
          _
        // Predicated region
        $region21: #{mel_encoder_forward.9} parent=11 // pred_check
          %p464 = pneg %p126
        $region22: #{mel_encoder_forward.9} parent=11 // pred_check_branch
          %466 = sbr.rel (%p464) target = $region24
        $region23: #{mel_encoder_forward.9} parent=11 // pred_region
          %s468 = ssub.s32 1024, 1024
          %469 = vsyncadd [#allocation9], %s468
          %s470 = sshll.u32 [#allocation8], 4
          %s471 = int_to_ptr.vmem [resolvable:$true] %s470
          %476 = dma.hbm_to_vmem [thread:$0]  %s3, 1024, %s471, [#allocation9], 64, 64, 4
        $region24: #{mel_encoder_forward.9} parent=11 // pred_fallthru
          _
        // Predicated region
        $region25: #{mel_encoder_forward.9} parent=11 // pred_check
          %p477 = pneg %p147
        $region26: #{mel_encoder_forward.9} parent=11 // pred_check_branch
          %479 = sbr.rel (%p477) target = $region28
        $region27: #{mel_encoder_forward.9} parent=11 // pred_region
          %s481 = ssub.s32 16, 16
          %482 = vsyncadd [#allocation9], %s481
          %s484 = sshll.u32 [#allocation10], 4
          %s485 = int_to_ptr.vmem [resolvable:$true] %s484
          %487 = dma.hbm_to_vmem [thread:$0]  %s4, 16, %s485, [#allocation9]
        $region28: #{mel_encoder_forward.9} parent=11 // pred_fallthru
          _
        // Predicated region
        $region29: #{mel_encoder_forward.9} parent=11 // pred_check
          %p488 = pneg %p168
        $region30: #{mel_encoder_forward.9} parent=11 // pred_check_branch
          %490 = sbr.rel (%p488) target = $region32
        $region31: #{mel_encoder_forward.9} parent=11 // pred_region
          %s492 = ssub.s32 1024, 1024
          %493 = vsyncadd [#allocation12], %s492
          %s494 = sshll.u32 [#allocation11], 4
          %s495 = int_to_ptr.vmem [resolvable:$true] %s494
          %500 = dma.hbm_to_vmem [thread:$0]  %s5, 1024, %s495, [#allocation12], 64, 64, 4
        $region32: #{mel_encoder_forward.9} parent=11 // pred_fallthru
          _
        // Predicated region
        $region33: #{mel_encoder_forward.9} parent=11 // pred_check
          %p501 = pneg %p189
        $region34: #{mel_encoder_forward.9} parent=11 // pred_check_branch
          %503 = sbr.rel (%p501) target = $region36
        $region35: #{mel_encoder_forward.9} parent=11 // pred_region
          %s505 = ssub.s32 16, 16
          %506 = vsyncadd [#allocation12], %s505
          %s508 = sshll.u32 [#allocation13], 4
          %s509 = int_to_ptr.vmem [resolvable:$true] %s508
          %511 = dma.hbm_to_vmem [thread:$0]  %s6, 16, %s509, [#allocation12]
        $region36: #{mel_encoder_forward.9} parent=11 // pred_fallthru
          _
        // Predicated region
        $region37: #{mel_encoder_forward.9} parent=11 // pred_check
          %p512 = pneg %p210
        $region38: #{mel_encoder_forward.9} parent=11 // pred_check_branch
          %514 = sbr.rel (%p512) target = $region40
        $region39: #{mel_encoder_forward.9} parent=11 // pred_region
          %s516 = ssub.s32 1024, 1024
          %517 = vsyncadd [#allocation15], %s516
          %s518 = sshll.u32 [#allocation14], 4
          %s519 = int_to_ptr.vmem [resolvable:$true] %s518
          %524 = dma.hbm_to_vmem [thread:$0]  %s7, 1024, %s519, [#allocation15], 64, 64, 4
        $region40: #{mel_encoder_forward.9} parent=11 // pred_fallthru
          _
        // Predicated region
        $region41: #{mel_encoder_forward.9} parent=11 // pred_check
          %p525 = pneg %p231
        $region42: #{mel_encoder_forward.9} parent=11 // pred_check_branch
          %527 = sbr.rel (%p525) target = $region44
        $region43: #{mel_encoder_forward.9} parent=11 // pred_region
          %s529 = ssub.s32 16, 16
          %530 = vsyncadd [#allocation15], %s529
          %s532 = sshll.u32 [#allocation16], 4
          %s533 = int_to_ptr.vmem [resolvable:$true] %s532
          %535 = dma.hbm_to_vmem [thread:$0]  %s8, 16, %s533, [#allocation15]
        $region44: #{mel_encoder_forward.9} parent=11 // pred_fallthru
          _
        // Predicated region
        $region45: #{mel_encoder_forward.9} parent=11 // pred_check
          %p536 = pneg %p252
        $region46: #{mel_encoder_forward.9} parent=11 // pred_check_branch
          %538 = sbr.rel (%p536) target = $region48
        $region47: #{mel_encoder_forward.9} parent=11 // pred_region
          %s540 = ssub.s32 16, 16
          %541 = vsyncadd [#allocation18], %s540
          %s543 = sshll.u32 [#allocation17], 4
          %s544 = int_to_ptr.vmem [resolvable:$true] %s543
          %546 = dma.hbm_to_vmem [thread:$0]  %s9, 16, %s544, [#allocation18]
        $region48: #{mel_encoder_forward.9} parent=11 // pred_fallthru
          _
        // Predicated region
        $region49: #{mel_encoder_forward.9} parent=11 // pred_check
          %p547 = pneg %p273
        $region50: #{mel_encoder_forward.9} parent=11 // pred_check_branch
          %549 = sbr.rel (%p547) target = $region52
        $region51: #{mel_encoder_forward.9} parent=11 // pred_region
          %s551 = ssub.s32 16, 16
          %552 = vsyncadd [#allocation18], %s551
          %s554 = sshll.u32 [#allocation19], 4
          %s555 = int_to_ptr.vmem [resolvable:$true] %s554
          %557 = dma.hbm_to_vmem [thread:$0]  %s10, 16, %s555, [#allocation18]
        $region52: #{mel_encoder_forward.9} parent=11 // pred_fallthru
          _
        // Predicated region
        $region53: #{mel_encoder_forward.9} parent=11 // pred_check
          %p558 = pneg %p294
        $region54: #{mel_encoder_forward.9} parent=11 // pred_check_branch
          %560 = sbr.rel (%p558) target = $region56
        $region55: #{mel_encoder_forward.9} parent=11 // pred_region
          %s562 = ssub.s32 4096, 4096
          %563 = vsyncadd [#allocation21], %s562
          %s564 = sshll.u32 [#allocation20], 4
          %s565 = int_to_ptr.vmem [resolvable:$true] %s564
          %570 = dma.hbm_to_vmem [thread:$0]  %s11, 4096, %s565, [#allocation21], 256, 256, 16
        $region56: #{mel_encoder_forward.9} parent=11 // pred_fallthru
          _
        // Predicated region
        $region57: #{mel_encoder_forward.9} parent=11 // pred_check
          %p571 = pneg %p315
        $region58: #{mel_encoder_forward.9} parent=11 // pred_check_branch
          %573 = sbr.rel (%p571) target = $region60
        $region59: #{mel_encoder_forward.9} parent=11 // pred_region
          %s575 = ssub.s32 64, 64
          %576 = vsyncadd [#allocation21], %s575
          %s578 = sshll.u32 [#allocation22], 4
          %s579 = int_to_ptr.vmem [resolvable:$true] %s578
          %581 = dma.hbm_to_vmem [thread:$0]  %s12, 64, %s579, [#allocation21]
        $region60: #{mel_encoder_forward.9} parent=11 // pred_fallthru
          _
        // Predicated region
        $region61: #{mel_encoder_forward.9} parent=11 // pred_check
          %p582 = pneg %p336
        $region62: #{mel_encoder_forward.9} parent=11 // pred_check_branch
          %584 = sbr.rel (%p582) target = $region64
        $region63: #{mel_encoder_forward.9} parent=11 // pred_region
          %s586 = ssub.s32 4096, 4096
          %587 = vsyncadd [#allocation24], %s586
          %s588 = sshll.u32 [#allocation23], 4
          %s589 = int_to_ptr.vmem [resolvable:$true] %s588
          %594 = dma.hbm_to_vmem [thread:$0]  %s13, 4096, %s589, [#allocation24], 64, 64, 4
        $region64: #{mel_encoder_forward.9} parent=11 // pred_fallthru
          _
        // Predicated region
        $region65: #{mel_encoder_forward.9} parent=11 // pred_check
          %p595 = pneg %p357
        $region66: #{mel_encoder_forward.9} parent=11 // pred_check_branch
          %597 = sbr.rel (%p595) target = $region68
        $region67: #{mel_encoder_forward.9} parent=11 // pred_region
          %s599 = ssub.s32 16, 16
          %600 = vsyncadd [#allocation24], %s599
          %s602 = sshll.u32 [#allocation25], 4
          %s603 = int_to_ptr.vmem [resolvable:$true] %s602
          %605 = dma.hbm_to_vmem [thread:$0]  %s14, 16, %s603, [#allocation24]
        $region68: #{mel_encoder_forward.9} parent=11 // pred_fallthru
          _
        // Predicated region
        $region69: #{mel_encoder_forward.9} parent=11 // pred_check
          %p606 = pneg %p378
        $region70: #{mel_encoder_forward.9} parent=11 // pred_check_branch
          %608 = sbr.rel (%p606) target = $region72
        $region71: #{mel_encoder_forward.9} parent=11 // pred_region
          %s610 = ssub.s32 16, 16
          %611 = vsyncadd [#allocation27], %s610
          %s613 = sshll.u32 [#allocation26], 4
          %s614 = int_to_ptr.vmem [resolvable:$true] %s613
          %616 = dma.hbm_to_vmem [thread:$0]  %s15, 16, %s614, [#allocation27]
        $region72: #{mel_encoder_forward.9} parent=11 // pred_fallthru
          _
        // Predicated region
        $region73: #{mel_encoder_forward.9} parent=11 // pred_check
          %p617 = pneg %p399
        $region74: #{mel_encoder_forward.9} parent=11 // pred_check_branch
          %619 = sbr.rel (%p617) target = $region76
        $region75: #{mel_encoder_forward.9} parent=11 // pred_region
          %s621 = ssub.s32 16, 16
          %622 = vsyncadd [#allocation27], %s621
          %s624 = sshll.u32 [#allocation28], 4
          %s625 = int_to_ptr.vmem [resolvable:$true] %s624
          %627 = dma.hbm_to_vmem [thread:$0]  %s16, 16, %s625, [#allocation27]
        $region76: #{mel_encoder_forward.9} parent=11 // pred_fallthru
          _
      $region12: #{mel_encoder_forward.9} parent=5 // pred_fallthru
        _
      %p628 = scmp.lt.s32.totalorder %s37, 2
      // Predicated region
      $region77: #{mel_encoder_forward.9} parent=5 // pred_check
        %p629 = pneg %p628
      $region78: #{mel_encoder_forward.9} parent=5 // pred_check_branch
        %631 = sbr.rel (%p629) target = $region80
      $region79: #{mel_encoder_forward.9} parent=5 // pred_region
        // Predicated region
        $region81: #{mel_encoder_forward.9} parent=79 // pred_check
          %p632 = pneg %p57
        $region82: #{mel_encoder_forward.9} parent=79 // pred_check_branch
          %634 = sbr.rel (%p632) target = $region84
        $region83: #{mel_encoder_forward.9} parent=79 // pred_region
          %s635 = sand.u32 %s47, 1
          %s636 = scalar_lea.sflag [#allocation3], %s635
          %s637 = sand.u32 %s47, 1
          %s638 = smul.addr %s637, 8
          %s639 = scalar_lea.vmem [#allocation2], %s638
          %s641 = ssub.s32 128, 128
          %642 = vsyncadd %s636, %s641
          %s643 = smul.addr %s37, 128
          %s644 = scalar_lea.hbm %s0, %s643
          %s646 = sshll.u32 %s639, 4
          %s647 = int_to_ptr.vmem [resolvable:$true] %s646
          %649 = dma.hbm_to_vmem [thread:$0]  %s644, 128, %s647, %s636
        $region84: #{mel_encoder_forward.9} parent=79 // pred_fallthru
          _
      $region80: #{mel_encoder_forward.9} parent=5 // pred_fallthru
        _
      %p650 = scmp.le.s32.totalorder 1, %s37
      %p651 = scmp.lt.s32.totalorder %s37, 3
      %p652 = pnand %p650, %p651
      %p653 = pneg %p652
      // Predicated region
      $region85: #{mel_encoder_forward.9} parent=5 // pred_check
        _
      $region86: #{mel_encoder_forward.9} parent=5 // pred_check_branch
        %655 = sbr.rel (%p652) target = $region88
      $region87: #{mel_encoder_forward.9} parent=5 // pred_region
        %s656 = ssub.s32 %s37, 1
        %s657 = sand.u32 %s50, 1
        %s658 = scalar_lea.sflag [#allocation3], %s657
        %s659 = sand.u32 %s50, 1
        %s660 = smul.addr %s659, 8
        %s661 = scalar_lea.vmem [#allocation2], %s660
        // Predicated region
        $region89: #{mel_encoder_forward.9} parent=87 // pred_check
          %p662 = pneg %p63
        $region90: #{mel_encoder_forward.9} parent=87 // pred_check_branch
          %664 = sbr.rel (%p662) target = $region92
        $region91: #{mel_encoder_forward.9} parent=87 // pred_region
          %665 = dma.done %s658, 128
        $region92: #{mel_encoder_forward.9} parent=87 // pred_fallthru
          _
        // Predicated region
        $region93: #{mel_encoder_forward.9} parent=87 // pred_check
          %p666 = pneg %p84
        $region94: #{mel_encoder_forward.9} parent=87 // pred_check_branch
          %668 = sbr.rel (%p666) target = $region96
        $region95: #{mel_encoder_forward.9} parent=87 // pred_region
          %669 = dma.done [#allocation6], 1024
        $region96: #{mel_encoder_forward.9} parent=87 // pred_fallthru
          _
        // Predicated region
        $region97: #{mel_encoder_forward.9} parent=87 // pred_check
          %p670 = pneg %p105
        $region98: #{mel_encoder_forward.9} parent=87 // pred_check_branch
          %672 = sbr.rel (%p670) target = $region100
        $region99: #{mel_encoder_forward.9} parent=87 // pred_region
          %673 = dma.done [#allocation6], 16
        $region100: #{mel_encoder_forward.9} parent=87 // pred_fallthru
          _
        // Predicated region
        $region101: #{mel_encoder_forward.9} parent=87 // pred_check
          %p674 = pneg %p126
        $region102: #{mel_encoder_forward.9} parent=87 // pred_check_branch
          %676 = sbr.rel (%p674) target = $region104
        $region103: #{mel_encoder_forward.9} parent=87 // pred_region
          %677 = dma.done [#allocation9], 1024
        $region104: #{mel_encoder_forward.9} parent=87 // pred_fallthru
          _
        // Predicated region
        $region105: #{mel_encoder_forward.9} parent=87 // pred_check
          %p678 = pneg %p147
        $region106: #{mel_encoder_forward.9} parent=87 // pred_check_branch
          %680 = sbr.rel (%p678) target = $region108
        $region107: #{mel_encoder_forward.9} parent=87 // pred_region
          %681 = dma.done [#allocation9], 16
        $region108: #{mel_encoder_forward.9} parent=87 // pred_fallthru
          _
        // Predicated region
        $region109: #{mel_encoder_forward.9} parent=87 // pred_check
          %p682 = pneg %p168
        $region110: #{mel_encoder_forward.9} parent=87 // pred_check_branch
          %684 = sbr.rel (%p682) target = $region112
        $region111: #{mel_encoder_forward.9} parent=87 // pred_region
          %685 = dma.done [#allocation12], 1024
        $region112: #{mel_encoder_forward.9} parent=87 // pred_fallthru
          _
        // Predicated region
        $region113: #{mel_encoder_forward.9} parent=87 // pred_check
          %p686 = pneg %p189
        $region114: #{mel_encoder_forward.9} parent=87 // pred_check_branch
          %688 = sbr.rel (%p686) target = $region116
        $region115: #{mel_encoder_forward.9} parent=87 // pred_region
          %689 = dma.done [#allocation12], 16
        $region116: #{mel_encoder_forward.9} parent=87 // pred_fallthru
          _
        // Predicated region
        $region117: #{mel_encoder_forward.9} parent=87 // pred_check
          %p690 = pneg %p210
        $region118: #{mel_encoder_forward.9} parent=87 // pred_check_branch
          %692 = sbr.rel (%p690) target = $region120
        $region119: #{mel_encoder_forward.9} parent=87 // pred_region
          %693 = dma.done [#allocation15], 1024
        $region120: #{mel_encoder_forward.9} parent=87 // pred_fallthru
          _
        // Predicated region
        $region121: #{mel_encoder_forward.9} parent=87 // pred_check
          %p694 = pneg %p231
        $region122: #{mel_encoder_forward.9} parent=87 // pred_check_branch
          %696 = sbr.rel (%p694) target = $region124
        $region123: #{mel_encoder_forward.9} parent=87 // pred_region
          %697 = dma.done [#allocation15], 16
        $region124: #{mel_encoder_forward.9} parent=87 // pred_fallthru
          _
        // Predicated region
        $region125: #{mel_encoder_forward.9} parent=87 // pred_check
          %p698 = pneg %p252
        $region126: #{mel_encoder_forward.9} parent=87 // pred_check_branch
          %700 = sbr.rel (%p698) target = $region128
        $region127: #{mel_encoder_forward.9} parent=87 // pred_region
          %701 = dma.done [#allocation18], 16
        $region128: #{mel_encoder_forward.9} parent=87 // pred_fallthru
          _
        // Predicated region
        $region129: #{mel_encoder_forward.9} parent=87 // pred_check
          %p702 = pneg %p273
        $region130: #{mel_encoder_forward.9} parent=87 // pred_check_branch
          %704 = sbr.rel (%p702) target = $region132
        $region131: #{mel_encoder_forward.9} parent=87 // pred_region
          %705 = dma.done [#allocation18], 16
        $region132: #{mel_encoder_forward.9} parent=87 // pred_fallthru
          _
        // Predicated region
        $region133: #{mel_encoder_forward.9} parent=87 // pred_check
          %p706 = pneg %p294
        $region134: #{mel_encoder_forward.9} parent=87 // pred_check_branch
          %708 = sbr.rel (%p706) target = $region136
        $region135: #{mel_encoder_forward.9} parent=87 // pred_region
          %709 = dma.done [#allocation21], 4096
        $region136: #{mel_encoder_forward.9} parent=87 // pred_fallthru
          _
        // Predicated region
        $region137: #{mel_encoder_forward.9} parent=87 // pred_check
          %p710 = pneg %p315
        $region138: #{mel_encoder_forward.9} parent=87 // pred_check_branch
          %712 = sbr.rel (%p710) target = $region140
        $region139: #{mel_encoder_forward.9} parent=87 // pred_region
          %713 = dma.done [#allocation21], 64
        $region140: #{mel_encoder_forward.9} parent=87 // pred_fallthru
          _
        // Predicated region
        $region141: #{mel_encoder_forward.9} parent=87 // pred_check
          %p714 = pneg %p336
        $region142: #{mel_encoder_forward.9} parent=87 // pred_check_branch
          %716 = sbr.rel (%p714) target = $region144
        $region143: #{mel_encoder_forward.9} parent=87 // pred_region
          %717 = dma.done [#allocation24], 4096
        $region144: #{mel_encoder_forward.9} parent=87 // pred_fallthru
          _
        // Predicated region
        $region145: #{mel_encoder_forward.9} parent=87 // pred_check
          %p718 = pneg %p357
        $region146: #{mel_encoder_forward.9} parent=87 // pred_check_branch
          %720 = sbr.rel (%p718) target = $region148
        $region147: #{mel_encoder_forward.9} parent=87 // pred_region
          %721 = dma.done [#allocation24], 16
        $region148: #{mel_encoder_forward.9} parent=87 // pred_fallthru
          _
        // Predicated region
        $region149: #{mel_encoder_forward.9} parent=87 // pred_check
          %p722 = pneg %p378
        $region150: #{mel_encoder_forward.9} parent=87 // pred_check_branch
          %724 = sbr.rel (%p722) target = $region152
        $region151: #{mel_encoder_forward.9} parent=87 // pred_region
          %725 = dma.done [#allocation27], 16
        $region152: #{mel_encoder_forward.9} parent=87 // pred_fallthru
          _
        // Predicated region
        $region153: #{mel_encoder_forward.9} parent=87 // pred_check
          %p726 = pneg %p399
        $region154: #{mel_encoder_forward.9} parent=87 // pred_check_branch
          %728 = sbr.rel (%p726) target = $region156
        $region155: #{mel_encoder_forward.9} parent=87 // pred_region
          %729 = dma.done [#allocation27], 16
        $region156: #{mel_encoder_forward.9} parent=87 // pred_fallthru
          _
        %s730 = sand.u32 %s50, 1
        %s731 = scalar_lea.sflag [#allocation3], %s730
        %s732 = sand.u32 %s50, 1
        %s733 = smul.addr %s732, 8
        %s734 = scalar_lea.vmem [#allocation2], %s733
        %p735 = pneg %p63
        %p736 = pneg %p60
        %p737 = pneg %p84
        %p738 = pneg %p81
        %p739 = pneg %p105
        %p740 = pneg %p102
        %p741 = pneg %p126
        %p742 = pneg %p123
        %p743 = pneg %p147
        %p744 = pneg %p144
        %p745 = pneg %p168
        %p746 = pneg %p165
        %p747 = pneg %p189
        %p748 = pneg %p186
        %p749 = pneg %p210
        %p750 = pneg %p207
        %p751 = pneg %p231
        %p752 = pneg %p228
        %p753 = pneg %p252
        %p754 = pneg %p249
        %p755 = pneg %p273
        %p756 = pneg %p270
        %p757 = pneg %p294
        %p758 = pneg %p291
        %p759 = pneg %p315
        %p760 = pneg %p312
        %p761 = pneg %p336
        %p762 = pneg %p333
        %p763 = pneg %p357
        %p764 = pneg %p354
        %p765 = pneg %p378
        %p766 = pneg %p375
        %p767 = pneg %p399
        %p768 = pneg %p396
        %p769 = pneg %p425
        %p770 = pneg %p422
        %s771 = sand.u32 %s412, 1
        %s772 = scalar_lea.sflag [#allocation4], %s771
        %s773 = sand.u32 %s412, 1
        %s774 = smul.addr %s773, 8
        %s775 = scalar_lea.vmem [#allocation29], %s774
        %v777 = vld [vmem:[%s661] sm:$0xff]
        %v778 = vpack.c.bf16 %v777, %v777
        %v779 = vld [vmem:[#allocation5] sm:$0xf]
        %v780 = vld [vmem:[#allocation5 + $0x4] sm:$0xf]
        %v781 = vld [vmem:[#allocation5 + $0x8] sm:$0xf]
        %v782 = vld [vmem:[#allocation5 + $0xc] sm:$0xf]
        %v783 = vld [vmem:[#allocation5 + $0x10] sm:$0xf]
        %v784 = vld [vmem:[#allocation5 + $0x14] sm:$0xf]
        %v785 = vld [vmem:[#allocation5 + $0x18] sm:$0xf]
        %v786 = vld [vmem:[#allocation5 + $0x1c] sm:$0xf]
        %v787 = vld [vmem:[#allocation5 + $0x20] sm:$0xf]
        %v788 = vld [vmem:[#allocation5 + $0x24] sm:$0xf]
        %v789 = vld [vmem:[#allocation5 + $0x28] sm:$0xf]
        %v790 = vld [vmem:[#allocation5 + $0x2c] sm:$0xf]
        %v791 = vld [vmem:[#allocation5 + $0x30] sm:$0xf]
        %v792 = vld [vmem:[#allocation5 + $0x34] sm:$0xf]
        %v793 = vld [vmem:[#allocation5 + $0x38] sm:$0xf]
        %v794 = vld [vmem:[#allocation5 + $0x3c] sm:$0xf]
        %v795 = vld [vmem:[#allocation7] sm:$0x1]
        %v797 = vlaneseq
        %v798 = vshrl.u32 %v797, 7
        %v799 = vsub.s32 0, %v798
        %v800 = vrot.slane %v795, %v799
        %v818 = vunpack.c.l.b16 %v779
        %v819 = vunpack.c.l.b16 %v780
        %v820 = vunpack.c.l.b16 %v781
        %v821 = vunpack.c.l.b16 %v782
        %v822 = vunpack.c.l.b16 %v783
        %v823 = vunpack.c.l.b16 %v784
        %v824 = vunpack.c.l.b16 %v785
        %v825 = vunpack.c.l.b16 %v786
        %v826 = vunpack.c.l.b16 %v787
        %v827 = vunpack.c.l.b16 %v788
        %v828 = vunpack.c.l.b16 %v789
        %v829 = vunpack.c.l.b16 %v790
        %v830 = vunpack.c.l.b16 %v791
        %v831 = vunpack.c.l.b16 %v792
        %v832 = vunpack.c.l.b16 %v793
        %v833 = vunpack.c.l.b16 %v794
        %v834 = vpack.c.b16 %v819, %v818
        %v835 = vpack.c.b16 %v821, %v820
        %v836 = vpack.c.b16 %v823, %v822
        %v837 = vpack.c.b16 %v825, %v824
        %v838 = vpack.c.b16 %v827, %v826
        %v839 = vpack.c.b16 %v829, %v828
        %v840 = vpack.c.b16 %v831, %v830
        %v841 = vpack.c.b16 %v833, %v832
        %850 = vmatprep.subr.bf16.mxu0 0
        %851 = vmatpush1.bf16.msra.mxu0 %v834
        %852 = vmatprep.subr.bf16.mxu0 0
        %853 = vmatpush1.bf16.msra.mxu0 %v835
        %854 = vmatprep.subr.bf16.mxu0 0
        %855 = vmatpush1.bf16.msra.mxu0 %v836
        %856 = vmatprep.subr.bf16.mxu0 0
        %857 = vmatpush1.bf16.msra.mxu0 %v837
        %858 = vmatprep.subr.bf16.mxu0 0
        %859 = vmatpush1.bf16.msra.mxu0 %v838
        %860 = vmatprep.subr.bf16.mxu0 0
        %861 = vmatpush1.bf16.msra.mxu0 %v839
        %862 = vmatprep.subr.bf16.mxu0 0
        %863 = vmatpush1.bf16.msra.mxu0 %v840
        %864 = vmatprep.subr.bf16.mxu0 0
        %865 = vmatpush1.bf16.msra.mxu0 %v841
        %866 = vmatprep.subr.bf16.mxu0 0
        %867 = vmatpush1.bf16.msra.mxu0 0
        %868 = vmatprep.subr.bf16.mxu0 0
        %869 = vmatpush1.bf16.msra.mxu0 0
        %870 = vmatprep.subr.bf16.mxu0 0
        %871 = vmatpush1.bf16.msra.mxu0 0
        %872 = vmatprep.subr.bf16.mxu0 0
        %873 = vmatpush1.bf16.msra.mxu0 0
        %874 = vmatprep.subr.bf16.mxu0 0
        %875 = vmatpush1.bf16.msra.mxu0 0
        %876 = vmatprep.subr.bf16.mxu0 0
        %877 = vmatpush1.bf16.msra.mxu0 0
        %878 = vmatprep.subr.bf16.mxu0 0
        %879 = vmatpush1.bf16.msra.mxu0 0
        %880 = vmatprep.subr.bf16.mxu0 0
        %881 = vmatpush1.bf16.msra.mxu0 0
        %882 = vmatprep.mubr.bf16.mxu0 0
        %883 = vmatmul.mubr.bf16.gmra.mrb[0].mxu0 %v778
        %v884 = vpop.f32.mrb[0].mxu0
        %v885 = vadd.f32 %v800, %v884
        %v886 = vpop.f32.mrb[0].mxu0
        %v887 = vpop.f32.mrb[0].mxu0
        %v888 = vpop.f32.mrb[0].mxu0
        %889 = vdwg.mxu0
        %v890 = vmul.f32 %v885, 0.17677669
        %v891 = vld [vmem:[#allocation8] sm:$0xf]
        %v892 = vld [vmem:[#allocation8 + $0x4] sm:$0xf]
        %v893 = vld [vmem:[#allocation8 + $0x8] sm:$0xf]
        %v894 = vld [vmem:[#allocation8 + $0xc] sm:$0xf]
        %v895 = vld [vmem:[#allocation8 + $0x10] sm:$0xf]
        %v896 = vld [vmem:[#allocation8 + $0x14] sm:$0xf]
        %v897 = vld [vmem:[#allocation8 + $0x18] sm:$0xf]
        %v898 = vld [vmem:[#allocation8 + $0x1c] sm:$0xf]
        %v899 = vld [vmem:[#allocation8 + $0x20] sm:$0xf]
        %v900 = vld [vmem:[#allocation8 + $0x24] sm:$0xf]
        %v901 = vld [vmem:[#allocation8 + $0x28] sm:$0xf]
        %v902 = vld [vmem:[#allocation8 + $0x2c] sm:$0xf]
        %v903 = vld [vmem:[#allocation8 + $0x30] sm:$0xf]
        %v904 = vld [vmem:[#allocation8 + $0x34] sm:$0xf]
        %v905 = vld [vmem:[#allocation8 + $0x38] sm:$0xf]
        %v906 = vld [vmem:[#allocation8 + $0x3c] sm:$0xf]
        %v907 = vld [vmem:[#allocation10] sm:$0x1]
        %v909 = vlaneseq
        %v910 = vshrl.u32 %v909, 7
        %v911 = vsub.s32 0, %v910
        %v912 = vrot.slane %v907, %v911
        %v930 = vunpack.c.l.b16 %v891
        %v931 = vunpack.c.l.b16 %v892
        %v932 = vunpack.c.l.b16 %v893
        %v933 = vunpack.c.l.b16 %v894
        %v934 = vunpack.c.l.b16 %v895
        %v935 = vunpack.c.l.b16 %v896
        %v936 = vunpack.c.l.b16 %v897
        %v937 = vunpack.c.l.b16 %v898
        %v938 = vunpack.c.l.b16 %v899
        %v939 = vunpack.c.l.b16 %v900
        %v940 = vunpack.c.l.b16 %v901
        %v941 = vunpack.c.l.b16 %v902
        %v942 = vunpack.c.l.b16 %v903
        %v943 = vunpack.c.l.b16 %v904
        %v944 = vunpack.c.l.b16 %v905
        %v945 = vunpack.c.l.b16 %v906
        %v946 = vpack.c.b16 %v931, %v930
        %v947 = vpack.c.b16 %v933, %v932
        %v948 = vpack.c.b16 %v935, %v934
        %v949 = vpack.c.b16 %v937, %v936
        %v950 = vpack.c.b16 %v939, %v938
        %v951 = vpack.c.b16 %v941, %v940
        %v952 = vpack.c.b16 %v943, %v942
        %v953 = vpack.c.b16 %v945, %v944
        %962 = vmatprep.subr.bf16.mxu0 0
        %963 = vmatpush1.bf16.msra.mxu0 %v946
        %964 = vmatprep.subr.bf16.mxu0 0
        %965 = vmatpush1.bf16.msra.mxu0 %v947
        %966 = vmatprep.subr.bf16.mxu0 0
        %967 = vmatpush1.bf16.msra.mxu0 %v948
        %968 = vmatprep.subr.bf16.mxu0 0
        %969 = vmatpush1.bf16.msra.mxu0 %v949
        %970 = vmatprep.subr.bf16.mxu0 0
        %971 = vmatpush1.bf16.msra.mxu0 %v950
        %972 = vmatprep.subr.bf16.mxu0 0
        %973 = vmatpush1.bf16.msra.mxu0 %v951
        %974 = vmatprep.subr.bf16.mxu0 0
        %975 = vmatpush1.bf16.msra.mxu0 %v952
        %976 = vmatprep.subr.bf16.mxu0 0
        %977 = vmatpush1.bf16.msra.mxu0 %v953
        %978 = vmatprep.subr.bf16.mxu0 0
        %979 = vmatpush1.bf16.msra.mxu0 0
        %980 = vmatprep.subr.bf16.mxu0 0
        %981 = vmatpush1.bf16.msra.mxu0 0
        %982 = vmatprep.subr.bf16.mxu0 0
        %983 = vmatpush1.bf16.msra.mxu0 0
        %984 = vmatprep.subr.bf16.mxu0 0
        %985 = vmatpush1.bf16.msra.mxu0 0
        %986 = vmatprep.subr.bf16.mxu0 0
        %987 = vmatpush1.bf16.msra.mxu0 0
        %988 = vmatprep.subr.bf16.mxu0 0
        %989 = vmatpush1.bf16.msra.mxu0 0
        %990 = vmatprep.subr.bf16.mxu0 0
        %991 = vmatpush1.bf16.msra.mxu0 0
        %992 = vmatprep.subr.bf16.mxu0 0
        %993 = vmatpush1.bf16.msra.mxu0 0
        %994 = vmatprep.mubr.bf16.mxu0 0
        %995 = vmatmul.mubr.bf16.gmra.mrb[0].mxu0 %v778
        %v996 = vpop.f32.mrb[0].mxu0
        %v997 = vadd.f32 %v912, %v996
        %v998 = vpop.f32.mrb[0].mxu0
        %v999 = vpop.f32.mrb[0].mxu0
        %v1000 = vpop.f32.mrb[0].mxu0
        %1001 = vdwg.mxu0
        %v1002 = vld [vmem:[#allocation11] sm:$0xf]
        %v1003 = vld [vmem:[#allocation11 + $0x4] sm:$0xf]
        %v1004 = vld [vmem:[#allocation11 + $0x8] sm:$0xf]
        %v1005 = vld [vmem:[#allocation11 + $0xc] sm:$0xf]
        %v1006 = vld [vmem:[#allocation11 + $0x10] sm:$0xf]
        %v1007 = vld [vmem:[#allocation11 + $0x14] sm:$0xf]
        %v1008 = vld [vmem:[#allocation11 + $0x18] sm:$0xf]
        %v1009 = vld [vmem:[#allocation11 + $0x1c] sm:$0xf]
        %v1010 = vld [vmem:[#allocation11 + $0x20] sm:$0xf]
        %v1011 = vld [vmem:[#allocation11 + $0x24] sm:$0xf]
        %v1012 = vld [vmem:[#allocation11 + $0x28] sm:$0xf]
        %v1013 = vld [vmem:[#allocation11 + $0x2c] sm:$0xf]
        %v1014 = vld [vmem:[#allocation11 + $0x30] sm:$0xf]
        %v1015 = vld [vmem:[#allocation11 + $0x34] sm:$0xf]
        %v1016 = vld [vmem:[#allocation11 + $0x38] sm:$0xf]
        %v1017 = vld [vmem:[#allocation11 + $0x3c] sm:$0xf]
        %v1018 = vld [vmem:[#allocation13] sm:$0x1]
        %v1020 = vlaneseq
        %v1021 = vshrl.u32 %v1020, 7
        %v1022 = vsub.s32 0, %v1021
        %v1023 = vrot.slane %v1018, %v1022
        %v1041 = vunpack.c.l.b16 %v1002
        %v1042 = vunpack.c.l.b16 %v1003
        %v1043 = vunpack.c.l.b16 %v1004
        %v1044 = vunpack.c.l.b16 %v1005
        %v1045 = vunpack.c.l.b16 %v1006
        %v1046 = vunpack.c.l.b16 %v1007
        %v1047 = vunpack.c.l.b16 %v1008
        %v1048 = vunpack.c.l.b16 %v1009
        %v1049 = vunpack.c.l.b16 %v1010
        %v1050 = vunpack.c.l.b16 %v1011
        %v1051 = vunpack.c.l.b16 %v1012
        %v1052 = vunpack.c.l.b16 %v1013
        %v1053 = vunpack.c.l.b16 %v1014
        %v1054 = vunpack.c.l.b16 %v1015
        %v1055 = vunpack.c.l.b16 %v1016
        %v1056 = vunpack.c.l.b16 %v1017
        %v1057 = vpack.c.b16 %v1042, %v1041
        %v1058 = vpack.c.b16 %v1044, %v1043
        %v1059 = vpack.c.b16 %v1046, %v1045
        %v1060 = vpack.c.b16 %v1048, %v1047
        %v1061 = vpack.c.b16 %v1050, %v1049
        %v1062 = vpack.c.b16 %v1052, %v1051
        %v1063 = vpack.c.b16 %v1054, %v1053
        %v1064 = vpack.c.b16 %v1056, %v1055
        %1073 = vmatprep.subr.bf16.mxu0 0
        %1074 = vmatpush1.bf16.msra.mxu0 %v1057
        %1075 = vmatprep.subr.bf16.mxu0 0
        %1076 = vmatpush1.bf16.msra.mxu0 %v1058
        %1077 = vmatprep.subr.bf16.mxu0 0
        %1078 = vmatpush1.bf16.msra.mxu0 %v1059
        %1079 = vmatprep.subr.bf16.mxu0 0
        %1080 = vmatpush1.bf16.msra.mxu0 %v1060
        %1081 = vmatprep.subr.bf16.mxu0 0
        %1082 = vmatpush1.bf16.msra.mxu0 %v1061
        %1083 = vmatprep.subr.bf16.mxu0 0
        %1084 = vmatpush1.bf16.msra.mxu0 %v1062
        %1085 = vmatprep.subr.bf16.mxu0 0
        %1086 = vmatpush1.bf16.msra.mxu0 %v1063
        %1087 = vmatprep.subr.bf16.mxu0 0
        %1088 = vmatpush1.bf16.msra.mxu0 %v1064
        %1089 = vmatprep.subr.bf16.mxu0 0
        %1090 = vmatpush1.bf16.msra.mxu0 0
        %1091 = vmatprep.subr.bf16.mxu0 0
        %1092 = vmatpush1.bf16.msra.mxu0 0
        %1093 = vmatprep.subr.bf16.mxu0 0
        %1094 = vmatpush1.bf16.msra.mxu0 0
        %1095 = vmatprep.subr.bf16.mxu0 0
        %1096 = vmatpush1.bf16.msra.mxu0 0
        %1097 = vmatprep.subr.bf16.mxu0 0
        %1098 = vmatpush1.bf16.msra.mxu0 0
        %1099 = vmatprep.subr.bf16.mxu0 0
        %1100 = vmatpush1.bf16.msra.mxu0 0
        %1101 = vmatprep.subr.bf16.mxu0 0
        %1102 = vmatpush1.bf16.msra.mxu0 0
        %1103 = vmatprep.subr.bf16.mxu0 0
        %1104 = vmatpush1.bf16.msra.mxu0 0
        %1105 = vmatprep.mubr.bf16.mxu0 0
        %1106 = vmatmul.mubr.bf16.gmra.mrb[0].mxu0 %v778
        %v1107 = vpop.f32.mrb[0].mxu0
        %v1108 = vadd.f32 %v1023, %v1107
        %v1109 = vpop.f32.mrb[0].mxu0
        %v1110 = vpop.f32.mrb[0].mxu0
        %v1111 = vpop.f32.mrb[0].mxu0
        %1112 = vdwg.mxu0
        %v1113 = vpack.c.bf16 %v890, %v890
        %1114 = vxpose.xlu0.b32.start [1/16] %v997, 128
        %1115 = vxpose.xlu0.b32.cont [2/16] 0.0, 128
        %1116 = vxpose.xlu0.b32.cont [3/16] 0.0, 128
        %1117 = vxpose.xlu0.b32.cont [4/16] 0.0, 128
        %1118 = vxpose.xlu0.b32.cont [5/16] 0.0, 128
        %1119 = vxpose.xlu0.b32.cont [6/16] 0.0, 128
        %1120 = vxpose.xlu0.b32.cont [7/16] 0.0, 128
        %1121 = vxpose.xlu0.b32.cont [8/16] 0.0, 128
        %1122 = vxpose.xlu0.b32.cont [9/16] 0.0, 128
        %1123 = vxpose.xlu0.b32.cont [10/16] 0.0, 128
        %1124 = vxpose.xlu0.b32.cont [11/16] 0.0, 128
        %1125 = vxpose.xlu0.b32.cont [12/16] 0.0, 128
        %1126 = vxpose.xlu0.b32.cont [13/16] 0.0, 128
        %1127 = vxpose.xlu0.b32.cont [14/16] 0.0, 128
        %1128 = vxpose.xlu0.b32.cont [15/16] 0.0, 128
        %1129 = vxpose.xlu0.b32.end [16/16] 0.0, 128
        %v1130 = vpop.trf.xlu0
        %v1131 = vpop.trf.xlu0
        %v1132 = vpop.trf.xlu0
        %v1133 = vpop.trf.xlu0
        %v1134 = vpop.trf.xlu0
        %v1135 = vpop.trf.xlu0
        %v1136 = vpop.trf.xlu0
        %v1137 = vpop.trf.xlu0
        %v1138 = vpop.trf.xlu0
        %v1139 = vpop.trf.xlu0
        %v1140 = vpop.trf.xlu0
        %v1141 = vpop.trf.xlu0
        %v1142 = vpop.trf.xlu0
        %v1143 = vpop.trf.xlu0
        %v1144 = vpop.trf.xlu0
        %v1145 = vpop.trf.xlu0
        %v1146 = vpack.c.bf16 %v1131, %v1130
        %v1147 = vpack.c.bf16 %v1133, %v1132
        %v1148 = vpack.c.bf16 %v1108, %v1108
        %vm1149 = vcmask 261120
        %v1151 = vsel %vm1149, %v1113, 0
        %1153 = vmatprep.subr.bf16.mxu0 0
        %1154 = vmatpush1.bf16.msra.mxu0 %v1146
        %1155 = vmatprep.subr.bf16.mxu0 0
        %1156 = vmatpush1.bf16.msra.mxu0 %v1147
        %1157 = vmatprep.subr.bf16.mxu0 0
        %1158 = vmatpush1.bf16.msra.mxu0 0
        %1159 = vmatprep.subr.bf16.mxu0 0
        %1160 = vmatpush1.bf16.msra.mxu0 0
        %1161 = vmatprep.subr.bf16.mxu0 0
        %1162 = vmatpush1.bf16.msra.mxu0 0
        %1163 = vmatprep.subr.bf16.mxu0 0
        %1164 = vmatpush1.bf16.msra.mxu0 0
        %1165 = vmatprep.subr.bf16.mxu0 0
        %1166 = vmatpush1.bf16.msra.mxu0 0
        %1167 = vmatprep.subr.bf16.mxu0 0
        %1168 = vmatpush1.bf16.msra.mxu0 0
        %1169 = vmatprep.subr.bf16.mxu0 0
        %1170 = vmatpush1.bf16.msra.mxu0 0
        %1171 = vmatprep.subr.bf16.mxu0 0
        %1172 = vmatpush1.bf16.msra.mxu0 0
        %1173 = vmatprep.subr.bf16.mxu0 0
        %1174 = vmatpush1.bf16.msra.mxu0 0
        %1175 = vmatprep.subr.bf16.mxu0 0
        %1176 = vmatpush1.bf16.msra.mxu0 0
        %1177 = vmatprep.subr.bf16.mxu0 0
        %1178 = vmatpush1.bf16.msra.mxu0 0
        %1179 = vmatprep.subr.bf16.mxu0 0
        %1180 = vmatpush1.bf16.msra.mxu0 0
        %1181 = vmatprep.subr.bf16.mxu0 0
        %1182 = vmatpush1.bf16.msra.mxu0 0
        %1183 = vmatprep.subr.bf16.mxu0 0
        %1184 = vmatpush1.bf16.msra.mxu0 0
        %1185 = vmatprep.mubr.bf16.mxu0 0
        %1186 = vmatmul.mubr.bf16.gmra.mrb[0].mxu0 %v1151
        %v1187 = vpop.f32.mrb[0].mxu0
        %v1188 = vadd.f32 0.0, %v1187
        %v1189 = vpop.f32.mrb[0].mxu0
        %v1190 = vpop.f32.mrb[0].mxu0
        %v1191 = vpop.f32.mrb[0].mxu0
        %1192 = vdwg.mxu0
        %vm1193 = vcmask 64512
        %v1194 = vsel %vm1193, %v1188, -inf
        %1195 = vmax.xlane.f32.xlu0 %v1194
        %v1196 = vpop.xlane.xlu0 %1195
        %v1197 = vsub.f32 %v1188, %v1196
        %v1198 = vmul.f32 %v1197, 1.442695
        %v1199 = vpow.pop %v1198
        %v1200 = vsel %vm1193, %v1199, 0.0
        %1201 = vadd.xlane.f32.xlu0 %v1200
        %v1202 = vpop.xlane.xlu0 %1201
        %v1203 = vrcp.pop %v1202
        %v1204 = vmul.f32 %v1199, %v1203
        %v1205 = vpack.c.bf16 %v1204, %v1204
        %v1207 = vsel %vm1193, %v1205, 0
        %vm1209 = vcmask 1043456
        %v1211 = vsel %vm1209, %v1148, 0
        %1213 = vmatprep.subr.bf16.mxu0 0
        %1214 = vmatpush1.bf16.msra.mxu0 %v1211
        %1215 = vmatprep.subr.bf16.mxu0 0
        %1216 = vmatpush1.bf16.msra.mxu0 0
        %1217 = vmatprep.subr.bf16.mxu0 0
        %1218 = vmatpush1.bf16.msra.mxu0 0
        %1219 = vmatprep.subr.bf16.mxu0 0
        %1220 = vmatpush1.bf16.msra.mxu0 0
        %1221 = vmatprep.subr.bf16.mxu0 0
        %1222 = vmatpush1.bf16.msra.mxu0 0
        %1223 = vmatprep.subr.bf16.mxu0 0
        %1224 = vmatpush1.bf16.msra.mxu0 0
        %1225 = vmatprep.subr.bf16.mxu0 0
        %1226 = vmatpush1.bf16.msra.mxu0 0
        %1227 = vmatprep.subr.bf16.mxu0 0
        %1228 = vmatpush1.bf16.msra.mxu0 0
        %1229 = vmatprep.subr.bf16.mxu0 0
        %1230 = vmatpush1.bf16.msra.mxu0 0
        %1231 = vmatprep.subr.bf16.mxu0 0
        %1232 = vmatpush1.bf16.msra.mxu0 0
        %1233 = vmatprep.subr.bf16.mxu0 0
        %1234 = vmatpush1.bf16.msra.mxu0 0
        %1235 = vmatprep.subr.bf16.mxu0 0
        %1236 = vmatpush1.bf16.msra.mxu0 0
        %1237 = vmatprep.subr.bf16.mxu0 0
        %1238 = vmatpush1.bf16.msra.mxu0 0
        %1239 = vmatprep.subr.bf16.mxu0 0
        %1240 = vmatpush1.bf16.msra.mxu0 0
        %1241 = vmatprep.subr.bf16.mxu0 0
        %1242 = vmatpush1.bf16.msra.mxu0 0
        %1243 = vmatprep.subr.bf16.mxu0 0
        %1244 = vmatpush1.bf16.msra.mxu0 0
        %1245 = vmatprep.mubr.bf16.mxu0 0
        %1246 = vmatmul.mubr.bf16.gmra.mrb[0].mxu0 %v1207
        %v1247 = vpop.f32.mrb[0].mxu0
        %v1248 = vadd.f32 0.0, %v1247
        %v1249 = vpop.f32.mrb[0].mxu0
        %v1250 = vpop.f32.mrb[0].mxu0
        %v1251 = vpop.f32.mrb[0].mxu0
        %1252 = vdwg.mxu0
        %1254 = vrot.lane.b32.xlu0 %v997, 96
        %v1255 = vpop.permute.xlu0 %1254
        %1257 = vxpose.xlu0.b32.start [1/16] %v1255, 128
        %1258 = vxpose.xlu0.b32.cont [2/16] 0.0, 128
        %1259 = vxpose.xlu0.b32.cont [3/16] 0.0, 128
        %1260 = vxpose.xlu0.b32.cont [4/16] 0.0, 128
        %1261 = vxpose.xlu0.b32.cont [5/16] 0.0, 128
        %1262 = vxpose.xlu0.b32.cont [6/16] 0.0, 128
        %1263 = vxpose.xlu0.b32.cont [7/16] 0.0, 128
        %1264 = vxpose.xlu0.b32.cont [8/16] 0.0, 128
        %1265 = vxpose.xlu0.b32.cont [9/16] 0.0, 128
        %1266 = vxpose.xlu0.b32.cont [10/16] 0.0, 128
        %1267 = vxpose.xlu0.b32.cont [11/16] 0.0, 128
        %1268 = vxpose.xlu0.b32.cont [12/16] 0.0, 128
        %1269 = vxpose.xlu0.b32.cont [13/16] 0.0, 128
        %1270 = vxpose.xlu0.b32.cont [14/16] 0.0, 128
        %1271 = vxpose.xlu0.b32.cont [15/16] 0.0, 128
        %1272 = vxpose.xlu0.b32.end [16/16] 0.0, 128
        %v1273 = vpop.trf.xlu0
        %v1274 = vpop.trf.xlu0
        %v1275 = vpop.trf.xlu0
        %v1276 = vpop.trf.xlu0
        %v1277 = vpop.trf.xlu0
        %v1278 = vpop.trf.xlu0
        %v1279 = vpop.trf.xlu0
        %v1280 = vpop.trf.xlu0
        %v1281 = vpop.trf.xlu0
        %v1282 = vpop.trf.xlu0
        %v1283 = vpop.trf.xlu0
        %v1284 = vpop.trf.xlu0
        %v1285 = vpop.trf.xlu0
        %v1286 = vpop.trf.xlu0
        %v1287 = vpop.trf.xlu0
        %v1288 = vpop.trf.xlu0
        %v1289 = vpack.c.bf16 %v1274, %v1273
        %v1290 = vpack.c.bf16 %v1276, %v1275
        %1292 = vrot.lane.b32.xlu0 %v1113, 96
        %v1293 = vpop.permute.xlu0 %1292
        %v1295 = vsel %vm1149, %v1293, 0
        %1297 = vmatprep.subr.bf16.mxu0 0
        %1298 = vmatpush1.bf16.msra.mxu0 %v1289
        %1299 = vmatprep.subr.bf16.mxu0 0
        %1300 = vmatpush1.bf16.msra.mxu0 %v1290
        %1301 = vmatprep.subr.bf16.mxu0 0
        %1302 = vmatpush1.bf16.msra.mxu0 0
        %1303 = vmatprep.subr.bf16.mxu0 0
        %1304 = vmatpush1.bf16.msra.mxu0 0
        %1305 = vmatprep.subr.bf16.mxu0 0
        %1306 = vmatpush1.bf16.msra.mxu0 0
        %1307 = vmatprep.subr.bf16.mxu0 0
        %1308 = vmatpush1.bf16.msra.mxu0 0
        %1309 = vmatprep.subr.bf16.mxu0 0
        %1310 = vmatpush1.bf16.msra.mxu0 0
        %1311 = vmatprep.subr.bf16.mxu0 0
        %1312 = vmatpush1.bf16.msra.mxu0 0
        %1313 = vmatprep.subr.bf16.mxu0 0
        %1314 = vmatpush1.bf16.msra.mxu0 0
        %1315 = vmatprep.subr.bf16.mxu0 0
        %1316 = vmatpush1.bf16.msra.mxu0 0
        %1317 = vmatprep.subr.bf16.mxu0 0
        %1318 = vmatpush1.bf16.msra.mxu0 0
        %1319 = vmatprep.subr.bf16.mxu0 0
        %1320 = vmatpush1.bf16.msra.mxu0 0
        %1321 = vmatprep.subr.bf16.mxu0 0
        %1322 = vmatpush1.bf16.msra.mxu0 0
        %1323 = vmatprep.subr.bf16.mxu0 0
        %1324 = vmatpush1.bf16.msra.mxu0 0
        %1325 = vmatprep.subr.bf16.mxu0 0
        %1326 = vmatpush1.bf16.msra.mxu0 0
        %1327 = vmatprep.subr.bf16.mxu0 0
        %1328 = vmatpush1.bf16.msra.mxu0 0
        %1329 = vmatprep.mubr.bf16.mxu0 0
        %1330 = vmatmul.mubr.bf16.gmra.mrb[0].mxu0 %v1295
        %v1331 = vpop.f32.mrb[0].mxu0
        %v1332 = vadd.f32 0.0, %v1331
        %v1333 = vpop.f32.mrb[0].mxu0
        %v1334 = vpop.f32.mrb[0].mxu0
        %v1335 = vpop.f32.mrb[0].mxu0
        %1336 = vdwg.mxu0
        %v1337 = vsel %vm1193, %v1332, -inf
        %1338 = vmax.xlane.f32.xlu0 %v1337
        %v1339 = vpop.xlane.xlu0 %1338
        %v1340 = vsub.f32 %v1332, %v1339
        %v1341 = vmul.f32 %v1340, 1.442695
        %v1342 = vpow.pop %v1341
        %v1343 = vsel %vm1193, %v1342, 0.0
        %1344 = vadd.xlane.f32.xlu0 %v1343
        %v1345 = vpop.xlane.xlu0 %1344
        %v1346 = vrcp.pop %v1345
        %v1347 = vmul.f32 %v1342, %v1346
        %v1348 = vpack.c.bf16 %v1347, %v1347
        %1350 = vrot.lane.b32.xlu0 %v1148, 96
        %v1351 = vpop.permute.xlu0 %1350
        %v1353 = vsel %vm1193, %v1348, 0
        %v1356 = vsel %vm1209, %v1351, 0
        %1358 = vmatprep.subr.bf16.mxu0 0
        %1359 = vmatpush1.bf16.msra.mxu0 %v1356
        %1360 = vmatprep.subr.bf16.mxu0 0
        %1361 = vmatpush1.bf16.msra.mxu0 0
        %1362 = vmatprep.subr.bf16.mxu0 0
        %1363 = vmatpush1.bf16.msra.mxu0 0
        %1364 = vmatprep.subr.bf16.mxu0 0
        %1365 = vmatpush1.bf16.msra.mxu0 0
        %1366 = vmatprep.subr.bf16.mxu0 0
        %1367 = vmatpush1.bf16.msra.mxu0 0
        %1368 = vmatprep.subr.bf16.mxu0 0
        %1369 = vmatpush1.bf16.msra.mxu0 0
        %1370 = vmatprep.subr.bf16.mxu0 0
        %1371 = vmatpush1.bf16.msra.mxu0 0
        %1372 = vmatprep.subr.bf16.mxu0 0
        %1373 = vmatpush1.bf16.msra.mxu0 0
        %1374 = vmatprep.subr.bf16.mxu0 0
        %1375 = vmatpush1.bf16.msra.mxu0 0
        %1376 = vmatprep.subr.bf16.mxu0 0
        %1377 = vmatpush1.bf16.msra.mxu0 0
        %1378 = vmatprep.subr.bf16.mxu0 0
        %1379 = vmatpush1.bf16.msra.mxu0 0
        %1380 = vmatprep.subr.bf16.mxu0 0
        %1381 = vmatpush1.bf16.msra.mxu0 0
        %1382 = vmatprep.subr.bf16.mxu0 0
        %1383 = vmatpush1.bf16.msra.mxu0 0
        %1384 = vmatprep.subr.bf16.mxu0 0
        %1385 = vmatpush1.bf16.msra.mxu0 0
        %1386 = vmatprep.subr.bf16.mxu0 0
        %1387 = vmatpush1.bf16.msra.mxu0 0
        %1388 = vmatprep.subr.bf16.mxu0 0
        %1389 = vmatpush1.bf16.msra.mxu0 0
        %1390 = vmatprep.mubr.bf16.mxu0 0
        %1391 = vmatmul.mubr.bf16.gmra.mrb[0].mxu0 %v1353
        %v1392 = vpop.f32.mrb[0].mxu0
        %v1393 = vadd.f32 0.0, %v1392
        %v1394 = vpop.f32.mrb[0].mxu0
        %v1395 = vpop.f32.mrb[0].mxu0
        %v1396 = vpop.f32.mrb[0].mxu0
        %1397 = vdwg.mxu0
        %1398 = vrot.lane.b32.xlu0 %v997, 64
        %v1399 = vpop.permute.xlu0 %1398
        %1401 = vxpose.xlu0.b32.start [1/16] %v1399, 128
        %1402 = vxpose.xlu0.b32.cont [2/16] 0.0, 128
        %1403 = vxpose.xlu0.b32.cont [3/16] 0.0, 128
        %1404 = vxpose.xlu0.b32.cont [4/16] 0.0, 128
        %1405 = vxpose.xlu0.b32.cont [5/16] 0.0, 128
        %1406 = vxpose.xlu0.b32.cont [6/16] 0.0, 128
        %1407 = vxpose.xlu0.b32.cont [7/16] 0.0, 128
        %1408 = vxpose.xlu0.b32.cont [8/16] 0.0, 128
        %1409 = vxpose.xlu0.b32.cont [9/16] 0.0, 128
        %1410 = vxpose.xlu0.b32.cont [10/16] 0.0, 128
        %1411 = vxpose.xlu0.b32.cont [11/16] 0.0, 128
        %1412 = vxpose.xlu0.b32.cont [12/16] 0.0, 128
        %1413 = vxpose.xlu0.b32.cont [13/16] 0.0, 128
        %1414 = vxpose.xlu0.b32.cont [14/16] 0.0, 128
        %1415 = vxpose.xlu0.b32.cont [15/16] 0.0, 128
        %1416 = vxpose.xlu0.b32.end [16/16] 0.0, 128
        %v1417 = vpop.trf.xlu0
        %v1418 = vpop.trf.xlu0
        %v1419 = vpop.trf.xlu0
        %v1420 = vpop.trf.xlu0
        %v1421 = vpop.trf.xlu0
        %v1422 = vpop.trf.xlu0
        %v1423 = vpop.trf.xlu0
        %v1424 = vpop.trf.xlu0
        %v1425 = vpop.trf.xlu0
        %v1426 = vpop.trf.xlu0
        %v1427 = vpop.trf.xlu0
        %v1428 = vpop.trf.xlu0
        %v1429 = vpop.trf.xlu0
        %v1430 = vpop.trf.xlu0
        %v1431 = vpop.trf.xlu0
        %v1432 = vpop.trf.xlu0
        %v1433 = vpack.c.bf16 %v1418, %v1417
        %v1434 = vpack.c.bf16 %v1420, %v1419
        %1435 = vrot.lane.b32.xlu0 %v1113, 64
        %v1436 = vpop.permute.xlu0 %1435
        %v1438 = vsel %vm1149, %v1436, 0
        %1440 = vmatprep.subr.bf16.mxu0 0
        %1441 = vmatpush1.bf16.msra.mxu0 %v1433
        %1442 = vmatprep.subr.bf16.mxu0 0
        %1443 = vmatpush1.bf16.msra.mxu0 %v1434
        %1444 = vmatprep.subr.bf16.mxu0 0
        %1445 = vmatpush1.bf16.msra.mxu0 0
        %1446 = vmatprep.subr.bf16.mxu0 0
        %1447 = vmatpush1.bf16.msra.mxu0 0
        %1448 = vmatprep.subr.bf16.mxu0 0
        %1449 = vmatpush1.bf16.msra.mxu0 0
        %1450 = vmatprep.subr.bf16.mxu0 0
        %1451 = vmatpush1.bf16.msra.mxu0 0
        %1452 = vmatprep.subr.bf16.mxu0 0
        %1453 = vmatpush1.bf16.msra.mxu0 0
        %1454 = vmatprep.subr.bf16.mxu0 0
        %1455 = vmatpush1.bf16.msra.mxu0 0
        %1456 = vmatprep.subr.bf16.mxu0 0
        %1457 = vmatpush1.bf16.msra.mxu0 0
        %1458 = vmatprep.subr.bf16.mxu0 0
        %1459 = vmatpush1.bf16.msra.mxu0 0
        %1460 = vmatprep.subr.bf16.mxu0 0
        %1461 = vmatpush1.bf16.msra.mxu0 0
        %1462 = vmatprep.subr.bf16.mxu0 0
        %1463 = vmatpush1.bf16.msra.mxu0 0
        %1464 = vmatprep.subr.bf16.mxu0 0
        %1465 = vmatpush1.bf16.msra.mxu0 0
        %1466 = vmatprep.subr.bf16.mxu0 0
        %1467 = vmatpush1.bf16.msra.mxu0 0
        %1468 = vmatprep.subr.bf16.mxu0 0
        %1469 = vmatpush1.bf16.msra.mxu0 0
        %1470 = vmatprep.subr.bf16.mxu0 0
        %1471 = vmatpush1.bf16.msra.mxu0 0
        %1472 = vmatprep.mubr.bf16.mxu0 0
        %1473 = vmatmul.mubr.bf16.gmra.mrb[0].mxu0 %v1438
        %v1474 = vpop.f32.mrb[0].mxu0
        %v1475 = vadd.f32 0.0, %v1474
        %v1476 = vpop.f32.mrb[0].mxu0
        %v1477 = vpop.f32.mrb[0].mxu0
        %v1478 = vpop.f32.mrb[0].mxu0
        %1479 = vdwg.mxu0
        %v1480 = vsel %vm1193, %v1475, -inf
        %1481 = vmax.xlane.f32.xlu0 %v1480
        %v1482 = vpop.xlane.xlu0 %1481
        %v1483 = vsub.f32 %v1475, %v1482
        %v1484 = vmul.f32 %v1483, 1.442695
        %v1485 = vpow.pop %v1484
        %v1486 = vsel %vm1193, %v1485, 0.0
        %1487 = vadd.xlane.f32.xlu0 %v1486
        %v1488 = vpop.xlane.xlu0 %1487
        %v1489 = vrcp.pop %v1488
        %v1490 = vmul.f32 %v1485, %v1489
        %v1491 = vpack.c.bf16 %v1490, %v1490
        %1492 = vrot.lane.b32.xlu0 %v1148, 64
        %v1493 = vpop.permute.xlu0 %1492
        %v1495 = vsel %vm1193, %v1491, 0
        %v1498 = vsel %vm1209, %v1493, 0
        %1500 = vmatprep.subr.bf16.mxu0 0
        %1501 = vmatpush1.bf16.msra.mxu0 %v1498
        %1502 = vmatprep.subr.bf16.mxu0 0
        %1503 = vmatpush1.bf16.msra.mxu0 0
        %1504 = vmatprep.subr.bf16.mxu0 0
        %1505 = vmatpush1.bf16.msra.mxu0 0
        %1506 = vmatprep.subr.bf16.mxu0 0
        %1507 = vmatpush1.bf16.msra.mxu0 0
        %1508 = vmatprep.subr.bf16.mxu0 0
        %1509 = vmatpush1.bf16.msra.mxu0 0
        %1510 = vmatprep.subr.bf16.mxu0 0
        %1511 = vmatpush1.bf16.msra.mxu0 0
        %1512 = vmatprep.subr.bf16.mxu0 0
        %1513 = vmatpush1.bf16.msra.mxu0 0
        %1514 = vmatprep.subr.bf16.mxu0 0
        %1515 = vmatpush1.bf16.msra.mxu0 0
        %1516 = vmatprep.subr.bf16.mxu0 0
        %1517 = vmatpush1.bf16.msra.mxu0 0
        %1518 = vmatprep.subr.bf16.mxu0 0
        %1519 = vmatpush1.bf16.msra.mxu0 0
        %1520 = vmatprep.subr.bf16.mxu0 0
        %1521 = vmatpush1.bf16.msra.mxu0 0
        %1522 = vmatprep.subr.bf16.mxu0 0
        %1523 = vmatpush1.bf16.msra.mxu0 0
        %1524 = vmatprep.subr.bf16.mxu0 0
        %1525 = vmatpush1.bf16.msra.mxu0 0
        %1526 = vmatprep.subr.bf16.mxu0 0
        %1527 = vmatpush1.bf16.msra.mxu0 0
        %1528 = vmatprep.subr.bf16.mxu0 0
        %1529 = vmatpush1.bf16.msra.mxu0 0
        %1530 = vmatprep.subr.bf16.mxu0 0
        %1531 = vmatpush1.bf16.msra.mxu0 0
        %1532 = vmatprep.mubr.bf16.mxu0 0
        %1533 = vmatmul.mubr.bf16.gmra.mrb[0].mxu0 %v1495
        %v1534 = vpop.f32.mrb[0].mxu0
        %v1535 = vadd.f32 0.0, %v1534
        %v1536 = vpop.f32.mrb[0].mxu0
        %v1537 = vpop.f32.mrb[0].mxu0
        %v1538 = vpop.f32.mrb[0].mxu0
        %1539 = vdwg.mxu0
        %1540 = vrot.lane.b32.xlu0 %v997, 32
        %v1541 = vpop.permute.xlu0 %1540
        %1543 = vxpose.xlu0.b32.start [1/16] %v1541, 128
        %1544 = vxpose.xlu0.b32.cont [2/16] 0.0, 128
        %1545 = vxpose.xlu0.b32.cont [3/16] 0.0, 128
        %1546 = vxpose.xlu0.b32.cont [4/16] 0.0, 128
        %1547 = vxpose.xlu0.b32.cont [5/16] 0.0, 128
        %1548 = vxpose.xlu0.b32.cont [6/16] 0.0, 128
        %1549 = vxpose.xlu0.b32.cont [7/16] 0.0, 128
        %1550 = vxpose.xlu0.b32.cont [8/16] 0.0, 128
        %1551 = vxpose.xlu0.b32.cont [9/16] 0.0, 128
        %1552 = vxpose.xlu0.b32.cont [10/16] 0.0, 128
        %1553 = vxpose.xlu0.b32.cont [11/16] 0.0, 128
        %1554 = vxpose.xlu0.b32.cont [12/16] 0.0, 128
        %1555 = vxpose.xlu0.b32.cont [13/16] 0.0, 128
        %1556 = vxpose.xlu0.b32.cont [14/16] 0.0, 128
        %1557 = vxpose.xlu0.b32.cont [15/16] 0.0, 128
        %1558 = vxpose.xlu0.b32.end [16/16] 0.0, 128
        %v1559 = vpop.trf.xlu0
        %v1560 = vpop.trf.xlu0
        %v1561 = vpop.trf.xlu0
        %v1562 = vpop.trf.xlu0
        %v1563 = vpop.trf.xlu0
        %v1564 = vpop.trf.xlu0
        %v1565 = vpop.trf.xlu0
        %v1566 = vpop.trf.xlu0
        %v1567 = vpop.trf.xlu0
        %v1568 = vpop.trf.xlu0
        %v1569 = vpop.trf.xlu0
        %v1570 = vpop.trf.xlu0
        %v1571 = vpop.trf.xlu0
        %v1572 = vpop.trf.xlu0
        %v1573 = vpop.trf.xlu0
        %v1574 = vpop.trf.xlu0
        %v1575 = vpack.c.bf16 %v1560, %v1559
        %v1576 = vpack.c.bf16 %v1562, %v1561
        %1577 = vrot.lane.b32.xlu0 %v1113, 32
        %v1578 = vpop.permute.xlu0 %1577
        %v1580 = vsel %vm1149, %v1578, 0
        %1582 = vmatprep.subr.bf16.mxu0 0
        %1583 = vmatpush1.bf16.msra.mxu0 %v1575
        %1584 = vmatprep.subr.bf16.mxu0 0
        %1585 = vmatpush1.bf16.msra.mxu0 %v1576
        %1586 = vmatprep.subr.bf16.mxu0 0
        %1587 = vmatpush1.bf16.msra.mxu0 0
        %1588 = vmatprep.subr.bf16.mxu0 0
        %1589 = vmatpush1.bf16.msra.mxu0 0
        %1590 = vmatprep.subr.bf16.mxu0 0
        %1591 = vmatpush1.bf16.msra.mxu0 0
        %1592 = vmatprep.subr.bf16.mxu0 0
        %1593 = vmatpush1.bf16.msra.mxu0 0
        %1594 = vmatprep.subr.bf16.mxu0 0
        %1595 = vmatpush1.bf16.msra.mxu0 0
        %1596 = vmatprep.subr.bf16.mxu0 0
        %1597 = vmatpush1.bf16.msra.mxu0 0
        %1598 = vmatprep.subr.bf16.mxu0 0
        %1599 = vmatpush1.bf16.msra.mxu0 0
        %1600 = vmatprep.subr.bf16.mxu0 0
        %1601 = vmatpush1.bf16.msra.mxu0 0
        %1602 = vmatprep.subr.bf16.mxu0 0
        %1603 = vmatpush1.bf16.msra.mxu0 0
        %1604 = vmatprep.subr.bf16.mxu0 0
        %1605 = vmatpush1.bf16.msra.mxu0 0
        %1606 = vmatprep.subr.bf16.mxu0 0
        %1607 = vmatpush1.bf16.msra.mxu0 0
        %1608 = vmatprep.subr.bf16.mxu0 0
        %1609 = vmatpush1.bf16.msra.mxu0 0
        %1610 = vmatprep.subr.bf16.mxu0 0
        %1611 = vmatpush1.bf16.msra.mxu0 0
        %1612 = vmatprep.subr.bf16.mxu0 0
        %1613 = vmatpush1.bf16.msra.mxu0 0
        %1614 = vmatprep.mubr.bf16.mxu0 0
        %1615 = vmatmul.mubr.bf16.gmra.mrb[0].mxu0 %v1580
        %v1616 = vpop.f32.mrb[0].mxu0
        %v1617 = vadd.f32 0.0, %v1616
        %v1618 = vpop.f32.mrb[0].mxu0
        %v1619 = vpop.f32.mrb[0].mxu0
        %v1620 = vpop.f32.mrb[0].mxu0
        %1621 = vdwg.mxu0
        %v1622 = vsel %vm1193, %v1617, -inf
        %1623 = vmax.xlane.f32.xlu0 %v1622
        %v1624 = vpop.xlane.xlu0 %1623
        %v1625 = vsub.f32 %v1617, %v1624
        %v1626 = vmul.f32 %v1625, 1.442695
        %v1627 = vpow.pop %v1626
        %v1628 = vsel %vm1193, %v1627, 0.0
        %1629 = vadd.xlane.f32.xlu0 %v1628
        %v1630 = vpop.xlane.xlu0 %1629
        %v1631 = vrcp.pop %v1630
        %v1632 = vmul.f32 %v1627, %v1631
        %v1633 = vpack.c.bf16 %v1632, %v1632
        %1634 = vrot.lane.b32.xlu0 %v1148, 32
        %v1635 = vpop.permute.xlu0 %1634
        %v1637 = vsel %vm1193, %v1633, 0
        %v1640 = vsel %vm1209, %v1635, 0
        %1642 = vmatprep.subr.bf16.mxu0 0
        %1643 = vmatpush1.bf16.msra.mxu0 %v1640
        %1644 = vmatprep.subr.bf16.mxu0 0
        %1645 = vmatpush1.bf16.msra.mxu0 0
        %1646 = vmatprep.subr.bf16.mxu0 0
        %1647 = vmatpush1.bf16.msra.mxu0 0
        %1648 = vmatprep.subr.bf16.mxu0 0
        %1649 = vmatpush1.bf16.msra.mxu0 0
        %1650 = vmatprep.subr.bf16.mxu0 0
        %1651 = vmatpush1.bf16.msra.mxu0 0
        %1652 = vmatprep.subr.bf16.mxu0 0
        %1653 = vmatpush1.bf16.msra.mxu0 0
        %1654 = vmatprep.subr.bf16.mxu0 0
        %1655 = vmatpush1.bf16.msra.mxu0 0
        %1656 = vmatprep.subr.bf16.mxu0 0
        %1657 = vmatpush1.bf16.msra.mxu0 0
        %1658 = vmatprep.subr.bf16.mxu0 0
        %1659 = vmatpush1.bf16.msra.mxu0 0
        %1660 = vmatprep.subr.bf16.mxu0 0
        %1661 = vmatpush1.bf16.msra.mxu0 0
        %1662 = vmatprep.subr.bf16.mxu0 0
        %1663 = vmatpush1.bf16.msra.mxu0 0
        %1664 = vmatprep.subr.bf16.mxu0 0
        %1665 = vmatpush1.bf16.msra.mxu0 0
        %1666 = vmatprep.subr.bf16.mxu0 0
        %1667 = vmatpush1.bf16.msra.mxu0 0
        %1668 = vmatprep.subr.bf16.mxu0 0
        %1669 = vmatpush1.bf16.msra.mxu0 0
        %1670 = vmatprep.subr.bf16.mxu0 0
        %1671 = vmatpush1.bf16.msra.mxu0 0
        %1672 = vmatprep.subr.bf16.mxu0 0
        %1673 = vmatpush1.bf16.msra.mxu0 0
        %1674 = vmatprep.mubr.bf16.mxu0 0
        %1675 = vmatmul.mubr.bf16.gmra.mrb[0].mxu0 %v1637
        %v1676 = vpop.f32.mrb[0].mxu0
        %v1677 = vadd.f32 0.0, %v1676
        %v1678 = vpop.f32.mrb[0].mxu0
        %v1679 = vpop.f32.mrb[0].mxu0
        %v1680 = vpop.f32.mrb[0].mxu0
        %1681 = vdwg.mxu0
        %1683 = vrot.lane.b32.xlu0 %v1393, 32
        %v1684 = vpop.permute.xlu0 %1683
        %1687 = vrot.lane.b32.xlu0 %v1535, 64
        %v1688 = vpop.permute.xlu0 %1687
        %1691 = vrot.lane.b32.xlu0 %v1677, 96
        %v1692 = vpop.permute.xlu0 %1691
        %v1694 = vsel %vm1149, %v1248, %v1684
        %vm1695 = vcmask 523264
        %v1696 = vsel %vm1695, %v1694, %v1688
        %vm1697 = vcmask 785408
        %v1698 = vsel %vm1697, %v1696, %v1692
        %v1699 = vpack.c.bf16 %v1698, %v1698
        %v1700 = vld [vmem:[#allocation14] sm:$0xf]
        %v1701 = vld [vmem:[#allocation14 + $0x4] sm:$0xf]
        %v1702 = vld [vmem:[#allocation14 + $0x8] sm:$0xf]
        %v1703 = vld [vmem:[#allocation14 + $0xc] sm:$0xf]
        %v1704 = vld [vmem:[#allocation14 + $0x10] sm:$0xf]
        %v1705 = vld [vmem:[#allocation14 + $0x14] sm:$0xf]
        %v1706 = vld [vmem:[#allocation14 + $0x18] sm:$0xf]
        %v1707 = vld [vmem:[#allocation14 + $0x1c] sm:$0xf]
        %v1708 = vld [vmem:[#allocation14 + $0x20] sm:$0xf]
        %v1709 = vld [vmem:[#allocation14 + $0x24] sm:$0xf]
        %v1710 = vld [vmem:[#allocation14 + $0x28] sm:$0xf]
        %v1711 = vld [vmem:[#allocation14 + $0x2c] sm:$0xf]
        %v1712 = vld [vmem:[#allocation14 + $0x30] sm:$0xf]
        %v1713 = vld [vmem:[#allocation14 + $0x34] sm:$0xf]
        %v1714 = vld [vmem:[#allocation14 + $0x38] sm:$0xf]
        %v1715 = vld [vmem:[#allocation14 + $0x3c] sm:$0xf]
        %v1716 = vld [vmem:[#allocation16] sm:$0x1]
        %v1718 = vlaneseq
        %v1719 = vshrl.u32 %v1718, 7
        %v1720 = vsub.s32 0, %v1719
        %v1721 = vrot.slane %v1716, %v1720
        %v1739 = vunpack.c.l.b16 %v1700
        %v1740 = vunpack.c.l.b16 %v1701
        %v1741 = vunpack.c.l.b16 %v1702
        %v1742 = vunpack.c.l.b16 %v1703
        %v1743 = vunpack.c.l.b16 %v1704
        %v1744 = vunpack.c.l.b16 %v1705
        %v1745 = vunpack.c.l.b16 %v1706
        %v1746 = vunpack.c.l.b16 %v1707
        %v1747 = vunpack.c.l.b16 %v1708
        %v1748 = vunpack.c.l.b16 %v1709
        %v1749 = vunpack.c.l.b16 %v1710
        %v1750 = vunpack.c.l.b16 %v1711
        %v1751 = vunpack.c.l.b16 %v1712
        %v1752 = vunpack.c.l.b16 %v1713
        %v1753 = vunpack.c.l.b16 %v1714
        %v1754 = vunpack.c.l.b16 %v1715
        %v1755 = vpack.c.b16 %v1740, %v1739
        %v1756 = vpack.c.b16 %v1742, %v1741
        %v1757 = vpack.c.b16 %v1744, %v1743
        %v1758 = vpack.c.b16 %v1746, %v1745
        %v1759 = vpack.c.b16 %v1748, %v1747
        %v1760 = vpack.c.b16 %v1750, %v1749
        %v1761 = vpack.c.b16 %v1752, %v1751
        %v1762 = vpack.c.b16 %v1754, %v1753
        %1771 = vmatprep.subr.bf16.mxu0 0
        %1772 = vmatpush1.bf16.msra.mxu0 %v1755
        %1773 = vmatprep.subr.bf16.mxu0 0
        %1774 = vmatpush1.bf16.msra.mxu0 %v1756
        %1775 = vmatprep.subr.bf16.mxu0 0
        %1776 = vmatpush1.bf16.msra.mxu0 %v1757
        %1777 = vmatprep.subr.bf16.mxu0 0
        %1778 = vmatpush1.bf16.msra.mxu0 %v1758
        %1779 = vmatprep.subr.bf16.mxu0 0
        %1780 = vmatpush1.bf16.msra.mxu0 %v1759
        %1781 = vmatprep.subr.bf16.mxu0 0
        %1782 = vmatpush1.bf16.msra.mxu0 %v1760
        %1783 = vmatprep.subr.bf16.mxu0 0
        %1784 = vmatpush1.bf16.msra.mxu0 %v1761
        %1785 = vmatprep.subr.bf16.mxu0 0
        %1786 = vmatpush1.bf16.msra.mxu0 %v1762
        %1787 = vmatprep.subr.bf16.mxu0 0
        %1788 = vmatpush1.bf16.msra.mxu0 0
        %1789 = vmatprep.subr.bf16.mxu0 0
        %1790 = vmatpush1.bf16.msra.mxu0 0
        %1791 = vmatprep.subr.bf16.mxu0 0
        %1792 = vmatpush1.bf16.msra.mxu0 0
        %1793 = vmatprep.subr.bf16.mxu0 0
        %1794 = vmatpush1.bf16.msra.mxu0 0
        %1795 = vmatprep.subr.bf16.mxu0 0
        %1796 = vmatpush1.bf16.msra.mxu0 0
        %1797 = vmatprep.subr.bf16.mxu0 0
        %1798 = vmatpush1.bf16.msra.mxu0 0
        %1799 = vmatprep.subr.bf16.mxu0 0
        %1800 = vmatpush1.bf16.msra.mxu0 0
        %1801 = vmatprep.subr.bf16.mxu0 0
        %1802 = vmatpush1.bf16.msra.mxu0 0
        %1803 = vmatprep.mubr.bf16.mxu0 0
        %1804 = vmatmul.mubr.bf16.gmra.mrb[0].mxu0 %v1699
        %v1805 = vpop.f32.mrb[0].mxu0
        %v1806 = vadd.f32 %v1721, %v1805
        %v1807 = vpop.f32.mrb[0].mxu0
        %v1808 = vpop.f32.mrb[0].mxu0
        %v1809 = vpop.f32.mrb[0].mxu0
        %1810 = vdwg.mxu0
        %v1811 = vadd.f32 %v777, %v1806
        %v1812 = vld [vmem:[#allocation17] sm:$0x1]
        %v1813 = vld [vmem:[#allocation19] sm:$0x1]
        %1814 = vadd.xlane.f32.xlu0 %v1811
        %v1815 = vpop.xlane.xlu0 %1814
        %v1816 = vrcp.pop 128.0
        %v1817 = vmul.f32 %v1815, %v1816
        %v1818 = vsub.f32 %v1811, %v1817
        %v1819 = vmul.f32 %v1818, %v1818
        %1820 = vadd.xlane.f32.xlu0 %v1819
        %v1821 = vpop.xlane.xlu0 %1820
        %v1822 = vmul.f32 %v1821, %v1816
        %v1823 = vadd.f32 %v1822, 1e-05
        %v1824 = vrsqrt.pop %v1823
        %v1825 = vmul.f32 %v1818, %v1824
        %v1827 = vlaneseq
        %v1828 = vshrl.u32 %v1827, 7
        %v1829 = vsub.s32 0, %v1828
        %v1830 = vrot.slane %v1812, %v1829
        %v1832 = vmul.f32 %v1825, %v1830
        %v1834 = vlaneseq
        %v1835 = vshrl.u32 %v1834, 7
        %v1836 = vsub.s32 0, %v1835
        %v1837 = vrot.slane %v1813, %v1836
        %v1839 = vadd.f32 %v1832, %v1837
        %v1840 = vpack.c.bf16 %v1839, %v1839
        %v1841 = vld [vmem:[#allocation20] sm:$0xff]
        %v1842 = vld [vmem:[#allocation20 + $0x8] sm:$0xff]
        %v1843 = vld [vmem:[#allocation20 + $0x10] sm:$0xff]
        %v1844 = vld [vmem:[#allocation20 + $0x18] sm:$0xff]
        %v1845 = vld [vmem:[#allocation20 + $0x20] sm:$0xff]
        %v1846 = vld [vmem:[#allocation20 + $0x28] sm:$0xff]
        %v1847 = vld [vmem:[#allocation20 + $0x30] sm:$0xff]
        %v1848 = vld [vmem:[#allocation20 + $0x38] sm:$0xff]
        %v1849 = vld [vmem:[#allocation20 + $0x40] sm:$0xff]
        %v1850 = vld [vmem:[#allocation20 + $0x48] sm:$0xff]
        %v1851 = vld [vmem:[#allocation20 + $0x50] sm:$0xff]
        %v1852 = vld [vmem:[#allocation20 + $0x58] sm:$0xff]
        %v1853 = vld [vmem:[#allocation20 + $0x60] sm:$0xff]
        %v1854 = vld [vmem:[#allocation20 + $0x68] sm:$0xff]
        %v1855 = vld [vmem:[#allocation20 + $0x70] sm:$0xff]
        %v1856 = vld [vmem:[#allocation20 + $0x78] sm:$0xff]
        %v1857 = vld [vmem:[#allocation20 + $0x80] sm:$0xff]
        %v1858 = vld [vmem:[#allocation20 + $0x88] sm:$0xff]
        %v1859 = vld [vmem:[#allocation20 + $0x90] sm:$0xff]
        %v1860 = vld [vmem:[#allocation20 + $0x98] sm:$0xff]
        %v1861 = vld [vmem:[#allocation20 + $0xa0] sm:$0xff]
        %v1862 = vld [vmem:[#allocation20 + $0xa8] sm:$0xff]
        %v1863 = vld [vmem:[#allocation20 + $0xb0] sm:$0xff]
        %v1864 = vld [vmem:[#allocation20 + $0xb8] sm:$0xff]
        %v1865 = vld [vmem:[#allocation20 + $0xc0] sm:$0xff]
        %v1866 = vld [vmem:[#allocation20 + $0xc8] sm:$0xff]
        %v1867 = vld [vmem:[#allocation20 + $0xd0] sm:$0xff]
        %v1868 = vld [vmem:[#allocation20 + $0xd8] sm:$0xff]
        %v1869 = vld [vmem:[#allocation20 + $0xe0] sm:$0xff]
        %v1870 = vld [vmem:[#allocation20 + $0xe8] sm:$0xff]
        %v1871 = vld [vmem:[#allocation20 + $0xf0] sm:$0xff]
        %v1872 = vld [vmem:[#allocation20 + $0xf8] sm:$0xff]
        %v1873 = vld [vmem:[#allocation22] sm:$0xf]
        %v1875 = vlaneseq
        %v1876 = vshrl.u32 %v1875, 7
        %v1877 = vsub.s32 0, %v1876
        %v1878 = vrot.slane %v1873, %v1877
        %v1879 = vlaneseq
        %v1880 = vshrl.u32 %v1879, 7
        %v1881 = vsub.s32 1, %v1880
        %v1882 = vrot.slane %v1873, %v1881
        %v1883 = vlaneseq
        %v1884 = vshrl.u32 %v1883, 7
        %v1885 = vsub.s32 2, %v1884
        %v1886 = vrot.slane %v1873, %v1885
        %v1887 = vlaneseq
        %v1888 = vshrl.u32 %v1887, 7
        %v1889 = vsub.s32 3, %v1888
        %v1890 = vrot.slane %v1873, %v1889
        %v1927 = vunpack.c.l.b16 %v1841
        %v1928 = vunpack.c.h.b16 %v1841
        %v1929 = vunpack.c.l.b16 %v1842
        %v1930 = vunpack.c.h.b16 %v1842
        %v1931 = vunpack.c.l.b16 %v1843
        %v1932 = vunpack.c.h.b16 %v1843
        %v1933 = vunpack.c.l.b16 %v1844
        %v1934 = vunpack.c.h.b16 %v1844
        %v1935 = vunpack.c.l.b16 %v1845
        %v1936 = vunpack.c.h.b16 %v1845
        %v1937 = vunpack.c.l.b16 %v1846
        %v1938 = vunpack.c.h.b16 %v1846
        %v1939 = vunpack.c.l.b16 %v1847
        %v1940 = vunpack.c.h.b16 %v1847
        %v1941 = vunpack.c.l.b16 %v1848
        %v1942 = vunpack.c.h.b16 %v1848
        %v1943 = vunpack.c.l.b16 %v1849
        %v1944 = vunpack.c.h.b16 %v1849
        %v1945 = vunpack.c.l.b16 %v1850
        %v1946 = vunpack.c.h.b16 %v1850
        %v1947 = vunpack.c.l.b16 %v1851
        %v1948 = vunpack.c.h.b16 %v1851
        %v1949 = vunpack.c.l.b16 %v1852
        %v1950 = vunpack.c.h.b16 %v1852
        %v1951 = vunpack.c.l.b16 %v1853
        %v1952 = vunpack.c.h.b16 %v1853
        %v1953 = vunpack.c.l.b16 %v1854
        %v1954 = vunpack.c.h.b16 %v1854
        %v1955 = vunpack.c.l.b16 %v1855
        %v1956 = vunpack.c.h.b16 %v1855
        %v1957 = vunpack.c.l.b16 %v1856
        %v1958 = vunpack.c.h.b16 %v1856
        %v1959 = vunpack.c.l.b16 %v1857
        %v1960 = vunpack.c.h.b16 %v1857
        %v1961 = vunpack.c.l.b16 %v1858
        %v1962 = vunpack.c.h.b16 %v1858
        %v1963 = vunpack.c.l.b16 %v1859
        %v1964 = vunpack.c.h.b16 %v1859
        %v1965 = vunpack.c.l.b16 %v1860
        %v1966 = vunpack.c.h.b16 %v1860
        %v1967 = vunpack.c.l.b16 %v1861
        %v1968 = vunpack.c.h.b16 %v1861
        %v1969 = vunpack.c.l.b16 %v1862
        %v1970 = vunpack.c.h.b16 %v1862
        %v1971 = vunpack.c.l.b16 %v1863
        %v1972 = vunpack.c.h.b16 %v1863
        %v1973 = vunpack.c.l.b16 %v1864
        %v1974 = vunpack.c.h.b16 %v1864
        %v1975 = vunpack.c.l.b16 %v1865
        %v1976 = vunpack.c.h.b16 %v1865
        %v1977 = vunpack.c.l.b16 %v1866
        %v1978 = vunpack.c.h.b16 %v1866
        %v1979 = vunpack.c.l.b16 %v1867
        %v1980 = vunpack.c.h.b16 %v1867
        %v1981 = vunpack.c.l.b16 %v1868
        %v1982 = vunpack.c.h.b16 %v1868
        %v1983 = vunpack.c.l.b16 %v1869
        %v1984 = vunpack.c.h.b16 %v1869
        %v1985 = vunpack.c.l.b16 %v1870
        %v1986 = vunpack.c.h.b16 %v1870
        %v1987 = vunpack.c.l.b16 %v1871
        %v1988 = vunpack.c.h.b16 %v1871
        %v1989 = vunpack.c.l.b16 %v1872
        %v1990 = vunpack.c.h.b16 %v1872
        %v1991 = vpack.c.b16 %v1931, %v1927
        %v1992 = vpack.c.b16 %v1932, %v1928
        %v1993 = vpack.c.b16 %v1933, %v1929
        %v1994 = vpack.c.b16 %v1934, %v1930
        %v1995 = vpack.c.b16 %v1939, %v1935
        %v1996 = vpack.c.b16 %v1940, %v1936
        %v1997 = vpack.c.b16 %v1941, %v1937
        %v1998 = vpack.c.b16 %v1942, %v1938
        %v1999 = vpack.c.b16 %v1947, %v1943
        %v2000 = vpack.c.b16 %v1948, %v1944
        %v2001 = vpack.c.b16 %v1949, %v1945
        %v2002 = vpack.c.b16 %v1950, %v1946
        %v2003 = vpack.c.b16 %v1955, %v1951
        %v2004 = vpack.c.b16 %v1956, %v1952
        %v2005 = vpack.c.b16 %v1957, %v1953
        %v2006 = vpack.c.b16 %v1958, %v1954
        %v2007 = vpack.c.b16 %v1963, %v1959
        %v2008 = vpack.c.b16 %v1964, %v1960
        %v2009 = vpack.c.b16 %v1965, %v1961
        %v2010 = vpack.c.b16 %v1966, %v1962
        %v2011 = vpack.c.b16 %v1971, %v1967
        %v2012 = vpack.c.b16 %v1972, %v1968
        %v2013 = vpack.c.b16 %v1973, %v1969
        %v2014 = vpack.c.b16 %v1974, %v1970
        %v2015 = vpack.c.b16 %v1979, %v1975
        %v2016 = vpack.c.b16 %v1980, %v1976
        %v2017 = vpack.c.b16 %v1981, %v1977
        %v2018 = vpack.c.b16 %v1982, %v1978
        %v2019 = vpack.c.b16 %v1987, %v1983
        %v2020 = vpack.c.b16 %v1988, %v1984
        %v2021 = vpack.c.b16 %v1989, %v1985
        %v2022 = vpack.c.b16 %v1990, %v1986
        %2055 = vmatprep.subr.bf16.mxu0 %v1992
        %2056 = vmatpush1.bf16.msra.mxu0 %v1991
        %2057 = vmatprep.subr.bf16.mxu0 %v1996
        %2058 = vmatpush1.bf16.msra.mxu0 %v1995
        %2059 = vmatprep.subr.bf16.mxu0 %v2000
        %2060 = vmatpush1.bf16.msra.mxu0 %v1999
        %2061 = vmatprep.subr.bf16.mxu0 %v2004
        %2062 = vmatpush1.bf16.msra.mxu0 %v2003
        %2063 = vmatprep.subr.bf16.mxu0 %v2008
        %2064 = vmatpush1.bf16.msra.mxu0 %v2007
        %2065 = vmatprep.subr.bf16.mxu0 %v2012
        %2066 = vmatpush1.bf16.msra.mxu0 %v2011
        %2067 = vmatprep.subr.bf16.mxu0 %v2016
        %2068 = vmatpush1.bf16.msra.mxu0 %v2015
        %2069 = vmatprep.subr.bf16.mxu0 %v2020
        %2070 = vmatpush1.bf16.msra.mxu0 %v2019
        %2071 = vmatprep.subr.bf16.mxu0 0
        %2072 = vmatpush1.bf16.msra.mxu0 0
        %2073 = vmatprep.subr.bf16.mxu0 0
        %2074 = vmatpush1.bf16.msra.mxu0 0
        %2075 = vmatprep.subr.bf16.mxu0 0
        %2076 = vmatpush1.bf16.msra.mxu0 0
        %2077 = vmatprep.subr.bf16.mxu0 0
        %2078 = vmatpush1.bf16.msra.mxu0 0
        %2079 = vmatprep.subr.bf16.mxu0 0
        %2080 = vmatpush1.bf16.msra.mxu0 0
        %2081 = vmatprep.subr.bf16.mxu0 0
        %2082 = vmatpush1.bf16.msra.mxu0 0
        %2083 = vmatprep.subr.bf16.mxu0 0
        %2084 = vmatpush1.bf16.msra.mxu0 0
        %2085 = vmatprep.subr.bf16.mxu0 0
        %2086 = vmatpush1.bf16.msra.mxu0 0
        %2087 = vmatprep.mubr.bf16.mxu0 0
        %2088 = vmatmul.mubr.bf16.gmra.mrb[0].mxu0 %v1840
        %v2089 = vpop.f32.mrb[0].mxu0
        %v2090 = vadd.f32 %v1878, %v2089
        %v2091 = vpop.f32.mrb[0].mxu0
        %v2092 = vadd.f32 %v1882, %v2091
        %v2093 = vpop.f32.mrb[0].mxu0
        %v2094 = vpop.f32.mrb[0].mxu0
        %2095 = vdwg.mxu0
        %2096 = vmatprep.subr.bf16.mxu0 %v1994
        %2097 = vmatpush1.bf16.msra.mxu0 %v1993
        %2098 = vmatprep.subr.bf16.mxu0 %v1998
        %2099 = vmatpush1.bf16.msra.mxu0 %v1997
        %2100 = vmatprep.subr.bf16.mxu0 %v2002
        %2101 = vmatpush1.bf16.msra.mxu0 %v2001
        %2102 = vmatprep.subr.bf16.mxu0 %v2006
        %2103 = vmatpush1.bf16.msra.mxu0 %v2005
        %2104 = vmatprep.subr.bf16.mxu0 %v2010
        %2105 = vmatpush1.bf16.msra.mxu0 %v2009
        %2106 = vmatprep.subr.bf16.mxu0 %v2014
        %2107 = vmatpush1.bf16.msra.mxu0 %v2013
        %2108 = vmatprep.subr.bf16.mxu0 %v2018
        %2109 = vmatpush1.bf16.msra.mxu0 %v2017
        %2110 = vmatprep.subr.bf16.mxu0 %v2022
        %2111 = vmatpush1.bf16.msra.mxu0 %v2021
        %2112 = vmatprep.subr.bf16.mxu0 0
        %2113 = vmatpush1.bf16.msra.mxu0 0
        %2114 = vmatprep.subr.bf16.mxu0 0
        %2115 = vmatpush1.bf16.msra.mxu0 0
        %2116 = vmatprep.subr.bf16.mxu0 0
        %2117 = vmatpush1.bf16.msra.mxu0 0
        %2118 = vmatprep.subr.bf16.mxu0 0
        %2119 = vmatpush1.bf16.msra.mxu0 0
        %2120 = vmatprep.subr.bf16.mxu0 0
        %2121 = vmatpush1.bf16.msra.mxu0 0
        %2122 = vmatprep.subr.bf16.mxu0 0
        %2123 = vmatpush1.bf16.msra.mxu0 0
        %2124 = vmatprep.subr.bf16.mxu0 0
        %2125 = vmatpush1.bf16.msra.mxu0 0
        %2126 = vmatprep.subr.bf16.mxu0 0
        %2127 = vmatpush1.bf16.msra.mxu0 0
        %2128 = vmatprep.mubr.bf16.mxu0 0
        %2129 = vmatmul.mubr.bf16.gmra.mrb[0].mxu0 %v1840
        %v2130 = vpop.f32.mrb[0].mxu0
        %v2131 = vadd.f32 %v1886, %v2130
        %v2132 = vpop.f32.mrb[0].mxu0
        %v2133 = vadd.f32 %v1890, %v2132
        %v2134 = vpop.f32.mrb[0].mxu0
        %v2135 = vpop.f32.mrb[0].mxu0
        %2136 = vdwg.mxu0
        %v2137 = vmax.f32 %v2090, 0.0
        %v2138 = vmax.f32 %v2092, 0.0
        %v2139 = vmax.f32 %v2131, 0.0
        %v2140 = vmax.f32 %v2133, 0.0
        %v2141 = vpack.c.bf16 %v2137, %v2137
        %v2142 = vpack.c.bf16 %v2138, %v2138
        %v2143 = vpack.c.bf16 %v2139, %v2139
        %v2144 = vpack.c.bf16 %v2140, %v2140
        %v2145 = vld [vmem:[#allocation23] sm:$0xf]
        %v2146 = vld [vmem:[#allocation23 + $0x4] sm:$0xf]
        %v2147 = vld [vmem:[#allocation23 + $0x8] sm:$0xf]
        %v2148 = vld [vmem:[#allocation23 + $0xc] sm:$0xf]
        %v2149 = vld [vmem:[#allocation23 + $0x10] sm:$0xf]
        %v2150 = vld [vmem:[#allocation23 + $0x14] sm:$0xf]
        %v2151 = vld [vmem:[#allocation23 + $0x18] sm:$0xf]
        %v2152 = vld [vmem:[#allocation23 + $0x1c] sm:$0xf]
        %v2153 = vld [vmem:[#allocation23 + $0x20] sm:$0xf]
        %v2154 = vld [vmem:[#allocation23 + $0x24] sm:$0xf]
        %v2155 = vld [vmem:[#allocation23 + $0x28] sm:$0xf]
        %v2156 = vld [vmem:[#allocation23 + $0x2c] sm:$0xf]
        %v2157 = vld [vmem:[#allocation23 + $0x30] sm:$0xf]
        %v2158 = vld [vmem:[#allocation23 + $0x34] sm:$0xf]
        %v2159 = vld [vmem:[#allocation23 + $0x38] sm:$0xf]
        %v2160 = vld [vmem:[#allocation23 + $0x3c] sm:$0xf]
        %v2161 = vld [vmem:[#allocation23 + $0x40] sm:$0xf]
        %v2162 = vld [vmem:[#allocation23 + $0x44] sm:$0xf]
        %v2163 = vld [vmem:[#allocation23 + $0x48] sm:$0xf]
        %v2164 = vld [vmem:[#allocation23 + $0x4c] sm:$0xf]
        %v2165 = vld [vmem:[#allocation23 + $0x50] sm:$0xf]
        %v2166 = vld [vmem:[#allocation23 + $0x54] sm:$0xf]
        %v2167 = vld [vmem:[#allocation23 + $0x58] sm:$0xf]
        %v2168 = vld [vmem:[#allocation23 + $0x5c] sm:$0xf]
        %v2169 = vld [vmem:[#allocation23 + $0x60] sm:$0xf]
        %v2170 = vld [vmem:[#allocation23 + $0x64] sm:$0xf]
        %v2171 = vld [vmem:[#allocation23 + $0x68] sm:$0xf]
        %v2172 = vld [vmem:[#allocation23 + $0x6c] sm:$0xf]
        %v2173 = vld [vmem:[#allocation23 + $0x70] sm:$0xf]
        %v2174 = vld [vmem:[#allocation23 + $0x74] sm:$0xf]
        %v2175 = vld [vmem:[#allocation23 + $0x78] sm:$0xf]
        %v2176 = vld [vmem:[#allocation23 + $0x7c] sm:$0xf]
        %v2177 = vld [vmem:[#allocation23 + $0x80] sm:$0xf]
        %v2178 = vld [vmem:[#allocation23 + $0x84] sm:$0xf]
        %v2179 = vld [vmem:[#allocation23 + $0x88] sm:$0xf]
        %v2180 = vld [vmem:[#allocation23 + $0x8c] sm:$0xf]
        %v2181 = vld [vmem:[#allocation23 + $0x90] sm:$0xf]
        %v2182 = vld [vmem:[#allocation23 + $0x94] sm:$0xf]
        %v2183 = vld [vmem:[#allocation23 + $0x98] sm:$0xf]
        %v2184 = vld [vmem:[#allocation23 + $0x9c] sm:$0xf]
        %v2185 = vld [vmem:[#allocation23 + $0xa0] sm:$0xf]
        %v2186 = vld [vmem:[#allocation23 + $0xa4] sm:$0xf]
        %v2187 = vld [vmem:[#allocation23 + $0xa8] sm:$0xf]
        %v2188 = vld [vmem:[#allocation23 + $0xac] sm:$0xf]
        %v2189 = vld [vmem:[#allocation23 + $0xb0] sm:$0xf]
        %v2190 = vld [vmem:[#allocation23 + $0xb4] sm:$0xf]
        %v2191 = vld [vmem:[#allocation23 + $0xb8] sm:$0xf]
        %v2192 = vld [vmem:[#allocation23 + $0xbc] sm:$0xf]
        %v2193 = vld [vmem:[#allocation23 + $0xc0] sm:$0xf]
        %v2194 = vld [vmem:[#allocation23 + $0xc4] sm:$0xf]
        %v2195 = vld [vmem:[#allocation23 + $0xc8] sm:$0xf]
        %v2196 = vld [vmem:[#allocation23 + $0xcc] sm:$0xf]
        %v2197 = vld [vmem:[#allocation23 + $0xd0] sm:$0xf]
        %v2198 = vld [vmem:[#allocation23 + $0xd4] sm:$0xf]
        %v2199 = vld [vmem:[#allocation23 + $0xd8] sm:$0xf]
        %v2200 = vld [vmem:[#allocation23 + $0xdc] sm:$0xf]
        %v2201 = vld [vmem:[#allocation23 + $0xe0] sm:$0xf]
        %v2202 = vld [vmem:[#allocation23 + $0xe4] sm:$0xf]
        %v2203 = vld [vmem:[#allocation23 + $0xe8] sm:$0xf]
        %v2204 = vld [vmem:[#allocation23 + $0xec] sm:$0xf]
        %v2205 = vld [vmem:[#allocation23 + $0xf0] sm:$0xf]
        %v2206 = vld [vmem:[#allocation23 + $0xf4] sm:$0xf]
        %v2207 = vld [vmem:[#allocation23 + $0xf8] sm:$0xf]
        %v2208 = vld [vmem:[#allocation23 + $0xfc] sm:$0xf]
        %v2209 = vld [vmem:[#allocation25] sm:$0x1]
        %v2211 = vlaneseq
        %v2212 = vshrl.u32 %v2211, 7
        %v2213 = vsub.s32 0, %v2212
        %v2214 = vrot.slane %v2209, %v2213
        %v2280 = vunpack.c.l.b16 %v2145
        %v2281 = vunpack.c.l.b16 %v2146
        %v2282 = vunpack.c.l.b16 %v2147
        %v2283 = vunpack.c.l.b16 %v2148
        %v2284 = vunpack.c.l.b16 %v2149
        %v2285 = vunpack.c.l.b16 %v2150
        %v2286 = vunpack.c.l.b16 %v2151
        %v2287 = vunpack.c.l.b16 %v2152
        %v2288 = vunpack.c.l.b16 %v2153
        %v2289 = vunpack.c.l.b16 %v2154
        %v2290 = vunpack.c.l.b16 %v2155
        %v2291 = vunpack.c.l.b16 %v2156
        %v2292 = vunpack.c.l.b16 %v2157
        %v2293 = vunpack.c.l.b16 %v2158
        %v2294 = vunpack.c.l.b16 %v2159
        %v2295 = vunpack.c.l.b16 %v2160
        %v2296 = vunpack.c.l.b16 %v2161
        %v2297 = vunpack.c.l.b16 %v2162
        %v2298 = vunpack.c.l.b16 %v2163
        %v2299 = vunpack.c.l.b16 %v2164
        %v2300 = vunpack.c.l.b16 %v2165
        %v2301 = vunpack.c.l.b16 %v2166
        %v2302 = vunpack.c.l.b16 %v2167
        %v2303 = vunpack.c.l.b16 %v2168
        %v2304 = vunpack.c.l.b16 %v2169
        %v2305 = vunpack.c.l.b16 %v2170
        %v2306 = vunpack.c.l.b16 %v2171
        %v2307 = vunpack.c.l.b16 %v2172
        %v2308 = vunpack.c.l.b16 %v2173
        %v2309 = vunpack.c.l.b16 %v2174
        %v2310 = vunpack.c.l.b16 %v2175
        %v2311 = vunpack.c.l.b16 %v2176
        %v2312 = vunpack.c.l.b16 %v2177
        %v2313 = vunpack.c.l.b16 %v2178
        %v2314 = vunpack.c.l.b16 %v2179
        %v2315 = vunpack.c.l.b16 %v2180
        %v2316 = vunpack.c.l.b16 %v2181
        %v2317 = vunpack.c.l.b16 %v2182
        %v2318 = vunpack.c.l.b16 %v2183
        %v2319 = vunpack.c.l.b16 %v2184
        %v2320 = vunpack.c.l.b16 %v2185
        %v2321 = vunpack.c.l.b16 %v2186
        %v2322 = vunpack.c.l.b16 %v2187
        %v2323 = vunpack.c.l.b16 %v2188
        %v2324 = vunpack.c.l.b16 %v2189
        %v2325 = vunpack.c.l.b16 %v2190
        %v2326 = vunpack.c.l.b16 %v2191
        %v2327 = vunpack.c.l.b16 %v2192
        %v2328 = vunpack.c.l.b16 %v2193
        %v2329 = vunpack.c.l.b16 %v2194
        %v2330 = vunpack.c.l.b16 %v2195
        %v2331 = vunpack.c.l.b16 %v2196
        %v2332 = vunpack.c.l.b16 %v2197
        %v2333 = vunpack.c.l.b16 %v2198
        %v2334 = vunpack.c.l.b16 %v2199
        %v2335 = vunpack.c.l.b16 %v2200
        %v2336 = vunpack.c.l.b16 %v2201
        %v2337 = vunpack.c.l.b16 %v2202
        %v2338 = vunpack.c.l.b16 %v2203
        %v2339 = vunpack.c.l.b16 %v2204
        %v2340 = vunpack.c.l.b16 %v2205
        %v2341 = vunpack.c.l.b16 %v2206
        %v2342 = vunpack.c.l.b16 %v2207
        %v2343 = vunpack.c.l.b16 %v2208
        %v2344 = vpack.c.b16 %v2281, %v2280
        %v2345 = vpack.c.b16 %v2283, %v2282
        %v2346 = vpack.c.b16 %v2285, %v2284
        %v2347 = vpack.c.b16 %v2287, %v2286
        %v2348 = vpack.c.b16 %v2289, %v2288
        %v2349 = vpack.c.b16 %v2291, %v2290
        %v2350 = vpack.c.b16 %v2293, %v2292
        %v2351 = vpack.c.b16 %v2295, %v2294
        %v2352 = vpack.c.b16 %v2297, %v2296
        %v2353 = vpack.c.b16 %v2299, %v2298
        %v2354 = vpack.c.b16 %v2301, %v2300
        %v2355 = vpack.c.b16 %v2303, %v2302
        %v2356 = vpack.c.b16 %v2305, %v2304
        %v2357 = vpack.c.b16 %v2307, %v2306
        %v2358 = vpack.c.b16 %v2309, %v2308
        %v2359 = vpack.c.b16 %v2311, %v2310
        %v2360 = vpack.c.b16 %v2313, %v2312
        %v2361 = vpack.c.b16 %v2315, %v2314
        %v2362 = vpack.c.b16 %v2317, %v2316
        %v2363 = vpack.c.b16 %v2319, %v2318
        %v2364 = vpack.c.b16 %v2321, %v2320
        %v2365 = vpack.c.b16 %v2323, %v2322
        %v2366 = vpack.c.b16 %v2325, %v2324
        %v2367 = vpack.c.b16 %v2327, %v2326
        %v2368 = vpack.c.b16 %v2329, %v2328
        %v2369 = vpack.c.b16 %v2331, %v2330
        %v2370 = vpack.c.b16 %v2333, %v2332
        %v2371 = vpack.c.b16 %v2335, %v2334
        %v2372 = vpack.c.b16 %v2337, %v2336
        %v2373 = vpack.c.b16 %v2339, %v2338
        %v2374 = vpack.c.b16 %v2341, %v2340
        %v2375 = vpack.c.b16 %v2343, %v2342
        %2408 = vmatprep.subr.bf16.mxu0 0
        %2409 = vmatpush1.bf16.msra.mxu0 %v2344
        %2410 = vmatprep.subr.bf16.mxu0 0
        %2411 = vmatpush1.bf16.msra.mxu0 %v2345
        %2412 = vmatprep.subr.bf16.mxu0 0
        %2413 = vmatpush1.bf16.msra.mxu0 %v2346
        %2414 = vmatprep.subr.bf16.mxu0 0
        %2415 = vmatpush1.bf16.msra.mxu0 %v2347
        %2416 = vmatprep.subr.bf16.mxu0 0
        %2417 = vmatpush1.bf16.msra.mxu0 %v2348
        %2418 = vmatprep.subr.bf16.mxu0 0
        %2419 = vmatpush1.bf16.msra.mxu0 %v2349
        %2420 = vmatprep.subr.bf16.mxu0 0
        %2421 = vmatpush1.bf16.msra.mxu0 %v2350
        %2422 = vmatprep.subr.bf16.mxu0 0
        %2423 = vmatpush1.bf16.msra.mxu0 %v2351
        %2424 = vmatprep.subr.bf16.mxu0 0
        %2425 = vmatpush1.bf16.msra.mxu0 %v2352
        %2426 = vmatprep.subr.bf16.mxu0 0
        %2427 = vmatpush1.bf16.msra.mxu0 %v2353
        %2428 = vmatprep.subr.bf16.mxu0 0
        %2429 = vmatpush1.bf16.msra.mxu0 %v2354
        %2430 = vmatprep.subr.bf16.mxu0 0
        %2431 = vmatpush1.bf16.msra.mxu0 %v2355
        %2432 = vmatprep.subr.bf16.mxu0 0
        %2433 = vmatpush1.bf16.msra.mxu0 %v2356
        %2434 = vmatprep.subr.bf16.mxu0 0
        %2435 = vmatpush1.bf16.msra.mxu0 %v2357
        %2436 = vmatprep.subr.bf16.mxu0 0
        %2437 = vmatpush1.bf16.msra.mxu0 %v2358
        %2438 = vmatprep.subr.bf16.mxu0 0
        %2439 = vmatpush1.bf16.msra.mxu0 %v2359
        %2440 = vmatprep.mubr.bf16.mxu0 %v2142
        %2441 = vmatmul.mubr.bf16.gmra.mrb[0].mxu0 %v2141
        %v2442 = vpop.f32.mrb[0].mxu0
        %v2443 = vadd.f32 %v2214, %v2442
        %v2444 = vpop.f32.mrb[0].mxu0
        %v2445 = vpop.f32.mrb[0].mxu0
        %v2446 = vpop.f32.mrb[0].mxu0
        %2447 = vdwg.mxu0
        %2448 = vmatprep.subr.bf16.mxu0 0
        %2449 = vmatpush1.bf16.msra.mxu0 %v2360
        %2450 = vmatprep.subr.bf16.mxu0 0
        %2451 = vmatpush1.bf16.msra.mxu0 %v2361
        %2452 = vmatprep.subr.bf16.mxu0 0
        %2453 = vmatpush1.bf16.msra.mxu0 %v2362
        %2454 = vmatprep.subr.bf16.mxu0 0
        %2455 = vmatpush1.bf16.msra.mxu0 %v2363
        %2456 = vmatprep.subr.bf16.mxu0 0
        %2457 = vmatpush1.bf16.msra.mxu0 %v2364
        %2458 = vmatprep.subr.bf16.mxu0 0
        %2459 = vmatpush1.bf16.msra.mxu0 %v2365
        %2460 = vmatprep.subr.bf16.mxu0 0
        %2461 = vmatpush1.bf16.msra.mxu0 %v2366
        %2462 = vmatprep.subr.bf16.mxu0 0
        %2463 = vmatpush1.bf16.msra.mxu0 %v2367
        %2464 = vmatprep.subr.bf16.mxu0 0
        %2465 = vmatpush1.bf16.msra.mxu0 %v2368
        %2466 = vmatprep.subr.bf16.mxu0 0
        %2467 = vmatpush1.bf16.msra.mxu0 %v2369
        %2468 = vmatprep.subr.bf16.mxu0 0
        %2469 = vmatpush1.bf16.msra.mxu0 %v2370
        %2470 = vmatprep.subr.bf16.mxu0 0
        %2471 = vmatpush1.bf16.msra.mxu0 %v2371
        %2472 = vmatprep.subr.bf16.mxu0 0
        %2473 = vmatpush1.bf16.msra.mxu0 %v2372
        %2474 = vmatprep.subr.bf16.mxu0 0
        %2475 = vmatpush1.bf16.msra.mxu0 %v2373
        %2476 = vmatprep.subr.bf16.mxu0 0
        %2477 = vmatpush1.bf16.msra.mxu0 %v2374
        %2478 = vmatprep.subr.bf16.mxu0 0
        %2479 = vmatpush1.bf16.msra.mxu0 %v2375
        %2480 = vmatprep.mubr.bf16.mxu0 %v2144
        %2481 = vmatmul.mubr.bf16.gmra.mrb[0].mxu0 %v2143
        %v2482 = vpop.f32.mrb[0].mxu0
        %v2483 = vadd.f32 %v2443, %v2482
        %v2484 = vpop.f32.mrb[0].mxu0
        %v2485 = vpop.f32.mrb[0].mxu0
        %v2486 = vpop.f32.mrb[0].mxu0
        %2487 = vdwg.mxu0
        %v2488 = vadd.f32 %v1839, %v2483
        %v2489 = vld [vmem:[#allocation26] sm:$0x1]
        %v2490 = vld [vmem:[#allocation28] sm:$0x1]
        %2491 = vadd.xlane.f32.xlu0 %v2488
        %v2492 = vpop.xlane.xlu0 %2491
        %v2493 = vmul.f32 %v2492, %v1816
        %v2494 = vsub.f32 %v2488, %v2493
        %v2495 = vmul.f32 %v2494, %v2494
        %2496 = vadd.xlane.f32.xlu0 %v2495
        %v2497 = vpop.xlane.xlu0 %2496
        %v2498 = vmul.f32 %v2497, %v1816
        %v2499 = vadd.f32 %v2498, 1e-05
        %v2500 = vrsqrt.pop %v2499
        %v2501 = vmul.f32 %v2494, %v2500
        %v2503 = vlaneseq
        %v2504 = vshrl.u32 %v2503, 7
        %v2505 = vsub.s32 0, %v2504
        %v2506 = vrot.slane %v2489, %v2505
        %v2508 = vmul.f32 %v2501, %v2506
        %v2510 = vlaneseq
        %v2511 = vshrl.u32 %v2510, 7
        %v2512 = vsub.s32 0, %v2511
        %v2513 = vrot.slane %v2490, %v2512
        %v2515 = vadd.f32 %v2508, %v2513
        %2516 = vst [vmem:[%s775] sm:$0xff] %v2515
        %s2517 = sand.u32 %s412, 1
        %s2518 = scalar_lea.sflag [#allocation4], %s2517
        %s2519 = sand.u32 %s412, 1
        %s2520 = smul.addr %s2519, 8
        %s2521 = scalar_lea.vmem [#allocation29], %s2520
        // Predicated region
        $region157: #{mel_encoder_forward.9} parent=87 // pred_check
          %p2522 = pneg %p422
        $region158: #{mel_encoder_forward.9} parent=87 // pred_check_branch
          %2524 = sbr.rel (%p2522) target = $region160
        $region159: #{mel_encoder_forward.9} parent=87 // pred_region
          %s2526 = ssub.s32 128, 128
          %2527 = vsyncadd %s2518, %s2526
          %s2528 = smul.addr %s42, 128
          %s2529 = scalar_lea.hbm %s17, %s2528
          %s2531 = sshll.u32 %s2521, 4
          %s2532 = int_to_ptr.vmem [resolvable:$true] %s2531
          %2534 = dma.vmem_to_hbm [thread:$0]  %s2532, 128, %s2529, %s2518
        $region160: #{mel_encoder_forward.9} parent=87 // pred_fallthru
          _
      $region88: #{mel_encoder_forward.9} parent=5 // pred_fallthru
        _
      %p2535 = scmp.le.s32.totalorder 2, %s37
      // Predicated region
      $region161: #{mel_encoder_forward.9} parent=5 // pred_check
        %p2536 = pneg %p2535
      $region162: #{mel_encoder_forward.9} parent=5 // pred_check_branch
        %2538 = sbr.rel (%p2536) target = $region164
      $region163: #{mel_encoder_forward.9} parent=5 // pred_region
        %s2539 = ssub.s32 %s37, 2
        // Predicated region
        $region165: #{mel_encoder_forward.9} parent=163 // pred_check
          %p2540 = pneg %p428
        $region166: #{mel_encoder_forward.9} parent=163 // pred_check_branch
          %2542 = sbr.rel (%p2540) target = $region168
        $region167: #{mel_encoder_forward.9} parent=163 // pred_region
          %s2543 = sand.u32 %s413, 1
          %s2544 = scalar_lea.sflag [#allocation4], %s2543
          %s2545 = sand.u32 %s413, 1
          %s2546 = smul.addr %s2545, 8
          %s2547 = scalar_lea.vmem [#allocation29], %s2546
          %2548 = dma.done %s2544, 128
        $region168: #{mel_encoder_forward.9} parent=163 // pred_fallthru
          _
      $region164: #{mel_encoder_forward.9} parent=5 // pred_fallthru
        _
    $region6: #{mel_encoder_forward.9} parent=1 // loop_footer
      %s41 = sadd.s32 1, %s37
    $region7: #{mel_encoder_forward.9} parent=1 // loop_footer_branch
      %36 = sbr.rel target = $region3
    $region8: #{mel_encoder_forward.9} parent=1 // loop_exit
      _
    %2549 = vsyncpa [#allocation3], 1
    %s2550 = scalar_lea.sflag [#allocation3], 1
    %2551 = vsyncpa %s2550, 1
    %2552 = vsyncpa [#allocation6], 1
    %2553 = vsyncpa [#allocation9], 1
    %2554 = vsyncpa [#allocation12], 1
    %2555 = vsyncpa [#allocation15], 1
    %2556 = vsyncpa [#allocation18], 1
    %2557 = vsyncpa [#allocation21], 1
    %2558 = vsyncpa [#allocation24], 1
    %2559 = vsyncpa [#allocation27], 1
    %2560 = vsyncpa [#allocation4], 1
    %s2561 = scalar_lea.sflag [#allocation4], 1
    %2562 = vsyncpa %s2561, 1

</llo_original>
